<compile_context>
chip_gen: v6e
topology: v6e:2x2x1
jax: 0.10.0
libtpu: 0.0.40
codegen_flags: <defaults>
</compile_context>

<pallas_src>
import jax
import jax.numpy as jnp
from jax import lax
from jax.experimental import pallas as pl
from jax.experimental.pallas import tpu as pltpu

CHANNEL = 2048            # fixed inside ChannelAttentionModule
REDUCTION = 16
MID = CHANNEL // REDUCTION
KSIZE = 7
PAD = 3


def cbam_attention_kernel(x_ref, w1_ref, b1_ref, w2_ref, b2_ref, mbig_ref, cb_ref,
                          feat_ref, mapt_ref):
    _, H, W, C = x_ref.shape
    f32 = jnp.float32

    # ---------------- Pass 1: global avg / max pool over (H, W) ----------------
    # sum accumulates in f32; max stays in the input dtype (exact for max) which
    # halves the accumulator vreg footprint on bf16-VPU chips.
    row0 = x_ref[0, 0]                                    # (W, C) bf16
    sum_acc = row0.astype(f32)
    max_acc = row0
    for h in range(1, H):
        r = x_ref[0, h]
        sum_acc = sum_acc + r.astype(f32)
        max_acc = jnp.maximum(max_acc, r)
    inv_hw = 1.0 / float(H * W)
    avg = jnp.sum(sum_acc, axis=0, keepdims=True) * inv_hw          # (1, C)
    mx = jnp.max(max_acc.astype(f32), axis=0, keepdims=True)        # (1, C)
    pooled = jnp.concatenate([avg, mx], axis=0)                     # (2, C)

    # ---------------- Shared MLP (bf16 MXU matmuls, f32 accumulation) ----------
    hmid = jnp.dot(pooled.astype(w1_ref.dtype), w1_ref[...],
                   preferred_element_type=f32)
    hmid = jnp.maximum(hmid + b1_ref[...], 0.0)                     # (2, MID)
    y = jnp.dot(hmid.astype(w2_ref.dtype), w2_ref[...],
                preferred_element_type=f32) + b2_ref[...]           # (2, C)
    attn = jax.nn.sigmoid(y[0:1] + y[1:2])                          # (1, C)
    attn_b = jnp.broadcast_to(attn, (W, C))                         # hoisted broadcast

    # ---------------- Pass 2: per-pixel channel mean/max of out = attn*x -------
    # Stats stay in registers as transposed (W, 1) columns (sublane = width).
    inv_c = 1.0 / float(C)
    mean_cols = []
    max_cols = []
    for h in range(H):
        orow = x_ref[0, h].astype(f32) * attn_b                     # (W, C)
        mean_cols.append(jnp.sum(orow, axis=1, keepdims=True) * inv_c)   # (W, 1)
        max_cols.append(jnp.max(orow, axis=1, keepdims=True))            # (W, 1)

    # ---------------- Spatial 7x7 conv as ONE stacked MXU matmul ----------------
    # smap_t[x, y] = sigmoid( (M_big @ B_big)[x, y] + cb ), with
    #   M_big = wrapper-precomputed (W, 2*KSIZE*W) banded kx-fold of the conv weights,
    #   B_big = ky-shifted bands of the transposed, row(H)-padded stat planes.
    zpad = jnp.zeros((W, PAD), f32)
    mean_t = jnp.concatenate([zpad] + mean_cols + [zpad], axis=1)   # (W, H + 2*PAD)
    max_t = jnp.concatenate([zpad] + max_cols + [zpad], axis=1)     # (W, H + 2*PAD)
    planes = (mean_t, max_t)
    bands = [planes[c][:, ky:ky + H] for c in range(2) for ky in range(KSIZE)]
    b_big = jnp.concatenate(bands, axis=0)                          # (2*KSIZE*W, H)
    smap_t = jax.nn.sigmoid(
        jnp.dot(mbig_ref[...], b_big, preferred_element_type=f32) + cb_ref[0])
    mapt_ref[0] = smap_t                                            # (W, H) transposed map

    # ---------------- Pass 3: feature = (attn*x) * map, single store per row ----
    for h in range(H):
        orow = x_ref[0, h].astype(f32) * attn_b                     # (W, C), recomputed
        scol = smap_t[:, h:h + 1]                                   # (W, 1) from registers
        feat_ref[0, h] = (orow * scol).astype(feat_ref.dtype)


def _conv_stacked_matrix(cw, width):
    """Fold the kx taps of the 7x7 conv into ONE stacked banded matrix (W, 2*KSIZE*W).

    MT[c, ky, x, j] = cw[0, c, ky, j + PAD - x] if 0 <= j + PAD - x < KSIZE else 0, so
    (MT[c,ky] @ band_T[c,ky])[x, y] = sum_kx cw[0,c,ky,kx]*stat_c[y+ky-PAD, x+kx-PAD];
    the (c, ky) blocks are concatenated along the contraction axis so the kernel needs
    a single matmul against the stacked bands.
    """
    x = jnp.arange(width)[:, None]          # output column index
    j = jnp.arange(width)[None, :]          # input  column index
    kx = j + PAD - x                        # (width, width)
    valid = (kx >= 0) & (kx < KSIZE)
    kxc = jnp.clip(kx, 0, KSIZE - 1)
    w_ck = cw[0].astype(jnp.float32)        # (2, KSIZE, KSIZE)
    mt = jnp.where(valid[None, None], w_ck[:, :, kxc], 0.0)         # (2, KSIZE, W, W)
    return jnp.concatenate([mt[c, ky] for c in range(2) for ky in range(KSIZE)],
                           axis=1)                                  # (W, 2*KSIZE*W)


def attention_forward(x_nchw, params):
    """Equivalent of attention.forward(input): returns (feature, map).

    feature is returned in bf16 NCHW (kernel I/O dtype); map is f32 (B,1,H,W).
    """
    w1, b1, w2, b2, cw, cb = params
    B, C, H, W = x_nchw.shape
    assert C == CHANNEL

    x = jnp.transpose(x_nchw, (0, 2, 3, 1)).astype(jnp.bfloat16)      # NHWC, bf16
    w1b = w1.astype(jnp.bfloat16)
    w2b = w2.astype(jnp.bfloat16)
    b1_2d = b1.reshape(1, MID).astype(jnp.float32)
    b2_2d = b2.reshape(1, CHANNEL).astype(jnp.float32)
    mbig = _conv_stacked_matrix(cw, W)                                # (W, 2*7*W) f32
    cb_s = cb.reshape(1).astype(jnp.float32)

    # VMEM budget: double-buffered bf16 x block + feature block + weights/headroom,
    # capped at 56 MiB so the same setting is safe on v7x (64 MiB physical).
    block_bytes = H * W * CHANNEL * 2
    vmem_limit = int(min(max(4 * block_bytes + (6 << 20), 32 << 20), 56 << 20))

    cost = pl.CostEstimate(
        flops=B * (5 * H * W * CHANNEL + 8 * CHANNEL * MID
                   + 2 * 2 * KSIZE * KSIZE * H * W),
        transcendentals=B * (CHANNEL + H * W),
        bytes_accessed=2 * B * H * W * CHANNEL * 2 + 4 * CHANNEL * MID + B * H * W * 4)

    feat, map_t = pl.pallas_call(
        cbam_attention_kernel,
        out_shape=(jax.ShapeDtypeStruct((B, H, W, C), jnp.bfloat16),
                   jax.ShapeDtypeStruct((B, W, H), jnp.float32)),
        grid=(B,),
        in_specs=[
            pl.BlockSpec((1, H, W, C), lambda b: (b, 0, 0, 0)),        # x (bf16)
            pl.BlockSpec((CHANNEL, MID), lambda b: (0, 0)),            # w1 (bf16)
            pl.BlockSpec((1, MID), lambda b: (0, 0)),                  # b1 (f32)
            pl.BlockSpec((MID, CHANNEL), lambda b: (0, 0)),            # w2 (bf16)
            pl.BlockSpec((1, CHANNEL), lambda b: (0, 0)),              # b2 (f32)
            pl.BlockSpec((W, 2 * KSIZE * W), lambda b: (0, 0)),        # stacked conv matrix
            pl.BlockSpec(memory_space=pltpu.MemorySpace.SMEM),         # conv bias (1,)
        ],
        out_specs=(
            pl.BlockSpec((1, H, W, C), lambda b: (b, 0, 0, 0)),        # feature (bf16)
            pl.BlockSpec((1, W, H), lambda b: (b, 0, 0)),              # transposed map (tiny)
        ),
        compiler_params=pltpu.CompilerParams(
            dimension_semantics=("parallel",),
            vmem_limit_bytes=vmem_limit),
        cost_estimate=cost,
    )(x, w1b, b1_2d, w2b, b2_2d, mbig, cb_s)

    feature = jnp.transpose(feat, (0, 3, 1, 2))            # back to NCHW (bf16)
    map_out = jnp.transpose(map_t, (0, 2, 1))[:, None]     # (B, 1, H, W) f32 (512 B, cheap)
    return feature, map_out


def reference_forward(x_nchw, params):
    """Pure-JAX f32 reference mirroring the PyTorch forward (NCHW)."""
    w1, b1, w2, b2, cw, cb = params
    avg = jnp.mean(x_nchw, axis=(2, 3))                      # (B, C)
    mx = jnp.max(x_nchw, axis=(2, 3))                        # (B, C)

    def mlp(v):
        h = jnp.maximum(v @ w1 + b1, 0.0)
        return h @ w2 + b2

    attn = jax.nn.sigmoid(mlp(avg) + mlp(mx))[:, :, None, None]
    out = x_nchw * attn                                      # channel attention applied
    avgc = jnp.mean(out, axis=1, keepdims=True)
    maxc = jnp.max(out, axis=1, keepdims=True)
    cat = jnp.concatenate([avgc, maxc], axis=1)              # (B, 2, H, W)
    conv = lax.conv_general_dilated(
        cat, cw, window_strides=(1, 1),
        padding=((PAD, PAD), (PAD, PAD)),
        dimension_numbers=('NCHW', 'OIHW', 'NCHW')) + cb.reshape(1, 1, 1, 1)
    smap = jax.nn.sigmoid(conv)                              # (B, 1, H, W)
    return out * smap, smap                                  # (feature, map)


if __name__ == "__main__":
    key = jax.random.PRNGKey(0)
    ks = jax.random.split(key, 7)
    B, H, W = 2, 8, 16                                       # small, non-square spatial; C fixed at 2048

    x = jax.random.normal(ks[0], (B, CHANNEL, H, W), jnp.float32)

    # Deterministic synthetic parameters (shapes from the module __init__).
    w1 = jax.random.normal(ks[1], (CHANNEL, MID), jnp.float32) * 0.02   # Linear(2048 -> 128)
    b1 = jax.random.normal(ks[2], (MID,), jnp.float32) * 0.02
    w2 = jax.random.normal(ks[3], (MID, CHANNEL), jnp.float32) * 0.02   # Linear(128 -> 2048)
    b2 = jax.random.normal(ks[4], (CHANNEL,), jnp.float32) * 0.02
    cw = jax.random.normal(ks[5], (1, 2, KSIZE, KSIZE), jnp.float32) * 0.1  # Conv2d(2,1,7)
    cb = jax.random.normal(ks[6], (1,), jnp.float32) * 0.1

    # Round the large operands to bf16-representable values so the bf16-I/O kernel and
    # the f32 reference consume numerically identical inputs/weights.
    w1 = w1.astype(jnp.bfloat16).astype(jnp.float32)
    w2 = w2.astype(jnp.bfloat16).astype(jnp.float32)
    x_q = x.astype(jnp.bfloat16).astype(jnp.float32)
    params = (w1, b1, w2, b2, cw, cb)

    feature, map_out = attention_forward(x_q, params)
    jax.block_until_ready((feature, map_out))

    ref_feat, ref_map = reference_forward(x_q, params)
    assert feature.shape == (B, CHANNEL, H, W)
    assert map_out.shape == (B, 1, H, W)
    # 2e-2 tolerance covers bf16 storage of feature and bf16 MLP operands.
    assert jnp.allclose(feature.astype(jnp.float32), ref_feat, atol=2e-2, rtol=2e-2)
    assert jnp.allclose(map_out, ref_map, atol=2e-2, rtol=2e-2)

    print("KERNEL_OK")
</pallas_src>

<mosaic_0001>
module attributes {stable_mosaic.version = 11 : i64} {
  func.func @cbam_attention_kernel(%arg0: i32, %arg1: memref<1x8x16x2048xbf16, #tpu.memory_space<vmem>>, %arg2: memref<2048x128xbf16, #tpu.memory_space<vmem>>, %arg3: memref<1x128xf32, #tpu.memory_space<vmem>>, %arg4: memref<128x2048xbf16, #tpu.memory_space<vmem>>, %arg5: memref<1x2048xf32, #tpu.memory_space<vmem>>, %arg6: memref<16x224xf32, #tpu.memory_space<vmem>>, %arg7: memref<1xf32, #tpu.memory_space<smem>>, %arg8: memref<1x8x16x2048xbf16, #tpu.memory_space<vmem>>, %arg9: memref<1x16x8xf32, #tpu.memory_space<vmem>>) attributes {dimension_semantics = [#tpu.dimension_semantics<parallel>], iteration_bounds = array<i64: 2>, scalar_prefetch = 0 : i64, scratch_operands = 0 : i64, tpu.core_type = #tpu.core_type<tc>, window_params = [{transform_indices = @transform_0, window_bounds = array<i64: 1, 8, 16, 2048>}, {pipeline_mode = #tpu.pipeline_mode<synchronous>, transform_indices = @transform_1, window_bounds = array<i64: 2048, 128>}, {pipeline_mode = #tpu.pipeline_mode<synchronous>, transform_indices = @transform_2, window_bounds = array<i64: 1, 128>}, {pipeline_mode = #tpu.pipeline_mode<synchronous>, transform_indices = @transform_3, window_bounds = array<i64: 128, 2048>}, {pipeline_mode = #tpu.pipeline_mode<synchronous>, transform_indices = @transform_4, window_bounds = array<i64: 1, 2048>}, {pipeline_mode = #tpu.pipeline_mode<synchronous>, transform_indices = @transform_5, window_bounds = array<i64: 16, 224>}, {transform_indices = @transform_6, window_bounds = array<i64: 1>}, {transform_indices = @transform_7, window_bounds = array<i64: 1, 8, 16, 2048>}, {transform_indices = @transform_8, window_bounds = array<i64: 1, 16, 8>}]} {
    %c0 = arith.constant 0 : index
    %c0_0 = arith.constant 0 : index
    %c0_1 = arith.constant 0 : index
    %c0_2 = arith.constant 0 : index
    %0 = vector.load %arg1[%c0, %c0_0, %c0_1, %c0_2] : memref<1x8x16x2048xbf16, #tpu.memory_space<vmem>>, vector<1x1x16x2048xbf16>
    %1 = vector.shape_cast %0 : vector<1x1x16x2048xbf16> to vector<16x2048xbf16>
    %2 = arith.extf %1 : vector<16x2048xbf16> to vector<16x2048xf32>
    %c0_3 = arith.constant 0 : index
    %c1 = arith.constant 1 : index
    %c0_4 = arith.constant 0 : index
    %c0_5 = arith.constant 0 : index
    %3 = vector.load %arg1[%c0_3, %c1, %c0_4, %c0_5] : memref<1x8x16x2048xbf16, #tpu.memory_space<vmem>>, vector<1x1x16x2048xbf16>
    %4 = vector.shape_cast %3 : vector<1x1x16x2048xbf16> to vector<16x2048xbf16>
    %5 = arith.extf %4 : vector<16x2048xbf16> to vector<16x2048xf32>
    %6 = arith.addf %2, %5 : vector<16x2048xf32>
    %7 = arith.maximumf %1, %4 : vector<16x2048xbf16>
    %c0_6 = arith.constant 0 : index
    %c2 = arith.constant 2 : index
    %c0_7 = arith.constant 0 : index
    %c0_8 = arith.constant 0 : index
    %8 = vector.load %arg1[%c0_6, %c2, %c0_7, %c0_8] : memref<1x8x16x2048xbf16, #tpu.memory_space<vmem>>, vector<1x1x16x2048xbf16>
    %9 = vector.shape_cast %8 : vector<1x1x16x2048xbf16> to vector<16x2048xbf16>
    %10 = arith.extf %9 : vector<16x2048xbf16> to vector<16x2048xf32>
    %11 = arith.addf %6, %10 : vector<16x2048xf32>
    %12 = arith.maximumf %7, %9 : vector<16x2048xbf16>
    %c0_9 = arith.constant 0 : index
    %c3 = arith.constant 3 : index
    %c0_10 = arith.constant 0 : index
    %c0_11 = arith.constant 0 : index
    %13 = vector.load %arg1[%c0_9, %c3, %c0_10, %c0_11] : memref<1x8x16x2048xbf16, #tpu.memory_space<vmem>>, vector<1x1x16x2048xbf16>
    %14 = vector.shape_cast %13 : vector<1x1x16x2048xbf16> to vector<16x2048xbf16>
    %15 = arith.extf %14 : vector<16x2048xbf16> to vector<16x2048xf32>
    %16 = arith.addf %11, %15 : vector<16x2048xf32>
    %17 = arith.maximumf %12, %14 : vector<16x2048xbf16>
    %c0_12 = arith.constant 0 : index
    %c4 = arith.constant 4 : index
    %c0_13 = arith.constant 0 : index
    %c0_14 = arith.constant 0 : index
    %18 = vector.load %arg1[%c0_12, %c4, %c0_13, %c0_14] : memref<1x8x16x2048xbf16, #tpu.memory_space<vmem>>, vector<1x1x16x2048xbf16>
    %19 = vector.shape_cast %18 : vector<1x1x16x2048xbf16> to vector<16x2048xbf16>
    %20 = arith.extf %19 : vector<16x2048xbf16> to vector<16x2048xf32>
    %21 = arith.addf %16, %20 : vector<16x2048xf32>
    %22 = arith.maximumf %17, %19 : vector<16x2048xbf16>
    %c0_15 = arith.constant 0 : index
    %c5 = arith.constant 5 : index
    %c0_16 = arith.constant 0 : index
    %c0_17 = arith.constant 0 : index
    %23 = vector.load %arg1[%c0_15, %c5, %c0_16, %c0_17] : memref<1x8x16x2048xbf16, #tpu.memory_space<vmem>>, vector<1x1x16x2048xbf16>
    %24 = vector.shape_cast %23 : vector<1x1x16x2048xbf16> to vector<16x2048xbf16>
    %25 = arith.extf %24 : vector<16x2048xbf16> to vector<16x2048xf32>
    %26 = arith.addf %21, %25 : vector<16x2048xf32>
    %27 = arith.maximumf %22, %24 : vector<16x2048xbf16>
    %c0_18 = arith.constant 0 : index
    %c6 = arith.constant 6 : index
    %c0_19 = arith.constant 0 : index
    %c0_20 = arith.constant 0 : index
    %28 = vector.load %arg1[%c0_18, %c6, %c0_19, %c0_20] : memref<1x8x16x2048xbf16, #tpu.memory_space<vmem>>, vector<1x1x16x2048xbf16>
    %29 = vector.shape_cast %28 : vector<1x1x16x2048xbf16> to vector<16x2048xbf16>
    %30 = arith.extf %29 : vector<16x2048xbf16> to vector<16x2048xf32>
    %31 = arith.addf %26, %30 : vector<16x2048xf32>
    %32 = arith.maximumf %27, %29 : vector<16x2048xbf16>
    %c0_21 = arith.constant 0 : index
    %c7 = arith.constant 7 : index
    %c0_22 = arith.constant 0 : index
    %c0_23 = arith.constant 0 : index
    %33 = vector.load %arg1[%c0_21, %c7, %c0_22, %c0_23] : memref<1x8x16x2048xbf16, #tpu.memory_space<vmem>>, vector<1x1x16x2048xbf16>
    %34 = vector.shape_cast %33 : vector<1x1x16x2048xbf16> to vector<16x2048xbf16>
    %35 = arith.extf %34 : vector<16x2048xbf16> to vector<16x2048xf32>
    %36 = arith.addf %31, %35 : vector<16x2048xf32>
    %37 = arith.maximumf %32, %34 : vector<16x2048xbf16>
    %cst = arith.constant dense<0.000000e+00> : vector<2048xf32>
    %38 = vector.multi_reduction <add>, %36, %cst [0] : vector<16x2048xf32> to vector<2048xf32>
    %39 = vector.shape_cast %38 : vector<2048xf32> to vector<1x2048xf32>
    %cst_24 = arith.constant 7.812500e-03 : f32
    %40 = vector.broadcast %cst_24 : f32 to vector<1x2048xf32>
    %41 = arith.mulf %39, %40 : vector<1x2048xf32>
    %42 = arith.extf %37 : vector<16x2048xbf16> to vector<16x2048xf32>
    %cst_25 = arith.constant dense<0xFF800000> : vector<2048xf32>
    %43 = vector.multi_reduction <maximumf>, %42, %cst_25 [0] : vector<16x2048xf32> to vector<2048xf32>
    %44 = vector.shape_cast %43 : vector<2048xf32> to vector<1x2048xf32>
    %45 = tpu.concatenate %41, %44 in 0 : vector<1x2048xf32>, vector<1x2048xf32> -> vector<2x2048xf32>
    %46 = arith.truncf %45 : vector<2x2048xf32> to vector<2x2048xbf16>
    %c0_26 = arith.constant 0 : index
    %c0_27 = arith.constant 0 : index
    %47 = vector.load %arg2[%c0_26, %c0_27] : memref<2048x128xbf16, #tpu.memory_space<vmem>>, vector<2048x128xbf16>
    %cst_28 = arith.constant dense<0.000000e+00> : vector<2x128xf32>
    %48 = tpu.matmul %46, %47, %cst_28 {dimension_numbers = #tpu.dot_dimension_numbers<[1], [0], [0], [1], [0, 0, 1, 1], [], []>} : vector<2x2048xbf16>, vector<2048x128xbf16>, vector<2x128xf32> -> vector<2x128xf32>
    %c0_29 = arith.constant 0 : index
    %c0_30 = arith.constant 0 : index
    %49 = vector.load %arg3[%c0_29, %c0_30] : memref<1x128xf32, #tpu.memory_space<vmem>>, vector<1x128xf32>
    %50 = vector.broadcast %49 : vector<1x128xf32> to vector<2x128xf32>
    %51 = arith.addf %48, %50 : vector<2x128xf32>
    %cst_31 = arith.constant 0.000000e+00 : f32
    %52 = vector.broadcast %cst_31 : f32 to vector<2x128xf32>
    %53 = arith.maximumf %51, %52 : vector<2x128xf32>
    %54 = arith.truncf %53 : vector<2x128xf32> to vector<2x128xbf16>
    %c0_32 = arith.constant 0 : index
    %c0_33 = arith.constant 0 : index
    %55 = vector.load %arg4[%c0_32, %c0_33] : memref<128x2048xbf16, #tpu.memory_space<vmem>>, vector<128x2048xbf16>
    %cst_34 = arith.constant dense<0.000000e+00> : vector<2x2048xf32>
    %56 = tpu.matmul %54, %55, %cst_34 {dimension_numbers = #tpu.dot_dimension_numbers<[1], [0], [0], [1], [0, 0, 1, 1], [], []>} : vector<2x128xbf16>, vector<128x2048xbf16>, vector<2x2048xf32> -> vector<2x2048xf32>
    %c0_35 = arith.constant 0 : index
    %c0_36 = arith.constant 0 : index
    %57 = vector.load %arg5[%c0_35, %c0_36] : memref<1x2048xf32, #tpu.memory_space<vmem>>, vector<1x2048xf32>
    %58 = vector.broadcast %57 : vector<1x2048xf32> to vector<2x2048xf32>
    %59 = arith.addf %56, %58 : vector<2x2048xf32>
    %60 = vector.extract_strided_slice %59 {offsets = [0, 0], sizes = [1, 2048], strides = [1, 1]} : vector<2x2048xf32> to vector<1x2048xf32>
    %61 = vector.extract_strided_slice %59 {offsets = [1, 0], sizes = [1, 2048], strides = [1, 1]} : vector<2x2048xf32> to vector<1x2048xf32>
    %62 = arith.addf %60, %61 : vector<1x2048xf32>
    %63 = arith.negf %62 : vector<1x2048xf32>
    %64 = math.exp %63 : vector<1x2048xf32>
    %cst_37 = arith.constant 1.000000e+00 : f32
    %65 = vector.broadcast %cst_37 : f32 to vector<1x2048xf32>
    %66 = arith.addf %65, %64 : vector<1x2048xf32>
    %67 = arith.divf %65, %66 : vector<1x2048xf32>
    %68 = vector.shape_cast %67 : vector<1x2048xf32> to vector<1x2048xf32>
    %69 = vector.broadcast %68 : vector<1x2048xf32> to vector<16x2048xf32>
    %c0_38 = arith.constant 0 : index
    %c0_39 = arith.constant 0 : index
    %c0_40 = arith.constant 0 : index
    %c0_41 = arith.constant 0 : index
    %70 = vector.load %arg1[%c0_38, %c0_39, %c0_40, %c0_41] : memref<1x8x16x2048xbf16, #tpu.memory_space<vmem>>, vector<1x1x16x2048xbf16>
    %71 = vector.shape_cast %70 : vector<1x1x16x2048xbf16> to vector<16x2048xbf16>
    %72 = arith.extf %71 : vector<16x2048xbf16> to vector<16x2048xf32>
    %73 = arith.mulf %72, %69 : vector<16x2048xf32>
    %cst_42 = arith.constant dense<0.000000e+00> : vector<16xf32>
    %74 = vector.multi_reduction <add>, %73, %cst_42 [1] : vector<16x2048xf32> to vector<16xf32>
    %75 = vector.shape_cast %74 : vector<16xf32> to vector<16x1xf32>
    %cst_43 = arith.constant 4.8828125E-4 : f32
    %76 = vector.broadcast %cst_43 : f32 to vector<16x1xf32>
    %77 = arith.mulf %75, %76 : vector<16x1xf32>
    %cst_44 = arith.constant dense<0xFF800000> : vector<16xf32>
    %78 = vector.multi_reduction <maximumf>, %73, %cst_44 [1] : vector<16x2048xf32> to vector<16xf32>
    %79 = vector.shape_cast %78 : vector<16xf32> to vector<16x1xf32>
    %c0_45 = arith.constant 0 : index
    %c1_46 = arith.constant 1 : index
    %c0_47 = arith.constant 0 : index
    %c0_48 = arith.constant 0 : index
    %80 = vector.load %arg1[%c0_45, %c1_46, %c0_47, %c0_48] : memref<1x8x16x2048xbf16, #tpu.memory_space<vmem>>, vector<1x1x16x2048xbf16>
    %81 = vector.shape_cast %80 : vector<1x1x16x2048xbf16> to vector<16x2048xbf16>
    %82 = arith.extf %81 : vector<16x2048xbf16> to vector<16x2048xf32>
    %83 = arith.mulf %82, %69 : vector<16x2048xf32>
    %cst_49 = arith.constant dense<0.000000e+00> : vector<16xf32>
    %84 = vector.multi_reduction <add>, %83, %cst_49 [1] : vector<16x2048xf32> to vector<16xf32>
    %85 = vector.shape_cast %84 : vector<16xf32> to vector<16x1xf32>
    %cst_50 = arith.constant 4.8828125E-4 : f32
    %86 = vector.broadcast %cst_50 : f32 to vector<16x1xf32>
    %87 = arith.mulf %85, %86 : vector<16x1xf32>
    %cst_51 = arith.constant dense<0xFF800000> : vector<16xf32>
    %88 = vector.multi_reduction <maximumf>, %83, %cst_51 [1] : vector<16x2048xf32> to vector<16xf32>
    %89 = vector.shape_cast %88 : vector<16xf32> to vector<16x1xf32>
    %c0_52 = arith.constant 0 : index
    %c2_53 = arith.constant 2 : index
    %c0_54 = arith.constant 0 : index
    %c0_55 = arith.constant 0 : index
    %90 = vector.load %arg1[%c0_52, %c2_53, %c0_54, %c0_55] : memref<1x8x16x2048xbf16, #tpu.memory_space<vmem>>, vector<1x1x16x2048xbf16>
    %91 = vector.shape_cast %90 : vector<1x1x16x2048xbf16> to vector<16x2048xbf16>
    %92 = arith.extf %91 : vector<16x2048xbf16> to vector<16x2048xf32>
    %93 = arith.mulf %92, %69 : vector<16x2048xf32>
    %cst_56 = arith.constant dense<0.000000e+00> : vector<16xf32>
    %94 = vector.multi_reduction <add>, %93, %cst_56 [1] : vector<16x2048xf32> to vector<16xf32>
    %95 = vector.shape_cast %94 : vector<16xf32> to vector<16x1xf32>
    %cst_57 = arith.constant 4.8828125E-4 : f32
    %96 = vector.broadcast %cst_57 : f32 to vector<16x1xf32>
    %97 = arith.mulf %95, %96 : vector<16x1xf32>
    %cst_58 = arith.constant dense<0xFF800000> : vector<16xf32>
    %98 = vector.multi_reduction <maximumf>, %93, %cst_58 [1] : vector<16x2048xf32> to vector<16xf32>
    %99 = vector.shape_cast %98 : vector<16xf32> to vector<16x1xf32>
    %c0_59 = arith.constant 0 : index
    %c3_60 = arith.constant 3 : index
    %c0_61 = arith.constant 0 : index
    %c0_62 = arith.constant 0 : index
    %100 = vector.load %arg1[%c0_59, %c3_60, %c0_61, %c0_62] : memref<1x8x16x2048xbf16, #tpu.memory_space<vmem>>, vector<1x1x16x2048xbf16>
    %101 = vector.shape_cast %100 : vector<1x1x16x2048xbf16> to vector<16x2048xbf16>
    %102 = arith.extf %101 : vector<16x2048xbf16> to vector<16x2048xf32>
    %103 = arith.mulf %102, %69 : vector<16x2048xf32>
    %cst_63 = arith.constant dense<0.000000e+00> : vector<16xf32>
    %104 = vector.multi_reduction <add>, %103, %cst_63 [1] : vector<16x2048xf32> to vector<16xf32>
    %105 = vector.shape_cast %104 : vector<16xf32> to vector<16x1xf32>
    %cst_64 = arith.constant 4.8828125E-4 : f32
    %106 = vector.broadcast %cst_64 : f32 to vector<16x1xf32>
    %107 = arith.mulf %105, %106 : vector<16x1xf32>
    %cst_65 = arith.constant dense<0xFF800000> : vector<16xf32>
    %108 = vector.multi_reduction <maximumf>, %103, %cst_65 [1] : vector<16x2048xf32> to vector<16xf32>
    %109 = vector.shape_cast %108 : vector<16xf32> to vector<16x1xf32>
    %c0_66 = arith.constant 0 : index
    %c4_67 = arith.constant 4 : index
    %c0_68 = arith.constant 0 : index
    %c0_69 = arith.constant 0 : index
    %110 = vector.load %arg1[%c0_66, %c4_67, %c0_68, %c0_69] : memref<1x8x16x2048xbf16, #tpu.memory_space<vmem>>, vector<1x1x16x2048xbf16>
    %111 = vector.shape_cast %110 : vector<1x1x16x2048xbf16> to vector<16x2048xbf16>
    %112 = arith.extf %111 : vector<16x2048xbf16> to vector<16x2048xf32>
    %113 = arith.mulf %112, %69 : vector<16x2048xf32>
    %cst_70 = arith.constant dense<0.000000e+00> : vector<16xf32>
    %114 = vector.multi_reduction <add>, %113, %cst_70 [1] : vector<16x2048xf32> to vector<16xf32>
    %115 = vector.shape_cast %114 : vector<16xf32> to vector<16x1xf32>
    %cst_71 = arith.constant 4.8828125E-4 : f32
    %116 = vector.broadcast %cst_71 : f32 to vector<16x1xf32>
    %117 = arith.mulf %115, %116 : vector<16x1xf32>
    %cst_72 = arith.constant dense<0xFF800000> : vector<16xf32>
    %118 = vector.multi_reduction <maximumf>, %113, %cst_72 [1] : vector<16x2048xf32> to vector<16xf32>
    %119 = vector.shape_cast %118 : vector<16xf32> to vector<16x1xf32>
    %c0_73 = arith.constant 0 : index
    %c5_74 = arith.constant 5 : index
    %c0_75 = arith.constant 0 : index
    %c0_76 = arith.constant 0 : index
    %120 = vector.load %arg1[%c0_73, %c5_74, %c0_75, %c0_76] : memref<1x8x16x2048xbf16, #tpu.memory_space<vmem>>, vector<1x1x16x2048xbf16>
    %121 = vector.shape_cast %120 : vector<1x1x16x2048xbf16> to vector<16x2048xbf16>
    %122 = arith.extf %121 : vector<16x2048xbf16> to vector<16x2048xf32>
    %123 = arith.mulf %122, %69 : vector<16x2048xf32>
    %cst_77 = arith.constant dense<0.000000e+00> : vector<16xf32>
    %124 = vector.multi_reduction <add>, %123, %cst_77 [1] : vector<16x2048xf32> to vector<16xf32>
    %125 = vector.shape_cast %124 : vector<16xf32> to vector<16x1xf32>
    %cst_78 = arith.constant 4.8828125E-4 : f32
    %126 = vector.broadcast %cst_78 : f32 to vector<16x1xf32>
    %127 = arith.mulf %125, %126 : vector<16x1xf32>
    %cst_79 = arith.constant dense<0xFF800000> : vector<16xf32>
    %128 = vector.multi_reduction <maximumf>, %123, %cst_79 [1] : vector<16x2048xf32> to vector<16xf32>
    %129 = vector.shape_cast %128 : vector<16xf32> to vector<16x1xf32>
    %c0_80 = arith.constant 0 : index
    %c6_81 = arith.constant 6 : index
    %c0_82 = arith.constant 0 : index
    %c0_83 = arith.constant 0 : index
    %130 = vector.load %arg1[%c0_80, %c6_81, %c0_82, %c0_83] : memref<1x8x16x2048xbf16, #tpu.memory_space<vmem>>, vector<1x1x16x2048xbf16>
    %131 = vector.shape_cast %130 : vector<1x1x16x2048xbf16> to vector<16x2048xbf16>
    %132 = arith.extf %131 : vector<16x2048xbf16> to vector<16x2048xf32>
    %133 = arith.mulf %132, %69 : vector<16x2048xf32>
    %cst_84 = arith.constant dense<0.000000e+00> : vector<16xf32>
    %134 = vector.multi_reduction <add>, %133, %cst_84 [1] : vector<16x2048xf32> to vector<16xf32>
    %135 = vector.shape_cast %134 : vector<16xf32> to vector<16x1xf32>
    %cst_85 = arith.constant 4.8828125E-4 : f32
    %136 = vector.broadcast %cst_85 : f32 to vector<16x1xf32>
    %137 = arith.mulf %135, %136 : vector<16x1xf32>
    %cst_86 = arith.constant dense<0xFF800000> : vector<16xf32>
    %138 = vector.multi_reduction <maximumf>, %133, %cst_86 [1] : vector<16x2048xf32> to vector<16xf32>
    %139 = vector.shape_cast %138 : vector<16xf32> to vector<16x1xf32>
    %c0_87 = arith.constant 0 : index
    %c7_88 = arith.constant 7 : index
    %c0_89 = arith.constant 0 : index
    %c0_90 = arith.constant 0 : index
    %140 = vector.load %arg1[%c0_87, %c7_88, %c0_89, %c0_90] : memref<1x8x16x2048xbf16, #tpu.memory_space<vmem>>, vector<1x1x16x2048xbf16>
    %141 = vector.shape_cast %140 : vector<1x1x16x2048xbf16> to vector<16x2048xbf16>
    %142 = arith.extf %141 : vector<16x2048xbf16> to vector<16x2048xf32>
    %143 = arith.mulf %142, %69 : vector<16x2048xf32>
    %cst_91 = arith.constant dense<0.000000e+00> : vector<16xf32>
    %144 = vector.multi_reduction <add>, %143, %cst_91 [1] : vector<16x2048xf32> to vector<16xf32>
    %145 = vector.shape_cast %144 : vector<16xf32> to vector<16x1xf32>
    %cst_92 = arith.constant 4.8828125E-4 : f32
    %146 = vector.broadcast %cst_92 : f32 to vector<16x1xf32>
    %147 = arith.mulf %145, %146 : vector<16x1xf32>
    %cst_93 = arith.constant dense<0xFF800000> : vector<16xf32>
    %148 = vector.multi_reduction <maximumf>, %143, %cst_93 [1] : vector<16x2048xf32> to vector<16xf32>
    %149 = vector.shape_cast %148 : vector<16xf32> to vector<16x1xf32>
    %cst_94 = arith.constant 0.000000e+00 : f32
    %150 = vector.broadcast %cst_94 : f32 to vector<16x3xf32>
    %151 = tpu.concatenate %150, %77, %87, %97, %107, %117, %127, %137, %147, %150 in 1 : vector<16x3xf32>, vector<16x1xf32>, vector<16x1xf32>, vector<16x1xf32>, vector<16x1xf32>, vector<16x1xf32>, vector<16x1xf32>, vector<16x1xf32>, vector<16x1xf32>, vector<16x3xf32> -> vector<16x14xf32>
    %152 = tpu.concatenate %150, %79, %89, %99, %109, %119, %129, %139, %149, %150 in 1 : vector<16x3xf32>, vector<16x1xf32>, vector<16x1xf32>, vector<16x1xf32>, vector<16x1xf32>, vector<16x1xf32>, vector<16x1xf32>, vector<16x1xf32>, vector<16x1xf32>, vector<16x3xf32> -> vector<16x14xf32>
    %153 = vector.extract_strided_slice %151 {offsets = [0, 0], sizes = [16, 8], strides = [1, 1]} : vector<16x14xf32> to vector<16x8xf32>
    %154 = vector.extract_strided_slice %151 {offsets = [0, 1], sizes = [16, 8], strides = [1, 1]} : vector<16x14xf32> to vector<16x8xf32>
    %155 = vector.extract_strided_slice %151 {offsets = [0, 2], sizes = [16, 8], strides = [1, 1]} : vector<16x14xf32> to vector<16x8xf32>
    %156 = vector.extract_strided_slice %151 {offsets = [0, 3], sizes = [16, 8], strides = [1, 1]} : vector<16x14xf32> to vector<16x8xf32>
    %157 = vector.extract_strided_slice %151 {offsets = [0, 4], sizes = [16, 8], strides = [1, 1]} : vector<16x14xf32> to vector<16x8xf32>
    %158 = vector.extract_strided_slice %151 {offsets = [0, 5], sizes = [16, 8], strides = [1, 1]} : vector<16x14xf32> to vector<16x8xf32>
    %159 = vector.extract_strided_slice %151 {offsets = [0, 6], sizes = [16, 8], strides = [1, 1]} : vector<16x14xf32> to vector<16x8xf32>
    %160 = vector.extract_strided_slice %152 {offsets = [0, 0], sizes = [16, 8], strides = [1, 1]} : vector<16x14xf32> to vector<16x8xf32>
    %161 = vector.extract_strided_slice %152 {offsets = [0, 1], sizes = [16, 8], strides = [1, 1]} : vector<16x14xf32> to vector<16x8xf32>
    %162 = vector.extract_strided_slice %152 {offsets = [0, 2], sizes = [16, 8], strides = [1, 1]} : vector<16x14xf32> to vector<16x8xf32>
    %163 = vector.extract_strided_slice %152 {offsets = [0, 3], sizes = [16, 8], strides = [1, 1]} : vector<16x14xf32> to vector<16x8xf32>
    %164 = vector.extract_strided_slice %152 {offsets = [0, 4], sizes = [16, 8], strides = [1, 1]} : vector<16x14xf32> to vector<16x8xf32>
    %165 = vector.extract_strided_slice %152 {offsets = [0, 5], sizes = [16, 8], strides = [1, 1]} : vector<16x14xf32> to vector<16x8xf32>
    %166 = vector.extract_strided_slice %152 {offsets = [0, 6], sizes = [16, 8], strides = [1, 1]} : vector<16x14xf32> to vector<16x8xf32>
    %167 = tpu.concatenate %153, %154, %155, %156, %157, %158, %159, %160, %161, %162, %163, %164, %165, %166 in 0 : vector<16x8xf32>, vector<16x8xf32>, vector<16x8xf32>, vector<16x8xf32>, vector<16x8xf32>, vector<16x8xf32>, vector<16x8xf32>, vector<16x8xf32>, vector<16x8xf32>, vector<16x8xf32>, vector<16x8xf32>, vector<16x8xf32>, vector<16x8xf32>, vector<16x8xf32> -> vector<224x8xf32>
    %c0_95 = arith.constant 0 : index
    %c0_96 = arith.constant 0 : index
    %168 = vector.load %arg6[%c0_95, %c0_96] : memref<16x224xf32, #tpu.memory_space<vmem>>, vector<16x224xf32>
    %cst_97 = arith.constant dense<0.000000e+00> : vector<16x8xf32>
    %169 = tpu.matmul %168, %167, %cst_97 {dimension_numbers = #tpu.dot_dimension_numbers<[1], [0], [0], [1], [0, 0, 1, 1], [], []>} : vector<16x224xf32>, vector<224x8xf32>, vector<16x8xf32> -> vector<16x8xf32>
    %c0_98 = arith.constant 0 : index
    %170 = memref.load %arg7[%c0_98] : memref<1xf32, #tpu.memory_space<smem>>
    %171 = vector.broadcast %170 : f32 to vector<16x8xf32>
    %172 = arith.addf %169, %171 : vector<16x8xf32>
    %173 = arith.negf %172 : vector<16x8xf32>
    %174 = math.exp %173 : vector<16x8xf32>
    %cst_99 = arith.constant 1.000000e+00 : f32
    %175 = vector.broadcast %cst_99 : f32 to vector<16x8xf32>
    %176 = arith.addf %175, %174 : vector<16x8xf32>
    %177 = arith.divf %175, %176 : vector<16x8xf32>
    %c0_100 = arith.constant 0 : index
    %c0_101 = arith.constant 0 : index
    %c0_102 = arith.constant 0 : index
    %178 = vector.load %arg9[%c0_100, %c0_101, %c0_102] : memref<1x16x8xf32, #tpu.memory_space<vmem>>, vector<1x16x8xf32>
    %179 = vector.shape_cast %178 : vector<1x16x8xf32> to vector<16x8xf32>
    %180 = vector.shape_cast %177 : vector<16x8xf32> to vector<1x16x8xf32>
    tpu.vector_store %arg9[%c0_100, %c0_101, %c0_102], %180 {strides = array<i32>} : memref<1x16x8xf32, #tpu.memory_space<vmem>>, vector<1x16x8xf32>,
    %c0_103 = arith.constant 0 : index
    %c0_104 = arith.constant 0 : index
    %c0_105 = arith.constant 0 : index
    %c0_106 = arith.constant 0 : index
    %181 = vector.load %arg1[%c0_103, %c0_104, %c0_105, %c0_106] : memref<1x8x16x2048xbf16, #tpu.memory_space<vmem>>, vector<1x1x16x2048xbf16>
    %182 = vector.shape_cast %181 : vector<1x1x16x2048xbf16> to vector<16x2048xbf16>
    %183 = arith.extf %182 : vector<16x2048xbf16> to vector<16x2048xf32>
    %184 = arith.mulf %183, %69 : vector<16x2048xf32>
    %185 = vector.extract_strided_slice %177 {offsets = [0, 0], sizes = [16, 1], strides = [1, 1]} : vector<16x8xf32> to vector<16x1xf32>
    %186 = vector.broadcast %185 : vector<16x1xf32> to vector<16x2048xf32>
    %187 = arith.mulf %184, %186 : vector<16x2048xf32>
    %188 = arith.truncf %187 : vector<16x2048xf32> to vector<16x2048xbf16>
    %c0_107 = arith.constant 0 : index
    %c0_108 = arith.constant 0 : index
    %c0_109 = arith.constant 0 : index
    %c0_110 = arith.constant 0 : index
    %189 = vector.load %arg8[%c0_107, %c0_108, %c0_109, %c0_110] : memref<1x8x16x2048xbf16, #tpu.memory_space<vmem>>, vector<1x1x16x2048xbf16>
    %190 = vector.shape_cast %189 : vector<1x1x16x2048xbf16> to vector<16x2048xbf16>
    %191 = vector.shape_cast %188 : vector<16x2048xbf16> to vector<1x1x16x2048xbf16>
    tpu.vector_store %arg8[%c0_107, %c0_108, %c0_109, %c0_110], %191 {strides = array<i32>} : memref<1x8x16x2048xbf16, #tpu.memory_space<vmem>>, vector<1x1x16x2048xbf16>,
    %c0_111 = arith.constant 0 : index
    %c1_112 = arith.constant 1 : index
    %c0_113 = arith.constant 0 : index
    %c0_114 = arith.constant 0 : index
    %192 = vector.load %arg1[%c0_111, %c1_112, %c0_113, %c0_114] : memref<1x8x16x2048xbf16, #tpu.memory_space<vmem>>, vector<1x1x16x2048xbf16>
    %193 = vector.shape_cast %192 : vector<1x1x16x2048xbf16> to vector<16x2048xbf16>
    %194 = arith.extf %193 : vector<16x2048xbf16> to vector<16x2048xf32>
    %195 = arith.mulf %194, %69 : vector<16x2048xf32>
    %196 = vector.extract_strided_slice %177 {offsets = [0, 1], sizes = [16, 1], strides = [1, 1]} : vector<16x8xf32> to vector<16x1xf32>
    %197 = vector.broadcast %196 : vector<16x1xf32> to vector<16x2048xf32>
    %198 = arith.mulf %195, %197 : vector<16x2048xf32>
    %199 = arith.truncf %198 : vector<16x2048xf32> to vector<16x2048xbf16>
    %c0_115 = arith.constant 0 : index
    %c1_116 = arith.constant 1 : index
    %c0_117 = arith.constant 0 : index
    %c0_118 = arith.constant 0 : index
    %200 = vector.load %arg8[%c0_115, %c1_116, %c0_117, %c0_118] : memref<1x8x16x2048xbf16, #tpu.memory_space<vmem>>, vector<1x1x16x2048xbf16>
    %201 = vector.shape_cast %200 : vector<1x1x16x2048xbf16> to vector<16x2048xbf16>
    %202 = vector.shape_cast %199 : vector<16x2048xbf16> to vector<1x1x16x2048xbf16>
    tpu.vector_store %arg8[%c0_115, %c1_116, %c0_117, %c0_118], %202 {strides = array<i32>} : memref<1x8x16x2048xbf16, #tpu.memory_space<vmem>>, vector<1x1x16x2048xbf16>,
    %c0_119 = arith.constant 0 : index
    %c2_120 = arith.constant 2 : index
    %c0_121 = arith.constant 0 : index
    %c0_122 = arith.constant 0 : index
    %203 = vector.load %arg1[%c0_119, %c2_120, %c0_121, %c0_122] : memref<1x8x16x2048xbf16, #tpu.memory_space<vmem>>, vector<1x1x16x2048xbf16>
    %204 = vector.shape_cast %203 : vector<1x1x16x2048xbf16> to vector<16x2048xbf16>
    %205 = arith.extf %204 : vector<16x2048xbf16> to vector<16x2048xf32>
    %206 = arith.mulf %205, %69 : vector<16x2048xf32>
    %207 = vector.extract_strided_slice %177 {offsets = [0, 2], sizes = [16, 1], strides = [1, 1]} : vector<16x8xf32> to vector<16x1xf32>
    %208 = vector.broadcast %207 : vector<16x1xf32> to vector<16x2048xf32>
    %209 = arith.mulf %206, %208 : vector<16x2048xf32>
    %210 = arith.truncf %209 : vector<16x2048xf32> to vector<16x2048xbf16>
    %c0_123 = arith.constant 0 : index
    %c2_124 = arith.constant 2 : index
    %c0_125 = arith.constant 0 : index
    %c0_126 = arith.constant 0 : index
    %211 = vector.load %arg8[%c0_123, %c2_124, %c0_125, %c0_126] : memref<1x8x16x2048xbf16, #tpu.memory_space<vmem>>, vector<1x1x16x2048xbf16>
    %212 = vector.shape_cast %211 : vector<1x1x16x2048xbf16> to vector<16x2048xbf16>
    %213 = vector.shape_cast %210 : vector<16x2048xbf16> to vector<1x1x16x2048xbf16>
    tpu.vector_store %arg8[%c0_123, %c2_124, %c0_125, %c0_126], %213 {strides = array<i32>} : memref<1x8x16x2048xbf16, #tpu.memory_space<vmem>>, vector<1x1x16x2048xbf16>,
    %c0_127 = arith.constant 0 : index
    %c3_128 = arith.constant 3 : index
    %c0_129 = arith.constant 0 : index
    %c0_130 = arith.constant 0 : index
    %214 = vector.load %arg1[%c0_127, %c3_128, %c0_129, %c0_130] : memref<1x8x16x2048xbf16, #tpu.memory_space<vmem>>, vector<1x1x16x2048xbf16>
    %215 = vector.shape_cast %214 : vector<1x1x16x2048xbf16> to vector<16x2048xbf16>
    %216 = arith.extf %215 : vector<16x2048xbf16> to vector<16x2048xf32>
    %217 = arith.mulf %216, %69 : vector<16x2048xf32>
    %218 = vector.extract_strided_slice %177 {offsets = [0, 3], sizes = [16, 1], strides = [1, 1]} : vector<16x8xf32> to vector<16x1xf32>
    %219 = vector.broadcast %218 : vector<16x1xf32> to vector<16x2048xf32>
    %220 = arith.mulf %217, %219 : vector<16x2048xf32>
    %221 = arith.truncf %220 : vector<16x2048xf32> to vector<16x2048xbf16>
    %c0_131 = arith.constant 0 : index
    %c3_132 = arith.constant 3 : index
    %c0_133 = arith.constant 0 : index
    %c0_134 = arith.constant 0 : index
    %222 = vector.load %arg8[%c0_131, %c3_132, %c0_133, %c0_134] : memref<1x8x16x2048xbf16, #tpu.memory_space<vmem>>, vector<1x1x16x2048xbf16>
    %223 = vector.shape_cast %222 : vector<1x1x16x2048xbf16> to vector<16x2048xbf16>
    %224 = vector.shape_cast %221 : vector<16x2048xbf16> to vector<1x1x16x2048xbf16>
    tpu.vector_store %arg8[%c0_131, %c3_132, %c0_133, %c0_134], %224 {strides = array<i32>} : memref<1x8x16x2048xbf16, #tpu.memory_space<vmem>>, vector<1x1x16x2048xbf16>,
    %c0_135 = arith.constant 0 : index
    %c4_136 = arith.constant 4 : index
    %c0_137 = arith.constant 0 : index
    %c0_138 = arith.constant 0 : index
    %225 = vector.load %arg1[%c0_135, %c4_136, %c0_137, %c0_138] : memref<1x8x16x2048xbf16, #tpu.memory_space<vmem>>, vector<1x1x16x2048xbf16>
    %226 = vector.shape_cast %225 : vector<1x1x16x2048xbf16> to vector<16x2048xbf16>
    %227 = arith.extf %226 : vector<16x2048xbf16> to vector<16x2048xf32>
    %228 = arith.mulf %227, %69 : vector<16x2048xf32>
    %229 = vector.extract_strided_slice %177 {offsets = [0, 4], sizes = [16, 1], strides = [1, 1]} : vector<16x8xf32> to vector<16x1xf32>
    %230 = vector.broadcast %229 : vector<16x1xf32> to vector<16x2048xf32>
    %231 = arith.mulf %228, %230 : vector<16x2048xf32>
    %232 = arith.truncf %231 : vector<16x2048xf32> to vector<16x2048xbf16>
    %c0_139 = arith.constant 0 : index
    %c4_140 = arith.constant 4 : index
    %c0_141 = arith.constant 0 : index
    %c0_142 = arith.constant 0 : index
    %233 = vector.load %arg8[%c0_139, %c4_140, %c0_141, %c0_142] : memref<1x8x16x2048xbf16, #tpu.memory_space<vmem>>, vector<1x1x16x2048xbf16>
    %234 = vector.shape_cast %233 : vector<1x1x16x2048xbf16> to vector<16x2048xbf16>
    %235 = vector.shape_cast %232 : vector<16x2048xbf16> to vector<1x1x16x2048xbf16>
    tpu.vector_store %arg8[%c0_139, %c4_140, %c0_141, %c0_142], %235 {strides = array<i32>} : memref<1x8x16x2048xbf16, #tpu.memory_space<vmem>>, vector<1x1x16x2048xbf16>,
    %c0_143 = arith.constant 0 : index
    %c5_144 = arith.constant 5 : index
    %c0_145 = arith.constant 0 : index
    %c0_146 = arith.constant 0 : index
    %236 = vector.load %arg1[%c0_143, %c5_144, %c0_145, %c0_146] : memref<1x8x16x2048xbf16, #tpu.memory_space<vmem>>, vector<1x1x16x2048xbf16>
    %237 = vector.shape_cast %236 : vector<1x1x16x2048xbf16> to vector<16x2048xbf16>
    %238 = arith.extf %237 : vector<16x2048xbf16> to vector<16x2048xf32>
    %239 = arith.mulf %238, %69 : vector<16x2048xf32>
    %240 = vector.extract_strided_slice %177 {offsets = [0, 5], sizes = [16, 1], strides = [1, 1]} : vector<16x8xf32> to vector<16x1xf32>
    %241 = vector.broadcast %240 : vector<16x1xf32> to vector<16x2048xf32>
    %242 = arith.mulf %239, %241 : vector<16x2048xf32>
    %243 = arith.truncf %242 : vector<16x2048xf32> to vector<16x2048xbf16>
    %c0_147 = arith.constant 0 : index
    %c5_148 = arith.constant 5 : index
    %c0_149 = arith.constant 0 : index
    %c0_150 = arith.constant 0 : index
    %244 = vector.load %arg8[%c0_147, %c5_148, %c0_149, %c0_150] : memref<1x8x16x2048xbf16, #tpu.memory_space<vmem>>, vector<1x1x16x2048xbf16>
    %245 = vector.shape_cast %244 : vector<1x1x16x2048xbf16> to vector<16x2048xbf16>
    %246 = vector.shape_cast %243 : vector<16x2048xbf16> to vector<1x1x16x2048xbf16>
    tpu.vector_store %arg8[%c0_147, %c5_148, %c0_149, %c0_150], %246 {strides = array<i32>} : memref<1x8x16x2048xbf16, #tpu.memory_space<vmem>>, vector<1x1x16x2048xbf16>,
    %c0_151 = arith.constant 0 : index
    %c6_152 = arith.constant 6 : index
    %c0_153 = arith.constant 0 : index
    %c0_154 = arith.constant 0 : index
    %247 = vector.load %arg1[%c0_151, %c6_152, %c0_153, %c0_154] : memref<1x8x16x2048xbf16, #tpu.memory_space<vmem>>, vector<1x1x16x2048xbf16>
    %248 = vector.shape_cast %247 : vector<1x1x16x2048xbf16> to vector<16x2048xbf16>
    %249 = arith.extf %248 : vector<16x2048xbf16> to vector<16x2048xf32>
    %250 = arith.mulf %249, %69 : vector<16x2048xf32>
    %251 = vector.extract_strided_slice %177 {offsets = [0, 6], sizes = [16, 1], strides = [1, 1]} : vector<16x8xf32> to vector<16x1xf32>
    %252 = vector.broadcast %251 : vector<16x1xf32> to vector<16x2048xf32>
    %253 = arith.mulf %250, %252 : vector<16x2048xf32>
    %254 = arith.truncf %253 : vector<16x2048xf32> to vector<16x2048xbf16>
    %c0_155 = arith.constant 0 : index
    %c6_156 = arith.constant 6 : index
    %c0_157 = arith.constant 0 : index
    %c0_158 = arith.constant 0 : index
    %255 = vector.load %arg8[%c0_155, %c6_156, %c0_157, %c0_158] : memref<1x8x16x2048xbf16, #tpu.memory_space<vmem>>, vector<1x1x16x2048xbf16>
    %256 = vector.shape_cast %255 : vector<1x1x16x2048xbf16> to vector<16x2048xbf16>
    %257 = vector.shape_cast %254 : vector<16x2048xbf16> to vector<1x1x16x2048xbf16>
    tpu.vector_store %arg8[%c0_155, %c6_156, %c0_157, %c0_158], %257 {strides = array<i32>} : memref<1x8x16x2048xbf16, #tpu.memory_space<vmem>>, vector<1x1x16x2048xbf16>,
    %c0_159 = arith.constant 0 : index
    %c7_160 = arith.constant 7 : index
    %c0_161 = arith.constant 0 : index
    %c0_162 = arith.constant 0 : index
    %258 = vector.load %arg1[%c0_159, %c7_160, %c0_161, %c0_162] : memref<1x8x16x2048xbf16, #tpu.memory_space<vmem>>, vector<1x1x16x2048xbf16>
    %259 = vector.shape_cast %258 : vector<1x1x16x2048xbf16> to vector<16x2048xbf16>
    %260 = arith.extf %259 : vector<16x2048xbf16> to vector<16x2048xf32>
    %261 = arith.mulf %260, %69 : vector<16x2048xf32>
    %262 = vector.extract_strided_slice %177 {offsets = [0, 7], sizes = [16, 1], strides = [1, 1]} : vector<16x8xf32> to vector<16x1xf32>
    %263 = vector.broadcast %262 : vector<16x1xf32> to vector<16x2048xf32>
    %264 = arith.mulf %261, %263 : vector<16x2048xf32>
    %265 = arith.truncf %264 : vector<16x2048xf32> to vector<16x2048xbf16>
    %c0_163 = arith.constant 0 : index
    %c7_164 = arith.constant 7 : index
    %c0_165 = arith.constant 0 : index
    %c0_166 = arith.constant 0 : index
    %266 = vector.load %arg8[%c0_163, %c7_164, %c0_165, %c0_166] : memref<1x8x16x2048xbf16, #tpu.memory_space<vmem>>, vector<1x1x16x2048xbf16>
    %267 = vector.shape_cast %266 : vector<1x1x16x2048xbf16> to vector<16x2048xbf16>
    %268 = vector.shape_cast %265 : vector<16x2048xbf16> to vector<1x1x16x2048xbf16>
    tpu.vector_store %arg8[%c0_163, %c7_164, %c0_165, %c0_166], %268 {strides = array<i32>} : memref<1x8x16x2048xbf16, #tpu.memory_space<vmem>>, vector<1x1x16x2048xbf16>,
    return
  }
  func.func @transform_0(%arg0: i32) -> (i32, i32, i32, i32) {
    %c0_i32 = arith.constant 0 : i32
    %c0_i32_0 = arith.constant 0 : i32
    %c0_i32_1 = arith.constant 0 : i32
    %c0_i32_2 = arith.constant 0 : i32
    return %arg0, %c0_i32, %c0_i32_0, %c0_i32_1 : i32, i32, i32, i32
  }
  func.func @transform_1(%arg0: i32) -> (i32, i32) {
    %c0_i32 = arith.constant 0 : i32
    %c0_i32_0 = arith.constant 0 : i32
    %c0_i32_1 = arith.constant 0 : i32
    return %c0_i32, %c0_i32_0 : i32, i32
  }
  func.func @transform_2(%arg0: i32) -> (i32, i32) {
    %c0_i32 = arith.constant 0 : i32
    %c0_i32_0 = arith.constant 0 : i32
    %c0_i32_1 = arith.constant 0 : i32
    return %c0_i32, %c0_i32_0 : i32, i32
  }
  func.func @transform_3(%arg0: i32) -> (i32, i32) {
    %c0_i32 = arith.constant 0 : i32
    %c0_i32_0 = arith.constant 0 : i32
    %c0_i32_1 = arith.constant 0 : i32
    return %c0_i32, %c0_i32_0 : i32, i32
  }
  func.func @transform_4(%arg0: i32) -> (i32, i32) {
    %c0_i32 = arith.constant 0 : i32
    %c0_i32_0 = arith.constant 0 : i32
    %c0_i32_1 = arith.constant 0 : i32
    return %c0_i32, %c0_i32_0 : i32, i32
  }
  func.func @transform_5(%arg0: i32) -> (i32, i32) {
    %c0_i32 = arith.constant 0 : i32
    %c0_i32_0 = arith.constant 0 : i32
    %c0_i32_1 = arith.constant 0 : i32
    return %c0_i32, %c0_i32_0 : i32, i32
  }
  func.func @transform_6(%arg0: i32) -> i32 {
    %c0_i32 = arith.constant 0 : i32
    %c0_i32_0 = arith.constant 0 : i32
    return %c0_i32 : i32
  }
  func.func @transform_7(%arg0: i32) -> (i32, i32, i32, i32) {
    %c0_i32 = arith.constant 0 : i32
    %c0_i32_0 = arith.constant 0 : i32
    %c0_i32_1 = arith.constant 0 : i32
    %c0_i32_2 = arith.constant 0 : i32
    return %arg0, %c0_i32, %c0_i32_0, %c0_i32_1 : i32, i32, i32, i32
  }
  func.func @transform_8(%arg0: i32) -> (i32, i32, i32) {
    %c0_i32 = arith.constant 0 : i32
    %c0_i32_0 = arith.constant 0 : i32
    %c0_i32_1 = arith.constant 0 : i32
    return %arg0, %c0_i32, %c0_i32_0 : i32, i32, i32
  }
}

</mosaic_0001>

<llo_original>
// kernel: tpu_custom_call.1
$region0: #{tpu_custom_call.1}
  #allocation0 [shape = 'u32[]', space=smem, size = 0x4, offset = 0x4, fixed_abs, tag = 'smem constant byte address 0x4 - core index']
  #allocation1 [shape = 'u32[144,128]{1,0:T(1,128)}', space=vmem, size = 0x12000, scoped, tag = 'internal scratch']
  #allocation2 [shape = 'f32[1]{0:T(128)S(6)}', space=smem, size = 0x200, scoped, tag = 'scoped memory for tpu_custom_call.1']
  %s0 = inlined_call_operand.hbm [shape: bf16[2,8,16,2048], index: 0, kind: input, shape index: {}]
  %s1 = inlined_call_operand.hbm [shape: bf16[2048,128], index: 1, kind: input, shape index: {}]
  %s2 = inlined_call_operand.vmem [shape: f32[1,128], index: 2, kind: input, shape index: {}]
  %s3 = inlined_call_operand.hbm [shape: bf16[128,2048], index: 3, kind: input, shape index: {}]
  %s4 = inlined_call_operand.hbm [shape: f32[1,2048], index: 4, kind: input, shape index: {}]
  %s5 = inlined_call_operand.hbm [shape: f32[16,224], index: 5, kind: input, shape index: {}]
  %s6 = inlined_call_operand.<no memory space> [shape: f32[1], index: 6, kind: input, shape index: {}]
  %s7 = inlined_call_operand.hbm [shape: bf16[2,8,16,2048], index: 7, kind: output, shape index: {0}]
  %s8 = inlined_call_operand.vmem [shape: f32[2,16,8], index: 8, kind: output, shape index: {1}]
  %9 = xla_tuple %s7, %s8
  %s10 = sld [smem:[#allocation0]]
  $region89: #{tpu_custom_call.1} parent=0
    _
  %s12 = ssub.s32 1, %s10
  %s13 = scalar_select 0, %s12, %s10
  %14 = sst [smem:[#allocation2]] %s6
  $region1: #{tpu_custom_call.1} parent=0
    #allocation3 [shape = 'u8[1048576]{0}', space=vmem, size = 0x100000, scoped, tag = 'input window, operand 0']
    #allocation4 [shape = 's32[2]{0}', space=sflag, size = 0x8, scoped, tag = 'scoped memory for tpu_custom_call.1']
    #allocation5 [shape = 's32[2]{0}', space=sflag, size = 0x8, scoped, tag = 'scoped memory for tpu_custom_call.1']
    #allocation6 [shape = 'u8[524288]{0}', space=vmem, size = 0x80000, scoped, tag = 'input window, operand 1, single buffered']
    #allocation7 [shape = 's32[1]{0}', space=sflag, size = 0x4, scoped, tag = 'scoped memory for tpu_custom_call.1']
    #allocation8 [shape = 'u8[524288]{0}', space=vmem, size = 0x80000, scoped, tag = 'input window, operand 3, single buffered']
    #allocation9 [shape = 'u8[8192]{0}', space=vmem, size = 0x2000, scoped, tag = 'input window, operand 4, single buffered']
    #allocation10 [shape = 's32[1]{0}', space=sflag, size = 0x4, scoped, tag = 'scoped memory for tpu_custom_call.1']
    #allocation11 [shape = 'u8[16384]{0}', space=vmem, size = 0x4000, scoped, tag = 'input window, operand 5, single buffered']
    #allocation12 [shape = 'u8[1048576]{0}', space=vmem, size = 0x100000, scoped, tag = 'output window, operand 0']
    %15 = vsyncpa [#allocation4], 0
    %s16 = scalar_lea.sflag [#allocation4], 1
    %17 = vsyncpa %s16, 0
    %18 = vsyncpa [#allocation7], 0
    %19 = vsyncpa [#allocation10], 0
    %20 = vsyncpa [#allocation5], 0
    %s21 = scalar_lea.sflag [#allocation5], 1
    %22 = vsyncpa %s21, 0
    loop: start=0, step=1, limit=4
    $region2: #{tpu_custom_call.1} parent=1 // loop_pre_header
      _
    $region3: #{tpu_custom_call.1} parent=1 // loop_header
      %s24 = sphi 0, %s28
      %p25 = scmp.ge.s32.totalorder %s24, 4
      %s34 = sphi 0, %s36
      %s37 = sphi 0, %s34
      %s38 = sphi 0, %s37
      %s54 = sphi 0, %s38
      %s58 = sphi 0, %s58
      %s60 = sphi 0, %s58
      %s61 = sphi 0, %s60
      %s75 = sphi 0, %s61
      %s79 = sphi 0, %s79
      %s81 = sphi 0, %s79
      %s82 = sphi 0, %s81
      %s96 = sphi 0, %s82
      %s100 = sphi 0, %s100
      %s102 = sphi 0, %s100
      %s103 = sphi 0, %s102
      %s117 = sphi 0, %s103
      %s121 = sphi 0, %s121
      %s123 = sphi 0, %s121
      %s124 = sphi 0, %s123
      %s138 = sphi 0, %s124
      %s142 = sphi 0, %s142
      %s144 = sphi 0, %s142
      %s145 = sphi 0, %s144
      %s159 = sphi 0, %s145
      %s163 = sphi 0, %s163
      %s165 = sphi 0, %s163
      %s166 = sphi 0, %s165
      %s180 = sphi 0, %s166
      %s186 = sphi 0, %s188
      %s189 = sphi 0, %s186
      %s190 = sphi 0, %s189
      %s206 = sphi 0, %s190
      %s212 = sphi 0, %s214
      %s215 = sphi 0, %s212
      %s216 = sphi 0, %s215
      %s232 = sphi 0, %s216
    $region4: #{tpu_custom_call.1} parent=1 // loop_header_branch
      %27 = sbr.rel (%p25) target = $region8
    $region5: #{tpu_custom_call.1} parent=1 // loop_body
      %s29 = ssub.s32 %s24, 1
      %s30 = ssub.s32 %s24, 2
      %s31 = sadd.s32 %s24, 1
      %s32 = ssub.s32 %s24, %s31
      %p33 = scmp.eq.s32.totalorder %s32, 0
      %s35 = sadd.s32 %s34, 1
      %s36 = scalar_select %p33, %s34, %s35
      %p39 = pneg %p33
      %p40 = scmp.eq.s32.totalorder %s24, 1
      %p41 = por %p39, %p40
      %p42 = scmp.ne.s32.totalorder %s34, %s37
      %p43 = scmp.eq.s32.totalorder %s24, 0
      %p44 = por %p42, %p43
      %p45 = scmp.ne.s32.totalorder %s34, %s37
      %p46 = scmp.eq.s32.totalorder %s29, 1
      %p47 = por %p45, %p46
      %p48 = scmp.ne.s32.totalorder %s37, %s38
      %p49 = scmp.eq.s32.totalorder %s29, 0
      %p50 = por %p48, %p49
      %p51 = scmp.ne.s32.totalorder %s37, %s38
      %p52 = scmp.eq.s32.totalorder %s30, 1
      %p53 = por %p51, %p52
      %p55 = scmp.ne.s32.totalorder %s38, %s54
      %p56 = scmp.eq.s32.totalorder %s30, 0
      %p57 = por %p55, %p56
      %s59 = sadd.s32 %s58, 1
      %p62 = scmp.eq.s32.totalorder %s24, 1
      %p63 = scmp.ne.s32.totalorder %s58, %s60
      %p64 = scmp.eq.s32.totalorder %s24, 0
      %p65 = por %p63, %p64
      %p66 = scmp.ne.s32.totalorder %s58, %s60
      %p67 = scmp.eq.s32.totalorder %s29, 1
      %p68 = por %p66, %p67
      %p69 = scmp.ne.s32.totalorder %s60, %s61
      %p70 = scmp.eq.s32.totalorder %s29, 0
      %p71 = por %p69, %p70
      %p72 = scmp.ne.s32.totalorder %s60, %s61
      %p73 = scmp.eq.s32.totalorder %s30, 1
      %p74 = por %p72, %p73
      %p76 = scmp.ne.s32.totalorder %s61, %s75
      %p77 = scmp.eq.s32.totalorder %s30, 0
      %p78 = por %p76, %p77
      %s80 = sadd.s32 %s79, 1
      %p83 = scmp.eq.s32.totalorder %s24, 1
      %p84 = scmp.ne.s32.totalorder %s79, %s81
      %p85 = scmp.eq.s32.totalorder %s24, 0
      %p86 = por %p84, %p85
      %p87 = scmp.ne.s32.totalorder %s79, %s81
      %p88 = scmp.eq.s32.totalorder %s29, 1
      %p89 = por %p87, %p88
      %p90 = scmp.ne.s32.totalorder %s81, %s82
      %p91 = scmp.eq.s32.totalorder %s29, 0
      %p92 = por %p90, %p91
      %p93 = scmp.ne.s32.totalorder %s81, %s82
      %p94 = scmp.eq.s32.totalorder %s30, 1
      %p95 = por %p93, %p94
      %p97 = scmp.ne.s32.totalorder %s82, %s96
      %p98 = scmp.eq.s32.totalorder %s30, 0
      %p99 = por %p97, %p98
      %s101 = sadd.s32 %s100, 1
      %p104 = scmp.eq.s32.totalorder %s24, 1
      %p105 = scmp.ne.s32.totalorder %s100, %s102
      %p106 = scmp.eq.s32.totalorder %s24, 0
      %p107 = por %p105, %p106
      %p108 = scmp.ne.s32.totalorder %s100, %s102
      %p109 = scmp.eq.s32.totalorder %s29, 1
      %p110 = por %p108, %p109
      %p111 = scmp.ne.s32.totalorder %s102, %s103
      %p112 = scmp.eq.s32.totalorder %s29, 0
      %p113 = por %p111, %p112
      %p114 = scmp.ne.s32.totalorder %s102, %s103
      %p115 = scmp.eq.s32.totalorder %s30, 1
      %p116 = por %p114, %p115
      %p118 = scmp.ne.s32.totalorder %s103, %s117
      %p119 = scmp.eq.s32.totalorder %s30, 0
      %p120 = por %p118, %p119
      %s122 = sadd.s32 %s121, 1
      %p125 = scmp.eq.s32.totalorder %s24, 1
      %p126 = scmp.ne.s32.totalorder %s121, %s123
      %p127 = scmp.eq.s32.totalorder %s24, 0
      %p128 = por %p126, %p127
      %p129 = scmp.ne.s32.totalorder %s121, %s123
      %p130 = scmp.eq.s32.totalorder %s29, 1
      %p131 = por %p129, %p130
      %p132 = scmp.ne.s32.totalorder %s123, %s124
      %p133 = scmp.eq.s32.totalorder %s29, 0
      %p134 = por %p132, %p133
      %p135 = scmp.ne.s32.totalorder %s123, %s124
      %p136 = scmp.eq.s32.totalorder %s30, 1
      %p137 = por %p135, %p136
      %p139 = scmp.ne.s32.totalorder %s124, %s138
      %p140 = scmp.eq.s32.totalorder %s30, 0
      %p141 = por %p139, %p140
      %s143 = sadd.s32 %s142, 1
      %p146 = scmp.eq.s32.totalorder %s24, 1
      %p147 = scmp.ne.s32.totalorder %s142, %s144
      %p148 = scmp.eq.s32.totalorder %s24, 0
      %p149 = por %p147, %p148
      %p150 = scmp.ne.s32.totalorder %s142, %s144
      %p151 = scmp.eq.s32.totalorder %s29, 1
      %p152 = por %p150, %p151
      %p153 = scmp.ne.s32.totalorder %s144, %s145
      %p154 = scmp.eq.s32.totalorder %s29, 0
      %p155 = por %p153, %p154
      %p156 = scmp.ne.s32.totalorder %s144, %s145
      %p157 = scmp.eq.s32.totalorder %s30, 1
      %p158 = por %p156, %p157
      %p160 = scmp.ne.s32.totalorder %s145, %s159
      %p161 = scmp.eq.s32.totalorder %s30, 0
      %p162 = por %p160, %p161
      %s164 = sadd.s32 %s163, 1
      %p167 = scmp.eq.s32.totalorder %s24, 1
      %p168 = scmp.ne.s32.totalorder %s163, %s165
      %p169 = scmp.eq.s32.totalorder %s24, 0
      %p170 = por %p168, %p169
      %p171 = scmp.ne.s32.totalorder %s163, %s165
      %p172 = scmp.eq.s32.totalorder %s29, 1
      %p173 = por %p171, %p172
      %p174 = scmp.ne.s32.totalorder %s165, %s166
      %p175 = scmp.eq.s32.totalorder %s29, 0
      %p176 = por %p174, %p175
      %p177 = scmp.ne.s32.totalorder %s165, %s166
      %p178 = scmp.eq.s32.totalorder %s30, 1
      %p179 = por %p177, %p178
      %p181 = scmp.ne.s32.totalorder %s166, %s180
      %p182 = scmp.eq.s32.totalorder %s30, 0
      %p183 = por %p181, %p182
      %s184 = ssub.s32 %s24, %s31
      %p185 = scmp.eq.s32.totalorder %s184, 0
      %s187 = sadd.s32 %s186, 1
      %s188 = scalar_select %p185, %s186, %s187
      %p191 = pneg %p185
      %p192 = scmp.eq.s32.totalorder %s24, 1
      %p193 = por %p191, %p192
      %p194 = scmp.ne.s32.totalorder %s186, %s189
      %p195 = scmp.eq.s32.totalorder %s24, 0
      %p196 = por %p194, %p195
      %p197 = scmp.ne.s32.totalorder %s186, %s189
      %p198 = scmp.eq.s32.totalorder %s29, 1
      %p199 = por %p197, %p198
      %p200 = scmp.ne.s32.totalorder %s189, %s190
      %p201 = scmp.eq.s32.totalorder %s29, 0
      %p202 = por %p200, %p201
      %p203 = scmp.ne.s32.totalorder %s189, %s190
      %p204 = scmp.eq.s32.totalorder %s30, 1
      %p205 = por %p203, %p204
      %p207 = scmp.ne.s32.totalorder %s190, %s206
      %p208 = scmp.eq.s32.totalorder %s30, 0
      %p209 = por %p207, %p208
      %s210 = ssub.s32 %s24, %s31
      %p211 = scmp.eq.s32.totalorder %s210, 0
      %s213 = sadd.s32 %s212, 1
      %s214 = scalar_select %p211, %s212, %s213
      %p217 = pneg %p211
      %p218 = scmp.eq.s32.totalorder %s24, 1
      %p219 = por %p217, %p218
      %p220 = scmp.ne.s32.totalorder %s212, %s215
      %p221 = scmp.eq.s32.totalorder %s24, 0
      %p222 = por %p220, %p221
      %p223 = scmp.ne.s32.totalorder %s212, %s215
      %p224 = scmp.eq.s32.totalorder %s29, 1
      %p225 = por %p223, %p224
      %p226 = scmp.ne.s32.totalorder %s215, %s216
      %p227 = scmp.eq.s32.totalorder %s29, 0
      %p228 = por %p226, %p227
      %p229 = scmp.ne.s32.totalorder %s215, %s216
      %p230 = scmp.eq.s32.totalorder %s30, 1
      %p231 = por %p229, %p230
      %p233 = scmp.ne.s32.totalorder %s216, %s232
      %p234 = scmp.eq.s32.totalorder %s30, 0
      %p235 = por %p233, %p234
      %p236 = scmp.le.s32.totalorder 1, %s24
      %p237 = scmp.lt.s32.totalorder %s24, 3
      %p238 = pnand %p236, %p237
      %p239 = pneg %p238
      // Predicated region
      $region9: #{tpu_custom_call.1} parent=5 // pred_check
        _
      $region10: #{tpu_custom_call.1} parent=5 // pred_check_branch
        %241 = sbr.rel (%p238) target = $region12
      $region11: #{tpu_custom_call.1} parent=5 // pred_region
        %s242 = ssub.s32 %s24, 1
        // Predicated region
        $region13: #{tpu_custom_call.1} parent=11 // pred_check
          %p243 = pneg %p71
        $region14: #{tpu_custom_call.1} parent=11 // pred_check_branch
          %245 = sbr.rel (%p243) target = $region16
        $region15: #{tpu_custom_call.1} parent=11 // pred_region
          %s247 = ssub.s32 16384, 16384
          %248 = vsyncadd [#allocation7], %s247
          %s249 = sshll.u32 [#allocation6], 4
          %s250 = int_to_ptr.vmem [resolvable:$true] %s249
          %255 = dma.hbm_to_vmem [thread:$0]  %s1, 16384, %s250, [#allocation7], 64, 64, 4
        $region16: #{tpu_custom_call.1} parent=11 // pred_fallthru
          _
        // Predicated region
        $region17: #{tpu_custom_call.1} parent=11 // pred_check
          %p256 = pneg %p92
        $region18: #{tpu_custom_call.1} parent=11 // pred_check_branch
          %258 = sbr.rel (%p256) target = $region20
        $region19: #{tpu_custom_call.1} parent=11 // pred_region
          _
        $region20: #{tpu_custom_call.1} parent=11 // pred_fallthru
          _
        // Predicated region
        $region21: #{tpu_custom_call.1} parent=11 // pred_check
          %p259 = pneg %p113
        $region22: #{tpu_custom_call.1} parent=11 // pred_check_branch
          %261 = sbr.rel (%p259) target = $region24
        $region23: #{tpu_custom_call.1} parent=11 // pred_region
          %s263 = ssub.s32 16384, 16384
          %264 = vsyncadd [#allocation7], %s263
          %s265 = sshll.u32 [#allocation8], 4
          %s266 = int_to_ptr.vmem [resolvable:$true] %s265
          %271 = dma.hbm_to_vmem [thread:$0]  %s3, 16384, %s266, [#allocation7], 1024, 1024, 64
        $region24: #{tpu_custom_call.1} parent=11 // pred_fallthru
          _
        // Predicated region
        $region25: #{tpu_custom_call.1} parent=11 // pred_check
          %p272 = pneg %p134
        $region26: #{tpu_custom_call.1} parent=11 // pred_check_branch
          %274 = sbr.rel (%p272) target = $region28
        $region27: #{tpu_custom_call.1} parent=11 // pred_region
          %s276 = ssub.s32 256, 256
          %277 = vsyncadd [#allocation10], %s276
          %s279 = sshll.u32 [#allocation9], 4
          %s280 = int_to_ptr.vmem [resolvable:$true] %s279
          %282 = dma.hbm_to_vmem [thread:$0]  %s4, 256, %s280, [#allocation10]
        $region28: #{tpu_custom_call.1} parent=11 // pred_fallthru
          _
        // Predicated region
        $region29: #{tpu_custom_call.1} parent=11 // pred_check
          %p283 = pneg %p155
        $region30: #{tpu_custom_call.1} parent=11 // pred_check_branch
          %285 = sbr.rel (%p283) target = $region32
        $region31: #{tpu_custom_call.1} parent=11 // pred_region
          %s287 = ssub.s32 512, 512
          %288 = vsyncadd [#allocation10], %s287
          %s289 = sshll.u32 [#allocation11], 4
          %s290 = int_to_ptr.vmem [resolvable:$true] %s289
          %295 = dma.hbm_to_vmem [thread:$0]  %s5, 512, %s290, [#allocation10], 256, 256, 16
        $region32: #{tpu_custom_call.1} parent=11 // pred_fallthru
          _
        // Predicated region
        $region33: #{tpu_custom_call.1} parent=11 // pred_check
          %p296 = pneg %p176
        $region34: #{tpu_custom_call.1} parent=11 // pred_check_branch
          %298 = sbr.rel (%p296) target = $region36
        $region35: #{tpu_custom_call.1} parent=11 // pred_region
          _
        $region36: #{tpu_custom_call.1} parent=11 // pred_fallthru
          _
      $region12: #{tpu_custom_call.1} parent=5 // pred_fallthru
        _
      %p299 = scmp.lt.s32.totalorder %s24, 2
      // Predicated region
      $region37: #{tpu_custom_call.1} parent=5 // pred_check
        %p300 = pneg %p299
      $region38: #{tpu_custom_call.1} parent=5 // pred_check_branch
        %302 = sbr.rel (%p300) target = $region40
      $region39: #{tpu_custom_call.1} parent=5 // pred_region
        // Predicated region
        $region41: #{tpu_custom_call.1} parent=39 // pred_check
          %p303 = pneg %p44
        $region42: #{tpu_custom_call.1} parent=39 // pred_check_branch
          %305 = sbr.rel (%p303) target = $region44
        $region43: #{tpu_custom_call.1} parent=39 // pred_region
          %s306 = sand.u32 %s34, 1
          %s307 = scalar_lea.sflag [#allocation4], %s306
          %s308 = sand.u32 %s34, 1
          %s309 = smul.addr %s308, 1024
          %s310 = scalar_lea.vmem [#allocation3], %s309
          %s312 = ssub.s32 16384, 16384
          %313 = vsyncadd %s307, %s312
          %s314 = smul.addr %s24, 256
          %s315 = smul.addr %s314, 64
          %s316 = scalar_lea.hbm %s0, %s315
          %s317 = sshll.u32 %s310, 4
          %s318 = int_to_ptr.vmem [resolvable:$true] %s317
          %323 = dma.hbm_to_vmem [thread:$0]  %s316, 16384, %s318, %s307, 1024, 1024, 64
        $region44: #{tpu_custom_call.1} parent=39 // pred_fallthru
          _
      $region40: #{tpu_custom_call.1} parent=5 // pred_fallthru
        _
      %p324 = scmp.le.s32.totalorder 1, %s24
      %p325 = scmp.lt.s32.totalorder %s24, 3
      %p326 = pnand %p324, %p325
      %p327 = pneg %p326
      // Predicated region
      $region45: #{tpu_custom_call.1} parent=5 // pred_check
        _
      $region46: #{tpu_custom_call.1} parent=5 // pred_check_branch
        %329 = sbr.rel (%p326) target = $region48
      $region47: #{tpu_custom_call.1} parent=5 // pred_region
        %s330 = ssub.s32 %s24, 1
        %s331 = sand.u32 %s37, 1
        %s332 = scalar_lea.sflag [#allocation4], %s331
        %s333 = sand.u32 %s37, 1
        %s334 = smul.addr %s333, 1024
        %s335 = scalar_lea.vmem [#allocation3], %s334
        // Predicated region
        $region49: #{tpu_custom_call.1} parent=47 // pred_check
          %p336 = pneg %p50
        $region50: #{tpu_custom_call.1} parent=47 // pred_check_branch
          %338 = sbr.rel (%p336) target = $region52
        $region51: #{tpu_custom_call.1} parent=47 // pred_region
          %339 = dma.done %s332, 16384
        $region52: #{tpu_custom_call.1} parent=47 // pred_fallthru
          _
        // Predicated region
        $region53: #{tpu_custom_call.1} parent=47 // pred_check
          %p340 = pneg %p71
        $region54: #{tpu_custom_call.1} parent=47 // pred_check_branch
          %342 = sbr.rel (%p340) target = $region56
        $region55: #{tpu_custom_call.1} parent=47 // pred_region
          %343 = dma.done [#allocation7], 16384
        $region56: #{tpu_custom_call.1} parent=47 // pred_fallthru
          _
        // Predicated region
        $region57: #{tpu_custom_call.1} parent=47 // pred_check
          %p344 = pneg %p113
        $region58: #{tpu_custom_call.1} parent=47 // pred_check_branch
          %346 = sbr.rel (%p344) target = $region60
        $region59: #{tpu_custom_call.1} parent=47 // pred_region
          %347 = dma.done [#allocation7], 16384
        $region60: #{tpu_custom_call.1} parent=47 // pred_fallthru
          _
        // Predicated region
        $region61: #{tpu_custom_call.1} parent=47 // pred_check
          %p348 = pneg %p134
        $region62: #{tpu_custom_call.1} parent=47 // pred_check_branch
          %350 = sbr.rel (%p348) target = $region64
        $region63: #{tpu_custom_call.1} parent=47 // pred_region
          %351 = dma.done [#allocation10], 256
        $region64: #{tpu_custom_call.1} parent=47 // pred_fallthru
          _
        // Predicated region
        $region65: #{tpu_custom_call.1} parent=47 // pred_check
          %p352 = pneg %p155
        $region66: #{tpu_custom_call.1} parent=47 // pred_check_branch
          %354 = sbr.rel (%p352) target = $region68
        $region67: #{tpu_custom_call.1} parent=47 // pred_region
          %355 = dma.done [#allocation10], 512
        $region68: #{tpu_custom_call.1} parent=47 // pred_fallthru
          _
        %s356 = sand.u32 %s37, 1
        %s357 = scalar_lea.sflag [#allocation4], %s356
        %s358 = sand.u32 %s37, 1
        %s359 = smul.addr %s358, 1024
        %s360 = scalar_lea.vmem [#allocation3], %s359
        %p361 = pneg %p50
        %p362 = pneg %p47
        %p363 = pneg %p71
        %p364 = pneg %p68
        %p365 = pneg %p92
        %p366 = pneg %p89
        %p367 = pneg %p113
        %p368 = pneg %p110
        %p369 = pneg %p134
        %p370 = pneg %p131
        %p371 = pneg %p155
        %p372 = pneg %p152
        %p373 = pneg %p176
        %p374 = pneg %p173
        %p375 = pneg %p202
        %p376 = pneg %p199
        %s377 = sand.u32 %s189, 1
        %s378 = scalar_lea.sflag [#allocation5], %s377
        %s379 = sand.u32 %s189, 1
        %s380 = smul.addr %s379, 1024
        %s381 = scalar_lea.vmem [#allocation12], %s380
        %p382 = pneg %p228
        %p383 = pneg %p225
        %p384 = scmp.lt.s32.totalorder %s29, 1
        %s385 = scalar_select %p384, %s29, 1
        %s386 = smul.addr %s385, 2
        %s387 = smul.addr %s386, 8
        %s388 = scalar_lea.vmem %s8, %s387
        %p389 = scmp.lt.s32.totalorder %s29, 1
        %s390 = scalar_select %p389, %s29, 1
        %s391 = smul.addr %s390, 2
        %s392 = smul.addr %s391, 8
        %s393 = scalar_lea.vmem %s8, %s392
        %v395 = vld [vmem:[%s335] sm:$0xff]
        %v396 = vld [vmem:[%s335 + $0x8] sm:$0xff]
        %v397 = vld [vmem:[%s335 + $0x10] sm:$0xff]
        %v398 = vld [vmem:[%s335 + $0x18] sm:$0xff]
        %v399 = vld [vmem:[%s335 + $0x20] sm:$0xff]
        %v400 = vld [vmem:[%s335 + $0x28] sm:$0xff]
        %v401 = vld [vmem:[%s335 + $0x30] sm:$0xff]
        %v402 = vld [vmem:[%s335 + $0x38] sm:$0xff]
        %v403 = vld [vmem:[%s335 + $0x40] sm:$0xff]
        %v404 = vld [vmem:[%s335 + $0x48] sm:$0xff]
        %v405 = vld [vmem:[%s335 + $0x50] sm:$0xff]
        %v406 = vld [vmem:[%s335 + $0x58] sm:$0xff]
        %v407 = vld [vmem:[%s335 + $0x60] sm:$0xff]
        %v408 = vld [vmem:[%s335 + $0x68] sm:$0xff]
        %v409 = vld [vmem:[%s335 + $0x70] sm:$0xff]
        %v410 = vld [vmem:[%s335 + $0x78] sm:$0xff]
        %v411 = vunpack.c.l.bf16 %v395
        %v412 = vunpack.c.h.bf16 %v395
        %v413 = vunpack.c.l.bf16 %v396
        %v414 = vunpack.c.h.bf16 %v396
        %v415 = vunpack.c.l.bf16 %v397
        %v416 = vunpack.c.h.bf16 %v397
        %v417 = vunpack.c.l.bf16 %v398
        %v418 = vunpack.c.h.bf16 %v398
        %v419 = vunpack.c.l.bf16 %v399
        %v420 = vunpack.c.h.bf16 %v399
        %v421 = vunpack.c.l.bf16 %v400
        %v422 = vunpack.c.h.bf16 %v400
        %v423 = vunpack.c.l.bf16 %v401
        %v424 = vunpack.c.h.bf16 %v401
        %v425 = vunpack.c.l.bf16 %v402
        %v426 = vunpack.c.h.bf16 %v402
        %v427 = vunpack.c.l.bf16 %v403
        %v428 = vunpack.c.h.bf16 %v403
        %v429 = vunpack.c.l.bf16 %v404
        %v430 = vunpack.c.h.bf16 %v404
        %v431 = vunpack.c.l.bf16 %v405
        %v432 = vunpack.c.h.bf16 %v405
        %v433 = vunpack.c.l.bf16 %v406
        %v434 = vunpack.c.h.bf16 %v406
        %v435 = vunpack.c.l.bf16 %v407
        %v436 = vunpack.c.h.bf16 %v407
        %v437 = vunpack.c.l.bf16 %v408
        %v438 = vunpack.c.h.bf16 %v408
        %v439 = vunpack.c.l.bf16 %v409
        %v440 = vunpack.c.h.bf16 %v409
        %v441 = vunpack.c.l.bf16 %v410
        %v442 = vunpack.c.h.bf16 %v410
        %s443 = scalar_lea.vmem %s335, 128 [#allocation3]
        %v444 = vld [vmem:[%s443] sm:$0xff]
        %v445 = vld [vmem:[%s443 + $0x8] sm:$0xff]
        %v446 = vld [vmem:[%s443 + $0x10] sm:$0xff]
        %v447 = vld [vmem:[%s443 + $0x18] sm:$0xff]
        %v448 = vld [vmem:[%s443 + $0x20] sm:$0xff]
        %v449 = vld [vmem:[%s443 + $0x28] sm:$0xff]
        %v450 = vld [vmem:[%s443 + $0x30] sm:$0xff]
        %v451 = vld [vmem:[%s443 + $0x38] sm:$0xff]
        %v452 = vld [vmem:[%s443 + $0x40] sm:$0xff]
        %v453 = vld [vmem:[%s443 + $0x48] sm:$0xff]
        %v454 = vld [vmem:[%s443 + $0x50] sm:$0xff]
        %v455 = vld [vmem:[%s443 + $0x58] sm:$0xff]
        %v456 = vld [vmem:[%s443 + $0x60] sm:$0xff]
        %v457 = vld [vmem:[%s443 + $0x68] sm:$0xff]
        %v458 = vld [vmem:[%s443 + $0x70] sm:$0xff]
        %v459 = vld [vmem:[%s443 + $0x78] sm:$0xff]
        %v460 = vunpack.c.l.bf16 %v444
        %v461 = vunpack.c.h.bf16 %v444
        %v462 = vunpack.c.l.bf16 %v445
        %v463 = vunpack.c.h.bf16 %v445
        %v464 = vunpack.c.l.bf16 %v446
        %v465 = vunpack.c.h.bf16 %v446
        %v466 = vunpack.c.l.bf16 %v447
        %v467 = vunpack.c.h.bf16 %v447
        %v468 = vunpack.c.l.bf16 %v448
        %v469 = vunpack.c.h.bf16 %v448
        %v470 = vunpack.c.l.bf16 %v449
        %v471 = vunpack.c.h.bf16 %v449
        %v472 = vunpack.c.l.bf16 %v450
        %v473 = vunpack.c.h.bf16 %v450
        %v474 = vunpack.c.l.bf16 %v451
        %v475 = vunpack.c.h.bf16 %v451
        %v476 = vunpack.c.l.bf16 %v452
        %v477 = vunpack.c.h.bf16 %v452
        %v478 = vunpack.c.l.bf16 %v453
        %v479 = vunpack.c.h.bf16 %v453
        %v480 = vunpack.c.l.bf16 %v454
        %v481 = vunpack.c.h.bf16 %v454
        %v482 = vunpack.c.l.bf16 %v455
        %v483 = vunpack.c.h.bf16 %v455
        %v484 = vunpack.c.l.bf16 %v456
        %v485 = vunpack.c.h.bf16 %v456
        %v486 = vunpack.c.l.bf16 %v457
        %v487 = vunpack.c.h.bf16 %v457
        %v488 = vunpack.c.l.bf16 %v458
        %v489 = vunpack.c.h.bf16 %v458
        %v490 = vunpack.c.l.bf16 %v459
        %v491 = vunpack.c.h.bf16 %v459
        %v492 = vadd.f32 %v411, %v460
        %v493 = vadd.f32 %v412, %v461
        %v494 = vadd.f32 %v413, %v462
        %v495 = vadd.f32 %v414, %v463
        %v496 = vadd.f32 %v415, %v464
        %v497 = vadd.f32 %v416, %v465
        %v498 = vadd.f32 %v417, %v466
        %v499 = vadd.f32 %v418, %v467
        %v500 = vadd.f32 %v419, %v468
        %v501 = vadd.f32 %v420, %v469
        %v502 = vadd.f32 %v421, %v470
        %v503 = vadd.f32 %v422, %v471
        %v504 = vadd.f32 %v423, %v472
        %v505 = vadd.f32 %v424, %v473
        %v506 = vadd.f32 %v425, %v474
        %v507 = vadd.f32 %v426, %v475
        %v508 = vadd.f32 %v427, %v476
        %v509 = vadd.f32 %v428, %v477
        %v510 = vadd.f32 %v429, %v478
        %v511 = vadd.f32 %v430, %v479
        %v512 = vadd.f32 %v431, %v480
        %v513 = vadd.f32 %v432, %v481
        %v514 = vadd.f32 %v433, %v482
        %v515 = vadd.f32 %v434, %v483
        %v516 = vadd.f32 %v435, %v484
        %v517 = vadd.f32 %v436, %v485
        %v518 = vadd.f32 %v437, %v486
        %v519 = vadd.f32 %v438, %v487
        %v520 = vadd.f32 %v439, %v488
        %v521 = vadd.f32 %v440, %v489
        %v522 = vadd.f32 %v441, %v490
        %v523 = vadd.f32 %v442, %v491
        %v524 = vmax.bf16 %v395, %v444
        %v525 = vmax.bf16 %v396, %v445
        %v526 = vmax.bf16 %v397, %v446
        %v527 = vmax.bf16 %v398, %v447
        %v528 = vmax.bf16 %v399, %v448
        %v529 = vmax.bf16 %v400, %v449
        %v530 = vmax.bf16 %v401, %v450
        %v531 = vmax.bf16 %v402, %v451
        %v532 = vmax.bf16 %v403, %v452
        %v533 = vmax.bf16 %v404, %v453
        %v534 = vmax.bf16 %v405, %v454
        %v535 = vmax.bf16 %v406, %v455
        %v536 = vmax.bf16 %v407, %v456
        %v537 = vmax.bf16 %v408, %v457
        %v538 = vmax.bf16 %v409, %v458
        %v539 = vmax.bf16 %v410, %v459
        %s540 = scalar_lea.vmem %s335, 256 [#allocation3]
        %v541 = vld [vmem:[%s540] sm:$0xff]
        %v542 = vld [vmem:[%s540 + $0x8] sm:$0xff]
        %v543 = vld [vmem:[%s540 + $0x10] sm:$0xff]
        %v544 = vld [vmem:[%s540 + $0x18] sm:$0xff]
        %v545 = vld [vmem:[%s540 + $0x20] sm:$0xff]
        %v546 = vld [vmem:[%s540 + $0x28] sm:$0xff]
        %v547 = vld [vmem:[%s540 + $0x30] sm:$0xff]
        %v548 = vld [vmem:[%s540 + $0x38] sm:$0xff]
        %v549 = vld [vmem:[%s540 + $0x40] sm:$0xff]
        %v550 = vld [vmem:[%s540 + $0x48] sm:$0xff]
        %v551 = vld [vmem:[%s540 + $0x50] sm:$0xff]
        %v552 = vld [vmem:[%s540 + $0x58] sm:$0xff]
        %v553 = vld [vmem:[%s540 + $0x60] sm:$0xff]
        %v554 = vld [vmem:[%s540 + $0x68] sm:$0xff]
        %v555 = vld [vmem:[%s540 + $0x70] sm:$0xff]
        %v556 = vld [vmem:[%s540 + $0x78] sm:$0xff]
        %v557 = vunpack.c.l.bf16 %v541
        %v558 = vunpack.c.h.bf16 %v541
        %v559 = vunpack.c.l.bf16 %v542
        %v560 = vunpack.c.h.bf16 %v542
        %v561 = vunpack.c.l.bf16 %v543
        %v562 = vunpack.c.h.bf16 %v543
        %v563 = vunpack.c.l.bf16 %v544
        %v564 = vunpack.c.h.bf16 %v544
        %v565 = vunpack.c.l.bf16 %v545
        %v566 = vunpack.c.h.bf16 %v545
        %v567 = vunpack.c.l.bf16 %v546
        %v568 = vunpack.c.h.bf16 %v546
        %v569 = vunpack.c.l.bf16 %v547
        %v570 = vunpack.c.h.bf16 %v547
        %v571 = vunpack.c.l.bf16 %v548
        %v572 = vunpack.c.h.bf16 %v548
        %v573 = vunpack.c.l.bf16 %v549
        %v574 = vunpack.c.h.bf16 %v549
        %v575 = vunpack.c.l.bf16 %v550
        %v576 = vunpack.c.h.bf16 %v550
        %v577 = vunpack.c.l.bf16 %v551
        %v578 = vunpack.c.h.bf16 %v551
        %v579 = vunpack.c.l.bf16 %v552
        %v580 = vunpack.c.h.bf16 %v552
        %v581 = vunpack.c.l.bf16 %v553
        %v582 = vunpack.c.h.bf16 %v553
        %v583 = vunpack.c.l.bf16 %v554
        %v584 = vunpack.c.h.bf16 %v554
        %v585 = vunpack.c.l.bf16 %v555
        %v586 = vunpack.c.h.bf16 %v555
        %v587 = vunpack.c.l.bf16 %v556
        %v588 = vunpack.c.h.bf16 %v556
        %v589 = vadd.f32 %v492, %v557
        %v590 = vadd.f32 %v493, %v558
        %v591 = vadd.f32 %v494, %v559
        %v592 = vadd.f32 %v495, %v560
        %v593 = vadd.f32 %v496, %v561
        %v594 = vadd.f32 %v497, %v562
        %v595 = vadd.f32 %v498, %v563
        %v596 = vadd.f32 %v499, %v564
        %v597 = vadd.f32 %v500, %v565
        %v598 = vadd.f32 %v501, %v566
        %v599 = vadd.f32 %v502, %v567
        %v600 = vadd.f32 %v503, %v568
        %v601 = vadd.f32 %v504, %v569
        %v602 = vadd.f32 %v505, %v570
        %v603 = vadd.f32 %v506, %v571
        %v604 = vadd.f32 %v507, %v572
        %v605 = vadd.f32 %v508, %v573
        %v606 = vadd.f32 %v509, %v574
        %v607 = vadd.f32 %v510, %v575
        %v608 = vadd.f32 %v511, %v576
        %v609 = vadd.f32 %v512, %v577
        %v610 = vadd.f32 %v513, %v578
        %v611 = vadd.f32 %v514, %v579
        %v612 = vadd.f32 %v515, %v580
        %v613 = vadd.f32 %v516, %v581
        %v614 = vadd.f32 %v517, %v582
        %v615 = vadd.f32 %v518, %v583
        %v616 = vadd.f32 %v519, %v584
        %v617 = vadd.f32 %v520, %v585
        %v618 = vadd.f32 %v521, %v586
        %v619 = vadd.f32 %v522, %v587
        %v620 = vadd.f32 %v523, %v588
        %v621 = vmax.bf16 %v524, %v541
        %v622 = vmax.bf16 %v525, %v542
        %v623 = vmax.bf16 %v526, %v543
        %v624 = vmax.bf16 %v527, %v544
        %v625 = vmax.bf16 %v528, %v545
        %v626 = vmax.bf16 %v529, %v546
        %v627 = vmax.bf16 %v530, %v547
        %v628 = vmax.bf16 %v531, %v548
        %v629 = vmax.bf16 %v532, %v549
        %v630 = vmax.bf16 %v533, %v550
        %v631 = vmax.bf16 %v534, %v551
        %v632 = vmax.bf16 %v535, %v552
        %v633 = vmax.bf16 %v536, %v553
        %v634 = vmax.bf16 %v537, %v554
        %v635 = vmax.bf16 %v538, %v555
        %v636 = vmax.bf16 %v539, %v556
        %s637 = scalar_lea.vmem %s335, 384 [#allocation3]
        %v638 = vld [vmem:[%s637] sm:$0xff]
        %v639 = vld [vmem:[%s637 + $0x8] sm:$0xff]
        %v640 = vld [vmem:[%s637 + $0x10] sm:$0xff]
        %v641 = vld [vmem:[%s637 + $0x18] sm:$0xff]
        %v642 = vld [vmem:[%s637 + $0x20] sm:$0xff]
        %v643 = vld [vmem:[%s637 + $0x28] sm:$0xff]
        %v644 = vld [vmem:[%s637 + $0x30] sm:$0xff]
        %v645 = vld [vmem:[%s637 + $0x38] sm:$0xff]
        %v646 = vld [vmem:[%s637 + $0x40] sm:$0xff]
        %v647 = vld [vmem:[%s637 + $0x48] sm:$0xff]
        %v648 = vld [vmem:[%s637 + $0x50] sm:$0xff]
        %v649 = vld [vmem:[%s637 + $0x58] sm:$0xff]
        %v650 = vld [vmem:[%s637 + $0x60] sm:$0xff]
        %v651 = vld [vmem:[%s637 + $0x68] sm:$0xff]
        %v652 = vld [vmem:[%s637 + $0x70] sm:$0xff]
        %v653 = vld [vmem:[%s637 + $0x78] sm:$0xff]
        %v654 = vunpack.c.l.bf16 %v638
        %v655 = vunpack.c.h.bf16 %v638
        %v656 = vunpack.c.l.bf16 %v639
        %v657 = vunpack.c.h.bf16 %v639
        %v658 = vunpack.c.l.bf16 %v640
        %v659 = vunpack.c.h.bf16 %v640
        %v660 = vunpack.c.l.bf16 %v641
        %v661 = vunpack.c.h.bf16 %v641
        %v662 = vunpack.c.l.bf16 %v642
        %v663 = vunpack.c.h.bf16 %v642
        %v664 = vunpack.c.l.bf16 %v643
        %v665 = vunpack.c.h.bf16 %v643
        %v666 = vunpack.c.l.bf16 %v644
        %v667 = vunpack.c.h.bf16 %v644
        %v668 = vunpack.c.l.bf16 %v645
        %v669 = vunpack.c.h.bf16 %v645
        %v670 = vunpack.c.l.bf16 %v646
        %v671 = vunpack.c.h.bf16 %v646
        %v672 = vunpack.c.l.bf16 %v647
        %v673 = vunpack.c.h.bf16 %v647
        %v674 = vunpack.c.l.bf16 %v648
        %v675 = vunpack.c.h.bf16 %v648
        %v676 = vunpack.c.l.bf16 %v649
        %v677 = vunpack.c.h.bf16 %v649
        %v678 = vunpack.c.l.bf16 %v650
        %v679 = vunpack.c.h.bf16 %v650
        %v680 = vunpack.c.l.bf16 %v651
        %v681 = vunpack.c.h.bf16 %v651
        %v682 = vunpack.c.l.bf16 %v652
        %v683 = vunpack.c.h.bf16 %v652
        %v684 = vunpack.c.l.bf16 %v653
        %v685 = vunpack.c.h.bf16 %v653
        %v686 = vadd.f32 %v589, %v654
        %v687 = vadd.f32 %v590, %v655
        %v688 = vadd.f32 %v591, %v656
        %v689 = vadd.f32 %v592, %v657
        %v690 = vadd.f32 %v593, %v658
        %v691 = vadd.f32 %v594, %v659
        %v692 = vadd.f32 %v595, %v660
        %v693 = vadd.f32 %v596, %v661
        %v694 = vadd.f32 %v597, %v662
        %v695 = vadd.f32 %v598, %v663
        %v696 = vadd.f32 %v599, %v664
        %v697 = vadd.f32 %v600, %v665
        %v698 = vadd.f32 %v601, %v666
        %v699 = vadd.f32 %v602, %v667
        %v700 = vadd.f32 %v603, %v668
        %v701 = vadd.f32 %v604, %v669
        %v702 = vadd.f32 %v605, %v670
        %v703 = vadd.f32 %v606, %v671
        %v704 = vadd.f32 %v607, %v672
        %v705 = vadd.f32 %v608, %v673
        %v706 = vadd.f32 %v609, %v674
        %v707 = vadd.f32 %v610, %v675
        %v708 = vadd.f32 %v611, %v676
        %v709 = vadd.f32 %v612, %v677
        %v710 = vadd.f32 %v613, %v678
        %v711 = vadd.f32 %v614, %v679
        %v712 = vadd.f32 %v615, %v680
        %v713 = vadd.f32 %v616, %v681
        %v714 = vadd.f32 %v617, %v682
        %v715 = vadd.f32 %v618, %v683
        %v716 = vadd.f32 %v619, %v684
        %v717 = vadd.f32 %v620, %v685
        %v718 = vmax.bf16 %v621, %v638
        %v719 = vmax.bf16 %v622, %v639
        %v720 = vmax.bf16 %v623, %v640
        %v721 = vmax.bf16 %v624, %v641
        %v722 = vmax.bf16 %v625, %v642
        %v723 = vmax.bf16 %v626, %v643
        %v724 = vmax.bf16 %v627, %v644
        %v725 = vmax.bf16 %v628, %v645
        %v726 = vmax.bf16 %v629, %v646
        %v727 = vmax.bf16 %v630, %v647
        %v728 = vmax.bf16 %v631, %v648
        %v729 = vmax.bf16 %v632, %v649
        %v730 = vmax.bf16 %v633, %v650
        %v731 = vmax.bf16 %v634, %v651
        %v732 = vmax.bf16 %v635, %v652
        %v733 = vmax.bf16 %v636, %v653
        %s734 = scalar_lea.vmem %s335, 512 [#allocation3]
        %v735 = vld [vmem:[%s734] sm:$0xff]
        %v736 = vld [vmem:[%s734 + $0x8] sm:$0xff]
        %v737 = vld [vmem:[%s734 + $0x10] sm:$0xff]
        %v738 = vld [vmem:[%s734 + $0x18] sm:$0xff]
        %v739 = vld [vmem:[%s734 + $0x20] sm:$0xff]
        %v740 = vld [vmem:[%s734 + $0x28] sm:$0xff]
        %v741 = vld [vmem:[%s734 + $0x30] sm:$0xff]
        %v742 = vld [vmem:[%s734 + $0x38] sm:$0xff]
        %v743 = vld [vmem:[%s734 + $0x40] sm:$0xff]
        %v744 = vld [vmem:[%s734 + $0x48] sm:$0xff]
        %v745 = vld [vmem:[%s734 + $0x50] sm:$0xff]
        %v746 = vld [vmem:[%s734 + $0x58] sm:$0xff]
        %v747 = vld [vmem:[%s734 + $0x60] sm:$0xff]
        %v748 = vld [vmem:[%s734 + $0x68] sm:$0xff]
        %v749 = vld [vmem:[%s734 + $0x70] sm:$0xff]
        %v750 = vld [vmem:[%s734 + $0x78] sm:$0xff]
        %v751 = vunpack.c.l.bf16 %v735
        %v752 = vunpack.c.h.bf16 %v735
        %v753 = vunpack.c.l.bf16 %v736
        %v754 = vunpack.c.h.bf16 %v736
        %v755 = vunpack.c.l.bf16 %v737
        %v756 = vunpack.c.h.bf16 %v737
        %v757 = vunpack.c.l.bf16 %v738
        %v758 = vunpack.c.h.bf16 %v738
        %v759 = vunpack.c.l.bf16 %v739
        %v760 = vunpack.c.h.bf16 %v739
        %v761 = vunpack.c.l.bf16 %v740
        %v762 = vunpack.c.h.bf16 %v740
        %v763 = vunpack.c.l.bf16 %v741
        %v764 = vunpack.c.h.bf16 %v741
        %v765 = vunpack.c.l.bf16 %v742
        %v766 = vunpack.c.h.bf16 %v742
        %v767 = vunpack.c.l.bf16 %v743
        %v768 = vunpack.c.h.bf16 %v743
        %v769 = vunpack.c.l.bf16 %v744
        %v770 = vunpack.c.h.bf16 %v744
        %v771 = vunpack.c.l.bf16 %v745
        %v772 = vunpack.c.h.bf16 %v745
        %v773 = vunpack.c.l.bf16 %v746
        %v774 = vunpack.c.h.bf16 %v746
        %v775 = vunpack.c.l.bf16 %v747
        %v776 = vunpack.c.h.bf16 %v747
        %v777 = vunpack.c.l.bf16 %v748
        %v778 = vunpack.c.h.bf16 %v748
        %v779 = vunpack.c.l.bf16 %v749
        %v780 = vunpack.c.h.bf16 %v749
        %v781 = vunpack.c.l.bf16 %v750
        %v782 = vunpack.c.h.bf16 %v750
        %v783 = vadd.f32 %v686, %v751
        %v784 = vadd.f32 %v687, %v752
        %v785 = vadd.f32 %v688, %v753
        %v786 = vadd.f32 %v689, %v754
        %v787 = vadd.f32 %v690, %v755
        %v788 = vadd.f32 %v691, %v756
        %v789 = vadd.f32 %v692, %v757
        %v790 = vadd.f32 %v693, %v758
        %v791 = vadd.f32 %v694, %v759
        %v792 = vadd.f32 %v695, %v760
        %v793 = vadd.f32 %v696, %v761
        %v794 = vadd.f32 %v697, %v762
        %v795 = vadd.f32 %v698, %v763
        %v796 = vadd.f32 %v699, %v764
        %v797 = vadd.f32 %v700, %v765
        %v798 = vadd.f32 %v701, %v766
        %v799 = vadd.f32 %v702, %v767
        %v800 = vadd.f32 %v703, %v768
        %v801 = vadd.f32 %v704, %v769
        %v802 = vadd.f32 %v705, %v770
        %v803 = vadd.f32 %v706, %v771
        %v804 = vadd.f32 %v707, %v772
        %v805 = vadd.f32 %v708, %v773
        %v806 = vadd.f32 %v709, %v774
        %v807 = vadd.f32 %v710, %v775
        %v808 = vadd.f32 %v711, %v776
        %v809 = vadd.f32 %v712, %v777
        %v810 = vadd.f32 %v713, %v778
        %v811 = vadd.f32 %v714, %v779
        %v812 = vadd.f32 %v715, %v780
        %v813 = vadd.f32 %v716, %v781
        %v814 = vadd.f32 %v717, %v782
        %v815 = vmax.bf16 %v718, %v735
        %v816 = vmax.bf16 %v719, %v736
        %v817 = vmax.bf16 %v720, %v737
        %v818 = vmax.bf16 %v721, %v738
        %v819 = vmax.bf16 %v722, %v739
        %v820 = vmax.bf16 %v723, %v740
        %v821 = vmax.bf16 %v724, %v741
        %v822 = vmax.bf16 %v725, %v742
        %v823 = vmax.bf16 %v726, %v743
        %v824 = vmax.bf16 %v727, %v744
        %v825 = vmax.bf16 %v728, %v745
        %v826 = vmax.bf16 %v729, %v746
        %v827 = vmax.bf16 %v730, %v747
        %v828 = vmax.bf16 %v731, %v748
        %v829 = vmax.bf16 %v732, %v749
        %v830 = vmax.bf16 %v733, %v750
        %s831 = scalar_lea.vmem %s335, 640 [#allocation3]
        %v832 = vld [vmem:[%s831] sm:$0xff]
        %v833 = vld [vmem:[%s831 + $0x8] sm:$0xff]
        %v834 = vld [vmem:[%s831 + $0x10] sm:$0xff]
        %v835 = vld [vmem:[%s831 + $0x18] sm:$0xff]
        %v836 = vld [vmem:[%s831 + $0x20] sm:$0xff]
        %v837 = vld [vmem:[%s831 + $0x28] sm:$0xff]
        %v838 = vld [vmem:[%s831 + $0x30] sm:$0xff]
        %v839 = vld [vmem:[%s831 + $0x38] sm:$0xff]
        %v840 = vld [vmem:[%s831 + $0x40] sm:$0xff]
        %v841 = vld [vmem:[%s831 + $0x48] sm:$0xff]
        %v842 = vld [vmem:[%s831 + $0x50] sm:$0xff]
        %v843 = vld [vmem:[%s831 + $0x58] sm:$0xff]
        %v844 = vld [vmem:[%s831 + $0x60] sm:$0xff]
        %v845 = vld [vmem:[%s831 + $0x68] sm:$0xff]
        %v846 = vld [vmem:[%s831 + $0x70] sm:$0xff]
        %v847 = vld [vmem:[%s831 + $0x78] sm:$0xff]
        %v848 = vunpack.c.l.bf16 %v832
        %v849 = vunpack.c.h.bf16 %v832
        %v850 = vunpack.c.l.bf16 %v833
        %v851 = vunpack.c.h.bf16 %v833
        %v852 = vunpack.c.l.bf16 %v834
        %v853 = vunpack.c.h.bf16 %v834
        %v854 = vunpack.c.l.bf16 %v835
        %v855 = vunpack.c.h.bf16 %v835
        %v856 = vunpack.c.l.bf16 %v836
        %v857 = vunpack.c.h.bf16 %v836
        %v858 = vunpack.c.l.bf16 %v837
        %v859 = vunpack.c.h.bf16 %v837
        %v860 = vunpack.c.l.bf16 %v838
        %v861 = vunpack.c.h.bf16 %v838
        %v862 = vunpack.c.l.bf16 %v839
        %v863 = vunpack.c.h.bf16 %v839
        %v864 = vunpack.c.l.bf16 %v840
        %v865 = vunpack.c.h.bf16 %v840
        %v866 = vunpack.c.l.bf16 %v841
        %v867 = vunpack.c.h.bf16 %v841
        %v868 = vunpack.c.l.bf16 %v842
        %v869 = vunpack.c.h.bf16 %v842
        %v870 = vunpack.c.l.bf16 %v843
        %v871 = vunpack.c.h.bf16 %v843
        %v872 = vunpack.c.l.bf16 %v844
        %v873 = vunpack.c.h.bf16 %v844
        %v874 = vunpack.c.l.bf16 %v845
        %v875 = vunpack.c.h.bf16 %v845
        %v876 = vunpack.c.l.bf16 %v846
        %v877 = vunpack.c.h.bf16 %v846
        %v878 = vunpack.c.l.bf16 %v847
        %v879 = vunpack.c.h.bf16 %v847
        %v880 = vadd.f32 %v783, %v848
        %v881 = vadd.f32 %v784, %v849
        %v882 = vadd.f32 %v785, %v850
        %v883 = vadd.f32 %v786, %v851
        %v884 = vadd.f32 %v787, %v852
        %v885 = vadd.f32 %v788, %v853
        %v886 = vadd.f32 %v789, %v854
        %v887 = vadd.f32 %v790, %v855
        %v888 = vadd.f32 %v791, %v856
        %v889 = vadd.f32 %v792, %v857
        %v890 = vadd.f32 %v793, %v858
        %v891 = vadd.f32 %v794, %v859
        %v892 = vadd.f32 %v795, %v860
        %v893 = vadd.f32 %v796, %v861
        %v894 = vadd.f32 %v797, %v862
        %v895 = vadd.f32 %v798, %v863
        %v896 = vadd.f32 %v799, %v864
        %v897 = vadd.f32 %v800, %v865
        %v898 = vadd.f32 %v801, %v866
        %v899 = vadd.f32 %v802, %v867
        %v900 = vadd.f32 %v803, %v868
        %v901 = vadd.f32 %v804, %v869
        %v902 = vadd.f32 %v805, %v870
        %v903 = vadd.f32 %v806, %v871
        %v904 = vadd.f32 %v807, %v872
        %v905 = vadd.f32 %v808, %v873
        %v906 = vadd.f32 %v809, %v874
        %v907 = vadd.f32 %v810, %v875
        %v908 = vadd.f32 %v811, %v876
        %v909 = vadd.f32 %v812, %v877
        %v910 = vadd.f32 %v813, %v878
        %v911 = vadd.f32 %v814, %v879
        %v912 = vmax.bf16 %v815, %v832
        %v913 = vmax.bf16 %v816, %v833
        %v914 = vmax.bf16 %v817, %v834
        %v915 = vmax.bf16 %v818, %v835
        %v916 = vmax.bf16 %v819, %v836
        %v917 = vmax.bf16 %v820, %v837
        %v918 = vmax.bf16 %v821, %v838
        %v919 = vmax.bf16 %v822, %v839
        %v920 = vmax.bf16 %v823, %v840
        %v921 = vmax.bf16 %v824, %v841
        %v922 = vmax.bf16 %v825, %v842
        %v923 = vmax.bf16 %v826, %v843
        %v924 = vmax.bf16 %v827, %v844
        %v925 = vmax.bf16 %v828, %v845
        %v926 = vmax.bf16 %v829, %v846
        %v927 = vmax.bf16 %v830, %v847
        %s928 = scalar_lea.vmem %s335, 768 [#allocation3]
        %v929 = vld [vmem:[%s928] sm:$0xff]
        %v930 = vld [vmem:[%s928 + $0x8] sm:$0xff]
        %v931 = vld [vmem:[%s928 + $0x10] sm:$0xff]
        %v932 = vld [vmem:[%s928 + $0x18] sm:$0xff]
        %v933 = vld [vmem:[%s928 + $0x20] sm:$0xff]
        %v934 = vld [vmem:[%s928 + $0x28] sm:$0xff]
        %v935 = vld [vmem:[%s928 + $0x30] sm:$0xff]
        %v936 = vld [vmem:[%s928 + $0x38] sm:$0xff]
        %v937 = vld [vmem:[%s928 + $0x40] sm:$0xff]
        %v938 = vld [vmem:[%s928 + $0x48] sm:$0xff]
        %v939 = vld [vmem:[%s928 + $0x50] sm:$0xff]
        %v940 = vld [vmem:[%s928 + $0x58] sm:$0xff]
        %v941 = vld [vmem:[%s928 + $0x60] sm:$0xff]
        %v942 = vld [vmem:[%s928 + $0x68] sm:$0xff]
        %v943 = vld [vmem:[%s928 + $0x70] sm:$0xff]
        %v944 = vld [vmem:[%s928 + $0x78] sm:$0xff]
        %v945 = vunpack.c.l.bf16 %v929
        %v946 = vunpack.c.h.bf16 %v929
        %v947 = vunpack.c.l.bf16 %v930
        %v948 = vunpack.c.h.bf16 %v930
        %v949 = vunpack.c.l.bf16 %v931
        %v950 = vunpack.c.h.bf16 %v931
        %v951 = vunpack.c.l.bf16 %v932
        %v952 = vunpack.c.h.bf16 %v932
        %v953 = vunpack.c.l.bf16 %v933
        %v954 = vunpack.c.h.bf16 %v933
        %v955 = vunpack.c.l.bf16 %v934
        %v956 = vunpack.c.h.bf16 %v934
        %v957 = vunpack.c.l.bf16 %v935
        %v958 = vunpack.c.h.bf16 %v935
        %v959 = vunpack.c.l.bf16 %v936
        %v960 = vunpack.c.h.bf16 %v936
        %v961 = vunpack.c.l.bf16 %v937
        %v962 = vunpack.c.h.bf16 %v937
        %v963 = vunpack.c.l.bf16 %v938
        %v964 = vunpack.c.h.bf16 %v938
        %v965 = vunpack.c.l.bf16 %v939
        %v966 = vunpack.c.h.bf16 %v939
        %v967 = vunpack.c.l.bf16 %v940
        %v968 = vunpack.c.h.bf16 %v940
        %v969 = vunpack.c.l.bf16 %v941
        %v970 = vunpack.c.h.bf16 %v941
        %v971 = vunpack.c.l.bf16 %v942
        %v972 = vunpack.c.h.bf16 %v942
        %v973 = vunpack.c.l.bf16 %v943
        %v974 = vunpack.c.h.bf16 %v943
        %v975 = vunpack.c.l.bf16 %v944
        %v976 = vunpack.c.h.bf16 %v944
        %v977 = vadd.f32 %v880, %v945
        %v978 = vadd.f32 %v881, %v946
        %v979 = vadd.f32 %v882, %v947
        %v980 = vadd.f32 %v883, %v948
        %v981 = vadd.f32 %v884, %v949
        %v982 = vadd.f32 %v885, %v950
        %v983 = vadd.f32 %v886, %v951
        %v984 = vadd.f32 %v887, %v952
        %v985 = vadd.f32 %v888, %v953
        %v986 = vadd.f32 %v889, %v954
        %v987 = vadd.f32 %v890, %v955
        %v988 = vadd.f32 %v891, %v956
        %v989 = vadd.f32 %v892, %v957
        %v990 = vadd.f32 %v893, %v958
        %v991 = vadd.f32 %v894, %v959
        %v992 = vadd.f32 %v895, %v960
        %v993 = vadd.f32 %v896, %v961
        %v994 = vadd.f32 %v897, %v962
        %v995 = vadd.f32 %v898, %v963
        %v996 = vadd.f32 %v899, %v964
        %v997 = vadd.f32 %v900, %v965
        %v998 = vadd.f32 %v901, %v966
        %v999 = vadd.f32 %v902, %v967
        %v1000 = vadd.f32 %v903, %v968
        %v1001 = vadd.f32 %v904, %v969
        %v1002 = vadd.f32 %v905, %v970
        %v1003 = vadd.f32 %v906, %v971
        %v1004 = vadd.f32 %v907, %v972
        %v1005 = vadd.f32 %v908, %v973
        %v1006 = vadd.f32 %v909, %v974
        %v1007 = vadd.f32 %v910, %v975
        %v1008 = vadd.f32 %v911, %v976
        %v1009 = vmax.bf16 %v912, %v929
        %v1010 = vmax.bf16 %v913, %v930
        %v1011 = vmax.bf16 %v914, %v931
        %v1012 = vmax.bf16 %v915, %v932
        %v1013 = vmax.bf16 %v916, %v933
        %v1014 = vmax.bf16 %v917, %v934
        %v1015 = vmax.bf16 %v918, %v935
        %v1016 = vmax.bf16 %v919, %v936
        %v1017 = vmax.bf16 %v920, %v937
        %v1018 = vmax.bf16 %v921, %v938
        %v1019 = vmax.bf16 %v922, %v939
        %v1020 = vmax.bf16 %v923, %v940
        %v1021 = vmax.bf16 %v924, %v941
        %v1022 = vmax.bf16 %v925, %v942
        %v1023 = vmax.bf16 %v926, %v943
        %v1024 = vmax.bf16 %v927, %v944
        %s1025 = scalar_lea.vmem %s335, 896 [#allocation3]
        %v1026 = vld [vmem:[%s1025] sm:$0xff]
        %v1027 = vld [vmem:[%s1025 + $0x8] sm:$0xff]
        %v1028 = vld [vmem:[%s1025 + $0x10] sm:$0xff]
        %v1029 = vld [vmem:[%s1025 + $0x18] sm:$0xff]
        %v1030 = vld [vmem:[%s1025 + $0x20] sm:$0xff]
        %v1031 = vld [vmem:[%s1025 + $0x28] sm:$0xff]
        %v1032 = vld [vmem:[%s1025 + $0x30] sm:$0xff]
        %v1033 = vld [vmem:[%s1025 + $0x38] sm:$0xff]
        %v1034 = vld [vmem:[%s1025 + $0x40] sm:$0xff]
        %v1035 = vld [vmem:[%s1025 + $0x48] sm:$0xff]
        %v1036 = vld [vmem:[%s1025 + $0x50] sm:$0xff]
        %v1037 = vld [vmem:[%s1025 + $0x58] sm:$0xff]
        %v1038 = vld [vmem:[%s1025 + $0x60] sm:$0xff]
        %v1039 = vld [vmem:[%s1025 + $0x68] sm:$0xff]
        %v1040 = vld [vmem:[%s1025 + $0x70] sm:$0xff]
        %v1041 = vld [vmem:[%s1025 + $0x78] sm:$0xff]
        %v1042 = vunpack.c.l.bf16 %v1026
        %v1043 = vunpack.c.h.bf16 %v1026
        %v1044 = vunpack.c.l.bf16 %v1027
        %v1045 = vunpack.c.h.bf16 %v1027
        %v1046 = vunpack.c.l.bf16 %v1028
        %v1047 = vunpack.c.h.bf16 %v1028
        %v1048 = vunpack.c.l.bf16 %v1029
        %v1049 = vunpack.c.h.bf16 %v1029
        %v1050 = vunpack.c.l.bf16 %v1030
        %v1051 = vunpack.c.h.bf16 %v1030
        %v1052 = vunpack.c.l.bf16 %v1031
        %v1053 = vunpack.c.h.bf16 %v1031
        %v1054 = vunpack.c.l.bf16 %v1032
        %v1055 = vunpack.c.h.bf16 %v1032
        %v1056 = vunpack.c.l.bf16 %v1033
        %v1057 = vunpack.c.h.bf16 %v1033
        %v1058 = vunpack.c.l.bf16 %v1034
        %v1059 = vunpack.c.h.bf16 %v1034
        %v1060 = vunpack.c.l.bf16 %v1035
        %v1061 = vunpack.c.h.bf16 %v1035
        %v1062 = vunpack.c.l.bf16 %v1036
        %v1063 = vunpack.c.h.bf16 %v1036
        %v1064 = vunpack.c.l.bf16 %v1037
        %v1065 = vunpack.c.h.bf16 %v1037
        %v1066 = vunpack.c.l.bf16 %v1038
        %v1067 = vunpack.c.h.bf16 %v1038
        %v1068 = vunpack.c.l.bf16 %v1039
        %v1069 = vunpack.c.h.bf16 %v1039
        %v1070 = vunpack.c.l.bf16 %v1040
        %v1071 = vunpack.c.h.bf16 %v1040
        %v1072 = vunpack.c.l.bf16 %v1041
        %v1073 = vunpack.c.h.bf16 %v1041
        %v1074 = vadd.f32 %v977, %v1042
        %v1075 = vadd.f32 %v978, %v1043
        %v1076 = vadd.f32 %v979, %v1044
        %v1077 = vadd.f32 %v980, %v1045
        %v1078 = vadd.f32 %v981, %v1046
        %v1079 = vadd.f32 %v982, %v1047
        %v1080 = vadd.f32 %v983, %v1048
        %v1081 = vadd.f32 %v984, %v1049
        %v1082 = vadd.f32 %v985, %v1050
        %v1083 = vadd.f32 %v986, %v1051
        %v1084 = vadd.f32 %v987, %v1052
        %v1085 = vadd.f32 %v988, %v1053
        %v1086 = vadd.f32 %v989, %v1054
        %v1087 = vadd.f32 %v990, %v1055
        %v1088 = vadd.f32 %v991, %v1056
        %v1089 = vadd.f32 %v992, %v1057
        %v1090 = vadd.f32 %v993, %v1058
        %v1091 = vadd.f32 %v994, %v1059
        %v1092 = vadd.f32 %v995, %v1060
        %v1093 = vadd.f32 %v996, %v1061
        %v1094 = vadd.f32 %v997, %v1062
        %v1095 = vadd.f32 %v998, %v1063
        %v1096 = vadd.f32 %v999, %v1064
        %v1097 = vadd.f32 %v1000, %v1065
        %v1098 = vadd.f32 %v1001, %v1066
        %v1099 = vadd.f32 %v1002, %v1067
        %v1100 = vadd.f32 %v1003, %v1068
        %v1101 = vadd.f32 %v1004, %v1069
        %v1102 = vadd.f32 %v1005, %v1070
        %v1103 = vadd.f32 %v1006, %v1071
        %v1104 = vadd.f32 %v1007, %v1072
        %v1105 = vadd.f32 %v1008, %v1073
        %v1106 = vmax.bf16 %v1009, %v1026
        %v1107 = vmax.bf16 %v1010, %v1027
        %v1108 = vmax.bf16 %v1011, %v1028
        %v1109 = vmax.bf16 %v1012, %v1029
        %v1110 = vmax.bf16 %v1013, %v1030
        %v1111 = vmax.bf16 %v1014, %v1031
        %v1112 = vmax.bf16 %v1015, %v1032
        %v1113 = vmax.bf16 %v1016, %v1033
        %v1114 = vmax.bf16 %v1017, %v1034
        %v1115 = vmax.bf16 %v1018, %v1035
        %v1116 = vmax.bf16 %v1019, %v1036
        %v1117 = vmax.bf16 %v1020, %v1037
        %v1118 = vmax.bf16 %v1021, %v1038
        %v1119 = vmax.bf16 %v1022, %v1039
        %v1120 = vmax.bf16 %v1023, %v1040
        %v1121 = vmax.bf16 %v1024, %v1041
        %v1122 = vadd.f32 %v1074, %v1090
        %v1123 = vrot.slane %v1122, 4
        %v1124 = vadd.f32 %v1122, %v1123
        %v1125 = vrot.slane %v1124, 2
        %v1126 = vadd.f32 %v1124, %v1125
        %v1127 = vrot.slane %v1126, 1
        %v1128 = vadd.f32 %v1126, %v1127
        %v1129 = vadd.f32 %v1075, %v1091
        %v1130 = vrot.slane %v1129, 4
        %v1131 = vadd.f32 %v1129, %v1130
        %v1132 = vrot.slane %v1131, 2
        %v1133 = vadd.f32 %v1131, %v1132
        %v1134 = vrot.slane %v1133, 1
        %v1135 = vadd.f32 %v1133, %v1134
        %v1136 = vadd.f32 %v1076, %v1092
        %v1137 = vrot.slane %v1136, 4
        %v1138 = vadd.f32 %v1136, %v1137
        %v1139 = vrot.slane %v1138, 2
        %v1140 = vadd.f32 %v1138, %v1139
        %v1141 = vrot.slane %v1140, 1
        %v1142 = vadd.f32 %v1140, %v1141
        %v1143 = vadd.f32 %v1077, %v1093
        %v1144 = vrot.slane %v1143, 4
        %v1145 = vadd.f32 %v1143, %v1144
        %v1146 = vrot.slane %v1145, 2
        %v1147 = vadd.f32 %v1145, %v1146
        %v1148 = vrot.slane %v1147, 1
        %v1149 = vadd.f32 %v1147, %v1148
        %v1150 = vadd.f32 %v1078, %v1094
        %v1151 = vrot.slane %v1150, 4
        %v1152 = vadd.f32 %v1150, %v1151
        %v1153 = vrot.slane %v1152, 2
        %v1154 = vadd.f32 %v1152, %v1153
        %v1155 = vrot.slane %v1154, 1
        %v1156 = vadd.f32 %v1154, %v1155
        %v1157 = vadd.f32 %v1079, %v1095
        %v1158 = vrot.slane %v1157, 4
        %v1159 = vadd.f32 %v1157, %v1158
        %v1160 = vrot.slane %v1159, 2
        %v1161 = vadd.f32 %v1159, %v1160
        %v1162 = vrot.slane %v1161, 1
        %v1163 = vadd.f32 %v1161, %v1162
        %v1164 = vadd.f32 %v1080, %v1096
        %v1165 = vrot.slane %v1164, 4
        %v1166 = vadd.f32 %v1164, %v1165
        %v1167 = vrot.slane %v1166, 2
        %v1168 = vadd.f32 %v1166, %v1167
        %v1169 = vrot.slane %v1168, 1
        %v1170 = vadd.f32 %v1168, %v1169
        %v1171 = vadd.f32 %v1081, %v1097
        %v1172 = vrot.slane %v1171, 4
        %v1173 = vadd.f32 %v1171, %v1172
        %v1174 = vrot.slane %v1173, 2
        %v1175 = vadd.f32 %v1173, %v1174
        %v1176 = vrot.slane %v1175, 1
        %v1177 = vadd.f32 %v1175, %v1176
        %v1178 = vadd.f32 %v1082, %v1098
        %v1179 = vrot.slane %v1178, 4
        %v1180 = vadd.f32 %v1178, %v1179
        %v1181 = vrot.slane %v1180, 2
        %v1182 = vadd.f32 %v1180, %v1181
        %v1183 = vrot.slane %v1182, 1
        %v1184 = vadd.f32 %v1182, %v1183
        %v1185 = vadd.f32 %v1083, %v1099
        %v1186 = vrot.slane %v1185, 4
        %v1187 = vadd.f32 %v1185, %v1186
        %v1188 = vrot.slane %v1187, 2
        %v1189 = vadd.f32 %v1187, %v1188
        %v1190 = vrot.slane %v1189, 1
        %v1191 = vadd.f32 %v1189, %v1190
        %v1192 = vadd.f32 %v1084, %v1100
        %v1193 = vrot.slane %v1192, 4
        %v1194 = vadd.f32 %v1192, %v1193
        %v1195 = vrot.slane %v1194, 2
        %v1196 = vadd.f32 %v1194, %v1195
        %v1197 = vrot.slane %v1196, 1
        %v1198 = vadd.f32 %v1196, %v1197
        %v1199 = vadd.f32 %v1085, %v1101
        %v1200 = vrot.slane %v1199, 4
        %v1201 = vadd.f32 %v1199, %v1200
        %v1202 = vrot.slane %v1201, 2
        %v1203 = vadd.f32 %v1201, %v1202
        %v1204 = vrot.slane %v1203, 1
        %v1205 = vadd.f32 %v1203, %v1204
        %v1206 = vadd.f32 %v1086, %v1102
        %v1207 = vrot.slane %v1206, 4
        %v1208 = vadd.f32 %v1206, %v1207
        %v1209 = vrot.slane %v1208, 2
        %v1210 = vadd.f32 %v1208, %v1209
        %v1211 = vrot.slane %v1210, 1
        %v1212 = vadd.f32 %v1210, %v1211
        %v1213 = vadd.f32 %v1087, %v1103
        %v1214 = vrot.slane %v1213, 4
        %v1215 = vadd.f32 %v1213, %v1214
        %v1216 = vrot.slane %v1215, 2
        %v1217 = vadd.f32 %v1215, %v1216
        %v1218 = vrot.slane %v1217, 1
        %v1219 = vadd.f32 %v1217, %v1218
        %v1220 = vadd.f32 %v1088, %v1104
        %v1221 = vrot.slane %v1220, 4
        %v1222 = vadd.f32 %v1220, %v1221
        %v1223 = vrot.slane %v1222, 2
        %v1224 = vadd.f32 %v1222, %v1223
        %v1225 = vrot.slane %v1224, 1
        %v1226 = vadd.f32 %v1224, %v1225
        %v1227 = vadd.f32 %v1089, %v1105
        %v1228 = vrot.slane %v1227, 4
        %v1229 = vadd.f32 %v1227, %v1228
        %v1230 = vrot.slane %v1229, 2
        %v1231 = vadd.f32 %v1229, %v1230
        %v1232 = vrot.slane %v1231, 1
        %v1233 = vadd.f32 %v1231, %v1232
        %v1234 = vmul.f32 %v1128, 0.0078125
        %v1235 = vmul.f32 %v1135, 0.0078125
        %v1236 = vmul.f32 %v1142, 0.0078125
        %v1237 = vmul.f32 %v1149, 0.0078125
        %v1238 = vmul.f32 %v1156, 0.0078125
        %v1239 = vmul.f32 %v1163, 0.0078125
        %v1240 = vmul.f32 %v1170, 0.0078125
        %v1241 = vmul.f32 %v1177, 0.0078125
        %v1242 = vmul.f32 %v1184, 0.0078125
        %v1243 = vmul.f32 %v1191, 0.0078125
        %v1244 = vmul.f32 %v1198, 0.0078125
        %v1245 = vmul.f32 %v1205, 0.0078125
        %v1246 = vmul.f32 %v1212, 0.0078125
        %v1247 = vmul.f32 %v1219, 0.0078125
        %v1248 = vmul.f32 %v1226, 0.0078125
        %v1249 = vmul.f32 %v1233, 0.0078125
        %v1250 = vunpack.c.l.bf16 %v1106
        %v1251 = vunpack.c.h.bf16 %v1106
        %v1252 = vunpack.c.l.bf16 %v1107
        %v1253 = vunpack.c.h.bf16 %v1107
        %v1254 = vunpack.c.l.bf16 %v1108
        %v1255 = vunpack.c.h.bf16 %v1108
        %v1256 = vunpack.c.l.bf16 %v1109
        %v1257 = vunpack.c.h.bf16 %v1109
        %v1258 = vunpack.c.l.bf16 %v1110
        %v1259 = vunpack.c.h.bf16 %v1110
        %v1260 = vunpack.c.l.bf16 %v1111
        %v1261 = vunpack.c.h.bf16 %v1111
        %v1262 = vunpack.c.l.bf16 %v1112
        %v1263 = vunpack.c.h.bf16 %v1112
        %v1264 = vunpack.c.l.bf16 %v1113
        %v1265 = vunpack.c.h.bf16 %v1113
        %v1266 = vunpack.c.l.bf16 %v1114
        %v1267 = vunpack.c.h.bf16 %v1114
        %v1268 = vunpack.c.l.bf16 %v1115
        %v1269 = vunpack.c.h.bf16 %v1115
        %v1270 = vunpack.c.l.bf16 %v1116
        %v1271 = vunpack.c.h.bf16 %v1116
        %v1272 = vunpack.c.l.bf16 %v1117
        %v1273 = vunpack.c.h.bf16 %v1117
        %v1274 = vunpack.c.l.bf16 %v1118
        %v1275 = vunpack.c.h.bf16 %v1118
        %v1276 = vunpack.c.l.bf16 %v1119
        %v1277 = vunpack.c.h.bf16 %v1119
        %v1278 = vunpack.c.l.bf16 %v1120
        %v1279 = vunpack.c.h.bf16 %v1120
        %v1280 = vunpack.c.l.bf16 %v1121
        %v1281 = vunpack.c.h.bf16 %v1121
        %v1282 = vmax.f32 %v1250, %v1266
        %v1283 = vrot.slane %v1282, 4
        %v1284 = vmax.f32 %v1282, %v1283
        %v1285 = vrot.slane %v1284, 2
        %v1286 = vmax.f32 %v1284, %v1285
        %v1287 = vrot.slane %v1286, 1
        %v1288 = vmax.f32 %v1286, %v1287
        %v1289 = vmax.f32 %v1251, %v1267
        %v1290 = vrot.slane %v1289, 4
        %v1291 = vmax.f32 %v1289, %v1290
        %v1292 = vrot.slane %v1291, 2
        %v1293 = vmax.f32 %v1291, %v1292
        %v1294 = vrot.slane %v1293, 1
        %v1295 = vmax.f32 %v1293, %v1294
        %v1296 = vmax.f32 %v1252, %v1268
        %v1297 = vrot.slane %v1296, 4
        %v1298 = vmax.f32 %v1296, %v1297
        %v1299 = vrot.slane %v1298, 2
        %v1300 = vmax.f32 %v1298, %v1299
        %v1301 = vrot.slane %v1300, 1
        %v1302 = vmax.f32 %v1300, %v1301
        %v1303 = vmax.f32 %v1253, %v1269
        %v1304 = vrot.slane %v1303, 4
        %v1305 = vmax.f32 %v1303, %v1304
        %v1306 = vrot.slane %v1305, 2
        %v1307 = vmax.f32 %v1305, %v1306
        %v1308 = vrot.slane %v1307, 1
        %v1309 = vmax.f32 %v1307, %v1308
        %v1310 = vmax.f32 %v1254, %v1270
        %v1311 = vrot.slane %v1310, 4
        %v1312 = vmax.f32 %v1310, %v1311
        %v1313 = vrot.slane %v1312, 2
        %v1314 = vmax.f32 %v1312, %v1313
        %v1315 = vrot.slane %v1314, 1
        %v1316 = vmax.f32 %v1314, %v1315
        %v1317 = vmax.f32 %v1255, %v1271
        %v1318 = vrot.slane %v1317, 4
        %v1319 = vmax.f32 %v1317, %v1318
        %v1320 = vrot.slane %v1319, 2
        %v1321 = vmax.f32 %v1319, %v1320
        %v1322 = vrot.slane %v1321, 1
        %v1323 = vmax.f32 %v1321, %v1322
        %v1324 = vmax.f32 %v1256, %v1272
        %v1325 = vrot.slane %v1324, 4
        %v1326 = vmax.f32 %v1324, %v1325
        %v1327 = vrot.slane %v1326, 2
        %v1328 = vmax.f32 %v1326, %v1327
        %v1329 = vrot.slane %v1328, 1
        %v1330 = vmax.f32 %v1328, %v1329
        %v1331 = vmax.f32 %v1257, %v1273
        %v1332 = vrot.slane %v1331, 4
        %v1333 = vmax.f32 %v1331, %v1332
        %v1334 = vrot.slane %v1333, 2
        %v1335 = vmax.f32 %v1333, %v1334
        %v1336 = vrot.slane %v1335, 1
        %v1337 = vmax.f32 %v1335, %v1336
        %v1338 = vmax.f32 %v1258, %v1274
        %v1339 = vrot.slane %v1338, 4
        %v1340 = vmax.f32 %v1338, %v1339
        %v1341 = vrot.slane %v1340, 2
        %v1342 = vmax.f32 %v1340, %v1341
        %v1343 = vrot.slane %v1342, 1
        %v1344 = vmax.f32 %v1342, %v1343
        %v1345 = vmax.f32 %v1259, %v1275
        %v1346 = vrot.slane %v1345, 4
        %v1347 = vmax.f32 %v1345, %v1346
        %v1348 = vrot.slane %v1347, 2
        %v1349 = vmax.f32 %v1347, %v1348
        %v1350 = vrot.slane %v1349, 1
        %v1351 = vmax.f32 %v1349, %v1350
        %v1352 = vmax.f32 %v1260, %v1276
        %v1353 = vrot.slane %v1352, 4
        %v1354 = vmax.f32 %v1352, %v1353
        %v1355 = vrot.slane %v1354, 2
        %v1356 = vmax.f32 %v1354, %v1355
        %v1357 = vrot.slane %v1356, 1
        %v1358 = vmax.f32 %v1356, %v1357
        %v1359 = vmax.f32 %v1261, %v1277
        %v1360 = vrot.slane %v1359, 4
        %v1361 = vmax.f32 %v1359, %v1360
        %v1362 = vrot.slane %v1361, 2
        %v1363 = vmax.f32 %v1361, %v1362
        %v1364 = vrot.slane %v1363, 1
        %v1365 = vmax.f32 %v1363, %v1364
        %v1366 = vmax.f32 %v1262, %v1278
        %v1367 = vrot.slane %v1366, 4
        %v1368 = vmax.f32 %v1366, %v1367
        %v1369 = vrot.slane %v1368, 2
        %v1370 = vmax.f32 %v1368, %v1369
        %v1371 = vrot.slane %v1370, 1
        %v1372 = vmax.f32 %v1370, %v1371
        %v1373 = vmax.f32 %v1263, %v1279
        %v1374 = vrot.slane %v1373, 4
        %v1375 = vmax.f32 %v1373, %v1374
        %v1376 = vrot.slane %v1375, 2
        %v1377 = vmax.f32 %v1375, %v1376
        %v1378 = vrot.slane %v1377, 1
        %v1379 = vmax.f32 %v1377, %v1378
        %v1380 = vmax.f32 %v1264, %v1280
        %v1381 = vrot.slane %v1380, 4
        %v1382 = vmax.f32 %v1380, %v1381
        %v1383 = vrot.slane %v1382, 2
        %v1384 = vmax.f32 %v1382, %v1383
        %v1385 = vrot.slane %v1384, 1
        %v1386 = vmax.f32 %v1384, %v1385
        %v1387 = vmax.f32 %v1265, %v1281
        %v1388 = vrot.slane %v1387, 4
        %v1389 = vmax.f32 %v1387, %v1388
        %v1390 = vrot.slane %v1389, 2
        %v1391 = vmax.f32 %v1389, %v1390
        %v1392 = vrot.slane %v1391, 1
        %v1393 = vmax.f32 %v1391, %v1392
        %vm1394 = vcmask 1040384
        %v1395 = vsel %vm1394, %v1234, %v1288
        %v1396 = vsel %vm1394, %v1235, %v1295
        %v1397 = vsel %vm1394, %v1236, %v1302
        %v1398 = vsel %vm1394, %v1237, %v1309
        %v1399 = vsel %vm1394, %v1238, %v1316
        %v1400 = vsel %vm1394, %v1239, %v1323
        %v1401 = vsel %vm1394, %v1240, %v1330
        %v1402 = vsel %vm1394, %v1241, %v1337
        %v1403 = vsel %vm1394, %v1242, %v1344
        %v1404 = vsel %vm1394, %v1243, %v1351
        %v1405 = vsel %vm1394, %v1244, %v1358
        %v1406 = vsel %vm1394, %v1245, %v1365
        %v1407 = vsel %vm1394, %v1246, %v1372
        %v1408 = vsel %vm1394, %v1247, %v1379
        %v1409 = vsel %vm1394, %v1248, %v1386
        %v1410 = vsel %vm1394, %v1249, %v1393
        %v1411 = vpack.c.bf16 %v1395, %v1395
        %v1412 = vpack.c.bf16 %v1396, %v1396
        %v1413 = vpack.c.bf16 %v1397, %v1397
        %v1414 = vpack.c.bf16 %v1398, %v1398
        %v1415 = vpack.c.bf16 %v1399, %v1399
        %v1416 = vpack.c.bf16 %v1400, %v1400
        %v1417 = vpack.c.bf16 %v1401, %v1401
        %v1418 = vpack.c.bf16 %v1402, %v1402
        %v1419 = vpack.c.bf16 %v1403, %v1403
        %v1420 = vpack.c.bf16 %v1404, %v1404
        %v1421 = vpack.c.bf16 %v1405, %v1405
        %v1422 = vpack.c.bf16 %v1406, %v1406
        %v1423 = vpack.c.bf16 %v1407, %v1407
        %v1424 = vpack.c.bf16 %v1408, %v1408
        %v1425 = vpack.c.bf16 %v1409, %v1409
        %v1426 = vpack.c.bf16 %v1410, %v1410
        %v1427 = vld [vmem:[#allocation6] sm:$0xf]
        %v1428 = vld [vmem:[#allocation6 + $0x4] sm:$0xf]
        %v1429 = vld [vmem:[#allocation6 + $0x8] sm:$0xf]
        %v1430 = vld [vmem:[#allocation6 + $0xc] sm:$0xf]
        %v1431 = vld [vmem:[#allocation6 + $0x10] sm:$0xf]
        %v1432 = vld [vmem:[#allocation6 + $0x14] sm:$0xf]
        %v1433 = vld [vmem:[#allocation6 + $0x18] sm:$0xf]
        %v1434 = vld [vmem:[#allocation6 + $0x1c] sm:$0xf]
        %v1435 = vld [vmem:[#allocation6 + $0x20] sm:$0xf]
        %v1436 = vld [vmem:[#allocation6 + $0x24] sm:$0xf]
        %v1437 = vld [vmem:[#allocation6 + $0x28] sm:$0xf]
        %v1438 = vld [vmem:[#allocation6 + $0x2c] sm:$0xf]
        %v1439 = vld [vmem:[#allocation6 + $0x30] sm:$0xf]
        %v1440 = vld [vmem:[#allocation6 + $0x34] sm:$0xf]
        %v1441 = vld [vmem:[#allocation6 + $0x38] sm:$0xf]
        %v1442 = vld [vmem:[#allocation6 + $0x3c] sm:$0xf]
        %v1443 = vld [vmem:[#allocation6 + $0x40] sm:$0xf]
        %v1444 = vld [vmem:[#allocation6 + $0x44] sm:$0xf]
        %v1445 = vld [vmem:[#allocation6 + $0x48] sm:$0xf]
        %v1446 = vld [vmem:[#allocation6 + $0x4c] sm:$0xf]
        %v1447 = vld [vmem:[#allocation6 + $0x50] sm:$0xf]
        %v1448 = vld [vmem:[#allocation6 + $0x54] sm:$0xf]
        %v1449 = vld [vmem:[#allocation6 + $0x58] sm:$0xf]
        %v1450 = vld [vmem:[#allocation6 + $0x5c] sm:$0xf]
        %v1451 = vld [vmem:[#allocation6 + $0x60] sm:$0xf]
        %v1452 = vld [vmem:[#allocation6 + $0x64] sm:$0xf]
        %v1453 = vld [vmem:[#allocation6 + $0x68] sm:$0xf]
        %v1454 = vld [vmem:[#allocation6 + $0x6c] sm:$0xf]
        %v1455 = vld [vmem:[#allocation6 + $0x70] sm:$0xf]
        %v1456 = vld [vmem:[#allocation6 + $0x74] sm:$0xf]
        %v1457 = vld [vmem:[#allocation6 + $0x78] sm:$0xf]
        %v1458 = vld [vmem:[#allocation6 + $0x7c] sm:$0xf]
        %v1459 = vld [vmem:[#allocation6 + $0x80] sm:$0xf]
        %v1460 = vld [vmem:[#allocation6 + $0x84] sm:$0xf]
        %v1461 = vld [vmem:[#allocation6 + $0x88] sm:$0xf]
        %v1462 = vld [vmem:[#allocation6 + $0x8c] sm:$0xf]
        %v1463 = vld [vmem:[#allocation6 + $0x90] sm:$0xf]
        %v1464 = vld [vmem:[#allocation6 + $0x94] sm:$0xf]
        %v1465 = vld [vmem:[#allocation6 + $0x98] sm:$0xf]
        %v1466 = vld [vmem:[#allocation6 + $0x9c] sm:$0xf]
        %v1467 = vld [vmem:[#allocation6 + $0xa0] sm:$0xf]
        %v1468 = vld [vmem:[#allocation6 + $0xa4] sm:$0xf]
        %v1469 = vld [vmem:[#allocation6 + $0xa8] sm:$0xf]
        %v1470 = vld [vmem:[#allocation6 + $0xac] sm:$0xf]
        %v1471 = vld [vmem:[#allocation6 + $0xb0] sm:$0xf]
        %v1472 = vld [vmem:[#allocation6 + $0xb4] sm:$0xf]
        %v1473 = vld [vmem:[#allocation6 + $0xb8] sm:$0xf]
        %v1474 = vld [vmem:[#allocation6 + $0xbc] sm:$0xf]
        %v1475 = vld [vmem:[#allocation6 + $0xc0] sm:$0xf]
        %v1476 = vld [vmem:[#allocation6 + $0xc4] sm:$0xf]
        %v1477 = vld [vmem:[#allocation6 + $0xc8] sm:$0xf]
        %v1478 = vld [vmem:[#allocation6 + $0xcc] sm:$0xf]
        %v1479 = vld [vmem:[#allocation6 + $0xd0] sm:$0xf]
        %v1480 = vld [vmem:[#allocation6 + $0xd4] sm:$0xf]
        %v1481 = vld [vmem:[#allocation6 + $0xd8] sm:$0xf]
        %v1482 = vld [vmem:[#allocation6 + $0xdc] sm:$0xf]
        %v1483 = vld [vmem:[#allocation6 + $0xe0] sm:$0xf]
        %v1484 = vld [vmem:[#allocation6 + $0xe4] sm:$0xf]
        %v1485 = vld [vmem:[#allocation6 + $0xe8] sm:$0xf]
        %v1486 = vld [vmem:[#allocation6 + $0xec] sm:$0xf]
        %v1487 = vld [vmem:[#allocation6 + $0xf0] sm:$0xf]
        %v1488 = vld [vmem:[#allocation6 + $0xf4] sm:$0xf]
        %v1489 = vld [vmem:[#allocation6 + $0xf8] sm:$0xf]
        %v1490 = vld [vmem:[#allocation6 + $0xfc] sm:$0xf]
        %v1491 = vld [vmem:[#allocation6 + $0x100] sm:$0xf]
        %v1492 = vld [vmem:[#allocation6 + $0x104] sm:$0xf]
        %v1493 = vld [vmem:[#allocation6 + $0x108] sm:$0xf]
        %v1494 = vld [vmem:[#allocation6 + $0x10c] sm:$0xf]
        %v1495 = vld [vmem:[#allocation6 + $0x110] sm:$0xf]
        %v1496 = vld [vmem:[#allocation6 + $0x114] sm:$0xf]
        %v1497 = vld [vmem:[#allocation6 + $0x118] sm:$0xf]
        %v1498 = vld [vmem:[#allocation6 + $0x11c] sm:$0xf]
        %v1499 = vld [vmem:[#allocation6 + $0x120] sm:$0xf]
        %v1500 = vld [vmem:[#allocation6 + $0x124] sm:$0xf]
        %v1501 = vld [vmem:[#allocation6 + $0x128] sm:$0xf]
        %v1502 = vld [vmem:[#allocation6 + $0x12c] sm:$0xf]
        %v1503 = vld [vmem:[#allocation6 + $0x130] sm:$0xf]
        %v1504 = vld [vmem:[#allocation6 + $0x134] sm:$0xf]
        %v1505 = vld [vmem:[#allocation6 + $0x138] sm:$0xf]
        %v1506 = vld [vmem:[#allocation6 + $0x13c] sm:$0xf]
        %v1507 = vld [vmem:[#allocation6 + $0x140] sm:$0xf]
        %v1508 = vld [vmem:[#allocation6 + $0x144] sm:$0xf]
        %v1509 = vld [vmem:[#allocation6 + $0x148] sm:$0xf]
        %v1510 = vld [vmem:[#allocation6 + $0x14c] sm:$0xf]
        %v1511 = vld [vmem:[#allocation6 + $0x150] sm:$0xf]
        %v1512 = vld [vmem:[#allocation6 + $0x154] sm:$0xf]
        %v1513 = vld [vmem:[#allocation6 + $0x158] sm:$0xf]
        %v1514 = vld [vmem:[#allocation6 + $0x15c] sm:$0xf]
        %v1515 = vld [vmem:[#allocation6 + $0x160] sm:$0xf]
        %v1516 = vld [vmem:[#allocation6 + $0x164] sm:$0xf]
        %v1517 = vld [vmem:[#allocation6 + $0x168] sm:$0xf]
        %v1518 = vld [vmem:[#allocation6 + $0x16c] sm:$0xf]
        %v1519 = vld [vmem:[#allocation6 + $0x170] sm:$0xf]
        %v1520 = vld [vmem:[#allocation6 + $0x174] sm:$0xf]
        %v1521 = vld [vmem:[#allocation6 + $0x178] sm:$0xf]
        %v1522 = vld [vmem:[#allocation6 + $0x17c] sm:$0xf]
        %v1523 = vld [vmem:[#allocation6 + $0x180] sm:$0xf]
        %v1524 = vld [vmem:[#allocation6 + $0x184] sm:$0xf]
        %v1525 = vld [vmem:[#allocation6 + $0x188] sm:$0xf]
        %v1526 = vld [vmem:[#allocation6 + $0x18c] sm:$0xf]
        %v1527 = vld [vmem:[#allocation6 + $0x190] sm:$0xf]
        %v1528 = vld [vmem:[#allocation6 + $0x194] sm:$0xf]
        %v1529 = vld [vmem:[#allocation6 + $0x198] sm:$0xf]
        %v1530 = vld [vmem:[#allocation6 + $0x19c] sm:$0xf]
        %v1531 = vld [vmem:[#allocation6 + $0x1a0] sm:$0xf]
        %v1532 = vld [vmem:[#allocation6 + $0x1a4] sm:$0xf]
        %v1533 = vld [vmem:[#allocation6 + $0x1a8] sm:$0xf]
        %v1534 = vld [vmem:[#allocation6 + $0x1ac] sm:$0xf]
        %v1535 = vld [vmem:[#allocation6 + $0x1b0] sm:$0xf]
        %v1536 = vld [vmem:[#allocation6 + $0x1b4] sm:$0xf]
        %v1537 = vld [vmem:[#allocation6 + $0x1b8] sm:$0xf]
        %v1538 = vld [vmem:[#allocation6 + $0x1bc] sm:$0xf]
        %v1539 = vld [vmem:[#allocation6 + $0x1c0] sm:$0xf]
        %v1540 = vld [vmem:[#allocation6 + $0x1c4] sm:$0xf]
        %v1541 = vld [vmem:[#allocation6 + $0x1c8] sm:$0xf]
        %v1542 = vld [vmem:[#allocation6 + $0x1cc] sm:$0xf]
        %v1543 = vld [vmem:[#allocation6 + $0x1d0] sm:$0xf]
        %v1544 = vld [vmem:[#allocation6 + $0x1d4] sm:$0xf]
        %v1545 = vld [vmem:[#allocation6 + $0x1d8] sm:$0xf]
        %v1546 = vld [vmem:[#allocation6 + $0x1dc] sm:$0xf]
        %v1547 = vld [vmem:[#allocation6 + $0x1e0] sm:$0xf]
        %v1548 = vld [vmem:[#allocation6 + $0x1e4] sm:$0xf]
        %v1549 = vld [vmem:[#allocation6 + $0x1e8] sm:$0xf]
        %v1550 = vld [vmem:[#allocation6 + $0x1ec] sm:$0xf]
        %v1551 = vld [vmem:[#allocation6 + $0x1f0] sm:$0xf]
        %v1552 = vld [vmem:[#allocation6 + $0x1f4] sm:$0xf]
        %v1553 = vld [vmem:[#allocation6 + $0x1f8] sm:$0xf]
        %v1554 = vld [vmem:[#allocation6 + $0x1fc] sm:$0xf]
        %v1555 = vld [vmem:[#allocation6 + $0x200] sm:$0xf]
        %v1556 = vld [vmem:[#allocation6 + $0x204] sm:$0xf]
        %v1557 = vld [vmem:[#allocation6 + $0x208] sm:$0xf]
        %v1558 = vld [vmem:[#allocation6 + $0x20c] sm:$0xf]
        %v1559 = vld [vmem:[#allocation6 + $0x210] sm:$0xf]
        %v1560 = vld [vmem:[#allocation6 + $0x214] sm:$0xf]
        %v1561 = vld [vmem:[#allocation6 + $0x218] sm:$0xf]
        %v1562 = vld [vmem:[#allocation6 + $0x21c] sm:$0xf]
        %v1563 = vld [vmem:[#allocation6 + $0x220] sm:$0xf]
        %v1564 = vld [vmem:[#allocation6 + $0x224] sm:$0xf]
        %v1565 = vld [vmem:[#allocation6 + $0x228] sm:$0xf]
        %v1566 = vld [vmem:[#allocation6 + $0x22c] sm:$0xf]
        %v1567 = vld [vmem:[#allocation6 + $0x230] sm:$0xf]
        %v1568 = vld [vmem:[#allocation6 + $0x234] sm:$0xf]
        %v1569 = vld [vmem:[#allocation6 + $0x238] sm:$0xf]
        %v1570 = vld [vmem:[#allocation6 + $0x23c] sm:$0xf]
        %v1571 = vld [vmem:[#allocation6 + $0x240] sm:$0xf]
        %v1572 = vld [vmem:[#allocation6 + $0x244] sm:$0xf]
        %v1573 = vld [vmem:[#allocation6 + $0x248] sm:$0xf]
        %v1574 = vld [vmem:[#allocation6 + $0x24c] sm:$0xf]
        %v1575 = vld [vmem:[#allocation6 + $0x250] sm:$0xf]
        %v1576 = vld [vmem:[#allocation6 + $0x254] sm:$0xf]
        %v1577 = vld [vmem:[#allocation6 + $0x258] sm:$0xf]
        %v1578 = vld [vmem:[#allocation6 + $0x25c] sm:$0xf]
        %v1579 = vld [vmem:[#allocation6 + $0x260] sm:$0xf]
        %v1580 = vld [vmem:[#allocation6 + $0x264] sm:$0xf]
        %v1581 = vld [vmem:[#allocation6 + $0x268] sm:$0xf]
        %v1582 = vld [vmem:[#allocation6 + $0x26c] sm:$0xf]
        %v1583 = vld [vmem:[#allocation6 + $0x270] sm:$0xf]
        %v1584 = vld [vmem:[#allocation6 + $0x274] sm:$0xf]
        %v1585 = vld [vmem:[#allocation6 + $0x278] sm:$0xf]
        %v1586 = vld [vmem:[#allocation6 + $0x27c] sm:$0xf]
        %v1587 = vld [vmem:[#allocation6 + $0x280] sm:$0xf]
        %v1588 = vld [vmem:[#allocation6 + $0x284] sm:$0xf]
        %v1589 = vld [vmem:[#allocation6 + $0x288] sm:$0xf]
        %v1590 = vld [vmem:[#allocation6 + $0x28c] sm:$0xf]
        %v1591 = vld [vmem:[#allocation6 + $0x290] sm:$0xf]
        %v1592 = vld [vmem:[#allocation6 + $0x294] sm:$0xf]
        %v1593 = vld [vmem:[#allocation6 + $0x298] sm:$0xf]
        %v1594 = vld [vmem:[#allocation6 + $0x29c] sm:$0xf]
        %v1595 = vld [vmem:[#allocation6 + $0x2a0] sm:$0xf]
        %v1596 = vld [vmem:[#allocation6 + $0x2a4] sm:$0xf]
        %v1597 = vld [vmem:[#allocation6 + $0x2a8] sm:$0xf]
        %v1598 = vld [vmem:[#allocation6 + $0x2ac] sm:$0xf]
        %v1599 = vld [vmem:[#allocation6 + $0x2b0] sm:$0xf]
        %v1600 = vld [vmem:[#allocation6 + $0x2b4] sm:$0xf]
        %v1601 = vld [vmem:[#allocation6 + $0x2b8] sm:$0xf]
        %v1602 = vld [vmem:[#allocation6 + $0x2bc] sm:$0xf]
        %v1603 = vld [vmem:[#allocation6 + $0x2c0] sm:$0xf]
        %v1604 = vld [vmem:[#allocation6 + $0x2c4] sm:$0xf]
        %v1605 = vld [vmem:[#allocation6 + $0x2c8] sm:$0xf]
        %v1606 = vld [vmem:[#allocation6 + $0x2cc] sm:$0xf]
        %v1607 = vld [vmem:[#allocation6 + $0x2d0] sm:$0xf]
        %v1608 = vld [vmem:[#allocation6 + $0x2d4] sm:$0xf]
        %v1609 = vld [vmem:[#allocation6 + $0x2d8] sm:$0xf]
        %v1610 = vld [vmem:[#allocation6 + $0x2dc] sm:$0xf]
        %v1611 = vld [vmem:[#allocation6 + $0x2e0] sm:$0xf]
        %v1612 = vld [vmem:[#allocation6 + $0x2e4] sm:$0xf]
        %v1613 = vld [vmem:[#allocation6 + $0x2e8] sm:$0xf]
        %v1614 = vld [vmem:[#allocation6 + $0x2ec] sm:$0xf]
        %v1615 = vld [vmem:[#allocation6 + $0x2f0] sm:$0xf]
        %v1616 = vld [vmem:[#allocation6 + $0x2f4] sm:$0xf]
        %v1617 = vld [vmem:[#allocation6 + $0x2f8] sm:$0xf]
        %v1618 = vld [vmem:[#allocation6 + $0x2fc] sm:$0xf]
        %v1619 = vld [vmem:[#allocation6 + $0x300] sm:$0xf]
        %v1620 = vld [vmem:[#allocation6 + $0x304] sm:$0xf]
        %v1621 = vld [vmem:[#allocation6 + $0x308] sm:$0xf]
        %v1622 = vld [vmem:[#allocation6 + $0x30c] sm:$0xf]
        %v1623 = vld [vmem:[#allocation6 + $0x310] sm:$0xf]
        %v1624 = vld [vmem:[#allocation6 + $0x314] sm:$0xf]
        %v1625 = vld [vmem:[#allocation6 + $0x318] sm:$0xf]
        %v1626 = vld [vmem:[#allocation6 + $0x31c] sm:$0xf]
        %v1627 = vld [vmem:[#allocation6 + $0x320] sm:$0xf]
        %v1628 = vld [vmem:[#allocation6 + $0x324] sm:$0xf]
        %v1629 = vld [vmem:[#allocation6 + $0x328] sm:$0xf]
        %v1630 = vld [vmem:[#allocation6 + $0x32c] sm:$0xf]
        %v1631 = vld [vmem:[#allocation6 + $0x330] sm:$0xf]
        %v1632 = vld [vmem:[#allocation6 + $0x334] sm:$0xf]
        %v1633 = vld [vmem:[#allocation6 + $0x338] sm:$0xf]
        %v1634 = vld [vmem:[#allocation6 + $0x33c] sm:$0xf]
        %v1635 = vld [vmem:[#allocation6 + $0x340] sm:$0xf]
        %v1636 = vld [vmem:[#allocation6 + $0x344] sm:$0xf]
        %v1637 = vld [vmem:[#allocation6 + $0x348] sm:$0xf]
        %v1638 = vld [vmem:[#allocation6 + $0x34c] sm:$0xf]
        %v1639 = vld [vmem:[#allocation6 + $0x350] sm:$0xf]
        %v1640 = vld [vmem:[#allocation6 + $0x354] sm:$0xf]
        %v1641 = vld [vmem:[#allocation6 + $0x358] sm:$0xf]
        %v1642 = vld [vmem:[#allocation6 + $0x35c] sm:$0xf]
        %v1643 = vld [vmem:[#allocation6 + $0x360] sm:$0xf]
        %v1644 = vld [vmem:[#allocation6 + $0x364] sm:$0xf]
        %v1645 = vld [vmem:[#allocation6 + $0x368] sm:$0xf]
        %v1646 = vld [vmem:[#allocation6 + $0x36c] sm:$0xf]
        %v1647 = vld [vmem:[#allocation6 + $0x370] sm:$0xf]
        %v1648 = vld [vmem:[#allocation6 + $0x374] sm:$0xf]
        %v1649 = vld [vmem:[#allocation6 + $0x378] sm:$0xf]
        %v1650 = vld [vmem:[#allocation6 + $0x37c] sm:$0xf]
        %v1651 = vld [vmem:[#allocation6 + $0x380] sm:$0xf]
        %v1652 = vld [vmem:[#allocation6 + $0x384] sm:$0xf]
        %v1653 = vld [vmem:[#allocation6 + $0x388] sm:$0xf]
        %v1654 = vld [vmem:[#allocation6 + $0x38c] sm:$0xf]
        %v1655 = vld [vmem:[#allocation6 + $0x390] sm:$0xf]
        %v1656 = vld [vmem:[#allocation6 + $0x394] sm:$0xf]
        %v1657 = vld [vmem:[#allocation6 + $0x398] sm:$0xf]
        %v1658 = vld [vmem:[#allocation6 + $0x39c] sm:$0xf]
        %v1659 = vld [vmem:[#allocation6 + $0x3a0] sm:$0xf]
        %v1660 = vld [vmem:[#allocation6 + $0x3a4] sm:$0xf]
        %v1661 = vld [vmem:[#allocation6 + $0x3a8] sm:$0xf]
        %v1662 = vld [vmem:[#allocation6 + $0x3ac] sm:$0xf]
        %v1663 = vld [vmem:[#allocation6 + $0x3b0] sm:$0xf]
        %v1664 = vld [vmem:[#allocation6 + $0x3b4] sm:$0xf]
        %v1665 = vld [vmem:[#allocation6 + $0x3b8] sm:$0xf]
        %v1666 = vld [vmem:[#allocation6 + $0x3bc] sm:$0xf]
        %v1667 = vld [vmem:[#allocation6 + $0x3c0] sm:$0xf]
        %v1668 = vld [vmem:[#allocation6 + $0x3c4] sm:$0xf]
        %v1669 = vld [vmem:[#allocation6 + $0x3c8] sm:$0xf]
        %v1670 = vld [vmem:[#allocation6 + $0x3cc] sm:$0xf]
        %v1671 = vld [vmem:[#allocation6 + $0x3d0] sm:$0xf]
        %v1672 = vld [vmem:[#allocation6 + $0x3d4] sm:$0xf]
        %v1673 = vld [vmem:[#allocation6 + $0x3d8] sm:$0xf]
        %v1674 = vld [vmem:[#allocation6 + $0x3dc] sm:$0xf]
        %v1675 = vld [vmem:[#allocation6 + $0x3e0] sm:$0xf]
        %v1676 = vld [vmem:[#allocation6 + $0x3e4] sm:$0xf]
        %v1677 = vld [vmem:[#allocation6 + $0x3e8] sm:$0xf]
        %v1678 = vld [vmem:[#allocation6 + $0x3ec] sm:$0xf]
        %v1679 = vld [vmem:[#allocation6 + $0x3f0] sm:$0xf]
        %v1680 = vld [vmem:[#allocation6 + $0x3f4] sm:$0xf]
        %v1681 = vld [vmem:[#allocation6 + $0x3f8] sm:$0xf]
        %v1682 = vld [vmem:[#allocation6 + $0x3fc] sm:$0xf]
        %v1683 = vld [vmem:[%s2] sm:$0x1]
        %v1685 = vlaneseq
        %v1686 = vshrl.u32 %v1685, 7
        %v1687 = vsub.s32 0, %v1686
        %v1688 = vrot.slane %v1683, %v1687
        %v1946 = vunpack.c.l.b16 %v1427
        %v1947 = vunpack.c.l.b16 %v1428
        %v1948 = vunpack.c.l.b16 %v1429
        %v1949 = vunpack.c.l.b16 %v1430
        %v1950 = vunpack.c.l.b16 %v1431
        %v1951 = vunpack.c.l.b16 %v1432
        %v1952 = vunpack.c.l.b16 %v1433
        %v1953 = vunpack.c.l.b16 %v1434
        %v1954 = vunpack.c.l.b16 %v1435
        %v1955 = vunpack.c.l.b16 %v1436
        %v1956 = vunpack.c.l.b16 %v1437
        %v1957 = vunpack.c.l.b16 %v1438
        %v1958 = vunpack.c.l.b16 %v1439
        %v1959 = vunpack.c.l.b16 %v1440
        %v1960 = vunpack.c.l.b16 %v1441
        %v1961 = vunpack.c.l.b16 %v1442
        %v1962 = vunpack.c.l.b16 %v1443
        %v1963 = vunpack.c.l.b16 %v1444
        %v1964 = vunpack.c.l.b16 %v1445
        %v1965 = vunpack.c.l.b16 %v1446
        %v1966 = vunpack.c.l.b16 %v1447
        %v1967 = vunpack.c.l.b16 %v1448
        %v1968 = vunpack.c.l.b16 %v1449
        %v1969 = vunpack.c.l.b16 %v1450
        %v1970 = vunpack.c.l.b16 %v1451
        %v1971 = vunpack.c.l.b16 %v1452
        %v1972 = vunpack.c.l.b16 %v1453
        %v1973 = vunpack.c.l.b16 %v1454
        %v1974 = vunpack.c.l.b16 %v1455
        %v1975 = vunpack.c.l.b16 %v1456
        %v1976 = vunpack.c.l.b16 %v1457
        %v1977 = vunpack.c.l.b16 %v1458
        %v1978 = vunpack.c.l.b16 %v1459
        %v1979 = vunpack.c.l.b16 %v1460
        %v1980 = vunpack.c.l.b16 %v1461
        %v1981 = vunpack.c.l.b16 %v1462
        %v1982 = vunpack.c.l.b16 %v1463
        %v1983 = vunpack.c.l.b16 %v1464
        %v1984 = vunpack.c.l.b16 %v1465
        %v1985 = vunpack.c.l.b16 %v1466
        %v1986 = vunpack.c.l.b16 %v1467
        %v1987 = vunpack.c.l.b16 %v1468
        %v1988 = vunpack.c.l.b16 %v1469
        %v1989 = vunpack.c.l.b16 %v1470
        %v1990 = vunpack.c.l.b16 %v1471
        %v1991 = vunpack.c.l.b16 %v1472
        %v1992 = vunpack.c.l.b16 %v1473
        %v1993 = vunpack.c.l.b16 %v1474
        %v1994 = vunpack.c.l.b16 %v1475
        %v1995 = vunpack.c.l.b16 %v1476
        %v1996 = vunpack.c.l.b16 %v1477
        %v1997 = vunpack.c.l.b16 %v1478
        %v1998 = vunpack.c.l.b16 %v1479
        %v1999 = vunpack.c.l.b16 %v1480
        %v2000 = vunpack.c.l.b16 %v1481
        %v2001 = vunpack.c.l.b16 %v1482
        %v2002 = vunpack.c.l.b16 %v1483
        %v2003 = vunpack.c.l.b16 %v1484
        %v2004 = vunpack.c.l.b16 %v1485
        %v2005 = vunpack.c.l.b16 %v1486
        %v2006 = vunpack.c.l.b16 %v1487
        %v2007 = vunpack.c.l.b16 %v1488
        %v2008 = vunpack.c.l.b16 %v1489
        %v2009 = vunpack.c.l.b16 %v1490
        %v2010 = vunpack.c.l.b16 %v1491
        %v2011 = vunpack.c.l.b16 %v1492
        %v2012 = vunpack.c.l.b16 %v1493
        %v2013 = vunpack.c.l.b16 %v1494
        %v2014 = vunpack.c.l.b16 %v1495
        %v2015 = vunpack.c.l.b16 %v1496
        %v2016 = vunpack.c.l.b16 %v1497
        %v2017 = vunpack.c.l.b16 %v1498
        %v2018 = vunpack.c.l.b16 %v1499
        %v2019 = vunpack.c.l.b16 %v1500
        %v2020 = vunpack.c.l.b16 %v1501
        %v2021 = vunpack.c.l.b16 %v1502
        %v2022 = vunpack.c.l.b16 %v1503
        %v2023 = vunpack.c.l.b16 %v1504
        %v2024 = vunpack.c.l.b16 %v1505
        %v2025 = vunpack.c.l.b16 %v1506
        %v2026 = vunpack.c.l.b16 %v1507
        %v2027 = vunpack.c.l.b16 %v1508
        %v2028 = vunpack.c.l.b16 %v1509
        %v2029 = vunpack.c.l.b16 %v1510
        %v2030 = vunpack.c.l.b16 %v1511
        %v2031 = vunpack.c.l.b16 %v1512
        %v2032 = vunpack.c.l.b16 %v1513
        %v2033 = vunpack.c.l.b16 %v1514
        %v2034 = vunpack.c.l.b16 %v1515
        %v2035 = vunpack.c.l.b16 %v1516
        %v2036 = vunpack.c.l.b16 %v1517
        %v2037 = vunpack.c.l.b16 %v1518
        %v2038 = vunpack.c.l.b16 %v1519
        %v2039 = vunpack.c.l.b16 %v1520
        %v2040 = vunpack.c.l.b16 %v1521
        %v2041 = vunpack.c.l.b16 %v1522
        %v2042 = vunpack.c.l.b16 %v1523
        %v2043 = vunpack.c.l.b16 %v1524
        %v2044 = vunpack.c.l.b16 %v1525
        %v2045 = vunpack.c.l.b16 %v1526
        %v2046 = vunpack.c.l.b16 %v1527
        %v2047 = vunpack.c.l.b16 %v1528
        %v2048 = vunpack.c.l.b16 %v1529
        %v2049 = vunpack.c.l.b16 %v1530
        %v2050 = vunpack.c.l.b16 %v1531
        %v2051 = vunpack.c.l.b16 %v1532
        %v2052 = vunpack.c.l.b16 %v1533
        %v2053 = vunpack.c.l.b16 %v1534
        %v2054 = vunpack.c.l.b16 %v1535
        %v2055 = vunpack.c.l.b16 %v1536
        %v2056 = vunpack.c.l.b16 %v1537
        %v2057 = vunpack.c.l.b16 %v1538
        %v2058 = vunpack.c.l.b16 %v1539
        %v2059 = vunpack.c.l.b16 %v1540
        %v2060 = vunpack.c.l.b16 %v1541
        %v2061 = vunpack.c.l.b16 %v1542
        %v2062 = vunpack.c.l.b16 %v1543
        %v2063 = vunpack.c.l.b16 %v1544
        %v2064 = vunpack.c.l.b16 %v1545
        %v2065 = vunpack.c.l.b16 %v1546
        %v2066 = vunpack.c.l.b16 %v1547
        %v2067 = vunpack.c.l.b16 %v1548
        %v2068 = vunpack.c.l.b16 %v1549
        %v2069 = vunpack.c.l.b16 %v1550
        %v2070 = vunpack.c.l.b16 %v1551
        %v2071 = vunpack.c.l.b16 %v1552
        %v2072 = vunpack.c.l.b16 %v1553
        %v2073 = vunpack.c.l.b16 %v1554
        %v2074 = vunpack.c.l.b16 %v1555
        %v2075 = vunpack.c.l.b16 %v1556
        %v2076 = vunpack.c.l.b16 %v1557
        %v2077 = vunpack.c.l.b16 %v1558
        %v2078 = vunpack.c.l.b16 %v1559
        %v2079 = vunpack.c.l.b16 %v1560
        %v2080 = vunpack.c.l.b16 %v1561
        %v2081 = vunpack.c.l.b16 %v1562
        %v2082 = vunpack.c.l.b16 %v1563
        %v2083 = vunpack.c.l.b16 %v1564
        %v2084 = vunpack.c.l.b16 %v1565
        %v2085 = vunpack.c.l.b16 %v1566
        %v2086 = vunpack.c.l.b16 %v1567
        %v2087 = vunpack.c.l.b16 %v1568
        %v2088 = vunpack.c.l.b16 %v1569
        %v2089 = vunpack.c.l.b16 %v1570
        %v2090 = vunpack.c.l.b16 %v1571
        %v2091 = vunpack.c.l.b16 %v1572
        %v2092 = vunpack.c.l.b16 %v1573
        %v2093 = vunpack.c.l.b16 %v1574
        %v2094 = vunpack.c.l.b16 %v1575
        %v2095 = vunpack.c.l.b16 %v1576
        %v2096 = vunpack.c.l.b16 %v1577
        %v2097 = vunpack.c.l.b16 %v1578
        %v2098 = vunpack.c.l.b16 %v1579
        %v2099 = vunpack.c.l.b16 %v1580
        %v2100 = vunpack.c.l.b16 %v1581
        %v2101 = vunpack.c.l.b16 %v1582
        %v2102 = vunpack.c.l.b16 %v1583
        %v2103 = vunpack.c.l.b16 %v1584
        %v2104 = vunpack.c.l.b16 %v1585
        %v2105 = vunpack.c.l.b16 %v1586
        %v2106 = vunpack.c.l.b16 %v1587
        %v2107 = vunpack.c.l.b16 %v1588
        %v2108 = vunpack.c.l.b16 %v1589
        %v2109 = vunpack.c.l.b16 %v1590
        %v2110 = vunpack.c.l.b16 %v1591
        %v2111 = vunpack.c.l.b16 %v1592
        %v2112 = vunpack.c.l.b16 %v1593
        %v2113 = vunpack.c.l.b16 %v1594
        %v2114 = vunpack.c.l.b16 %v1595
        %v2115 = vunpack.c.l.b16 %v1596
        %v2116 = vunpack.c.l.b16 %v1597
        %v2117 = vunpack.c.l.b16 %v1598
        %v2118 = vunpack.c.l.b16 %v1599
        %v2119 = vunpack.c.l.b16 %v1600
        %v2120 = vunpack.c.l.b16 %v1601
        %v2121 = vunpack.c.l.b16 %v1602
        %v2122 = vunpack.c.l.b16 %v1603
        %v2123 = vunpack.c.l.b16 %v1604
        %v2124 = vunpack.c.l.b16 %v1605
        %v2125 = vunpack.c.l.b16 %v1606
        %v2126 = vunpack.c.l.b16 %v1607
        %v2127 = vunpack.c.l.b16 %v1608
        %v2128 = vunpack.c.l.b16 %v1609
        %v2129 = vunpack.c.l.b16 %v1610
        %v2130 = vunpack.c.l.b16 %v1611
        %v2131 = vunpack.c.l.b16 %v1612
        %v2132 = vunpack.c.l.b16 %v1613
        %v2133 = vunpack.c.l.b16 %v1614
        %v2134 = vunpack.c.l.b16 %v1615
        %v2135 = vunpack.c.l.b16 %v1616
        %v2136 = vunpack.c.l.b16 %v1617
        %v2137 = vunpack.c.l.b16 %v1618
        %v2138 = vunpack.c.l.b16 %v1619
        %v2139 = vunpack.c.l.b16 %v1620
        %v2140 = vunpack.c.l.b16 %v1621
        %v2141 = vunpack.c.l.b16 %v1622
        %v2142 = vunpack.c.l.b16 %v1623
        %v2143 = vunpack.c.l.b16 %v1624
        %v2144 = vunpack.c.l.b16 %v1625
        %v2145 = vunpack.c.l.b16 %v1626
        %v2146 = vunpack.c.l.b16 %v1627
        %v2147 = vunpack.c.l.b16 %v1628
        %v2148 = vunpack.c.l.b16 %v1629
        %v2149 = vunpack.c.l.b16 %v1630
        %v2150 = vunpack.c.l.b16 %v1631
        %v2151 = vunpack.c.l.b16 %v1632
        %v2152 = vunpack.c.l.b16 %v1633
        %v2153 = vunpack.c.l.b16 %v1634
        %v2154 = vunpack.c.l.b16 %v1635
        %v2155 = vunpack.c.l.b16 %v1636
        %v2156 = vunpack.c.l.b16 %v1637
        %v2157 = vunpack.c.l.b16 %v1638
        %v2158 = vunpack.c.l.b16 %v1639
        %v2159 = vunpack.c.l.b16 %v1640
        %v2160 = vunpack.c.l.b16 %v1641
        %v2161 = vunpack.c.l.b16 %v1642
        %v2162 = vunpack.c.l.b16 %v1643
        %v2163 = vunpack.c.l.b16 %v1644
        %v2164 = vunpack.c.l.b16 %v1645
        %v2165 = vunpack.c.l.b16 %v1646
        %v2166 = vunpack.c.l.b16 %v1647
        %v2167 = vunpack.c.l.b16 %v1648
        %v2168 = vunpack.c.l.b16 %v1649
        %v2169 = vunpack.c.l.b16 %v1650
        %v2170 = vunpack.c.l.b16 %v1651
        %v2171 = vunpack.c.l.b16 %v1652
        %v2172 = vunpack.c.l.b16 %v1653
        %v2173 = vunpack.c.l.b16 %v1654
        %v2174 = vunpack.c.l.b16 %v1655
        %v2175 = vunpack.c.l.b16 %v1656
        %v2176 = vunpack.c.l.b16 %v1657
        %v2177 = vunpack.c.l.b16 %v1658
        %v2178 = vunpack.c.l.b16 %v1659
        %v2179 = vunpack.c.l.b16 %v1660
        %v2180 = vunpack.c.l.b16 %v1661
        %v2181 = vunpack.c.l.b16 %v1662
        %v2182 = vunpack.c.l.b16 %v1663
        %v2183 = vunpack.c.l.b16 %v1664
        %v2184 = vunpack.c.l.b16 %v1665
        %v2185 = vunpack.c.l.b16 %v1666
        %v2186 = vunpack.c.l.b16 %v1667
        %v2187 = vunpack.c.l.b16 %v1668
        %v2188 = vunpack.c.l.b16 %v1669
        %v2189 = vunpack.c.l.b16 %v1670
        %v2190 = vunpack.c.l.b16 %v1671
        %v2191 = vunpack.c.l.b16 %v1672
        %v2192 = vunpack.c.l.b16 %v1673
        %v2193 = vunpack.c.l.b16 %v1674
        %v2194 = vunpack.c.l.b16 %v1675
        %v2195 = vunpack.c.l.b16 %v1676
        %v2196 = vunpack.c.l.b16 %v1677
        %v2197 = vunpack.c.l.b16 %v1678
        %v2198 = vunpack.c.l.b16 %v1679
        %v2199 = vunpack.c.l.b16 %v1680
        %v2200 = vunpack.c.l.b16 %v1681
        %v2201 = vunpack.c.l.b16 %v1682
        %v2202 = vpack.c.b16 %v1947, %v1946
        %v2203 = vpack.c.b16 %v1949, %v1948
        %v2204 = vpack.c.b16 %v1951, %v1950
        %v2205 = vpack.c.b16 %v1953, %v1952
        %v2206 = vpack.c.b16 %v1955, %v1954
        %v2207 = vpack.c.b16 %v1957, %v1956
        %v2208 = vpack.c.b16 %v1959, %v1958
        %v2209 = vpack.c.b16 %v1961, %v1960
        %v2210 = vpack.c.b16 %v1963, %v1962
        %v2211 = vpack.c.b16 %v1965, %v1964
        %v2212 = vpack.c.b16 %v1967, %v1966
        %v2213 = vpack.c.b16 %v1969, %v1968
        %v2214 = vpack.c.b16 %v1971, %v1970
        %v2215 = vpack.c.b16 %v1973, %v1972
        %v2216 = vpack.c.b16 %v1975, %v1974
        %v2217 = vpack.c.b16 %v1977, %v1976
        %v2218 = vpack.c.b16 %v1979, %v1978
        %v2219 = vpack.c.b16 %v1981, %v1980
        %v2220 = vpack.c.b16 %v1983, %v1982
        %v2221 = vpack.c.b16 %v1985, %v1984
        %v2222 = vpack.c.b16 %v1987, %v1986
        %v2223 = vpack.c.b16 %v1989, %v1988
        %v2224 = vpack.c.b16 %v1991, %v1990
        %v2225 = vpack.c.b16 %v1993, %v1992
        %v2226 = vpack.c.b16 %v1995, %v1994
        %v2227 = vpack.c.b16 %v1997, %v1996
        %v2228 = vpack.c.b16 %v1999, %v1998
        %v2229 = vpack.c.b16 %v2001, %v2000
        %v2230 = vpack.c.b16 %v2003, %v2002
        %v2231 = vpack.c.b16 %v2005, %v2004
        %v2232 = vpack.c.b16 %v2007, %v2006
        %v2233 = vpack.c.b16 %v2009, %v2008
        %v2234 = vpack.c.b16 %v2011, %v2010
        %v2235 = vpack.c.b16 %v2013, %v2012
        %v2236 = vpack.c.b16 %v2015, %v2014
        %v2237 = vpack.c.b16 %v2017, %v2016
        %v2238 = vpack.c.b16 %v2019, %v2018
        %v2239 = vpack.c.b16 %v2021, %v2020
        %v2240 = vpack.c.b16 %v2023, %v2022
        %v2241 = vpack.c.b16 %v2025, %v2024
        %v2242 = vpack.c.b16 %v2027, %v2026
        %v2243 = vpack.c.b16 %v2029, %v2028
        %v2244 = vpack.c.b16 %v2031, %v2030
        %v2245 = vpack.c.b16 %v2033, %v2032
        %v2246 = vpack.c.b16 %v2035, %v2034
        %v2247 = vpack.c.b16 %v2037, %v2036
        %v2248 = vpack.c.b16 %v2039, %v2038
        %v2249 = vpack.c.b16 %v2041, %v2040
        %v2250 = vpack.c.b16 %v2043, %v2042
        %v2251 = vpack.c.b16 %v2045, %v2044
        %v2252 = vpack.c.b16 %v2047, %v2046
        %v2253 = vpack.c.b16 %v2049, %v2048
        %v2254 = vpack.c.b16 %v2051, %v2050
        %v2255 = vpack.c.b16 %v2053, %v2052
        %v2256 = vpack.c.b16 %v2055, %v2054
        %v2257 = vpack.c.b16 %v2057, %v2056
        %v2258 = vpack.c.b16 %v2059, %v2058
        %v2259 = vpack.c.b16 %v2061, %v2060
        %v2260 = vpack.c.b16 %v2063, %v2062
        %v2261 = vpack.c.b16 %v2065, %v2064
        %v2262 = vpack.c.b16 %v2067, %v2066
        %v2263 = vpack.c.b16 %v2069, %v2068
        %v2264 = vpack.c.b16 %v2071, %v2070
        %v2265 = vpack.c.b16 %v2073, %v2072
        %v2266 = vpack.c.b16 %v2075, %v2074
        %v2267 = vpack.c.b16 %v2077, %v2076
        %v2268 = vpack.c.b16 %v2079, %v2078
        %v2269 = vpack.c.b16 %v2081, %v2080
        %v2270 = vpack.c.b16 %v2083, %v2082
        %v2271 = vpack.c.b16 %v2085, %v2084
        %v2272 = vpack.c.b16 %v2087, %v2086
        %v2273 = vpack.c.b16 %v2089, %v2088
        %v2274 = vpack.c.b16 %v2091, %v2090
        %v2275 = vpack.c.b16 %v2093, %v2092
        %v2276 = vpack.c.b16 %v2095, %v2094
        %v2277 = vpack.c.b16 %v2097, %v2096
        %v2278 = vpack.c.b16 %v2099, %v2098
        %v2279 = vpack.c.b16 %v2101, %v2100
        %v2280 = vpack.c.b16 %v2103, %v2102
        %v2281 = vpack.c.b16 %v2105, %v2104
        %v2282 = vpack.c.b16 %v2107, %v2106
        %v2283 = vpack.c.b16 %v2109, %v2108
        %v2284 = vpack.c.b16 %v2111, %v2110
        %v2285 = vpack.c.b16 %v2113, %v2112
        %v2286 = vpack.c.b16 %v2115, %v2114
        %v2287 = vpack.c.b16 %v2117, %v2116
        %v2288 = vpack.c.b16 %v2119, %v2118
        %v2289 = vpack.c.b16 %v2121, %v2120
        %v2290 = vpack.c.b16 %v2123, %v2122
        %v2291 = vpack.c.b16 %v2125, %v2124
        %v2292 = vpack.c.b16 %v2127, %v2126
        %v2293 = vpack.c.b16 %v2129, %v2128
        %v2294 = vpack.c.b16 %v2131, %v2130
        %v2295 = vpack.c.b16 %v2133, %v2132
        %v2296 = vpack.c.b16 %v2135, %v2134
        %v2297 = vpack.c.b16 %v2137, %v2136
        %v2298 = vpack.c.b16 %v2139, %v2138
        %v2299 = vpack.c.b16 %v2141, %v2140
        %v2300 = vpack.c.b16 %v2143, %v2142
        %v2301 = vpack.c.b16 %v2145, %v2144
        %v2302 = vpack.c.b16 %v2147, %v2146
        %v2303 = vpack.c.b16 %v2149, %v2148
        %v2304 = vpack.c.b16 %v2151, %v2150
        %v2305 = vpack.c.b16 %v2153, %v2152
        %v2306 = vpack.c.b16 %v2155, %v2154
        %v2307 = vpack.c.b16 %v2157, %v2156
        %v2308 = vpack.c.b16 %v2159, %v2158
        %v2309 = vpack.c.b16 %v2161, %v2160
        %v2310 = vpack.c.b16 %v2163, %v2162
        %v2311 = vpack.c.b16 %v2165, %v2164
        %v2312 = vpack.c.b16 %v2167, %v2166
        %v2313 = vpack.c.b16 %v2169, %v2168
        %v2314 = vpack.c.b16 %v2171, %v2170
        %v2315 = vpack.c.b16 %v2173, %v2172
        %v2316 = vpack.c.b16 %v2175, %v2174
        %v2317 = vpack.c.b16 %v2177, %v2176
        %v2318 = vpack.c.b16 %v2179, %v2178
        %v2319 = vpack.c.b16 %v2181, %v2180
        %v2320 = vpack.c.b16 %v2183, %v2182
        %v2321 = vpack.c.b16 %v2185, %v2184
        %v2322 = vpack.c.b16 %v2187, %v2186
        %v2323 = vpack.c.b16 %v2189, %v2188
        %v2324 = vpack.c.b16 %v2191, %v2190
        %v2325 = vpack.c.b16 %v2193, %v2192
        %v2326 = vpack.c.b16 %v2195, %v2194
        %v2327 = vpack.c.b16 %v2197, %v2196
        %v2328 = vpack.c.b16 %v2199, %v2198
        %v2329 = vpack.c.b16 %v2201, %v2200
        %2458 = vmatprep.subr.bf16.mxu0 0
        %2459 = vmatpush1.bf16.msra.mxu0 %v2209
        %2460 = vmatprep.subr.bf16.mxu0 0
        %2461 = vmatpush1.bf16.msra.mxu0 %v2208
        %2462 = vmatprep.subr.bf16.mxu0 0
        %2463 = vmatpush1.bf16.msra.mxu0 %v2207
        %2464 = vmatprep.subr.bf16.mxu0 0
        %2465 = vmatpush1.bf16.msra.mxu0 %v2206
        %2466 = vmatprep.subr.bf16.mxu0 0
        %2467 = vmatpush1.bf16.msra.mxu0 %v2205
        %2468 = vmatprep.subr.bf16.mxu0 0
        %2469 = vmatpush1.bf16.msra.mxu0 %v2204
        %2470 = vmatprep.subr.bf16.mxu0 0
        %2471 = vmatpush1.bf16.msra.mxu0 %v2203
        %2472 = vmatprep.subr.bf16.mxu0 0
        %2473 = vmatpush1.bf16.msra.mxu0 %v2202
        %2474 = vmatprep.subr.bf16.mxu0 0
        %2475 = vmatpush2.bf16.msra.mxu0 %v2217
        %2476 = vmatprep.subr.bf16.mxu0 0
        %2477 = vmatpush2.bf16.msra.mxu0 %v2216
        %2478 = vmatprep.subr.bf16.mxu0 0
        %2479 = vmatpush2.bf16.msra.mxu0 %v2215
        %2480 = vmatprep.subr.bf16.mxu0 0
        %2481 = vmatpush2.bf16.msra.mxu0 %v2214
        %2482 = vmatprep.subr.bf16.mxu0 0
        %2483 = vmatpush2.bf16.msra.mxu0 %v2213
        %2484 = vmatprep.subr.bf16.mxu0 0
        %2485 = vmatpush2.bf16.msra.mxu0 %v2212
        %2486 = vmatprep.subr.bf16.mxu0 0
        %2487 = vmatpush2.bf16.msra.mxu0 %v2211
        %2488 = vmatprep.subr.bf16.mxu0 0
        %2489 = vmatpush2.bf16.msra.mxu0 %v2210
        %2490 = vmatprep.mubr.bf16.mxu0 %v1412
        %2491 = vmatmul.mubr.bf16.gmra.mxu0 %v1411
        %v2492 = vpop.f32.mrf.mxu0
        %v2493 = vadd.f32 %v1688, %v2492
        %v2494 = vpop.f32.mrf.mxu0
        %v2495 = vpop.f32.mrf.mxu0
        %v2496 = vpop.f32.mrf.mxu0
        %2497 = vdwg.mxu0
        %2498 = vmatprep.subr.bf16.mxu0 0
        %2499 = vmatpush1.bf16.msra.mxu0 %v2225
        %2500 = vmatprep.subr.bf16.mxu0 0
        %2501 = vmatpush1.bf16.msra.mxu0 %v2224
        %2502 = vmatprep.subr.bf16.mxu0 0
        %2503 = vmatpush1.bf16.msra.mxu0 %v2223
        %2504 = vmatprep.subr.bf16.mxu0 0
        %2505 = vmatpush1.bf16.msra.mxu0 %v2222
        %2506 = vmatprep.subr.bf16.mxu0 0
        %2507 = vmatpush1.bf16.msra.mxu0 %v2221
        %2508 = vmatprep.subr.bf16.mxu0 0
        %2509 = vmatpush1.bf16.msra.mxu0 %v2220
        %2510 = vmatprep.subr.bf16.mxu0 0
        %2511 = vmatpush1.bf16.msra.mxu0 %v2219
        %2512 = vmatprep.subr.bf16.mxu0 0
        %2513 = vmatpush1.bf16.msra.mxu0 %v2218
        %2514 = vmatprep.subr.bf16.mxu0 0
        %2515 = vmatpush2.bf16.msra.mxu0 %v2233
        %2516 = vmatprep.subr.bf16.mxu0 0
        %2517 = vmatpush2.bf16.msra.mxu0 %v2232
        %2518 = vmatprep.subr.bf16.mxu0 0
        %2519 = vmatpush2.bf16.msra.mxu0 %v2231
        %2520 = vmatprep.subr.bf16.mxu0 0
        %2521 = vmatpush2.bf16.msra.mxu0 %v2230
        %2522 = vmatprep.subr.bf16.mxu0 0
        %2523 = vmatpush2.bf16.msra.mxu0 %v2229
        %2524 = vmatprep.subr.bf16.mxu0 0
        %2525 = vmatpush2.bf16.msra.mxu0 %v2228
        %2526 = vmatprep.subr.bf16.mxu0 0
        %2527 = vmatpush2.bf16.msra.mxu0 %v2227
        %2528 = vmatprep.subr.bf16.mxu0 0
        %2529 = vmatpush2.bf16.msra.mxu0 %v2226
        %2530 = vmatprep.mubr.bf16.mxu0 %v1414
        %2531 = vmatmul.mubr.bf16.gmra.mxu0 %v1413
        %v2532 = vpop.f32.mrf.mxu0
        %v2533 = vadd.f32 %v2493, %v2532
        %v2534 = vpop.f32.mrf.mxu0
        %v2535 = vpop.f32.mrf.mxu0
        %v2536 = vpop.f32.mrf.mxu0
        %2537 = vdwg.mxu0
        %2538 = vmatprep.subr.bf16.mxu0 0
        %2539 = vmatpush1.bf16.msra.mxu0 %v2241
        %2540 = vmatprep.subr.bf16.mxu0 0
        %2541 = vmatpush1.bf16.msra.mxu0 %v2240
        %2542 = vmatprep.subr.bf16.mxu0 0
        %2543 = vmatpush1.bf16.msra.mxu0 %v2239
        %2544 = vmatprep.subr.bf16.mxu0 0
        %2545 = vmatpush1.bf16.msra.mxu0 %v2238
        %2546 = vmatprep.subr.bf16.mxu0 0
        %2547 = vmatpush1.bf16.msra.mxu0 %v2237
        %2548 = vmatprep.subr.bf16.mxu0 0
        %2549 = vmatpush1.bf16.msra.mxu0 %v2236
        %2550 = vmatprep.subr.bf16.mxu0 0
        %2551 = vmatpush1.bf16.msra.mxu0 %v2235
        %2552 = vmatprep.subr.bf16.mxu0 0
        %2553 = vmatpush1.bf16.msra.mxu0 %v2234
        %2554 = vmatprep.subr.bf16.mxu0 0
        %2555 = vmatpush2.bf16.msra.mxu0 %v2249
        %2556 = vmatprep.subr.bf16.mxu0 0
        %2557 = vmatpush2.bf16.msra.mxu0 %v2248
        %2558 = vmatprep.subr.bf16.mxu0 0
        %2559 = vmatpush2.bf16.msra.mxu0 %v2247
        %2560 = vmatprep.subr.bf16.mxu0 0
        %2561 = vmatpush2.bf16.msra.mxu0 %v2246
        %2562 = vmatprep.subr.bf16.mxu0 0
        %2563 = vmatpush2.bf16.msra.mxu0 %v2245
        %2564 = vmatprep.subr.bf16.mxu0 0
        %2565 = vmatpush2.bf16.msra.mxu0 %v2244
        %2566 = vmatprep.subr.bf16.mxu0 0
        %2567 = vmatpush2.bf16.msra.mxu0 %v2243
        %2568 = vmatprep.subr.bf16.mxu0 0
        %2569 = vmatpush2.bf16.msra.mxu0 %v2242
        %2570 = vmatprep.mubr.bf16.mxu0 %v1416
        %2571 = vmatmul.mubr.bf16.gmra.mxu0 %v1415
        %v2572 = vpop.f32.mrf.mxu0
        %v2573 = vadd.f32 %v2533, %v2572
        %v2574 = vpop.f32.mrf.mxu0
        %v2575 = vpop.f32.mrf.mxu0
        %v2576 = vpop.f32.mrf.mxu0
        %2577 = vdwg.mxu0
        %2578 = vmatprep.subr.bf16.mxu0 0
        %2579 = vmatpush1.bf16.msra.mxu0 %v2257
        %2580 = vmatprep.subr.bf16.mxu0 0
        %2581 = vmatpush1.bf16.msra.mxu0 %v2256
        %2582 = vmatprep.subr.bf16.mxu0 0
        %2583 = vmatpush1.bf16.msra.mxu0 %v2255
        %2584 = vmatprep.subr.bf16.mxu0 0
        %2585 = vmatpush1.bf16.msra.mxu0 %v2254
        %2586 = vmatprep.subr.bf16.mxu0 0
        %2587 = vmatpush1.bf16.msra.mxu0 %v2253
        %2588 = vmatprep.subr.bf16.mxu0 0
        %2589 = vmatpush1.bf16.msra.mxu0 %v2252
        %2590 = vmatprep.subr.bf16.mxu0 0
        %2591 = vmatpush1.bf16.msra.mxu0 %v2251
        %2592 = vmatprep.subr.bf16.mxu0 0
        %2593 = vmatpush1.bf16.msra.mxu0 %v2250
        %2594 = vmatprep.subr.bf16.mxu0 0
        %2595 = vmatpush2.bf16.msra.mxu0 %v2265
        %2596 = vmatprep.subr.bf16.mxu0 0
        %2597 = vmatpush2.bf16.msra.mxu0 %v2264
        %2598 = vmatprep.subr.bf16.mxu0 0
        %2599 = vmatpush2.bf16.msra.mxu0 %v2263
        %2600 = vmatprep.subr.bf16.mxu0 0
        %2601 = vmatpush2.bf16.msra.mxu0 %v2262
        %2602 = vmatprep.subr.bf16.mxu0 0
        %2603 = vmatpush2.bf16.msra.mxu0 %v2261
        %2604 = vmatprep.subr.bf16.mxu0 0
        %2605 = vmatpush2.bf16.msra.mxu0 %v2260
        %2606 = vmatprep.subr.bf16.mxu0 0
        %2607 = vmatpush2.bf16.msra.mxu0 %v2259
        %2608 = vmatprep.subr.bf16.mxu0 0
        %2609 = vmatpush2.bf16.msra.mxu0 %v2258
        %2610 = vmatprep.mubr.bf16.mxu0 %v1418
        %2611 = vmatmul.mubr.bf16.gmra.mxu0 %v1417
        %v2612 = vpop.f32.mrf.mxu0
        %v2613 = vadd.f32 %v2573, %v2612
        %v2614 = vpop.f32.mrf.mxu0
        %v2615 = vpop.f32.mrf.mxu0
        %v2616 = vpop.f32.mrf.mxu0
        %2617 = vdwg.mxu0
        %2618 = vmatprep.subr.bf16.mxu0 0
        %2619 = vmatpush1.bf16.msra.mxu0 %v2273
        %2620 = vmatprep.subr.bf16.mxu0 0
        %2621 = vmatpush1.bf16.msra.mxu0 %v2272
        %2622 = vmatprep.subr.bf16.mxu0 0
        %2623 = vmatpush1.bf16.msra.mxu0 %v2271
        %2624 = vmatprep.subr.bf16.mxu0 0
        %2625 = vmatpush1.bf16.msra.mxu0 %v2270
        %2626 = vmatprep.subr.bf16.mxu0 0
        %2627 = vmatpush1.bf16.msra.mxu0 %v2269
        %2628 = vmatprep.subr.bf16.mxu0 0
        %2629 = vmatpush1.bf16.msra.mxu0 %v2268
        %2630 = vmatprep.subr.bf16.mxu0 0
        %2631 = vmatpush1.bf16.msra.mxu0 %v2267
        %2632 = vmatprep.subr.bf16.mxu0 0
        %2633 = vmatpush1.bf16.msra.mxu0 %v2266
        %2634 = vmatprep.subr.bf16.mxu0 0
        %2635 = vmatpush2.bf16.msra.mxu0 %v2281
        %2636 = vmatprep.subr.bf16.mxu0 0
        %2637 = vmatpush2.bf16.msra.mxu0 %v2280
        %2638 = vmatprep.subr.bf16.mxu0 0
        %2639 = vmatpush2.bf16.msra.mxu0 %v2279
        %2640 = vmatprep.subr.bf16.mxu0 0
        %2641 = vmatpush2.bf16.msra.mxu0 %v2278
        %2642 = vmatprep.subr.bf16.mxu0 0
        %2643 = vmatpush2.bf16.msra.mxu0 %v2277
        %2644 = vmatprep.subr.bf16.mxu0 0
        %2645 = vmatpush2.bf16.msra.mxu0 %v2276
        %2646 = vmatprep.subr.bf16.mxu0 0
        %2647 = vmatpush2.bf16.msra.mxu0 %v2275
        %2648 = vmatprep.subr.bf16.mxu0 0
        %2649 = vmatpush2.bf16.msra.mxu0 %v2274
        %2650 = vmatprep.mubr.bf16.mxu0 %v1420
        %2651 = vmatmul.mubr.bf16.gmra.mxu0 %v1419
        %v2652 = vpop.f32.mrf.mxu0
        %v2653 = vadd.f32 %v2613, %v2652
        %v2654 = vpop.f32.mrf.mxu0
        %v2655 = vpop.f32.mrf.mxu0
        %v2656 = vpop.f32.mrf.mxu0
        %2657 = vdwg.mxu0
        %2658 = vmatprep.subr.bf16.mxu0 0
        %2659 = vmatpush1.bf16.msra.mxu0 %v2289
        %2660 = vmatprep.subr.bf16.mxu0 0
        %2661 = vmatpush1.bf16.msra.mxu0 %v2288
        %2662 = vmatprep.subr.bf16.mxu0 0
        %2663 = vmatpush1.bf16.msra.mxu0 %v2287
        %2664 = vmatprep.subr.bf16.mxu0 0
        %2665 = vmatpush1.bf16.msra.mxu0 %v2286
        %2666 = vmatprep.subr.bf16.mxu0 0
        %2667 = vmatpush1.bf16.msra.mxu0 %v2285
        %2668 = vmatprep.subr.bf16.mxu0 0
        %2669 = vmatpush1.bf16.msra.mxu0 %v2284
        %2670 = vmatprep.subr.bf16.mxu0 0
        %2671 = vmatpush1.bf16.msra.mxu0 %v2283
        %2672 = vmatprep.subr.bf16.mxu0 0
        %2673 = vmatpush1.bf16.msra.mxu0 %v2282
        %2674 = vmatprep.subr.bf16.mxu0 0
        %2675 = vmatpush2.bf16.msra.mxu0 %v2297
        %2676 = vmatprep.subr.bf16.mxu0 0
        %2677 = vmatpush2.bf16.msra.mxu0 %v2296
        %2678 = vmatprep.subr.bf16.mxu0 0
        %2679 = vmatpush2.bf16.msra.mxu0 %v2295
        %2680 = vmatprep.subr.bf16.mxu0 0
        %2681 = vmatpush2.bf16.msra.mxu0 %v2294
        %2682 = vmatprep.subr.bf16.mxu0 0
        %2683 = vmatpush2.bf16.msra.mxu0 %v2293
        %2684 = vmatprep.subr.bf16.mxu0 0
        %2685 = vmatpush2.bf16.msra.mxu0 %v2292
        %2686 = vmatprep.subr.bf16.mxu0 0
        %2687 = vmatpush2.bf16.msra.mxu0 %v2291
        %2688 = vmatprep.subr.bf16.mxu0 0
        %2689 = vmatpush2.bf16.msra.mxu0 %v2290
        %2690 = vmatprep.mubr.bf16.mxu0 %v1422
        %2691 = vmatmul.mubr.bf16.gmra.mxu0 %v1421
        %v2692 = vpop.f32.mrf.mxu0
        %v2693 = vadd.f32 %v2653, %v2692
        %v2694 = vpop.f32.mrf.mxu0
        %v2695 = vpop.f32.mrf.mxu0
        %v2696 = vpop.f32.mrf.mxu0
        %2697 = vdwg.mxu0
        %2698 = vmatprep.subr.bf16.mxu0 0
        %2699 = vmatpush1.bf16.msra.mxu0 %v2305
        %2700 = vmatprep.subr.bf16.mxu0 0
        %2701 = vmatpush1.bf16.msra.mxu0 %v2304
        %2702 = vmatprep.subr.bf16.mxu0 0
        %2703 = vmatpush1.bf16.msra.mxu0 %v2303
        %2704 = vmatprep.subr.bf16.mxu0 0
        %2705 = vmatpush1.bf16.msra.mxu0 %v2302
        %2706 = vmatprep.subr.bf16.mxu0 0
        %2707 = vmatpush1.bf16.msra.mxu0 %v2301
        %2708 = vmatprep.subr.bf16.mxu0 0
        %2709 = vmatpush1.bf16.msra.mxu0 %v2300
        %2710 = vmatprep.subr.bf16.mxu0 0
        %2711 = vmatpush1.bf16.msra.mxu0 %v2299
        %2712 = vmatprep.subr.bf16.mxu0 0
        %2713 = vmatpush1.bf16.msra.mxu0 %v2298
        %2714 = vmatprep.subr.bf16.mxu0 0
        %2715 = vmatpush2.bf16.msra.mxu0 %v2313
        %2716 = vmatprep.subr.bf16.mxu0 0
        %2717 = vmatpush2.bf16.msra.mxu0 %v2312
        %2718 = vmatprep.subr.bf16.mxu0 0
        %2719 = vmatpush2.bf16.msra.mxu0 %v2311
        %2720 = vmatprep.subr.bf16.mxu0 0
        %2721 = vmatpush2.bf16.msra.mxu0 %v2310
        %2722 = vmatprep.subr.bf16.mxu0 0
        %2723 = vmatpush2.bf16.msra.mxu0 %v2309
        %2724 = vmatprep.subr.bf16.mxu0 0
        %2725 = vmatpush2.bf16.msra.mxu0 %v2308
        %2726 = vmatprep.subr.bf16.mxu0 0
        %2727 = vmatpush2.bf16.msra.mxu0 %v2307
        %2728 = vmatprep.subr.bf16.mxu0 0
        %2729 = vmatpush2.bf16.msra.mxu0 %v2306
        %2730 = vmatprep.mubr.bf16.mxu0 %v1424
        %2731 = vmatmul.mubr.bf16.gmra.mxu0 %v1423
        %v2732 = vpop.f32.mrf.mxu0
        %v2733 = vadd.f32 %v2693, %v2732
        %v2734 = vpop.f32.mrf.mxu0
        %v2735 = vpop.f32.mrf.mxu0
        %v2736 = vpop.f32.mrf.mxu0
        %2737 = vdwg.mxu0
        %2738 = vmatprep.subr.bf16.mxu0 0
        %2739 = vmatpush1.bf16.msra.mxu0 %v2321
        %2740 = vmatprep.subr.bf16.mxu0 0
        %2741 = vmatpush1.bf16.msra.mxu0 %v2320
        %2742 = vmatprep.subr.bf16.mxu0 0
        %2743 = vmatpush1.bf16.msra.mxu0 %v2319
        %2744 = vmatprep.subr.bf16.mxu0 0
        %2745 = vmatpush1.bf16.msra.mxu0 %v2318
        %2746 = vmatprep.subr.bf16.mxu0 0
        %2747 = vmatpush1.bf16.msra.mxu0 %v2317
        %2748 = vmatprep.subr.bf16.mxu0 0
        %2749 = vmatpush1.bf16.msra.mxu0 %v2316
        %2750 = vmatprep.subr.bf16.mxu0 0
        %2751 = vmatpush1.bf16.msra.mxu0 %v2315
        %2752 = vmatprep.subr.bf16.mxu0 0
        %2753 = vmatpush1.bf16.msra.mxu0 %v2314
        %2754 = vmatprep.subr.bf16.mxu0 0
        %2755 = vmatpush2.bf16.msra.mxu0 %v2329
        %2756 = vmatprep.subr.bf16.mxu0 0
        %2757 = vmatpush2.bf16.msra.mxu0 %v2328
        %2758 = vmatprep.subr.bf16.mxu0 0
        %2759 = vmatpush2.bf16.msra.mxu0 %v2327
        %2760 = vmatprep.subr.bf16.mxu0 0
        %2761 = vmatpush2.bf16.msra.mxu0 %v2326
        %2762 = vmatprep.subr.bf16.mxu0 0
        %2763 = vmatpush2.bf16.msra.mxu0 %v2325
        %2764 = vmatprep.subr.bf16.mxu0 0
        %2765 = vmatpush2.bf16.msra.mxu0 %v2324
        %2766 = vmatprep.subr.bf16.mxu0 0
        %2767 = vmatpush2.bf16.msra.mxu0 %v2323
        %2768 = vmatprep.subr.bf16.mxu0 0
        %2769 = vmatpush2.bf16.msra.mxu0 %v2322
        %2770 = vmatprep.mubr.bf16.mxu0 %v1426
        %2771 = vmatmul.mubr.bf16.gmra.mxu0 %v1425
        %v2772 = vpop.f32.mrf.mxu0
        %v2773 = vadd.f32 %v2733, %v2772
        %v2774 = vpop.f32.mrf.mxu0
        %v2775 = vpop.f32.mrf.mxu0
        %v2776 = vpop.f32.mrf.mxu0
        %2777 = vdwg.mxu0
        %v2778 = vmax.f32 %v2773, 0.0
        %v2779 = vpack.c.bf16 %v2778, %v2778
        %v2780 = vld [vmem:[#allocation8] sm:$0xff]
        %v2781 = vld [vmem:[#allocation8 + $0x8] sm:$0xff]
        %v2782 = vld [vmem:[#allocation8 + $0x10] sm:$0xff]
        %v2783 = vld [vmem:[#allocation8 + $0x18] sm:$0xff]
        %v2784 = vld [vmem:[#allocation8 + $0x20] sm:$0xff]
        %v2785 = vld [vmem:[#allocation8 + $0x28] sm:$0xff]
        %v2786 = vld [vmem:[#allocation8 + $0x30] sm:$0xff]
        %v2787 = vld [vmem:[#allocation8 + $0x38] sm:$0xff]
        %v2788 = vld [vmem:[#allocation8 + $0x40] sm:$0xff]
        %v2789 = vld [vmem:[#allocation8 + $0x48] sm:$0xff]
        %v2790 = vld [vmem:[#allocation8 + $0x50] sm:$0xff]
        %v2791 = vld [vmem:[#allocation8 + $0x58] sm:$0xff]
        %v2792 = vld [vmem:[#allocation8 + $0x60] sm:$0xff]
        %v2793 = vld [vmem:[#allocation8 + $0x68] sm:$0xff]
        %v2794 = vld [vmem:[#allocation8 + $0x70] sm:$0xff]
        %v2795 = vld [vmem:[#allocation8 + $0x78] sm:$0xff]
        %v2796 = vld [vmem:[#allocation8 + $0x80] sm:$0xff]
        %v2797 = vld [vmem:[#allocation8 + $0x88] sm:$0xff]
        %v2798 = vld [vmem:[#allocation8 + $0x90] sm:$0xff]
        %v2799 = vld [vmem:[#allocation8 + $0x98] sm:$0xff]
        %v2800 = vld [vmem:[#allocation8 + $0xa0] sm:$0xff]
        %v2801 = vld [vmem:[#allocation8 + $0xa8] sm:$0xff]
        %v2802 = vld [vmem:[#allocation8 + $0xb0] sm:$0xff]
        %v2803 = vld [vmem:[#allocation8 + $0xb8] sm:$0xff]
        %v2804 = vld [vmem:[#allocation8 + $0xc0] sm:$0xff]
        %v2805 = vld [vmem:[#allocation8 + $0xc8] sm:$0xff]
        %v2806 = vld [vmem:[#allocation8 + $0xd0] sm:$0xff]
        %v2807 = vld [vmem:[#allocation8 + $0xd8] sm:$0xff]
        %v2808 = vld [vmem:[#allocation8 + $0xe0] sm:$0xff]
        %v2809 = vld [vmem:[#allocation8 + $0xe8] sm:$0xff]
        %v2810 = vld [vmem:[#allocation8 + $0xf0] sm:$0xff]
        %v2811 = vld [vmem:[#allocation8 + $0xf8] sm:$0xff]
        %v2812 = vld [vmem:[#allocation8 + $0x100] sm:$0xff]
        %v2813 = vld [vmem:[#allocation8 + $0x108] sm:$0xff]
        %v2814 = vld [vmem:[#allocation8 + $0x110] sm:$0xff]
        %v2815 = vld [vmem:[#allocation8 + $0x118] sm:$0xff]
        %v2816 = vld [vmem:[#allocation8 + $0x120] sm:$0xff]
        %v2817 = vld [vmem:[#allocation8 + $0x128] sm:$0xff]
        %v2818 = vld [vmem:[#allocation8 + $0x130] sm:$0xff]
        %v2819 = vld [vmem:[#allocation8 + $0x138] sm:$0xff]
        %v2820 = vld [vmem:[#allocation8 + $0x140] sm:$0xff]
        %v2821 = vld [vmem:[#allocation8 + $0x148] sm:$0xff]
        %v2822 = vld [vmem:[#allocation8 + $0x150] sm:$0xff]
        %v2823 = vld [vmem:[#allocation8 + $0x158] sm:$0xff]
        %v2824 = vld [vmem:[#allocation8 + $0x160] sm:$0xff]
        %v2825 = vld [vmem:[#allocation8 + $0x168] sm:$0xff]
        %v2826 = vld [vmem:[#allocation8 + $0x170] sm:$0xff]
        %v2827 = vld [vmem:[#allocation8 + $0x178] sm:$0xff]
        %v2828 = vld [vmem:[#allocation8 + $0x180] sm:$0xff]
        %v2829 = vld [vmem:[#allocation8 + $0x188] sm:$0xff]
        %v2830 = vld [vmem:[#allocation8 + $0x190] sm:$0xff]
        %v2831 = vld [vmem:[#allocation8 + $0x198] sm:$0xff]
        %v2832 = vld [vmem:[#allocation8 + $0x1a0] sm:$0xff]
        %v2833 = vld [vmem:[#allocation8 + $0x1a8] sm:$0xff]
        %v2834 = vld [vmem:[#allocation8 + $0x1b0] sm:$0xff]
        %v2835 = vld [vmem:[#allocation8 + $0x1b8] sm:$0xff]
        %v2836 = vld [vmem:[#allocation8 + $0x1c0] sm:$0xff]
        %v2837 = vld [vmem:[#allocation8 + $0x1c8] sm:$0xff]
        %v2838 = vld [vmem:[#allocation8 + $0x1d0] sm:$0xff]
        %v2839 = vld [vmem:[#allocation8 + $0x1d8] sm:$0xff]
        %v2840 = vld [vmem:[#allocation8 + $0x1e0] sm:$0xff]
        %v2841 = vld [vmem:[#allocation8 + $0x1e8] sm:$0xff]
        %v2842 = vld [vmem:[#allocation8 + $0x1f0] sm:$0xff]
        %v2843 = vld [vmem:[#allocation8 + $0x1f8] sm:$0xff]
        %v2844 = vld [vmem:[#allocation8 + $0x200] sm:$0xff]
        %v2845 = vld [vmem:[#allocation8 + $0x208] sm:$0xff]
        %v2846 = vld [vmem:[#allocation8 + $0x210] sm:$0xff]
        %v2847 = vld [vmem:[#allocation8 + $0x218] sm:$0xff]
        %v2848 = vld [vmem:[#allocation8 + $0x220] sm:$0xff]
        %v2849 = vld [vmem:[#allocation8 + $0x228] sm:$0xff]
        %v2850 = vld [vmem:[#allocation8 + $0x230] sm:$0xff]
        %v2851 = vld [vmem:[#allocation8 + $0x238] sm:$0xff]
        %v2852 = vld [vmem:[#allocation8 + $0x240] sm:$0xff]
        %v2853 = vld [vmem:[#allocation8 + $0x248] sm:$0xff]
        %v2854 = vld [vmem:[#allocation8 + $0x250] sm:$0xff]
        %v2855 = vld [vmem:[#allocation8 + $0x258] sm:$0xff]
        %v2856 = vld [vmem:[#allocation8 + $0x260] sm:$0xff]
        %v2857 = vld [vmem:[#allocation8 + $0x268] sm:$0xff]
        %v2858 = vld [vmem:[#allocation8 + $0x270] sm:$0xff]
        %v2859 = vld [vmem:[#allocation8 + $0x278] sm:$0xff]
        %v2860 = vld [vmem:[#allocation8 + $0x280] sm:$0xff]
        %v2861 = vld [vmem:[#allocation8 + $0x288] sm:$0xff]
        %v2862 = vld [vmem:[#allocation8 + $0x290] sm:$0xff]
        %v2863 = vld [vmem:[#allocation8 + $0x298] sm:$0xff]
        %v2864 = vld [vmem:[#allocation8 + $0x2a0] sm:$0xff]
        %v2865 = vld [vmem:[#allocation8 + $0x2a8] sm:$0xff]
        %v2866 = vld [vmem:[#allocation8 + $0x2b0] sm:$0xff]
        %v2867 = vld [vmem:[#allocation8 + $0x2b8] sm:$0xff]
        %v2868 = vld [vmem:[#allocation8 + $0x2c0] sm:$0xff]
        %v2869 = vld [vmem:[#allocation8 + $0x2c8] sm:$0xff]
        %v2870 = vld [vmem:[#allocation8 + $0x2d0] sm:$0xff]
        %v2871 = vld [vmem:[#allocation8 + $0x2d8] sm:$0xff]
        %v2872 = vld [vmem:[#allocation8 + $0x2e0] sm:$0xff]
        %v2873 = vld [vmem:[#allocation8 + $0x2e8] sm:$0xff]
        %v2874 = vld [vmem:[#allocation8 + $0x2f0] sm:$0xff]
        %v2875 = vld [vmem:[#allocation8 + $0x2f8] sm:$0xff]
        %v2876 = vld [vmem:[#allocation8 + $0x300] sm:$0xff]
        %v2877 = vld [vmem:[#allocation8 + $0x308] sm:$0xff]
        %v2878 = vld [vmem:[#allocation8 + $0x310] sm:$0xff]
        %v2879 = vld [vmem:[#allocation8 + $0x318] sm:$0xff]
        %v2880 = vld [vmem:[#allocation8 + $0x320] sm:$0xff]
        %v2881 = vld [vmem:[#allocation8 + $0x328] sm:$0xff]
        %v2882 = vld [vmem:[#allocation8 + $0x330] sm:$0xff]
        %v2883 = vld [vmem:[#allocation8 + $0x338] sm:$0xff]
        %v2884 = vld [vmem:[#allocation8 + $0x340] sm:$0xff]
        %v2885 = vld [vmem:[#allocation8 + $0x348] sm:$0xff]
        %v2886 = vld [vmem:[#allocation8 + $0x350] sm:$0xff]
        %v2887 = vld [vmem:[#allocation8 + $0x358] sm:$0xff]
        %v2888 = vld [vmem:[#allocation8 + $0x360] sm:$0xff]
        %v2889 = vld [vmem:[#allocation8 + $0x368] sm:$0xff]
        %v2890 = vld [vmem:[#allocation8 + $0x370] sm:$0xff]
        %v2891 = vld [vmem:[#allocation8 + $0x378] sm:$0xff]
        %v2892 = vld [vmem:[#allocation8 + $0x380] sm:$0xff]
        %v2893 = vld [vmem:[#allocation8 + $0x388] sm:$0xff]
        %v2894 = vld [vmem:[#allocation8 + $0x390] sm:$0xff]
        %v2895 = vld [vmem:[#allocation8 + $0x398] sm:$0xff]
        %v2896 = vld [vmem:[#allocation8 + $0x3a0] sm:$0xff]
        %v2897 = vld [vmem:[#allocation8 + $0x3a8] sm:$0xff]
        %v2898 = vld [vmem:[#allocation8 + $0x3b0] sm:$0xff]
        %v2899 = vld [vmem:[#allocation8 + $0x3b8] sm:$0xff]
        %v2900 = vld [vmem:[#allocation8 + $0x3c0] sm:$0xff]
        %v2901 = vld [vmem:[#allocation8 + $0x3c8] sm:$0xff]
        %v2902 = vld [vmem:[#allocation8 + $0x3d0] sm:$0xff]
        %v2903 = vld [vmem:[#allocation8 + $0x3d8] sm:$0xff]
        %v2904 = vld [vmem:[#allocation8 + $0x3e0] sm:$0xff]
        %v2905 = vld [vmem:[#allocation8 + $0x3e8] sm:$0xff]
        %v2906 = vld [vmem:[#allocation8 + $0x3f0] sm:$0xff]
        %v2907 = vld [vmem:[#allocation8 + $0x3f8] sm:$0xff]
        %v2908 = vld [vmem:[#allocation9] sm:$0xff]
        %v2909 = vld [vmem:[#allocation9 + $0x8] sm:$0xff]
        %v2912 = vlaneseq
        %v2913 = vshrl.u32 %v2912, 7
        %v2914 = vsub.s32 0, %v2913
        %v2915 = vrot.slane %v2908, %v2914
        %v2916 = vlaneseq
        %v2917 = vshrl.u32 %v2916, 7
        %v2918 = vsub.s32 1, %v2917
        %v2919 = vrot.slane %v2908, %v2918
        %v2920 = vlaneseq
        %v2921 = vshrl.u32 %v2920, 7
        %v2922 = vsub.s32 2, %v2921
        %v2923 = vrot.slane %v2908, %v2922
        %v2924 = vlaneseq
        %v2925 = vshrl.u32 %v2924, 7
        %v2926 = vsub.s32 3, %v2925
        %v2927 = vrot.slane %v2908, %v2926
        %v2928 = vlaneseq
        %v2929 = vshrl.u32 %v2928, 7
        %v2930 = vsub.s32 4, %v2929
        %v2931 = vrot.slane %v2908, %v2930
        %v2932 = vlaneseq
        %v2933 = vshrl.u32 %v2932, 7
        %v2934 = vsub.s32 5, %v2933
        %v2935 = vrot.slane %v2908, %v2934
        %v2936 = vlaneseq
        %v2937 = vshrl.u32 %v2936, 7
        %v2938 = vsub.s32 6, %v2937
        %v2939 = vrot.slane %v2908, %v2938
        %v2940 = vlaneseq
        %v2941 = vshrl.u32 %v2940, 7
        %v2942 = vsub.s32 7, %v2941
        %v2943 = vrot.slane %v2908, %v2942
        %v2944 = vlaneseq
        %v2945 = vshrl.u32 %v2944, 7
        %v2946 = vsub.s32 0, %v2945
        %v2947 = vrot.slane %v2909, %v2946
        %v2948 = vlaneseq
        %v2949 = vshrl.u32 %v2948, 7
        %v2950 = vsub.s32 1, %v2949
        %v2951 = vrot.slane %v2909, %v2950
        %v2952 = vlaneseq
        %v2953 = vshrl.u32 %v2952, 7
        %v2954 = vsub.s32 2, %v2953
        %v2955 = vrot.slane %v2909, %v2954
        %v2956 = vlaneseq
        %v2957 = vshrl.u32 %v2956, 7
        %v2958 = vsub.s32 3, %v2957
        %v2959 = vrot.slane %v2909, %v2958
        %v2960 = vlaneseq
        %v2961 = vshrl.u32 %v2960, 7
        %v2962 = vsub.s32 4, %v2961
        %v2963 = vrot.slane %v2909, %v2962
        %v2964 = vlaneseq
        %v2965 = vshrl.u32 %v2964, 7
        %v2966 = vsub.s32 5, %v2965
        %v2967 = vrot.slane %v2909, %v2966
        %v2968 = vlaneseq
        %v2969 = vshrl.u32 %v2968, 7
        %v2970 = vsub.s32 6, %v2969
        %v2971 = vrot.slane %v2909, %v2970
        %v2972 = vlaneseq
        %v2973 = vshrl.u32 %v2972, 7
        %v2974 = vsub.s32 7, %v2973
        %v2975 = vrot.slane %v2909, %v2974
        %v3120 = vunpack.c.l.b16 %v2780
        %v3121 = vunpack.c.h.b16 %v2780
        %v3122 = vunpack.c.l.b16 %v2781
        %v3123 = vunpack.c.h.b16 %v2781
        %v3124 = vunpack.c.l.b16 %v2782
        %v3125 = vunpack.c.h.b16 %v2782
        %v3126 = vunpack.c.l.b16 %v2783
        %v3127 = vunpack.c.h.b16 %v2783
        %v3128 = vunpack.c.l.b16 %v2784
        %v3129 = vunpack.c.h.b16 %v2784
        %v3130 = vunpack.c.l.b16 %v2785
        %v3131 = vunpack.c.h.b16 %v2785
        %v3132 = vunpack.c.l.b16 %v2786
        %v3133 = vunpack.c.h.b16 %v2786
        %v3134 = vunpack.c.l.b16 %v2787
        %v3135 = vunpack.c.h.b16 %v2787
        %v3136 = vunpack.c.l.b16 %v2788
        %v3137 = vunpack.c.h.b16 %v2788
        %v3138 = vunpack.c.l.b16 %v2789
        %v3139 = vunpack.c.h.b16 %v2789
        %v3140 = vunpack.c.l.b16 %v2790
        %v3141 = vunpack.c.h.b16 %v2790
        %v3142 = vunpack.c.l.b16 %v2791
        %v3143 = vunpack.c.h.b16 %v2791
        %v3144 = vunpack.c.l.b16 %v2792
        %v3145 = vunpack.c.h.b16 %v2792
        %v3146 = vunpack.c.l.b16 %v2793
        %v3147 = vunpack.c.h.b16 %v2793
        %v3148 = vunpack.c.l.b16 %v2794
        %v3149 = vunpack.c.h.b16 %v2794
        %v3150 = vunpack.c.l.b16 %v2795
        %v3151 = vunpack.c.h.b16 %v2795
        %v3152 = vunpack.c.l.b16 %v2796
        %v3153 = vunpack.c.h.b16 %v2796
        %v3154 = vunpack.c.l.b16 %v2797
        %v3155 = vunpack.c.h.b16 %v2797
        %v3156 = vunpack.c.l.b16 %v2798
        %v3157 = vunpack.c.h.b16 %v2798
        %v3158 = vunpack.c.l.b16 %v2799
        %v3159 = vunpack.c.h.b16 %v2799
        %v3160 = vunpack.c.l.b16 %v2800
        %v3161 = vunpack.c.h.b16 %v2800
        %v3162 = vunpack.c.l.b16 %v2801
        %v3163 = vunpack.c.h.b16 %v2801
        %v3164 = vunpack.c.l.b16 %v2802
        %v3165 = vunpack.c.h.b16 %v2802
        %v3166 = vunpack.c.l.b16 %v2803
        %v3167 = vunpack.c.h.b16 %v2803
        %v3168 = vunpack.c.l.b16 %v2804
        %v3169 = vunpack.c.h.b16 %v2804
        %v3170 = vunpack.c.l.b16 %v2805
        %v3171 = vunpack.c.h.b16 %v2805
        %v3172 = vunpack.c.l.b16 %v2806
        %v3173 = vunpack.c.h.b16 %v2806
        %v3174 = vunpack.c.l.b16 %v2807
        %v3175 = vunpack.c.h.b16 %v2807
        %v3176 = vunpack.c.l.b16 %v2808
        %v3177 = vunpack.c.h.b16 %v2808
        %v3178 = vunpack.c.l.b16 %v2809
        %v3179 = vunpack.c.h.b16 %v2809
        %v3180 = vunpack.c.l.b16 %v2810
        %v3181 = vunpack.c.h.b16 %v2810
        %v3182 = vunpack.c.l.b16 %v2811
        %v3183 = vunpack.c.h.b16 %v2811
        %v3184 = vunpack.c.l.b16 %v2812
        %v3185 = vunpack.c.h.b16 %v2812
        %v3186 = vunpack.c.l.b16 %v2813
        %v3187 = vunpack.c.h.b16 %v2813
        %v3188 = vunpack.c.l.b16 %v2814
        %v3189 = vunpack.c.h.b16 %v2814
        %v3190 = vunpack.c.l.b16 %v2815
        %v3191 = vunpack.c.h.b16 %v2815
        %v3192 = vunpack.c.l.b16 %v2816
        %v3193 = vunpack.c.h.b16 %v2816
        %v3194 = vunpack.c.l.b16 %v2817
        %v3195 = vunpack.c.h.b16 %v2817
        %v3196 = vunpack.c.l.b16 %v2818
        %v3197 = vunpack.c.h.b16 %v2818
        %v3198 = vunpack.c.l.b16 %v2819
        %v3199 = vunpack.c.h.b16 %v2819
        %v3200 = vunpack.c.l.b16 %v2820
        %v3201 = vunpack.c.h.b16 %v2820
        %v3202 = vunpack.c.l.b16 %v2821
        %v3203 = vunpack.c.h.b16 %v2821
        %v3204 = vunpack.c.l.b16 %v2822
        %v3205 = vunpack.c.h.b16 %v2822
        %v3206 = vunpack.c.l.b16 %v2823
        %v3207 = vunpack.c.h.b16 %v2823
        %v3208 = vunpack.c.l.b16 %v2824
        %v3209 = vunpack.c.h.b16 %v2824
        %v3210 = vunpack.c.l.b16 %v2825
        %v3211 = vunpack.c.h.b16 %v2825
        %v3212 = vunpack.c.l.b16 %v2826
        %v3213 = vunpack.c.h.b16 %v2826
        %v3214 = vunpack.c.l.b16 %v2827
        %v3215 = vunpack.c.h.b16 %v2827
        %v3216 = vunpack.c.l.b16 %v2828
        %v3217 = vunpack.c.h.b16 %v2828
        %v3218 = vunpack.c.l.b16 %v2829
        %v3219 = vunpack.c.h.b16 %v2829
        %v3220 = vunpack.c.l.b16 %v2830
        %v3221 = vunpack.c.h.b16 %v2830
        %v3222 = vunpack.c.l.b16 %v2831
        %v3223 = vunpack.c.h.b16 %v2831
        %v3224 = vunpack.c.l.b16 %v2832
        %v3225 = vunpack.c.h.b16 %v2832
        %v3226 = vunpack.c.l.b16 %v2833
        %v3227 = vunpack.c.h.b16 %v2833
        %v3228 = vunpack.c.l.b16 %v2834
        %v3229 = vunpack.c.h.b16 %v2834
        %v3230 = vunpack.c.l.b16 %v2835
        %v3231 = vunpack.c.h.b16 %v2835
        %v3232 = vunpack.c.l.b16 %v2836
        %v3233 = vunpack.c.h.b16 %v2836
        %v3234 = vunpack.c.l.b16 %v2837
        %v3235 = vunpack.c.h.b16 %v2837
        %v3236 = vunpack.c.l.b16 %v2838
        %v3237 = vunpack.c.h.b16 %v2838
        %v3238 = vunpack.c.l.b16 %v2839
        %v3239 = vunpack.c.h.b16 %v2839
        %v3240 = vunpack.c.l.b16 %v2840
        %v3241 = vunpack.c.h.b16 %v2840
        %v3242 = vunpack.c.l.b16 %v2841
        %v3243 = vunpack.c.h.b16 %v2841
        %v3244 = vunpack.c.l.b16 %v2842
        %v3245 = vunpack.c.h.b16 %v2842
        %v3246 = vunpack.c.l.b16 %v2843
        %v3247 = vunpack.c.h.b16 %v2843
        %v3248 = vunpack.c.l.b16 %v2844
        %v3249 = vunpack.c.h.b16 %v2844
        %v3250 = vunpack.c.l.b16 %v2845
        %v3251 = vunpack.c.h.b16 %v2845
        %v3252 = vunpack.c.l.b16 %v2846
        %v3253 = vunpack.c.h.b16 %v2846
        %v3254 = vunpack.c.l.b16 %v2847
        %v3255 = vunpack.c.h.b16 %v2847
        %v3256 = vunpack.c.l.b16 %v2848
        %v3257 = vunpack.c.h.b16 %v2848
        %v3258 = vunpack.c.l.b16 %v2849
        %v3259 = vunpack.c.h.b16 %v2849
        %v3260 = vunpack.c.l.b16 %v2850
        %v3261 = vunpack.c.h.b16 %v2850
        %v3262 = vunpack.c.l.b16 %v2851
        %v3263 = vunpack.c.h.b16 %v2851
        %v3264 = vunpack.c.l.b16 %v2852
        %v3265 = vunpack.c.h.b16 %v2852
        %v3266 = vunpack.c.l.b16 %v2853
        %v3267 = vunpack.c.h.b16 %v2853
        %v3268 = vunpack.c.l.b16 %v2854
        %v3269 = vunpack.c.h.b16 %v2854
        %v3270 = vunpack.c.l.b16 %v2855
        %v3271 = vunpack.c.h.b16 %v2855
        %v3272 = vunpack.c.l.b16 %v2856
        %v3273 = vunpack.c.h.b16 %v2856
        %v3274 = vunpack.c.l.b16 %v2857
        %v3275 = vunpack.c.h.b16 %v2857
        %v3276 = vunpack.c.l.b16 %v2858
        %v3277 = vunpack.c.h.b16 %v2858
        %v3278 = vunpack.c.l.b16 %v2859
        %v3279 = vunpack.c.h.b16 %v2859
        %v3280 = vunpack.c.l.b16 %v2860
        %v3281 = vunpack.c.h.b16 %v2860
        %v3282 = vunpack.c.l.b16 %v2861
        %v3283 = vunpack.c.h.b16 %v2861
        %v3284 = vunpack.c.l.b16 %v2862
        %v3285 = vunpack.c.h.b16 %v2862
        %v3286 = vunpack.c.l.b16 %v2863
        %v3287 = vunpack.c.h.b16 %v2863
        %v3288 = vunpack.c.l.b16 %v2864
        %v3289 = vunpack.c.h.b16 %v2864
        %v3290 = vunpack.c.l.b16 %v2865
        %v3291 = vunpack.c.h.b16 %v2865
        %v3292 = vunpack.c.l.b16 %v2866
        %v3293 = vunpack.c.h.b16 %v2866
        %v3294 = vunpack.c.l.b16 %v2867
        %v3295 = vunpack.c.h.b16 %v2867
        %v3296 = vunpack.c.l.b16 %v2868
        %v3297 = vunpack.c.h.b16 %v2868
        %v3298 = vunpack.c.l.b16 %v2869
        %v3299 = vunpack.c.h.b16 %v2869
        %v3300 = vunpack.c.l.b16 %v2870
        %v3301 = vunpack.c.h.b16 %v2870
        %v3302 = vunpack.c.l.b16 %v2871
        %v3303 = vunpack.c.h.b16 %v2871
        %v3304 = vunpack.c.l.b16 %v2872
        %v3305 = vunpack.c.h.b16 %v2872
        %v3306 = vunpack.c.l.b16 %v2873
        %v3307 = vunpack.c.h.b16 %v2873
        %v3308 = vunpack.c.l.b16 %v2874
        %v3309 = vunpack.c.h.b16 %v2874
        %v3310 = vunpack.c.l.b16 %v2875
        %v3311 = vunpack.c.h.b16 %v2875
        %v3312 = vunpack.c.l.b16 %v2876
        %v3313 = vunpack.c.h.b16 %v2876
        %v3314 = vunpack.c.l.b16 %v2877
        %v3315 = vunpack.c.h.b16 %v2877
        %v3316 = vunpack.c.l.b16 %v2878
        %v3317 = vunpack.c.h.b16 %v2878
        %v3318 = vunpack.c.l.b16 %v2879
        %v3319 = vunpack.c.h.b16 %v2879
        %v3320 = vunpack.c.l.b16 %v2880
        %v3321 = vunpack.c.h.b16 %v2880
        %v3322 = vunpack.c.l.b16 %v2881
        %v3323 = vunpack.c.h.b16 %v2881
        %v3324 = vunpack.c.l.b16 %v2882
        %v3325 = vunpack.c.h.b16 %v2882
        %v3326 = vunpack.c.l.b16 %v2883
        %v3327 = vunpack.c.h.b16 %v2883
        %v3328 = vunpack.c.l.b16 %v2884
        %v3329 = vunpack.c.h.b16 %v2884
        %v3330 = vunpack.c.l.b16 %v2885
        %v3331 = vunpack.c.h.b16 %v2885
        %v3332 = vunpack.c.l.b16 %v2886
        %v3333 = vunpack.c.h.b16 %v2886
        %v3334 = vunpack.c.l.b16 %v2887
        %v3335 = vunpack.c.h.b16 %v2887
        %v3336 = vunpack.c.l.b16 %v2888
        %v3337 = vunpack.c.h.b16 %v2888
        %v3338 = vunpack.c.l.b16 %v2889
        %v3339 = vunpack.c.h.b16 %v2889
        %v3340 = vunpack.c.l.b16 %v2890
        %v3341 = vunpack.c.h.b16 %v2890
        %v3342 = vunpack.c.l.b16 %v2891
        %v3343 = vunpack.c.h.b16 %v2891
        %v3344 = vunpack.c.l.b16 %v2892
        %v3345 = vunpack.c.h.b16 %v2892
        %v3346 = vunpack.c.l.b16 %v2893
        %v3347 = vunpack.c.h.b16 %v2893
        %v3348 = vunpack.c.l.b16 %v2894
        %v3349 = vunpack.c.h.b16 %v2894
        %v3350 = vunpack.c.l.b16 %v2895
        %v3351 = vunpack.c.h.b16 %v2895
        %v3352 = vunpack.c.l.b16 %v2896
        %v3353 = vunpack.c.h.b16 %v2896
        %v3354 = vunpack.c.l.b16 %v2897
        %v3355 = vunpack.c.h.b16 %v2897
        %v3356 = vunpack.c.l.b16 %v2898
        %v3357 = vunpack.c.h.b16 %v2898
        %v3358 = vunpack.c.l.b16 %v2899
        %v3359 = vunpack.c.h.b16 %v2899
        %v3360 = vunpack.c.l.b16 %v2900
        %v3361 = vunpack.c.h.b16 %v2900
        %v3362 = vunpack.c.l.b16 %v2901
        %v3363 = vunpack.c.h.b16 %v2901
        %v3364 = vunpack.c.l.b16 %v2902
        %v3365 = vunpack.c.h.b16 %v2902
        %v3366 = vunpack.c.l.b16 %v2903
        %v3367 = vunpack.c.h.b16 %v2903
        %v3368 = vunpack.c.l.b16 %v2904
        %v3369 = vunpack.c.h.b16 %v2904
        %v3370 = vunpack.c.l.b16 %v2905
        %v3371 = vunpack.c.h.b16 %v2905
        %v3372 = vunpack.c.l.b16 %v2906
        %v3373 = vunpack.c.h.b16 %v2906
        %v3374 = vunpack.c.l.b16 %v2907
        %v3375 = vunpack.c.h.b16 %v2907
        %v3376 = vpack.c.b16 %v3136, %v3120
        %v3377 = vpack.c.b16 %v3137, %v3121
        %v3378 = vpack.c.b16 %v3138, %v3122
        %v3379 = vpack.c.b16 %v3139, %v3123
        %v3380 = vpack.c.b16 %v3140, %v3124
        %v3381 = vpack.c.b16 %v3141, %v3125
        %v3382 = vpack.c.b16 %v3142, %v3126
        %v3383 = vpack.c.b16 %v3143, %v3127
        %v3384 = vpack.c.b16 %v3144, %v3128
        %v3385 = vpack.c.b16 %v3145, %v3129
        %v3386 = vpack.c.b16 %v3146, %v3130
        %v3387 = vpack.c.b16 %v3147, %v3131
        %v3388 = vpack.c.b16 %v3148, %v3132
        %v3389 = vpack.c.b16 %v3149, %v3133
        %v3390 = vpack.c.b16 %v3150, %v3134
        %v3391 = vpack.c.b16 %v3151, %v3135
        %v3392 = vpack.c.b16 %v3168, %v3152
        %v3393 = vpack.c.b16 %v3169, %v3153
        %v3394 = vpack.c.b16 %v3170, %v3154
        %v3395 = vpack.c.b16 %v3171, %v3155
        %v3396 = vpack.c.b16 %v3172, %v3156
        %v3397 = vpack.c.b16 %v3173, %v3157
        %v3398 = vpack.c.b16 %v3174, %v3158
        %v3399 = vpack.c.b16 %v3175, %v3159
        %v3400 = vpack.c.b16 %v3176, %v3160
        %v3401 = vpack.c.b16 %v3177, %v3161
        %v3402 = vpack.c.b16 %v3178, %v3162
        %v3403 = vpack.c.b16 %v3179, %v3163
        %v3404 = vpack.c.b16 %v3180, %v3164
        %v3405 = vpack.c.b16 %v3181, %v3165
        %v3406 = vpack.c.b16 %v3182, %v3166
        %v3407 = vpack.c.b16 %v3183, %v3167
        %v3408 = vpack.c.b16 %v3200, %v3184
        %v3409 = vpack.c.b16 %v3201, %v3185
        %v3410 = vpack.c.b16 %v3202, %v3186
        %v3411 = vpack.c.b16 %v3203, %v3187
        %v3412 = vpack.c.b16 %v3204, %v3188
        %v3413 = vpack.c.b16 %v3205, %v3189
        %v3414 = vpack.c.b16 %v3206, %v3190
        %v3415 = vpack.c.b16 %v3207, %v3191
        %v3416 = vpack.c.b16 %v3208, %v3192
        %v3417 = vpack.c.b16 %v3209, %v3193
        %v3418 = vpack.c.b16 %v3210, %v3194
        %v3419 = vpack.c.b16 %v3211, %v3195
        %v3420 = vpack.c.b16 %v3212, %v3196
        %v3421 = vpack.c.b16 %v3213, %v3197
        %v3422 = vpack.c.b16 %v3214, %v3198
        %v3423 = vpack.c.b16 %v3215, %v3199
        %v3424 = vpack.c.b16 %v3232, %v3216
        %v3425 = vpack.c.b16 %v3233, %v3217
        %v3426 = vpack.c.b16 %v3234, %v3218
        %v3427 = vpack.c.b16 %v3235, %v3219
        %v3428 = vpack.c.b16 %v3236, %v3220
        %v3429 = vpack.c.b16 %v3237, %v3221
        %v3430 = vpack.c.b16 %v3238, %v3222
        %v3431 = vpack.c.b16 %v3239, %v3223
        %v3432 = vpack.c.b16 %v3240, %v3224
        %v3433 = vpack.c.b16 %v3241, %v3225
        %v3434 = vpack.c.b16 %v3242, %v3226
        %v3435 = vpack.c.b16 %v3243, %v3227
        %v3436 = vpack.c.b16 %v3244, %v3228
        %v3437 = vpack.c.b16 %v3245, %v3229
        %v3438 = vpack.c.b16 %v3246, %v3230
        %v3439 = vpack.c.b16 %v3247, %v3231
        %v3440 = vpack.c.b16 %v3264, %v3248
        %v3441 = vpack.c.b16 %v3265, %v3249
        %v3442 = vpack.c.b16 %v3266, %v3250
        %v3443 = vpack.c.b16 %v3267, %v3251
        %v3444 = vpack.c.b16 %v3268, %v3252
        %v3445 = vpack.c.b16 %v3269, %v3253
        %v3446 = vpack.c.b16 %v3270, %v3254
        %v3447 = vpack.c.b16 %v3271, %v3255
        %v3448 = vpack.c.b16 %v3272, %v3256
        %v3449 = vpack.c.b16 %v3273, %v3257
        %v3450 = vpack.c.b16 %v3274, %v3258
        %v3451 = vpack.c.b16 %v3275, %v3259
        %v3452 = vpack.c.b16 %v3276, %v3260
        %v3453 = vpack.c.b16 %v3277, %v3261
        %v3454 = vpack.c.b16 %v3278, %v3262
        %v3455 = vpack.c.b16 %v3279, %v3263
        %v3456 = vpack.c.b16 %v3296, %v3280
        %v3457 = vpack.c.b16 %v3297, %v3281
        %v3458 = vpack.c.b16 %v3298, %v3282
        %v3459 = vpack.c.b16 %v3299, %v3283
        %v3460 = vpack.c.b16 %v3300, %v3284
        %v3461 = vpack.c.b16 %v3301, %v3285
        %v3462 = vpack.c.b16 %v3302, %v3286
        %v3463 = vpack.c.b16 %v3303, %v3287
        %v3464 = vpack.c.b16 %v3304, %v3288
        %v3465 = vpack.c.b16 %v3305, %v3289
        %v3466 = vpack.c.b16 %v3306, %v3290
        %v3467 = vpack.c.b16 %v3307, %v3291
        %v3468 = vpack.c.b16 %v3308, %v3292
        %v3469 = vpack.c.b16 %v3309, %v3293
        %v3470 = vpack.c.b16 %v3310, %v3294
        %v3471 = vpack.c.b16 %v3311, %v3295
        %v3472 = vpack.c.b16 %v3328, %v3312
        %v3473 = vpack.c.b16 %v3329, %v3313
        %v3474 = vpack.c.b16 %v3330, %v3314
        %v3475 = vpack.c.b16 %v3331, %v3315
        %v3476 = vpack.c.b16 %v3332, %v3316
        %v3477 = vpack.c.b16 %v3333, %v3317
        %v3478 = vpack.c.b16 %v3334, %v3318
        %v3479 = vpack.c.b16 %v3335, %v3319
        %v3480 = vpack.c.b16 %v3336, %v3320
        %v3481 = vpack.c.b16 %v3337, %v3321
        %v3482 = vpack.c.b16 %v3338, %v3322
        %v3483 = vpack.c.b16 %v3339, %v3323
        %v3484 = vpack.c.b16 %v3340, %v3324
        %v3485 = vpack.c.b16 %v3341, %v3325
        %v3486 = vpack.c.b16 %v3342, %v3326
        %v3487 = vpack.c.b16 %v3343, %v3327
        %v3488 = vpack.c.b16 %v3360, %v3344
        %v3489 = vpack.c.b16 %v3361, %v3345
        %v3490 = vpack.c.b16 %v3362, %v3346
        %v3491 = vpack.c.b16 %v3363, %v3347
        %v3492 = vpack.c.b16 %v3364, %v3348
        %v3493 = vpack.c.b16 %v3365, %v3349
        %v3494 = vpack.c.b16 %v3366, %v3350
        %v3495 = vpack.c.b16 %v3367, %v3351
        %v3496 = vpack.c.b16 %v3368, %v3352
        %v3497 = vpack.c.b16 %v3369, %v3353
        %v3498 = vpack.c.b16 %v3370, %v3354
        %v3499 = vpack.c.b16 %v3371, %v3355
        %v3500 = vpack.c.b16 %v3372, %v3356
        %v3501 = vpack.c.b16 %v3373, %v3357
        %v3502 = vpack.c.b16 %v3374, %v3358
        %v3503 = vpack.c.b16 %v3375, %v3359
        %3632 = vmatprep.subr.bf16.mxu0 %v3489
        %3633 = vmatpush1.bf16.msra.mxu0 %v3488
        %3634 = vmatprep.subr.bf16.mxu0 %v3473
        %3635 = vmatpush1.bf16.msra.mxu0 %v3472
        %3636 = vmatprep.subr.bf16.mxu0 %v3457
        %3637 = vmatpush1.bf16.msra.mxu0 %v3456
        %3638 = vmatprep.subr.bf16.mxu0 %v3441
        %3639 = vmatpush1.bf16.msra.mxu0 %v3440
        %3640 = vmatprep.subr.bf16.mxu0 %v3425
        %3641 = vmatpush1.bf16.msra.mxu0 %v3424
        %3642 = vmatprep.subr.bf16.mxu0 %v3409
        %3643 = vmatpush1.bf16.msra.mxu0 %v3408
        %3644 = vmatprep.subr.bf16.mxu0 %v3393
        %3645 = vmatpush1.bf16.msra.mxu0 %v3392
        %3646 = vmatprep.subr.bf16.mxu0 %v3377
        %3647 = vmatpush1.bf16.msra.mxu0 %v3376
        %3648 = vmatprep.subr.bf16.mxu0 0
        %3649 = vmatpush2.bf16.msra.mxu0 0
        %3650 = vmatprep.subr.bf16.mxu0 0
        %3651 = vmatpush2.bf16.msra.mxu0 0
        %3652 = vmatprep.subr.bf16.mxu0 0
        %3653 = vmatpush2.bf16.msra.mxu0 0
        %3654 = vmatprep.subr.bf16.mxu0 0
        %3655 = vmatpush2.bf16.msra.mxu0 0
        %3656 = vmatprep.subr.bf16.mxu0 0
        %3657 = vmatpush2.bf16.msra.mxu0 0
        %3658 = vmatprep.subr.bf16.mxu0 0
        %3659 = vmatpush2.bf16.msra.mxu0 0
        %3660 = vmatprep.subr.bf16.mxu0 0
        %3661 = vmatpush2.bf16.msra.mxu0 0
        %3662 = vmatprep.subr.bf16.mxu0 0
        %3663 = vmatpush2.bf16.msra.mxu0 0
        %3664 = vmatprep.mubr.bf16.mxu0 0
        %3665 = vmatmul.mubr.bf16.gmra.mxu0 %v2779
        %v3666 = vpop.f32.mrf.mxu0
        %v3667 = vadd.f32 %v2915, %v3666
        %v3668 = vpop.f32.mrf.mxu0
        %v3669 = vadd.f32 %v2919, %v3668
        %v3670 = vpop.f32.mrf.mxu0
        %v3671 = vpop.f32.mrf.mxu0
        %3672 = vdwg.mxu0
        %3673 = vmatprep.subr.bf16.mxu0 %v3491
        %3674 = vmatpush1.bf16.msra.mxu0 %v3490
        %3675 = vmatprep.subr.bf16.mxu0 %v3475
        %3676 = vmatpush1.bf16.msra.mxu0 %v3474
        %3677 = vmatprep.subr.bf16.mxu0 %v3459
        %3678 = vmatpush1.bf16.msra.mxu0 %v3458
        %3679 = vmatprep.subr.bf16.mxu0 %v3443
        %3680 = vmatpush1.bf16.msra.mxu0 %v3442
        %3681 = vmatprep.subr.bf16.mxu0 %v3427
        %3682 = vmatpush1.bf16.msra.mxu0 %v3426
        %3683 = vmatprep.subr.bf16.mxu0 %v3411
        %3684 = vmatpush1.bf16.msra.mxu0 %v3410
        %3685 = vmatprep.subr.bf16.mxu0 %v3395
        %3686 = vmatpush1.bf16.msra.mxu0 %v3394
        %3687 = vmatprep.subr.bf16.mxu0 %v3379
        %3688 = vmatpush1.bf16.msra.mxu0 %v3378
        %3689 = vmatprep.subr.bf16.mxu0 0
        %3690 = vmatpush2.bf16.msra.mxu0 0
        %3691 = vmatprep.subr.bf16.mxu0 0
        %3692 = vmatpush2.bf16.msra.mxu0 0
        %3693 = vmatprep.subr.bf16.mxu0 0
        %3694 = vmatpush2.bf16.msra.mxu0 0
        %3695 = vmatprep.subr.bf16.mxu0 0
        %3696 = vmatpush2.bf16.msra.mxu0 0
        %3697 = vmatprep.subr.bf16.mxu0 0
        %3698 = vmatpush2.bf16.msra.mxu0 0
        %3699 = vmatprep.subr.bf16.mxu0 0
        %3700 = vmatpush2.bf16.msra.mxu0 0
        %3701 = vmatprep.subr.bf16.mxu0 0
        %3702 = vmatpush2.bf16.msra.mxu0 0
        %3703 = vmatprep.subr.bf16.mxu0 0
        %3704 = vmatpush2.bf16.msra.mxu0 0
        %3705 = vmatprep.mubr.bf16.mxu0 0
        %3706 = vmatmul.mubr.bf16.gmra.mxu0 %v2779
        %v3707 = vpop.f32.mrf.mxu0
        %v3708 = vadd.f32 %v2923, %v3707
        %v3709 = vpop.f32.mrf.mxu0
        %v3710 = vadd.f32 %v2927, %v3709
        %v3711 = vpop.f32.mrf.mxu0
        %v3712 = vpop.f32.mrf.mxu0
        %3713 = vdwg.mxu0
        %3714 = vmatprep.subr.bf16.mxu0 %v3493
        %3715 = vmatpush1.bf16.msra.mxu0 %v3492
        %3716 = vmatprep.subr.bf16.mxu0 %v3477
        %3717 = vmatpush1.bf16.msra.mxu0 %v3476
        %3718 = vmatprep.subr.bf16.mxu0 %v3461
        %3719 = vmatpush1.bf16.msra.mxu0 %v3460
        %3720 = vmatprep.subr.bf16.mxu0 %v3445
        %3721 = vmatpush1.bf16.msra.mxu0 %v3444
        %3722 = vmatprep.subr.bf16.mxu0 %v3429
        %3723 = vmatpush1.bf16.msra.mxu0 %v3428
        %3724 = vmatprep.subr.bf16.mxu0 %v3413
        %3725 = vmatpush1.bf16.msra.mxu0 %v3412
        %3726 = vmatprep.subr.bf16.mxu0 %v3397
        %3727 = vmatpush1.bf16.msra.mxu0 %v3396
        %3728 = vmatprep.subr.bf16.mxu0 %v3381
        %3729 = vmatpush1.bf16.msra.mxu0 %v3380
        %3730 = vmatprep.subr.bf16.mxu0 0
        %3731 = vmatpush2.bf16.msra.mxu0 0
        %3732 = vmatprep.subr.bf16.mxu0 0
        %3733 = vmatpush2.bf16.msra.mxu0 0
        %3734 = vmatprep.subr.bf16.mxu0 0
        %3735 = vmatpush2.bf16.msra.mxu0 0
        %3736 = vmatprep.subr.bf16.mxu0 0
        %3737 = vmatpush2.bf16.msra.mxu0 0
        %3738 = vmatprep.subr.bf16.mxu0 0
        %3739 = vmatpush2.bf16.msra.mxu0 0
        %3740 = vmatprep.subr.bf16.mxu0 0
        %3741 = vmatpush2.bf16.msra.mxu0 0
        %3742 = vmatprep.subr.bf16.mxu0 0
        %3743 = vmatpush2.bf16.msra.mxu0 0
        %3744 = vmatprep.subr.bf16.mxu0 0
        %3745 = vmatpush2.bf16.msra.mxu0 0
        %3746 = vmatprep.mubr.bf16.mxu0 0
        %3747 = vmatmul.mubr.bf16.gmra.mxu0 %v2779
        %v3748 = vpop.f32.mrf.mxu0
        %v3749 = vadd.f32 %v2931, %v3748
        %v3750 = vpop.f32.mrf.mxu0
        %v3751 = vadd.f32 %v2935, %v3750
        %v3752 = vpop.f32.mrf.mxu0
        %v3753 = vpop.f32.mrf.mxu0
        %3754 = vdwg.mxu0
        %3755 = vmatprep.subr.bf16.mxu0 %v3495
        %3756 = vmatpush1.bf16.msra.mxu0 %v3494
        %3757 = vmatprep.subr.bf16.mxu0 %v3479
        %3758 = vmatpush1.bf16.msra.mxu0 %v3478
        %3759 = vmatprep.subr.bf16.mxu0 %v3463
        %3760 = vmatpush1.bf16.msra.mxu0 %v3462
        %3761 = vmatprep.subr.bf16.mxu0 %v3447
        %3762 = vmatpush1.bf16.msra.mxu0 %v3446
        %3763 = vmatprep.subr.bf16.mxu0 %v3431
        %3764 = vmatpush1.bf16.msra.mxu0 %v3430
        %3765 = vmatprep.subr.bf16.mxu0 %v3415
        %3766 = vmatpush1.bf16.msra.mxu0 %v3414
        %3767 = vmatprep.subr.bf16.mxu0 %v3399
        %3768 = vmatpush1.bf16.msra.mxu0 %v3398
        %3769 = vmatprep.subr.bf16.mxu0 %v3383
        %3770 = vmatpush1.bf16.msra.mxu0 %v3382
        %3771 = vmatprep.subr.bf16.mxu0 0
        %3772 = vmatpush2.bf16.msra.mxu0 0
        %3773 = vmatprep.subr.bf16.mxu0 0
        %3774 = vmatpush2.bf16.msra.mxu0 0
        %3775 = vmatprep.subr.bf16.mxu0 0
        %3776 = vmatpush2.bf16.msra.mxu0 0
        %3777 = vmatprep.subr.bf16.mxu0 0
        %3778 = vmatpush2.bf16.msra.mxu0 0
        %3779 = vmatprep.subr.bf16.mxu0 0
        %3780 = vmatpush2.bf16.msra.mxu0 0
        %3781 = vmatprep.subr.bf16.mxu0 0
        %3782 = vmatpush2.bf16.msra.mxu0 0
        %3783 = vmatprep.subr.bf16.mxu0 0
        %3784 = vmatpush2.bf16.msra.mxu0 0
        %3785 = vmatprep.subr.bf16.mxu0 0
        %3786 = vmatpush2.bf16.msra.mxu0 0
        %3787 = vmatprep.mubr.bf16.mxu0 0
        %3788 = vmatmul.mubr.bf16.gmra.mxu0 %v2779
        %v3789 = vpop.f32.mrf.mxu0
        %v3790 = vadd.f32 %v2939, %v3789
        %v3791 = vpop.f32.mrf.mxu0
        %v3792 = vadd.f32 %v2943, %v3791
        %v3793 = vpop.f32.mrf.mxu0
        %v3794 = vpop.f32.mrf.mxu0
        %3795 = vdwg.mxu0
        %3796 = vmatprep.subr.bf16.mxu0 %v3497
        %3797 = vmatpush1.bf16.msra.mxu0 %v3496
        %3798 = vmatprep.subr.bf16.mxu0 %v3481
        %3799 = vmatpush1.bf16.msra.mxu0 %v3480
        %3800 = vmatprep.subr.bf16.mxu0 %v3465
        %3801 = vmatpush1.bf16.msra.mxu0 %v3464
        %3802 = vmatprep.subr.bf16.mxu0 %v3449
        %3803 = vmatpush1.bf16.msra.mxu0 %v3448
        %3804 = vmatprep.subr.bf16.mxu0 %v3433
        %3805 = vmatpush1.bf16.msra.mxu0 %v3432
        %3806 = vmatprep.subr.bf16.mxu0 %v3417
        %3807 = vmatpush1.bf16.msra.mxu0 %v3416
        %3808 = vmatprep.subr.bf16.mxu0 %v3401
        %3809 = vmatpush1.bf16.msra.mxu0 %v3400
        %3810 = vmatprep.subr.bf16.mxu0 %v3385
        %3811 = vmatpush1.bf16.msra.mxu0 %v3384
        %3812 = vmatprep.subr.bf16.mxu0 0
        %3813 = vmatpush2.bf16.msra.mxu0 0
        %3814 = vmatprep.subr.bf16.mxu0 0
        %3815 = vmatpush2.bf16.msra.mxu0 0
        %3816 = vmatprep.subr.bf16.mxu0 0
        %3817 = vmatpush2.bf16.msra.mxu0 0
        %3818 = vmatprep.subr.bf16.mxu0 0
        %3819 = vmatpush2.bf16.msra.mxu0 0
        %3820 = vmatprep.subr.bf16.mxu0 0
        %3821 = vmatpush2.bf16.msra.mxu0 0
        %3822 = vmatprep.subr.bf16.mxu0 0
        %3823 = vmatpush2.bf16.msra.mxu0 0
        %3824 = vmatprep.subr.bf16.mxu0 0
        %3825 = vmatpush2.bf16.msra.mxu0 0
        %3826 = vmatprep.subr.bf16.mxu0 0
        %3827 = vmatpush2.bf16.msra.mxu0 0
        %3828 = vmatprep.mubr.bf16.mxu0 0
        %3829 = vmatmul.mubr.bf16.gmra.mxu0 %v2779
        %v3830 = vpop.f32.mrf.mxu0
        %v3831 = vadd.f32 %v2947, %v3830
        %v3832 = vpop.f32.mrf.mxu0
        %v3833 = vadd.f32 %v2951, %v3832
        %v3834 = vpop.f32.mrf.mxu0
        %v3835 = vpop.f32.mrf.mxu0
        %3836 = vdwg.mxu0
        %3837 = vmatprep.subr.bf16.mxu0 %v3499
        %3838 = vmatpush1.bf16.msra.mxu0 %v3498
        %3839 = vmatprep.subr.bf16.mxu0 %v3483
        %3840 = vmatpush1.bf16.msra.mxu0 %v3482
        %3841 = vmatprep.subr.bf16.mxu0 %v3467
        %3842 = vmatpush1.bf16.msra.mxu0 %v3466
        %3843 = vmatprep.subr.bf16.mxu0 %v3451
        %3844 = vmatpush1.bf16.msra.mxu0 %v3450
        %3845 = vmatprep.subr.bf16.mxu0 %v3435
        %3846 = vmatpush1.bf16.msra.mxu0 %v3434
        %3847 = vmatprep.subr.bf16.mxu0 %v3419
        %3848 = vmatpush1.bf16.msra.mxu0 %v3418
        %3849 = vmatprep.subr.bf16.mxu0 %v3403
        %3850 = vmatpush1.bf16.msra.mxu0 %v3402
        %3851 = vmatprep.subr.bf16.mxu0 %v3387
        %3852 = vmatpush1.bf16.msra.mxu0 %v3386
        %3853 = vmatprep.subr.bf16.mxu0 0
        %3854 = vmatpush2.bf16.msra.mxu0 0
        %3855 = vmatprep.subr.bf16.mxu0 0
        %3856 = vmatpush2.bf16.msra.mxu0 0
        %3857 = vmatprep.subr.bf16.mxu0 0
        %3858 = vmatpush2.bf16.msra.mxu0 0
        %3859 = vmatprep.subr.bf16.mxu0 0
        %3860 = vmatpush2.bf16.msra.mxu0 0
        %3861 = vmatprep.subr.bf16.mxu0 0
        %3862 = vmatpush2.bf16.msra.mxu0 0
        %3863 = vmatprep.subr.bf16.mxu0 0
        %3864 = vmatpush2.bf16.msra.mxu0 0
        %3865 = vmatprep.subr.bf16.mxu0 0
        %3866 = vmatpush2.bf16.msra.mxu0 0
        %3867 = vmatprep.subr.bf16.mxu0 0
        %3868 = vmatpush2.bf16.msra.mxu0 0
        %3869 = vmatprep.mubr.bf16.mxu0 0
        %3870 = vmatmul.mubr.bf16.gmra.mxu0 %v2779
        %v3871 = vpop.f32.mrf.mxu0
        %v3872 = vadd.f32 %v2955, %v3871
        %v3873 = vpop.f32.mrf.mxu0
        %v3874 = vadd.f32 %v2959, %v3873
        %v3875 = vpop.f32.mrf.mxu0
        %v3876 = vpop.f32.mrf.mxu0
        %3877 = vdwg.mxu0
        %3878 = vmatprep.subr.bf16.mxu0 %v3501
        %3879 = vmatpush1.bf16.msra.mxu0 %v3500
        %3880 = vmatprep.subr.bf16.mxu0 %v3485
        %3881 = vmatpush1.bf16.msra.mxu0 %v3484
        %3882 = vmatprep.subr.bf16.mxu0 %v3469
        %3883 = vmatpush1.bf16.msra.mxu0 %v3468
        %3884 = vmatprep.subr.bf16.mxu0 %v3453
        %3885 = vmatpush1.bf16.msra.mxu0 %v3452
        %3886 = vmatprep.subr.bf16.mxu0 %v3437
        %3887 = vmatpush1.bf16.msra.mxu0 %v3436
        %3888 = vmatprep.subr.bf16.mxu0 %v3421
        %3889 = vmatpush1.bf16.msra.mxu0 %v3420
        %3890 = vmatprep.subr.bf16.mxu0 %v3405
        %3891 = vmatpush1.bf16.msra.mxu0 %v3404
        %3892 = vmatprep.subr.bf16.mxu0 %v3389
        %3893 = vmatpush1.bf16.msra.mxu0 %v3388
        %3894 = vmatprep.subr.bf16.mxu0 0
        %3895 = vmatpush2.bf16.msra.mxu0 0
        %3896 = vmatprep.subr.bf16.mxu0 0
        %3897 = vmatpush2.bf16.msra.mxu0 0
        %3898 = vmatprep.subr.bf16.mxu0 0
        %3899 = vmatpush2.bf16.msra.mxu0 0
        %3900 = vmatprep.subr.bf16.mxu0 0
        %3901 = vmatpush2.bf16.msra.mxu0 0
        %3902 = vmatprep.subr.bf16.mxu0 0
        %3903 = vmatpush2.bf16.msra.mxu0 0
        %3904 = vmatprep.subr.bf16.mxu0 0
        %3905 = vmatpush2.bf16.msra.mxu0 0
        %3906 = vmatprep.subr.bf16.mxu0 0
        %3907 = vmatpush2.bf16.msra.mxu0 0
        %3908 = vmatprep.subr.bf16.mxu0 0
        %3909 = vmatpush2.bf16.msra.mxu0 0
        %3910 = vmatprep.mubr.bf16.mxu0 0
        %3911 = vmatmul.mubr.bf16.gmra.mxu0 %v2779
        %v3912 = vpop.f32.mrf.mxu0
        %v3913 = vadd.f32 %v2963, %v3912
        %v3914 = vpop.f32.mrf.mxu0
        %v3915 = vadd.f32 %v2967, %v3914
        %v3916 = vpop.f32.mrf.mxu0
        %v3917 = vpop.f32.mrf.mxu0
        %3918 = vdwg.mxu0
        %3919 = vmatprep.subr.bf16.mxu0 %v3503
        %3920 = vmatpush1.bf16.msra.mxu0 %v3502
        %3921 = vmatprep.subr.bf16.mxu0 %v3487
        %3922 = vmatpush1.bf16.msra.mxu0 %v3486
        %3923 = vmatprep.subr.bf16.mxu0 %v3471
        %3924 = vmatpush1.bf16.msra.mxu0 %v3470
        %3925 = vmatprep.subr.bf16.mxu0 %v3455
        %3926 = vmatpush1.bf16.msra.mxu0 %v3454
        %3927 = vmatprep.subr.bf16.mxu0 %v3439
        %3928 = vmatpush1.bf16.msra.mxu0 %v3438
        %3929 = vmatprep.subr.bf16.mxu0 %v3423
        %3930 = vmatpush1.bf16.msra.mxu0 %v3422
        %3931 = vmatprep.subr.bf16.mxu0 %v3407
        %3932 = vmatpush1.bf16.msra.mxu0 %v3406
        %3933 = vmatprep.subr.bf16.mxu0 %v3391
        %3934 = vmatpush1.bf16.msra.mxu0 %v3390
        %3935 = vmatprep.subr.bf16.mxu0 0
        %3936 = vmatpush2.bf16.msra.mxu0 0
        %3937 = vmatprep.subr.bf16.mxu0 0
        %3938 = vmatpush2.bf16.msra.mxu0 0
        %3939 = vmatprep.subr.bf16.mxu0 0
        %3940 = vmatpush2.bf16.msra.mxu0 0
        %3941 = vmatprep.subr.bf16.mxu0 0
        %3942 = vmatpush2.bf16.msra.mxu0 0
        %3943 = vmatprep.subr.bf16.mxu0 0
        %3944 = vmatpush2.bf16.msra.mxu0 0
        %3945 = vmatprep.subr.bf16.mxu0 0
        %3946 = vmatpush2.bf16.msra.mxu0 0
        %3947 = vmatprep.subr.bf16.mxu0 0
        %3948 = vmatpush2.bf16.msra.mxu0 0
        %3949 = vmatprep.subr.bf16.mxu0 0
        %3950 = vmatpush2.bf16.msra.mxu0 0
        %3951 = vmatprep.mubr.bf16.mxu0 0
        %3952 = vmatmul.mubr.bf16.gmra.mxu0 %v2779
        %v3953 = vpop.f32.mrf.mxu0
        %v3954 = vadd.f32 %v2971, %v3953
        %v3955 = vpop.f32.mrf.mxu0
        %v3956 = vadd.f32 %v2975, %v3955
        %v3957 = vpop.f32.mrf.mxu0
        %v3958 = vpop.f32.mrf.mxu0
        %3959 = vdwg.mxu0
        %v3976 = vrot.slane %v3667, 1
        %v3977 = vrot.slane %v3669, 1
        %v3978 = vrot.slane %v3708, 1
        %v3979 = vrot.slane %v3710, 1
        %v3980 = vrot.slane %v3749, 1
        %v3981 = vrot.slane %v3751, 1
        %v3982 = vrot.slane %v3790, 1
        %v3983 = vrot.slane %v3792, 1
        %v3984 = vrot.slane %v3831, 1
        %v3985 = vrot.slane %v3833, 1
        %v3986 = vrot.slane %v3872, 1
        %v3987 = vrot.slane %v3874, 1
        %v3988 = vrot.slane %v3913, 1
        %v3989 = vrot.slane %v3915, 1
        %v3990 = vrot.slane %v3954, 1
        %v3991 = vrot.slane %v3956, 1
        %v4008 = vadd.f32 %v3667, %v3976
        %v4009 = vadd.f32 %v3669, %v3977
        %v4010 = vadd.f32 %v3708, %v3978
        %v4011 = vadd.f32 %v3710, %v3979
        %v4012 = vadd.f32 %v3749, %v3980
        %v4013 = vadd.f32 %v3751, %v3981
        %v4014 = vadd.f32 %v3790, %v3982
        %v4015 = vadd.f32 %v3792, %v3983
        %v4016 = vadd.f32 %v3831, %v3984
        %v4017 = vadd.f32 %v3833, %v3985
        %v4018 = vadd.f32 %v3872, %v3986
        %v4019 = vadd.f32 %v3874, %v3987
        %v4020 = vadd.f32 %v3913, %v3988
        %v4021 = vadd.f32 %v3915, %v3989
        %v4022 = vadd.f32 %v3954, %v3990
        %v4023 = vadd.f32 %v3956, %v3991
        %v4024 = vxor.u32 %v4008, 2147483648
        %v4025 = vxor.u32 %v4009, 2147483648
        %v4026 = vxor.u32 %v4010, 2147483648
        %v4027 = vxor.u32 %v4011, 2147483648
        %v4028 = vxor.u32 %v4012, 2147483648
        %v4029 = vxor.u32 %v4013, 2147483648
        %v4030 = vxor.u32 %v4014, 2147483648
        %v4031 = vxor.u32 %v4015, 2147483648
        %v4032 = vxor.u32 %v4016, 2147483648
        %v4033 = vxor.u32 %v4017, 2147483648
        %v4034 = vxor.u32 %v4018, 2147483648
        %v4035 = vxor.u32 %v4019, 2147483648
        %v4036 = vxor.u32 %v4020, 2147483648
        %v4037 = vxor.u32 %v4021, 2147483648
        %v4038 = vxor.u32 %v4022, 2147483648
        %v4039 = vxor.u32 %v4023, 2147483648
        %v4040 = vmul.f32 %v4024, 1.442695
        %v4041 = vpow.pop %v4040
        %v4042 = vmul.f32 %v4025, 1.442695
        %v4043 = vpow.pop %v4042
        %v4044 = vmul.f32 %v4026, 1.442695
        %v4045 = vpow.pop %v4044
        %v4046 = vmul.f32 %v4027, 1.442695
        %v4047 = vpow.pop %v4046
        %v4048 = vmul.f32 %v4028, 1.442695
        %v4049 = vpow.pop %v4048
        %v4050 = vmul.f32 %v4029, 1.442695
        %v4051 = vpow.pop %v4050
        %v4052 = vmul.f32 %v4030, 1.442695
        %v4053 = vpow.pop %v4052
        %v4054 = vmul.f32 %v4031, 1.442695
        %v4055 = vpow.pop %v4054
        %v4056 = vmul.f32 %v4032, 1.442695
        %v4057 = vpow.pop %v4056
        %v4058 = vmul.f32 %v4033, 1.442695
        %v4059 = vpow.pop %v4058
        %v4060 = vmul.f32 %v4034, 1.442695
        %v4061 = vpow.pop %v4060
        %v4062 = vmul.f32 %v4035, 1.442695
        %v4063 = vpow.pop %v4062
        %v4064 = vmul.f32 %v4036, 1.442695
        %v4065 = vpow.pop %v4064
        %v4066 = vmul.f32 %v4037, 1.442695
        %v4067 = vpow.pop %v4066
        %v4068 = vmul.f32 %v4038, 1.442695
        %v4069 = vpow.pop %v4068
        %v4070 = vmul.f32 %v4039, 1.442695
        %v4071 = vpow.pop %v4070
        %v4072 = vadd.f32 %v4041, 1.0
        %v4073 = vadd.f32 %v4043, 1.0
        %v4074 = vadd.f32 %v4045, 1.0
        %v4075 = vadd.f32 %v4047, 1.0
        %v4076 = vadd.f32 %v4049, 1.0
        %v4077 = vadd.f32 %v4051, 1.0
        %v4078 = vadd.f32 %v4053, 1.0
        %v4079 = vadd.f32 %v4055, 1.0
        %v4080 = vadd.f32 %v4057, 1.0
        %v4081 = vadd.f32 %v4059, 1.0
        %v4082 = vadd.f32 %v4061, 1.0
        %v4083 = vadd.f32 %v4063, 1.0
        %v4084 = vadd.f32 %v4065, 1.0
        %v4085 = vadd.f32 %v4067, 1.0
        %v4086 = vadd.f32 %v4069, 1.0
        %v4087 = vadd.f32 %v4071, 1.0
        %v4088 = vrcp.pop %v4072
        %v4089 = vmul.f32 1.0, %v4088
        %v4090 = vrcp.pop %v4073
        %v4091 = vmul.f32 1.0, %v4090
        %v4092 = vrcp.pop %v4074
        %v4093 = vmul.f32 1.0, %v4092
        %v4094 = vrcp.pop %v4075
        %v4095 = vmul.f32 1.0, %v4094
        %v4096 = vrcp.pop %v4076
        %v4097 = vmul.f32 1.0, %v4096
        %v4098 = vrcp.pop %v4077
        %v4099 = vmul.f32 1.0, %v4098
        %v4100 = vrcp.pop %v4078
        %v4101 = vmul.f32 1.0, %v4100
        %v4102 = vrcp.pop %v4079
        %v4103 = vmul.f32 1.0, %v4102
        %v4104 = vrcp.pop %v4080
        %v4105 = vmul.f32 1.0, %v4104
        %v4106 = vrcp.pop %v4081
        %v4107 = vmul.f32 1.0, %v4106
        %v4108 = vrcp.pop %v4082
        %v4109 = vmul.f32 1.0, %v4108
        %v4110 = vrcp.pop %v4083
        %v4111 = vmul.f32 1.0, %v4110
        %v4112 = vrcp.pop %v4084
        %v4113 = vmul.f32 1.0, %v4112
        %v4114 = vrcp.pop %v4085
        %v4115 = vmul.f32 1.0, %v4114
        %v4116 = vrcp.pop %v4086
        %v4117 = vmul.f32 1.0, %v4116
        %v4118 = vrcp.pop %v4087
        %v4119 = vmul.f32 1.0, %v4118
        %v4120 = vlaneseq
        %v4121 = vshrl.u32 %v4120, 7
        %v4122 = vsub.s32 0, %v4121
        %v4123 = vrot.slane %v4089, %v4122
        %v4124 = vlaneseq
        %v4125 = vshrl.u32 %v4124, 7
        %v4126 = vsub.s32 0, %v4125
        %v4127 = vrot.slane %v4091, %v4126
        %v4128 = vlaneseq
        %v4129 = vshrl.u32 %v4128, 7
        %v4130 = vsub.s32 0, %v4129
        %v4131 = vrot.slane %v4093, %v4130
        %v4132 = vlaneseq
        %v4133 = vshrl.u32 %v4132, 7
        %v4134 = vsub.s32 0, %v4133
        %v4135 = vrot.slane %v4095, %v4134
        %v4136 = vlaneseq
        %v4137 = vshrl.u32 %v4136, 7
        %v4138 = vsub.s32 0, %v4137
        %v4139 = vrot.slane %v4097, %v4138
        %v4140 = vlaneseq
        %v4141 = vshrl.u32 %v4140, 7
        %v4142 = vsub.s32 0, %v4141
        %v4143 = vrot.slane %v4099, %v4142
        %v4144 = vlaneseq
        %v4145 = vshrl.u32 %v4144, 7
        %v4146 = vsub.s32 0, %v4145
        %v4147 = vrot.slane %v4101, %v4146
        %v4148 = vlaneseq
        %v4149 = vshrl.u32 %v4148, 7
        %v4150 = vsub.s32 0, %v4149
        %v4151 = vrot.slane %v4103, %v4150
        %v4152 = vlaneseq
        %v4153 = vshrl.u32 %v4152, 7
        %v4154 = vsub.s32 0, %v4153
        %v4155 = vrot.slane %v4105, %v4154
        %v4156 = vlaneseq
        %v4157 = vshrl.u32 %v4156, 7
        %v4158 = vsub.s32 0, %v4157
        %v4159 = vrot.slane %v4107, %v4158
        %v4160 = vlaneseq
        %v4161 = vshrl.u32 %v4160, 7
        %v4162 = vsub.s32 0, %v4161
        %v4163 = vrot.slane %v4109, %v4162
        %v4164 = vlaneseq
        %v4165 = vshrl.u32 %v4164, 7
        %v4166 = vsub.s32 0, %v4165
        %v4167 = vrot.slane %v4111, %v4166
        %v4168 = vlaneseq
        %v4169 = vshrl.u32 %v4168, 7
        %v4170 = vsub.s32 0, %v4169
        %v4171 = vrot.slane %v4113, %v4170
        %v4172 = vlaneseq
        %v4173 = vshrl.u32 %v4172, 7
        %v4174 = vsub.s32 0, %v4173
        %v4175 = vrot.slane %v4115, %v4174
        %v4176 = vlaneseq
        %v4177 = vshrl.u32 %v4176, 7
        %v4178 = vsub.s32 0, %v4177
        %v4179 = vrot.slane %v4117, %v4178
        %v4180 = vlaneseq
        %v4181 = vshrl.u32 %v4180, 7
        %v4182 = vsub.s32 0, %v4181
        %v4183 = vrot.slane %v4119, %v4182
        %v4184 = vmul.f32 %v411, %v4123
        %v4185 = vmul.f32 %v412, %v4127
        %v4186 = vmul.f32 %v413, %v4131
        %v4187 = vmul.f32 %v414, %v4135
        %v4188 = vmul.f32 %v415, %v4139
        %v4189 = vmul.f32 %v416, %v4143
        %v4190 = vmul.f32 %v417, %v4147
        %v4191 = vmul.f32 %v418, %v4151
        %v4192 = vmul.f32 %v419, %v4155
        %v4193 = vmul.f32 %v420, %v4159
        %v4194 = vmul.f32 %v421, %v4163
        %v4195 = vmul.f32 %v422, %v4167
        %v4196 = vmul.f32 %v423, %v4171
        %v4197 = vmul.f32 %v424, %v4175
        %v4198 = vmul.f32 %v425, %v4179
        %v4199 = vmul.f32 %v426, %v4183
        %v4200 = vmul.f32 %v427, %v4123
        %v4201 = vmul.f32 %v428, %v4127
        %v4202 = vmul.f32 %v429, %v4131
        %v4203 = vmul.f32 %v430, %v4135
        %v4204 = vmul.f32 %v431, %v4139
        %v4205 = vmul.f32 %v432, %v4143
        %v4206 = vmul.f32 %v433, %v4147
        %v4207 = vmul.f32 %v434, %v4151
        %v4208 = vmul.f32 %v435, %v4155
        %v4209 = vmul.f32 %v436, %v4159
        %v4210 = vmul.f32 %v437, %v4163
        %v4211 = vmul.f32 %v438, %v4167
        %v4212 = vmul.f32 %v439, %v4171
        %v4213 = vmul.f32 %v440, %v4175
        %v4214 = vmul.f32 %v441, %v4179
        %v4215 = vmul.f32 %v442, %v4183
        %v4216 = vadd.f32 %v4184, %v4185
        %v4217 = vadd.f32 %v4216, %v4186
        %v4218 = vadd.f32 %v4217, %v4187
        %v4219 = vadd.f32 %v4218, %v4188
        %v4220 = vadd.f32 %v4219, %v4189
        %v4221 = vadd.f32 %v4220, %v4190
        %v4222 = vadd.f32 %v4221, %v4191
        %v4223 = vadd.f32 %v4222, %v4192
        %v4224 = vadd.f32 %v4223, %v4193
        %v4225 = vadd.f32 %v4224, %v4194
        %v4226 = vadd.f32 %v4225, %v4195
        %v4227 = vadd.f32 %v4226, %v4196
        %v4228 = vadd.f32 %v4227, %v4197
        %v4229 = vadd.f32 %v4228, %v4198
        %v4230 = vadd.f32 %v4229, %v4199
        %4231 = vadd.xlane.f32.xlu0 %v4230
        %v4232 = vpop.xlane.xlu0 %4231
        %v4233 = vadd.f32 %v4200, %v4201
        %v4234 = vadd.f32 %v4233, %v4202
        %v4235 = vadd.f32 %v4234, %v4203
        %v4236 = vadd.f32 %v4235, %v4204
        %v4237 = vadd.f32 %v4236, %v4205
        %v4238 = vadd.f32 %v4237, %v4206
        %v4239 = vadd.f32 %v4238, %v4207
        %v4240 = vadd.f32 %v4239, %v4208
        %v4241 = vadd.f32 %v4240, %v4209
        %v4242 = vadd.f32 %v4241, %v4210
        %v4243 = vadd.f32 %v4242, %v4211
        %v4244 = vadd.f32 %v4243, %v4212
        %v4245 = vadd.f32 %v4244, %v4213
        %v4246 = vadd.f32 %v4245, %v4214
        %v4247 = vadd.f32 %v4246, %v4215
        %4248 = vadd.xlane.f32.xlu0 %v4247
        %v4249 = vpop.xlane.xlu0 %4248
        %v4250 = vmul.f32 %v4232, 0.00048828125
        %v4251 = vmul.f32 %v4249, 0.00048828125
        %v4252 = vmax.f32 %v4184, %v4186
        %v4253 = vmax.f32 %v4185, %v4187
        %v4254 = vmax.f32 %v4252, %v4188
        %v4255 = vmax.f32 %v4253, %v4189
        %v4256 = vmax.f32 %v4254, %v4190
        %v4257 = vmax.f32 %v4255, %v4191
        %v4258 = vmax.f32 %v4256, %v4192
        %v4259 = vmax.f32 %v4257, %v4193
        %v4260 = vmax.f32 %v4258, %v4194
        %v4261 = vmax.f32 %v4259, %v4195
        %v4262 = vmax.f32 %v4260, %v4196
        %v4263 = vmax.f32 %v4261, %v4197
        %v4264 = vmax.f32 %v4262, %v4198
        %v4265 = vmax.f32 %v4263, %v4199
        %v4266 = vmax.f32 %v4264, %v4265
        %4267 = vmax.xlane.f32.xlu0 %v4266
        %v4268 = vpop.xlane.xlu0 %4267
        %v4269 = vmax.f32 %v4200, %v4202
        %v4270 = vmax.f32 %v4201, %v4203
        %v4271 = vmax.f32 %v4269, %v4204
        %v4272 = vmax.f32 %v4270, %v4205
        %v4273 = vmax.f32 %v4271, %v4206
        %v4274 = vmax.f32 %v4272, %v4207
        %v4275 = vmax.f32 %v4273, %v4208
        %v4276 = vmax.f32 %v4274, %v4209
        %v4277 = vmax.f32 %v4275, %v4210
        %v4278 = vmax.f32 %v4276, %v4211
        %v4279 = vmax.f32 %v4277, %v4212
        %v4280 = vmax.f32 %v4278, %v4213
        %v4281 = vmax.f32 %v4279, %v4214
        %v4282 = vmax.f32 %v4280, %v4215
        %v4283 = vmax.f32 %v4281, %v4282
        %4284 = vmax.xlane.f32.xlu0 %v4283
        %v4285 = vpop.xlane.xlu0 %4284
        %v4286 = vmul.f32 %v460, %v4123
        %v4287 = vmul.f32 %v461, %v4127
        %v4288 = vmul.f32 %v462, %v4131
        %v4289 = vmul.f32 %v463, %v4135
        %v4290 = vmul.f32 %v464, %v4139
        %v4291 = vmul.f32 %v465, %v4143
        %v4292 = vmul.f32 %v466, %v4147
        %v4293 = vmul.f32 %v467, %v4151
        %v4294 = vmul.f32 %v468, %v4155
        %v4295 = vmul.f32 %v469, %v4159
        %v4296 = vmul.f32 %v470, %v4163
        %v4297 = vmul.f32 %v471, %v4167
        %v4298 = vmul.f32 %v472, %v4171
        %v4299 = vmul.f32 %v473, %v4175
        %v4300 = vmul.f32 %v474, %v4179
        %v4301 = vmul.f32 %v475, %v4183
        %v4302 = vmul.f32 %v476, %v4123
        %v4303 = vmul.f32 %v477, %v4127
        %v4304 = vmul.f32 %v478, %v4131
        %v4305 = vmul.f32 %v479, %v4135
        %v4306 = vmul.f32 %v480, %v4139
        %v4307 = vmul.f32 %v481, %v4143
        %v4308 = vmul.f32 %v482, %v4147
        %v4309 = vmul.f32 %v483, %v4151
        %v4310 = vmul.f32 %v484, %v4155
        %v4311 = vmul.f32 %v485, %v4159
        %v4312 = vmul.f32 %v486, %v4163
        %v4313 = vmul.f32 %v487, %v4167
        %v4314 = vmul.f32 %v488, %v4171
        %v4315 = vmul.f32 %v489, %v4175
        %v4316 = vmul.f32 %v490, %v4179
        %v4317 = vmul.f32 %v491, %v4183
        %v4318 = vadd.f32 %v4286, %v4287
        %v4319 = vadd.f32 %v4318, %v4288
        %v4320 = vadd.f32 %v4319, %v4289
        %v4321 = vadd.f32 %v4320, %v4290
        %v4322 = vadd.f32 %v4321, %v4291
        %v4323 = vadd.f32 %v4322, %v4292
        %v4324 = vadd.f32 %v4323, %v4293
        %v4325 = vadd.f32 %v4324, %v4294
        %v4326 = vadd.f32 %v4325, %v4295
        %v4327 = vadd.f32 %v4326, %v4296
        %v4328 = vadd.f32 %v4327, %v4297
        %v4329 = vadd.f32 %v4328, %v4298
        %v4330 = vadd.f32 %v4329, %v4299
        %v4331 = vadd.f32 %v4330, %v4300
        %v4332 = vadd.f32 %v4331, %v4301
        %4333 = vadd.xlane.f32.xlu0 %v4332
        %v4334 = vpop.xlane.xlu0 %4333
        %v4335 = vadd.f32 %v4302, %v4303
        %v4336 = vadd.f32 %v4335, %v4304
        %v4337 = vadd.f32 %v4336, %v4305
        %v4338 = vadd.f32 %v4337, %v4306
        %v4339 = vadd.f32 %v4338, %v4307
        %v4340 = vadd.f32 %v4339, %v4308
        %v4341 = vadd.f32 %v4340, %v4309
        %v4342 = vadd.f32 %v4341, %v4310
        %v4343 = vadd.f32 %v4342, %v4311
        %v4344 = vadd.f32 %v4343, %v4312
        %v4345 = vadd.f32 %v4344, %v4313
        %v4346 = vadd.f32 %v4345, %v4314
        %v4347 = vadd.f32 %v4346, %v4315
        %v4348 = vadd.f32 %v4347, %v4316
        %v4349 = vadd.f32 %v4348, %v4317
        %4350 = vadd.xlane.f32.xlu0 %v4349
        %v4351 = vpop.xlane.xlu0 %4350
        %v4352 = vmul.f32 %v4334, 0.00048828125
        %v4353 = vmul.f32 %v4351, 0.00048828125
        %v4354 = vmax.f32 %v4286, %v4288
        %v4355 = vmax.f32 %v4287, %v4289
        %v4356 = vmax.f32 %v4354, %v4290
        %v4357 = vmax.f32 %v4355, %v4291
        %v4358 = vmax.f32 %v4356, %v4292
        %v4359 = vmax.f32 %v4357, %v4293
        %v4360 = vmax.f32 %v4358, %v4294
        %v4361 = vmax.f32 %v4359, %v4295
        %v4362 = vmax.f32 %v4360, %v4296
        %v4363 = vmax.f32 %v4361, %v4297
        %v4364 = vmax.f32 %v4362, %v4298
        %v4365 = vmax.f32 %v4363, %v4299
        %v4366 = vmax.f32 %v4364, %v4300
        %v4367 = vmax.f32 %v4365, %v4301
        %v4368 = vmax.f32 %v4366, %v4367
        %4369 = vmax.xlane.f32.xlu0 %v4368
        %v4370 = vpop.xlane.xlu0 %4369
        %v4371 = vmax.f32 %v4302, %v4304
        %v4372 = vmax.f32 %v4303, %v4305
        %v4373 = vmax.f32 %v4371, %v4306
        %v4374 = vmax.f32 %v4372, %v4307
        %v4375 = vmax.f32 %v4373, %v4308
        %v4376 = vmax.f32 %v4374, %v4309
        %v4377 = vmax.f32 %v4375, %v4310
        %v4378 = vmax.f32 %v4376, %v4311
        %v4379 = vmax.f32 %v4377, %v4312
        %v4380 = vmax.f32 %v4378, %v4313
        %v4381 = vmax.f32 %v4379, %v4314
        %v4382 = vmax.f32 %v4380, %v4315
        %v4383 = vmax.f32 %v4381, %v4316
        %v4384 = vmax.f32 %v4382, %v4317
        %v4385 = vmax.f32 %v4383, %v4384
        %4386 = vmax.xlane.f32.xlu0 %v4385
        %v4387 = vpop.xlane.xlu0 %4386
        %v4388 = vmul.f32 %v557, %v4123
        %v4389 = vmul.f32 %v558, %v4127
        %v4390 = vmul.f32 %v559, %v4131
        %v4391 = vmul.f32 %v560, %v4135
        %v4392 = vmul.f32 %v561, %v4139
        %v4393 = vmul.f32 %v562, %v4143
        %v4394 = vmul.f32 %v563, %v4147
        %v4395 = vmul.f32 %v564, %v4151
        %v4396 = vmul.f32 %v565, %v4155
        %v4397 = vmul.f32 %v566, %v4159
        %v4398 = vmul.f32 %v567, %v4163
        %v4399 = vmul.f32 %v568, %v4167
        %v4400 = vmul.f32 %v569, %v4171
        %v4401 = vmul.f32 %v570, %v4175
        %v4402 = vmul.f32 %v571, %v4179
        %v4403 = vmul.f32 %v572, %v4183
        %v4404 = vmul.f32 %v573, %v4123
        %v4405 = vmul.f32 %v574, %v4127
        %v4406 = vmul.f32 %v575, %v4131
        %v4407 = vmul.f32 %v576, %v4135
        %v4408 = vmul.f32 %v577, %v4139
        %v4409 = vmul.f32 %v578, %v4143
        %v4410 = vmul.f32 %v579, %v4147
        %v4411 = vmul.f32 %v580, %v4151
        %v4412 = vmul.f32 %v581, %v4155
        %v4413 = vmul.f32 %v582, %v4159
        %v4414 = vmul.f32 %v583, %v4163
        %v4415 = vmul.f32 %v584, %v4167
        %v4416 = vmul.f32 %v585, %v4171
        %v4417 = vmul.f32 %v586, %v4175
        %v4418 = vmul.f32 %v587, %v4179
        %v4419 = vmul.f32 %v588, %v4183
        %v4420 = vadd.f32 %v4388, %v4389
        %v4421 = vadd.f32 %v4420, %v4390
        %v4422 = vadd.f32 %v4421, %v4391
        %v4423 = vadd.f32 %v4422, %v4392
        %v4424 = vadd.f32 %v4423, %v4393
        %v4425 = vadd.f32 %v4424, %v4394
        %v4426 = vadd.f32 %v4425, %v4395
        %v4427 = vadd.f32 %v4426, %v4396
        %v4428 = vadd.f32 %v4427, %v4397
        %v4429 = vadd.f32 %v4428, %v4398
        %v4430 = vadd.f32 %v4429, %v4399
        %v4431 = vadd.f32 %v4430, %v4400
        %v4432 = vadd.f32 %v4431, %v4401
        %v4433 = vadd.f32 %v4432, %v4402
        %v4434 = vadd.f32 %v4433, %v4403
        %4435 = vadd.xlane.f32.xlu0 %v4434
        %v4436 = vpop.xlane.xlu0 %4435
        %v4437 = vadd.f32 %v4404, %v4405
        %v4438 = vadd.f32 %v4437, %v4406
        %v4439 = vadd.f32 %v4438, %v4407
        %v4440 = vadd.f32 %v4439, %v4408
        %v4441 = vadd.f32 %v4440, %v4409
        %v4442 = vadd.f32 %v4441, %v4410
        %v4443 = vadd.f32 %v4442, %v4411
        %v4444 = vadd.f32 %v4443, %v4412
        %v4445 = vadd.f32 %v4444, %v4413
        %v4446 = vadd.f32 %v4445, %v4414
        %v4447 = vadd.f32 %v4446, %v4415
        %v4448 = vadd.f32 %v4447, %v4416
        %v4449 = vadd.f32 %v4448, %v4417
        %v4450 = vadd.f32 %v4449, %v4418
        %v4451 = vadd.f32 %v4450, %v4419
        %4452 = vadd.xlane.f32.xlu0 %v4451
        %v4453 = vpop.xlane.xlu0 %4452
        %v4454 = vmul.f32 %v4436, 0.00048828125
        %v4455 = vmul.f32 %v4453, 0.00048828125
        %v4456 = vmax.f32 %v4388, %v4390
        %v4457 = vmax.f32 %v4389, %v4391
        %v4458 = vmax.f32 %v4456, %v4392
        %v4459 = vmax.f32 %v4457, %v4393
        %v4460 = vmax.f32 %v4458, %v4394
        %v4461 = vmax.f32 %v4459, %v4395
        %v4462 = vmax.f32 %v4460, %v4396
        %v4463 = vmax.f32 %v4461, %v4397
        %v4464 = vmax.f32 %v4462, %v4398
        %v4465 = vmax.f32 %v4463, %v4399
        %v4466 = vmax.f32 %v4464, %v4400
        %v4467 = vmax.f32 %v4465, %v4401
        %v4468 = vmax.f32 %v4466, %v4402
        %v4469 = vmax.f32 %v4467, %v4403
        %v4470 = vmax.f32 %v4468, %v4469
        %4471 = vmax.xlane.f32.xlu0 %v4470
        %v4472 = vpop.xlane.xlu0 %4471
        %v4473 = vmax.f32 %v4404, %v4406
        %v4474 = vmax.f32 %v4405, %v4407
        %v4475 = vmax.f32 %v4473, %v4408
        %v4476 = vmax.f32 %v4474, %v4409
        %v4477 = vmax.f32 %v4475, %v4410
        %v4478 = vmax.f32 %v4476, %v4411
        %v4479 = vmax.f32 %v4477, %v4412
        %v4480 = vmax.f32 %v4478, %v4413
        %v4481 = vmax.f32 %v4479, %v4414
        %v4482 = vmax.f32 %v4480, %v4415
        %v4483 = vmax.f32 %v4481, %v4416
        %v4484 = vmax.f32 %v4482, %v4417
        %v4485 = vmax.f32 %v4483, %v4418
        %v4486 = vmax.f32 %v4484, %v4419
        %v4487 = vmax.f32 %v4485, %v4486
        %4488 = vmax.xlane.f32.xlu0 %v4487
        %v4489 = vpop.xlane.xlu0 %4488
        %v4490 = vmul.f32 %v654, %v4123
        %v4491 = vmul.f32 %v655, %v4127
        %v4492 = vmul.f32 %v656, %v4131
        %v4493 = vmul.f32 %v657, %v4135
        %v4494 = vmul.f32 %v658, %v4139
        %v4495 = vmul.f32 %v659, %v4143
        %v4496 = vmul.f32 %v660, %v4147
        %v4497 = vmul.f32 %v661, %v4151
        %v4498 = vmul.f32 %v662, %v4155
        %v4499 = vmul.f32 %v663, %v4159
        %v4500 = vmul.f32 %v664, %v4163
        %v4501 = vmul.f32 %v665, %v4167
        %v4502 = vmul.f32 %v666, %v4171
        %v4503 = vmul.f32 %v667, %v4175
        %v4504 = vmul.f32 %v668, %v4179
        %v4505 = vmul.f32 %v669, %v4183
        %v4506 = vmul.f32 %v670, %v4123
        %v4507 = vmul.f32 %v671, %v4127
        %v4508 = vmul.f32 %v672, %v4131
        %v4509 = vmul.f32 %v673, %v4135
        %v4510 = vmul.f32 %v674, %v4139
        %v4511 = vmul.f32 %v675, %v4143
        %v4512 = vmul.f32 %v676, %v4147
        %v4513 = vmul.f32 %v677, %v4151
        %v4514 = vmul.f32 %v678, %v4155
        %v4515 = vmul.f32 %v679, %v4159
        %v4516 = vmul.f32 %v680, %v4163
        %v4517 = vmul.f32 %v681, %v4167
        %v4518 = vmul.f32 %v682, %v4171
        %v4519 = vmul.f32 %v683, %v4175
        %v4520 = vmul.f32 %v684, %v4179
        %v4521 = vmul.f32 %v685, %v4183
        %v4522 = vadd.f32 %v4490, %v4491
        %v4523 = vadd.f32 %v4522, %v4492
        %v4524 = vadd.f32 %v4523, %v4493
        %v4525 = vadd.f32 %v4524, %v4494
        %v4526 = vadd.f32 %v4525, %v4495
        %v4527 = vadd.f32 %v4526, %v4496
        %v4528 = vadd.f32 %v4527, %v4497
        %v4529 = vadd.f32 %v4528, %v4498
        %v4530 = vadd.f32 %v4529, %v4499
        %v4531 = vadd.f32 %v4530, %v4500
        %v4532 = vadd.f32 %v4531, %v4501
        %v4533 = vadd.f32 %v4532, %v4502
        %v4534 = vadd.f32 %v4533, %v4503
        %v4535 = vadd.f32 %v4534, %v4504
        %v4536 = vadd.f32 %v4535, %v4505
        %4537 = vadd.xlane.f32.xlu0 %v4536
        %v4538 = vpop.xlane.xlu0 %4537
        %v4539 = vadd.f32 %v4506, %v4507
        %v4540 = vadd.f32 %v4539, %v4508
        %v4541 = vadd.f32 %v4540, %v4509
        %v4542 = vadd.f32 %v4541, %v4510
        %v4543 = vadd.f32 %v4542, %v4511
        %v4544 = vadd.f32 %v4543, %v4512
        %v4545 = vadd.f32 %v4544, %v4513
        %v4546 = vadd.f32 %v4545, %v4514
        %v4547 = vadd.f32 %v4546, %v4515
        %v4548 = vadd.f32 %v4547, %v4516
        %v4549 = vadd.f32 %v4548, %v4517
        %v4550 = vadd.f32 %v4549, %v4518
        %v4551 = vadd.f32 %v4550, %v4519
        %v4552 = vadd.f32 %v4551, %v4520
        %v4553 = vadd.f32 %v4552, %v4521
        %4554 = vadd.xlane.f32.xlu0 %v4553
        %v4555 = vpop.xlane.xlu0 %4554
        %v4556 = vmul.f32 %v4538, 0.00048828125
        %v4557 = vmul.f32 %v4555, 0.00048828125
        %v4558 = vmax.f32 %v4490, %v4492
        %v4559 = vmax.f32 %v4491, %v4493
        %v4560 = vmax.f32 %v4558, %v4494
        %v4561 = vmax.f32 %v4559, %v4495
        %v4562 = vmax.f32 %v4560, %v4496
        %v4563 = vmax.f32 %v4561, %v4497
        %v4564 = vmax.f32 %v4562, %v4498
        %v4565 = vmax.f32 %v4563, %v4499
        %v4566 = vmax.f32 %v4564, %v4500
        %v4567 = vmax.f32 %v4565, %v4501
        %v4568 = vmax.f32 %v4566, %v4502
        %v4569 = vmax.f32 %v4567, %v4503
        %v4570 = vmax.f32 %v4568, %v4504
        %v4571 = vmax.f32 %v4569, %v4505
        %v4572 = vmax.f32 %v4570, %v4571
        %4573 = vmax.xlane.f32.xlu0 %v4572
        %v4574 = vpop.xlane.xlu0 %4573
        %v4575 = vmax.f32 %v4506, %v4508
        %v4576 = vmax.f32 %v4507, %v4509
        %v4577 = vmax.f32 %v4575, %v4510
        %v4578 = vmax.f32 %v4576, %v4511
        %v4579 = vmax.f32 %v4577, %v4512
        %v4580 = vmax.f32 %v4578, %v4513
        %v4581 = vmax.f32 %v4579, %v4514
        %v4582 = vmax.f32 %v4580, %v4515
        %v4583 = vmax.f32 %v4581, %v4516
        %v4584 = vmax.f32 %v4582, %v4517
        %v4585 = vmax.f32 %v4583, %v4518
        %v4586 = vmax.f32 %v4584, %v4519
        %v4587 = vmax.f32 %v4585, %v4520
        %v4588 = vmax.f32 %v4586, %v4521
        %v4589 = vmax.f32 %v4587, %v4588
        %4590 = vmax.xlane.f32.xlu0 %v4589
        %v4591 = vpop.xlane.xlu0 %4590
        %v4592 = vmul.f32 %v751, %v4123
        %v4593 = vmul.f32 %v752, %v4127
        %v4594 = vmul.f32 %v753, %v4131
        %v4595 = vmul.f32 %v754, %v4135
        %v4596 = vmul.f32 %v755, %v4139
        %v4597 = vmul.f32 %v756, %v4143
        %v4598 = vmul.f32 %v757, %v4147
        %v4599 = vmul.f32 %v758, %v4151
        %v4600 = vmul.f32 %v759, %v4155
        %v4601 = vmul.f32 %v760, %v4159
        %v4602 = vmul.f32 %v761, %v4163
        %v4603 = vmul.f32 %v762, %v4167
        %v4604 = vmul.f32 %v763, %v4171
        %v4605 = vmul.f32 %v764, %v4175
        %v4606 = vmul.f32 %v765, %v4179
        %v4607 = vmul.f32 %v766, %v4183
        %v4608 = vmul.f32 %v767, %v4123
        %v4609 = vmul.f32 %v768, %v4127
        %v4610 = vmul.f32 %v769, %v4131
        %v4611 = vmul.f32 %v770, %v4135
        %v4612 = vmul.f32 %v771, %v4139
        %v4613 = vmul.f32 %v772, %v4143
        %v4614 = vmul.f32 %v773, %v4147
        %v4615 = vmul.f32 %v774, %v4151
        %v4616 = vmul.f32 %v775, %v4155
        %v4617 = vmul.f32 %v776, %v4159
        %v4618 = vmul.f32 %v777, %v4163
        %v4619 = vmul.f32 %v778, %v4167
        %v4620 = vmul.f32 %v779, %v4171
        %v4621 = vmul.f32 %v780, %v4175
        %v4622 = vmul.f32 %v781, %v4179
        %v4623 = vmul.f32 %v782, %v4183
        %v4624 = vadd.f32 %v4592, %v4593
        %v4625 = vadd.f32 %v4624, %v4594
        %v4626 = vadd.f32 %v4625, %v4595
        %v4627 = vadd.f32 %v4626, %v4596
        %v4628 = vadd.f32 %v4627, %v4597
        %v4629 = vadd.f32 %v4628, %v4598
        %v4630 = vadd.f32 %v4629, %v4599
        %v4631 = vadd.f32 %v4630, %v4600
        %v4632 = vadd.f32 %v4631, %v4601
        %v4633 = vadd.f32 %v4632, %v4602
        %v4634 = vadd.f32 %v4633, %v4603
        %v4635 = vadd.f32 %v4634, %v4604
        %v4636 = vadd.f32 %v4635, %v4605
        %v4637 = vadd.f32 %v4636, %v4606
        %v4638 = vadd.f32 %v4637, %v4607
        %4639 = vadd.xlane.f32.xlu0 %v4638
        %v4640 = vpop.xlane.xlu0 %4639
        %v4641 = vadd.f32 %v4608, %v4609
        %v4642 = vadd.f32 %v4641, %v4610
        %v4643 = vadd.f32 %v4642, %v4611
        %v4644 = vadd.f32 %v4643, %v4612
        %v4645 = vadd.f32 %v4644, %v4613
        %v4646 = vadd.f32 %v4645, %v4614
        %v4647 = vadd.f32 %v4646, %v4615
        %v4648 = vadd.f32 %v4647, %v4616
        %v4649 = vadd.f32 %v4648, %v4617
        %v4650 = vadd.f32 %v4649, %v4618
        %v4651 = vadd.f32 %v4650, %v4619
        %v4652 = vadd.f32 %v4651, %v4620
        %v4653 = vadd.f32 %v4652, %v4621
        %v4654 = vadd.f32 %v4653, %v4622
        %v4655 = vadd.f32 %v4654, %v4623
        %4656 = vadd.xlane.f32.xlu0 %v4655
        %v4657 = vpop.xlane.xlu0 %4656
        %v4658 = vmul.f32 %v4640, 0.00048828125
        %v4659 = vmul.f32 %v4657, 0.00048828125
        %v4660 = vmax.f32 %v4592, %v4594
        %v4661 = vmax.f32 %v4593, %v4595
        %v4662 = vmax.f32 %v4660, %v4596
        %v4663 = vmax.f32 %v4661, %v4597
        %v4664 = vmax.f32 %v4662, %v4598
        %v4665 = vmax.f32 %v4663, %v4599
        %v4666 = vmax.f32 %v4664, %v4600
        %v4667 = vmax.f32 %v4665, %v4601
        %v4668 = vmax.f32 %v4666, %v4602
        %v4669 = vmax.f32 %v4667, %v4603
        %v4670 = vmax.f32 %v4668, %v4604
        %v4671 = vmax.f32 %v4669, %v4605
        %v4672 = vmax.f32 %v4670, %v4606
        %v4673 = vmax.f32 %v4671, %v4607
        %v4674 = vmax.f32 %v4672, %v4673
        %4675 = vmax.xlane.f32.xlu0 %v4674
        %v4676 = vpop.xlane.xlu0 %4675
        %v4677 = vmax.f32 %v4608, %v4610
        %v4678 = vmax.f32 %v4609, %v4611
        %v4679 = vmax.f32 %v4677, %v4612
        %v4680 = vmax.f32 %v4678, %v4613
        %v4681 = vmax.f32 %v4679, %v4614
        %v4682 = vmax.f32 %v4680, %v4615
        %v4683 = vmax.f32 %v4681, %v4616
        %v4684 = vmax.f32 %v4682, %v4617
        %v4685 = vmax.f32 %v4683, %v4618
        %v4686 = vmax.f32 %v4684, %v4619
        %v4687 = vmax.f32 %v4685, %v4620
        %v4688 = vmax.f32 %v4686, %v4621
        %v4689 = vmax.f32 %v4687, %v4622
        %v4690 = vmax.f32 %v4688, %v4623
        %v4691 = vmax.f32 %v4689, %v4690
        %4692 = vmax.xlane.f32.xlu0 %v4691
        %v4693 = vpop.xlane.xlu0 %4692
        %v4694 = vmul.f32 %v848, %v4123
        %v4695 = vmul.f32 %v849, %v4127
        %v4696 = vmul.f32 %v850, %v4131
        %v4697 = vmul.f32 %v851, %v4135
        %v4698 = vmul.f32 %v852, %v4139
        %v4699 = vmul.f32 %v853, %v4143
        %v4700 = vmul.f32 %v854, %v4147
        %v4701 = vmul.f32 %v855, %v4151
        %v4702 = vmul.f32 %v856, %v4155
        %v4703 = vmul.f32 %v857, %v4159
        %v4704 = vmul.f32 %v858, %v4163
        %v4705 = vmul.f32 %v859, %v4167
        %v4706 = vmul.f32 %v860, %v4171
        %v4707 = vmul.f32 %v861, %v4175
        %v4708 = vmul.f32 %v862, %v4179
        %v4709 = vmul.f32 %v863, %v4183
        %v4710 = vmul.f32 %v864, %v4123
        %v4711 = vmul.f32 %v865, %v4127
        %v4712 = vmul.f32 %v866, %v4131
        %v4713 = vmul.f32 %v867, %v4135
        %v4714 = vmul.f32 %v868, %v4139
        %v4715 = vmul.f32 %v869, %v4143
        %v4716 = vmul.f32 %v870, %v4147
        %v4717 = vmul.f32 %v871, %v4151
        %v4718 = vmul.f32 %v872, %v4155
        %v4719 = vmul.f32 %v873, %v4159
        %v4720 = vmul.f32 %v874, %v4163
        %v4721 = vmul.f32 %v875, %v4167
        %v4722 = vmul.f32 %v876, %v4171
        %v4723 = vmul.f32 %v877, %v4175
        %v4724 = vmul.f32 %v878, %v4179
        %v4725 = vmul.f32 %v879, %v4183
        %v4726 = vadd.f32 %v4694, %v4695
        %v4727 = vadd.f32 %v4726, %v4696
        %v4728 = vadd.f32 %v4727, %v4697
        %v4729 = vadd.f32 %v4728, %v4698
        %v4730 = vadd.f32 %v4729, %v4699
        %v4731 = vadd.f32 %v4730, %v4700
        %v4732 = vadd.f32 %v4731, %v4701
        %v4733 = vadd.f32 %v4732, %v4702
        %v4734 = vadd.f32 %v4733, %v4703
        %v4735 = vadd.f32 %v4734, %v4704
        %v4736 = vadd.f32 %v4735, %v4705
        %v4737 = vadd.f32 %v4736, %v4706
        %v4738 = vadd.f32 %v4737, %v4707
        %v4739 = vadd.f32 %v4738, %v4708
        %v4740 = vadd.f32 %v4739, %v4709
        %4741 = vadd.xlane.f32.xlu0 %v4740
        %v4742 = vpop.xlane.xlu0 %4741
        %v4743 = vadd.f32 %v4710, %v4711
        %v4744 = vadd.f32 %v4743, %v4712
        %v4745 = vadd.f32 %v4744, %v4713
        %v4746 = vadd.f32 %v4745, %v4714
        %v4747 = vadd.f32 %v4746, %v4715
        %v4748 = vadd.f32 %v4747, %v4716
        %v4749 = vadd.f32 %v4748, %v4717
        %v4750 = vadd.f32 %v4749, %v4718
        %v4751 = vadd.f32 %v4750, %v4719
        %v4752 = vadd.f32 %v4751, %v4720
        %v4753 = vadd.f32 %v4752, %v4721
        %v4754 = vadd.f32 %v4753, %v4722
        %v4755 = vadd.f32 %v4754, %v4723
        %v4756 = vadd.f32 %v4755, %v4724
        %v4757 = vadd.f32 %v4756, %v4725
        %4758 = vadd.xlane.f32.xlu0 %v4757
        %v4759 = vpop.xlane.xlu0 %4758
        %v4760 = vmul.f32 %v4742, 0.00048828125
        %v4761 = vmul.f32 %v4759, 0.00048828125
        %v4762 = vmax.f32 %v4694, %v4696
        %v4763 = vmax.f32 %v4695, %v4697
        %v4764 = vmax.f32 %v4762, %v4698
        %v4765 = vmax.f32 %v4763, %v4699
        %v4766 = vmax.f32 %v4764, %v4700
        %v4767 = vmax.f32 %v4765, %v4701
        %v4768 = vmax.f32 %v4766, %v4702
        %v4769 = vmax.f32 %v4767, %v4703
        %v4770 = vmax.f32 %v4768, %v4704
        %v4771 = vmax.f32 %v4769, %v4705
        %v4772 = vmax.f32 %v4770, %v4706
        %v4773 = vmax.f32 %v4771, %v4707
        %v4774 = vmax.f32 %v4772, %v4708
        %v4775 = vmax.f32 %v4773, %v4709
        %v4776 = vmax.f32 %v4774, %v4775
        %4777 = vmax.xlane.f32.xlu0 %v4776
        %v4778 = vpop.xlane.xlu0 %4777
        %v4779 = vmax.f32 %v4710, %v4712
        %v4780 = vmax.f32 %v4711, %v4713
        %v4781 = vmax.f32 %v4779, %v4714
        %v4782 = vmax.f32 %v4780, %v4715
        %v4783 = vmax.f32 %v4781, %v4716
        %v4784 = vmax.f32 %v4782, %v4717
        %v4785 = vmax.f32 %v4783, %v4718
        %v4786 = vmax.f32 %v4784, %v4719
        %v4787 = vmax.f32 %v4785, %v4720
        %v4788 = vmax.f32 %v4786, %v4721
        %v4789 = vmax.f32 %v4787, %v4722
        %v4790 = vmax.f32 %v4788, %v4723
        %v4791 = vmax.f32 %v4789, %v4724
        %v4792 = vmax.f32 %v4790, %v4725
        %v4793 = vmax.f32 %v4791, %v4792
        %4794 = vmax.xlane.f32.xlu0 %v4793
        %v4795 = vpop.xlane.xlu0 %4794
        %v4796 = vmul.f32 %v945, %v4123
        %v4797 = vmul.f32 %v946, %v4127
        %v4798 = vmul.f32 %v947, %v4131
        %v4799 = vmul.f32 %v948, %v4135
        %v4800 = vmul.f32 %v949, %v4139
        %v4801 = vmul.f32 %v950, %v4143
        %v4802 = vmul.f32 %v951, %v4147
        %v4803 = vmul.f32 %v952, %v4151
        %v4804 = vmul.f32 %v953, %v4155
        %v4805 = vmul.f32 %v954, %v4159
        %v4806 = vmul.f32 %v955, %v4163
        %v4807 = vmul.f32 %v956, %v4167
        %v4808 = vmul.f32 %v957, %v4171
        %v4809 = vmul.f32 %v958, %v4175
        %v4810 = vmul.f32 %v959, %v4179
        %v4811 = vmul.f32 %v960, %v4183
        %v4812 = vmul.f32 %v961, %v4123
        %v4813 = vmul.f32 %v962, %v4127
        %v4814 = vmul.f32 %v963, %v4131
        %v4815 = vmul.f32 %v964, %v4135
        %v4816 = vmul.f32 %v965, %v4139
        %v4817 = vmul.f32 %v966, %v4143
        %v4818 = vmul.f32 %v967, %v4147
        %v4819 = vmul.f32 %v968, %v4151
        %v4820 = vmul.f32 %v969, %v4155
        %v4821 = vmul.f32 %v970, %v4159
        %v4822 = vmul.f32 %v971, %v4163
        %v4823 = vmul.f32 %v972, %v4167
        %v4824 = vmul.f32 %v973, %v4171
        %v4825 = vmul.f32 %v974, %v4175
        %v4826 = vmul.f32 %v975, %v4179
        %v4827 = vmul.f32 %v976, %v4183
        %v4828 = vadd.f32 %v4796, %v4797
        %v4829 = vadd.f32 %v4828, %v4798
        %v4830 = vadd.f32 %v4829, %v4799
        %v4831 = vadd.f32 %v4830, %v4800
        %v4832 = vadd.f32 %v4831, %v4801
        %v4833 = vadd.f32 %v4832, %v4802
        %v4834 = vadd.f32 %v4833, %v4803
        %v4835 = vadd.f32 %v4834, %v4804
        %v4836 = vadd.f32 %v4835, %v4805
        %v4837 = vadd.f32 %v4836, %v4806
        %v4838 = vadd.f32 %v4837, %v4807
        %v4839 = vadd.f32 %v4838, %v4808
        %v4840 = vadd.f32 %v4839, %v4809
        %v4841 = vadd.f32 %v4840, %v4810
        %v4842 = vadd.f32 %v4841, %v4811
        %4843 = vadd.xlane.f32.xlu0 %v4842
        %v4844 = vpop.xlane.xlu0 %4843
        %v4845 = vadd.f32 %v4812, %v4813
        %v4846 = vadd.f32 %v4845, %v4814
        %v4847 = vadd.f32 %v4846, %v4815
        %v4848 = vadd.f32 %v4847, %v4816
        %v4849 = vadd.f32 %v4848, %v4817
        %v4850 = vadd.f32 %v4849, %v4818
        %v4851 = vadd.f32 %v4850, %v4819
        %v4852 = vadd.f32 %v4851, %v4820
        %v4853 = vadd.f32 %v4852, %v4821
        %v4854 = vadd.f32 %v4853, %v4822
        %v4855 = vadd.f32 %v4854, %v4823
        %v4856 = vadd.f32 %v4855, %v4824
        %v4857 = vadd.f32 %v4856, %v4825
        %v4858 = vadd.f32 %v4857, %v4826
        %v4859 = vadd.f32 %v4858, %v4827
        %4860 = vadd.xlane.f32.xlu0 %v4859
        %v4861 = vpop.xlane.xlu0 %4860
        %v4862 = vmul.f32 %v4844, 0.00048828125
        %v4863 = vmul.f32 %v4861, 0.00048828125
        %v4864 = vmax.f32 %v4796, %v4798
        %v4865 = vmax.f32 %v4797, %v4799
        %v4866 = vmax.f32 %v4864, %v4800
        %v4867 = vmax.f32 %v4865, %v4801
        %v4868 = vmax.f32 %v4866, %v4802
        %v4869 = vmax.f32 %v4867, %v4803
        %v4870 = vmax.f32 %v4868, %v4804
        %v4871 = vmax.f32 %v4869, %v4805
        %v4872 = vmax.f32 %v4870, %v4806
        %v4873 = vmax.f32 %v4871, %v4807
        %v4874 = vmax.f32 %v4872, %v4808
        %v4875 = vmax.f32 %v4873, %v4809
        %v4876 = vmax.f32 %v4874, %v4810
        %v4877 = vmax.f32 %v4875, %v4811
        %v4878 = vmax.f32 %v4876, %v4877
        %4879 = vmax.xlane.f32.xlu0 %v4878
        %v4880 = vpop.xlane.xlu0 %4879
        %v4881 = vmax.f32 %v4812, %v4814
        %v4882 = vmax.f32 %v4813, %v4815
        %v4883 = vmax.f32 %v4881, %v4816
        %v4884 = vmax.f32 %v4882, %v4817
        %v4885 = vmax.f32 %v4883, %v4818
        %v4886 = vmax.f32 %v4884, %v4819
        %v4887 = vmax.f32 %v4885, %v4820
        %v4888 = vmax.f32 %v4886, %v4821
        %v4889 = vmax.f32 %v4887, %v4822
        %v4890 = vmax.f32 %v4888, %v4823
        %v4891 = vmax.f32 %v4889, %v4824
        %v4892 = vmax.f32 %v4890, %v4825
        %v4893 = vmax.f32 %v4891, %v4826
        %v4894 = vmax.f32 %v4892, %v4827
        %v4895 = vmax.f32 %v4893, %v4894
        %4896 = vmax.xlane.f32.xlu0 %v4895
        %v4897 = vpop.xlane.xlu0 %4896
        %v4898 = vmul.f32 %v1042, %v4123
        %v4899 = vmul.f32 %v1043, %v4127
        %v4900 = vmul.f32 %v1044, %v4131
        %v4901 = vmul.f32 %v1045, %v4135
        %v4902 = vmul.f32 %v1046, %v4139
        %v4903 = vmul.f32 %v1047, %v4143
        %v4904 = vmul.f32 %v1048, %v4147
        %v4905 = vmul.f32 %v1049, %v4151
        %v4906 = vmul.f32 %v1050, %v4155
        %v4907 = vmul.f32 %v1051, %v4159
        %v4908 = vmul.f32 %v1052, %v4163
        %v4909 = vmul.f32 %v1053, %v4167
        %v4910 = vmul.f32 %v1054, %v4171
        %v4911 = vmul.f32 %v1055, %v4175
        %v4912 = vmul.f32 %v1056, %v4179
        %v4913 = vmul.f32 %v1057, %v4183
        %v4914 = vmul.f32 %v1058, %v4123
        %v4915 = vmul.f32 %v1059, %v4127
        %v4916 = vmul.f32 %v1060, %v4131
        %v4917 = vmul.f32 %v1061, %v4135
        %v4918 = vmul.f32 %v1062, %v4139
        %v4919 = vmul.f32 %v1063, %v4143
        %v4920 = vmul.f32 %v1064, %v4147
        %v4921 = vmul.f32 %v1065, %v4151
        %v4922 = vmul.f32 %v1066, %v4155
        %v4923 = vmul.f32 %v1067, %v4159
        %v4924 = vmul.f32 %v1068, %v4163
        %v4925 = vmul.f32 %v1069, %v4167
        %v4926 = vmul.f32 %v1070, %v4171
        %v4927 = vmul.f32 %v1071, %v4175
        %v4928 = vmul.f32 %v1072, %v4179
        %v4929 = vmul.f32 %v1073, %v4183
        %v4930 = vadd.f32 %v4898, %v4899
        %v4931 = vadd.f32 %v4930, %v4900
        %v4932 = vadd.f32 %v4931, %v4901
        %v4933 = vadd.f32 %v4932, %v4902
        %v4934 = vadd.f32 %v4933, %v4903
        %v4935 = vadd.f32 %v4934, %v4904
        %v4936 = vadd.f32 %v4935, %v4905
        %v4937 = vadd.f32 %v4936, %v4906
        %v4938 = vadd.f32 %v4937, %v4907
        %v4939 = vadd.f32 %v4938, %v4908
        %v4940 = vadd.f32 %v4939, %v4909
        %v4941 = vadd.f32 %v4940, %v4910
        %v4942 = vadd.f32 %v4941, %v4911
        %v4943 = vadd.f32 %v4942, %v4912
        %v4944 = vadd.f32 %v4943, %v4913
        %4945 = vadd.xlane.f32.xlu0 %v4944
        %v4946 = vpop.xlane.xlu0 %4945
        %v4947 = vadd.f32 %v4914, %v4915
        %v4948 = vadd.f32 %v4947, %v4916
        %v4949 = vadd.f32 %v4948, %v4917
        %v4950 = vadd.f32 %v4949, %v4918
        %v4951 = vadd.f32 %v4950, %v4919
        %v4952 = vadd.f32 %v4951, %v4920
        %v4953 = vadd.f32 %v4952, %v4921
        %v4954 = vadd.f32 %v4953, %v4922
        %v4955 = vadd.f32 %v4954, %v4923
        %v4956 = vadd.f32 %v4955, %v4924
        %v4957 = vadd.f32 %v4956, %v4925
        %v4958 = vadd.f32 %v4957, %v4926
        %v4959 = vadd.f32 %v4958, %v4927
        %v4960 = vadd.f32 %v4959, %v4928
        %v4961 = vadd.f32 %v4960, %v4929
        %4962 = vadd.xlane.f32.xlu0 %v4961
        %v4963 = vpop.xlane.xlu0 %4962
        %v4964 = vmul.f32 %v4946, 0.00048828125
        %v4965 = vmul.f32 %v4963, 0.00048828125
        %v4966 = vmax.f32 %v4898, %v4900
        %v4967 = vmax.f32 %v4899, %v4901
        %v4968 = vmax.f32 %v4966, %v4902
        %v4969 = vmax.f32 %v4967, %v4903
        %v4970 = vmax.f32 %v4968, %v4904
        %v4971 = vmax.f32 %v4969, %v4905
        %v4972 = vmax.f32 %v4970, %v4906
        %v4973 = vmax.f32 %v4971, %v4907
        %v4974 = vmax.f32 %v4972, %v4908
        %v4975 = vmax.f32 %v4973, %v4909
        %v4976 = vmax.f32 %v4974, %v4910
        %v4977 = vmax.f32 %v4975, %v4911
        %v4978 = vmax.f32 %v4976, %v4912
        %v4979 = vmax.f32 %v4977, %v4913
        %v4980 = vmax.f32 %v4978, %v4979
        %4981 = vmax.xlane.f32.xlu0 %v4980
        %v4982 = vpop.xlane.xlu0 %4981
        %v4983 = vmax.f32 %v4914, %v4916
        %v4984 = vmax.f32 %v4915, %v4917
        %v4985 = vmax.f32 %v4983, %v4918
        %v4986 = vmax.f32 %v4984, %v4919
        %v4987 = vmax.f32 %v4985, %v4920
        %v4988 = vmax.f32 %v4986, %v4921
        %v4989 = vmax.f32 %v4987, %v4922
        %v4990 = vmax.f32 %v4988, %v4923
        %v4991 = vmax.f32 %v4989, %v4924
        %v4992 = vmax.f32 %v4990, %v4925
        %v4993 = vmax.f32 %v4991, %v4926
        %v4994 = vmax.f32 %v4992, %v4927
        %v4995 = vmax.f32 %v4993, %v4928
        %v4996 = vmax.f32 %v4994, %v4929
        %v4997 = vmax.f32 %v4995, %v4996
        %4998 = vmax.xlane.f32.xlu0 %v4997
        %v4999 = vpop.xlane.xlu0 %4998
        %vm5000 = vcmask 23552
        %v5001 = vsel %vm5000, 0.0, %v4250
        %v5002 = vsel %vm5000, 0.0, %v4251
        %vm5003 = vcmask 31744
        %v5004 = vsel %vm5003, %v5001, %v4352
        %v5005 = vsel %vm5003, %v5002, %v4353
        %vm5006 = vcmask 39936
        %v5007 = vsel %vm5006, %v5004, %v4454
        %v5008 = vsel %vm5006, %v5005, %v4455
        %vm5009 = vcmask 48128
        %v5010 = vsel %vm5009, %v5007, %v4556
        %v5011 = vsel %vm5009, %v5008, %v4557
        %vm5012 = vcmask 56320
        %v5013 = vsel %vm5012, %v5010, %v4658
        %v5014 = vsel %vm5012, %v5011, %v4659
        %vm5015 = vcmask 64512
        %v5016 = vsel %vm5015, %v5013, %v4760
        %v5017 = vsel %vm5015, %v5014, %v4761
        %vm5018 = vcmask 72704
        %v5019 = vsel %vm5018, %v5016, %v4862
        %v5020 = vsel %vm5018, %v5017, %v4863
        %vm5021 = vcmask 80896
        %v5022 = vsel %vm5021, %v5019, %v4964
        %v5023 = vsel %vm5021, %v5020, %v4965
        %vm5024 = vcmask 89088
        %v5025 = vsel %vm5024, %v5022, 0.0
        %v5026 = vsel %vm5024, %v5023, 0.0
        %v5027 = vsel %vm5000, 0.0, %v4268
        %v5028 = vsel %vm5000, 0.0, %v4285
        %v5029 = vsel %vm5003, %v5027, %v4370
        %v5030 = vsel %vm5003, %v5028, %v4387
        %v5031 = vsel %vm5006, %v5029, %v4472
        %v5032 = vsel %vm5006, %v5030, %v4489
        %v5033 = vsel %vm5009, %v5031, %v4574
        %v5034 = vsel %vm5009, %v5032, %v4591
        %v5035 = vsel %vm5012, %v5033, %v4676
        %v5036 = vsel %vm5012, %v5034, %v4693
        %v5037 = vsel %vm5015, %v5035, %v4778
        %v5038 = vsel %vm5015, %v5036, %v4795
        %v5039 = vsel %vm5018, %v5037, %v4880
        %v5040 = vsel %vm5018, %v5038, %v4897
        %v5041 = vsel %vm5021, %v5039, %v4982
        %v5042 = vsel %vm5021, %v5040, %v4999
        %v5043 = vsel %vm5024, %v5041, 0.0
        %v5044 = vsel %vm5024, %v5042, 0.0
        %5047 = vrot.lane.b32.xlu0 %v5025, 127
        %v5048 = vpop.permute.xlu0 %5047
        %5049 = vrot.lane.b32.xlu0 %v5026, 127
        %v5050 = vpop.permute.xlu0 %5049
        %5053 = vrot.lane.b32.xlu0 %v5025, 126
        %v5054 = vpop.permute.xlu0 %5053
        %5055 = vrot.lane.b32.xlu0 %v5026, 126
        %v5056 = vpop.permute.xlu0 %5055
        %5059 = vrot.lane.b32.xlu0 %v5025, 125
        %v5060 = vpop.permute.xlu0 %5059
        %5061 = vrot.lane.b32.xlu0 %v5026, 125
        %v5062 = vpop.permute.xlu0 %5061
        %5065 = vrot.lane.b32.xlu0 %v5025, 124
        %v5066 = vpop.permute.xlu0 %5065
        %5067 = vrot.lane.b32.xlu0 %v5026, 124
        %v5068 = vpop.permute.xlu0 %5067
        %5071 = vrot.lane.b32.xlu0 %v5025, 123
        %v5072 = vpop.permute.xlu0 %5071
        %5073 = vrot.lane.b32.xlu0 %v5026, 123
        %v5074 = vpop.permute.xlu0 %5073
        %5077 = vrot.lane.b32.xlu0 %v5025, 122
        %v5078 = vpop.permute.xlu0 %5077
        %5079 = vrot.lane.b32.xlu0 %v5026, 122
        %v5080 = vpop.permute.xlu0 %5079
        %5085 = vrot.lane.b32.xlu0 %v5043, 127
        %v5086 = vpop.permute.xlu0 %5085
        %5087 = vrot.lane.b32.xlu0 %v5044, 127
        %v5088 = vpop.permute.xlu0 %5087
        %5091 = vrot.lane.b32.xlu0 %v5043, 126
        %v5092 = vpop.permute.xlu0 %5091
        %5093 = vrot.lane.b32.xlu0 %v5044, 126
        %v5094 = vpop.permute.xlu0 %5093
        %5097 = vrot.lane.b32.xlu0 %v5043, 125
        %v5098 = vpop.permute.xlu0 %5097
        %5099 = vrot.lane.b32.xlu0 %v5044, 125
        %v5100 = vpop.permute.xlu0 %5099
        %5103 = vrot.lane.b32.xlu0 %v5043, 124
        %v5104 = vpop.permute.xlu0 %5103
        %5105 = vrot.lane.b32.xlu0 %v5044, 124
        %v5106 = vpop.permute.xlu0 %5105
        %5109 = vrot.lane.b32.xlu0 %v5043, 123
        %v5110 = vpop.permute.xlu0 %5109
        %5111 = vrot.lane.b32.xlu0 %v5044, 123
        %v5112 = vpop.permute.xlu0 %5111
        %5115 = vrot.lane.b32.xlu0 %v5043, 122
        %v5116 = vpop.permute.xlu0 %5115
        %5117 = vrot.lane.b32.xlu0 %v5044, 122
        %v5118 = vpop.permute.xlu0 %5117
        %v5121 = vld [vmem:[#allocation11] sm:$0xff]
        %v5122 = vld [vmem:[#allocation11 + $0x8] sm:$0xff]
        %v5123 = vld [vmem:[#allocation11 + $0x10] sm:$0xff]
        %v5124 = vld [vmem:[#allocation11 + $0x18] sm:$0xff]
        %s5125 = sld [smem:[#allocation2]]
        %v5126 = vstv %s5125
        %vm5127 = vcmask 785408
        %v5129 = vsel %vm5127, %v5122, 0
        %v5132 = vsel %vm5127, %v5124, 0
        %5134 = vmatprep.subr.mxu0 0.0
        %5135 = vmatpush1.msra.mxu0 %v5044
        %5136 = vmatprep.subr.mxu0 0.0
        %5137 = vmatpush1.msra.mxu0 %v5043
        %5138 = vmatprep.subr.mxu0 0.0
        %5139 = vmatpush1.msra.mxu0 %v5080
        %5140 = vmatprep.subr.mxu0 0.0
        %5141 = vmatpush1.msra.mxu0 %v5078
        %5142 = vmatprep.subr.mxu0 0.0
        %5143 = vmatpush1.msra.mxu0 %v5074
        %5144 = vmatprep.subr.mxu0 0.0
        %5145 = vmatpush1.msra.mxu0 %v5072
        %5146 = vmatprep.subr.mxu0 0.0
        %5147 = vmatpush1.msra.mxu0 %v5068
        %5148 = vmatprep.subr.mxu0 0.0
        %5149 = vmatpush1.msra.mxu0 %v5066
        %5150 = vmatprep.subr.mxu0 0.0
        %5151 = vmatpush1.msra.mxu0 %v5062
        %5152 = vmatprep.subr.mxu0 0.0
        %5153 = vmatpush1.msra.mxu0 %v5060
        %5154 = vmatprep.subr.mxu0 0.0
        %5155 = vmatpush1.msra.mxu0 %v5056
        %5156 = vmatprep.subr.mxu0 0.0
        %5157 = vmatpush1.msra.mxu0 %v5054
        %5158 = vmatprep.subr.mxu0 0.0
        %5159 = vmatpush1.msra.mxu0 %v5050
        %5160 = vmatprep.subr.mxu0 0.0
        %5161 = vmatpush1.msra.mxu0 %v5048
        %5162 = vmatprep.subr.mxu0 0.0
        %5163 = vmatpush1.msra.mxu0 %v5026
        %5164 = vmatprep.subr.mxu0 0.0
        %5165 = vmatpush1.msra.mxu0 %v5025
        %5166 = vmatprep.subr.mxu0 0.0
        %5167 = vmatpush2.msra.mxu0 0.0
        %5168 = vmatprep.subr.mxu0 0.0
        %5169 = vmatpush2.msra.mxu0 0.0
        %5170 = vmatprep.subr.mxu0 0.0
        %5171 = vmatpush2.msra.mxu0 0.0
        %5172 = vmatprep.subr.mxu0 0.0
        %5173 = vmatpush2.msra.mxu0 0.0
        %5174 = vmatprep.subr.mxu0 0.0
        %5175 = vmatpush2.msra.mxu0 %v5118
        %5176 = vmatprep.subr.mxu0 0.0
        %5177 = vmatpush2.msra.mxu0 %v5116
        %5178 = vmatprep.subr.mxu0 0.0
        %5179 = vmatpush2.msra.mxu0 %v5112
        %5180 = vmatprep.subr.mxu0 0.0
        %5181 = vmatpush2.msra.mxu0 %v5110
        %5182 = vmatprep.subr.mxu0 0.0
        %5183 = vmatpush2.msra.mxu0 %v5106
        %5184 = vmatprep.subr.mxu0 0.0
        %5185 = vmatpush2.msra.mxu0 %v5104
        %5186 = vmatprep.subr.mxu0 0.0
        %5187 = vmatpush2.msra.mxu0 %v5100
        %5188 = vmatprep.subr.mxu0 0.0
        %5189 = vmatpush2.msra.mxu0 %v5098
        %5190 = vmatprep.subr.mxu0 0.0
        %5191 = vmatpush2.msra.mxu0 %v5094
        %5192 = vmatprep.subr.mxu0 0.0
        %5193 = vmatpush2.msra.mxu0 %v5092
        %5194 = vmatprep.subr.mxu0 0.0
        %5195 = vmatpush2.msra.mxu0 %v5088
        %5196 = vmatprep.subr.mxu0 0.0
        %5197 = vmatpush2.msra.mxu0 %v5086
        %5198 = vmatprep.mubr.f32.mxu0 %v5129
        %5199 = vmatmul.mubr.f32.gmra.mxu0 %v5121
        %v5200 = vpop.f32.mrf.mxu0
        %v5201 = vadd.f32 %v5126, %v5200
        %v5202 = vpop.f32.mrf.mxu0
        %5203 = vmatprep.mubr.f32.mxu0 %v5132
        %5204 = vmatmul.mubr.f32.gmra.mxu0 %v5123
        %v5205 = vpop.f32.mrf.mxu0
        %v5206 = vadd.f32 %v5126, %v5205
        %v5207 = vpop.f32.mrf.mxu0
        %5208 = vdwg.mxu0
        %v5209 = vxor.u32 %v5201, 2147483648
        %v5210 = vxor.u32 %v5206, 2147483648
        %v5211 = vmul.f32 %v5209, 1.442695
        %v5212 = vpow.pop %v5211
        %v5213 = vmul.f32 %v5210, 1.442695
        %v5214 = vpow.pop %v5213
        %v5215 = vadd.f32 %v5212, 1.0
        %v5216 = vadd.f32 %v5214, 1.0
        %v5217 = vrcp.pop %v5215
        %v5218 = vmul.f32 1.0, %v5217
        %v5219 = vrcp.pop %v5216
        %v5220 = vmul.f32 1.0, %v5219
        %5221 = vst.msk [vmem:[%s393] sm:$0xff] %vm5015, %v5218
        %5222 = vst.msk [vmem:[%s393 + $0x8] sm:$0xff] %vm5015, %v5220
        %v5223 = vld [vmem:[%s335] sm:$0xff]
        %v5224 = vld [vmem:[%s335 + $0x8] sm:$0xff]
        %v5225 = vld [vmem:[%s335 + $0x10] sm:$0xff]
        %v5226 = vld [vmem:[%s335 + $0x18] sm:$0xff]
        %v5227 = vld [vmem:[%s335 + $0x20] sm:$0xff]
        %v5228 = vld [vmem:[%s335 + $0x28] sm:$0xff]
        %v5229 = vld [vmem:[%s335 + $0x30] sm:$0xff]
        %v5230 = vld [vmem:[%s335 + $0x38] sm:$0xff]
        %v5231 = vld [vmem:[%s335 + $0x40] sm:$0xff]
        %v5232 = vld [vmem:[%s335 + $0x48] sm:$0xff]
        %v5233 = vld [vmem:[%s335 + $0x50] sm:$0xff]
        %v5234 = vld [vmem:[%s335 + $0x58] sm:$0xff]
        %v5235 = vld [vmem:[%s335 + $0x60] sm:$0xff]
        %v5236 = vld [vmem:[%s335 + $0x68] sm:$0xff]
        %v5237 = vld [vmem:[%s335 + $0x70] sm:$0xff]
        %v5238 = vld [vmem:[%s335 + $0x78] sm:$0xff]
        %v5239 = vunpack.c.l.bf16 %v5223
        %v5240 = vunpack.c.h.bf16 %v5223
        %v5241 = vunpack.c.l.bf16 %v5224
        %v5242 = vunpack.c.h.bf16 %v5224
        %v5243 = vunpack.c.l.bf16 %v5225
        %v5244 = vunpack.c.h.bf16 %v5225
        %v5245 = vunpack.c.l.bf16 %v5226
        %v5246 = vunpack.c.h.bf16 %v5226
        %v5247 = vunpack.c.l.bf16 %v5227
        %v5248 = vunpack.c.h.bf16 %v5227
        %v5249 = vunpack.c.l.bf16 %v5228
        %v5250 = vunpack.c.h.bf16 %v5228
        %v5251 = vunpack.c.l.bf16 %v5229
        %v5252 = vunpack.c.h.bf16 %v5229
        %v5253 = vunpack.c.l.bf16 %v5230
        %v5254 = vunpack.c.h.bf16 %v5230
        %v5255 = vunpack.c.l.bf16 %v5231
        %v5256 = vunpack.c.h.bf16 %v5231
        %v5257 = vunpack.c.l.bf16 %v5232
        %v5258 = vunpack.c.h.bf16 %v5232
        %v5259 = vunpack.c.l.bf16 %v5233
        %v5260 = vunpack.c.h.bf16 %v5233
        %v5261 = vunpack.c.l.bf16 %v5234
        %v5262 = vunpack.c.h.bf16 %v5234
        %v5263 = vunpack.c.l.bf16 %v5235
        %v5264 = vunpack.c.h.bf16 %v5235
        %v5265 = vunpack.c.l.bf16 %v5236
        %v5266 = vunpack.c.h.bf16 %v5236
        %v5267 = vunpack.c.l.bf16 %v5237
        %v5268 = vunpack.c.h.bf16 %v5237
        %v5269 = vunpack.c.l.bf16 %v5238
        %v5270 = vunpack.c.h.bf16 %v5238
        %v5271 = vmul.f32 %v5239, %v4123
        %v5272 = vmul.f32 %v5240, %v4127
        %v5273 = vmul.f32 %v5241, %v4131
        %v5274 = vmul.f32 %v5242, %v4135
        %v5275 = vmul.f32 %v5243, %v4139
        %v5276 = vmul.f32 %v5244, %v4143
        %v5277 = vmul.f32 %v5245, %v4147
        %v5278 = vmul.f32 %v5246, %v4151
        %v5279 = vmul.f32 %v5247, %v4155
        %v5280 = vmul.f32 %v5248, %v4159
        %v5281 = vmul.f32 %v5249, %v4163
        %v5282 = vmul.f32 %v5250, %v4167
        %v5283 = vmul.f32 %v5251, %v4171
        %v5284 = vmul.f32 %v5252, %v4175
        %v5285 = vmul.f32 %v5253, %v4179
        %v5286 = vmul.f32 %v5254, %v4183
        %v5287 = vmul.f32 %v5255, %v4123
        %v5288 = vmul.f32 %v5256, %v4127
        %v5289 = vmul.f32 %v5257, %v4131
        %v5290 = vmul.f32 %v5258, %v4135
        %v5291 = vmul.f32 %v5259, %v4139
        %v5292 = vmul.f32 %v5260, %v4143
        %v5293 = vmul.f32 %v5261, %v4147
        %v5294 = vmul.f32 %v5262, %v4151
        %v5295 = vmul.f32 %v5263, %v4155
        %v5296 = vmul.f32 %v5264, %v4159
        %v5297 = vmul.f32 %v5265, %v4163
        %v5298 = vmul.f32 %v5266, %v4167
        %v5299 = vmul.f32 %v5267, %v4171
        %v5300 = vmul.f32 %v5268, %v4175
        %v5301 = vmul.f32 %v5269, %v4179
        %v5302 = vmul.f32 %v5270, %v4183
        %5304 = vset.pattern.permute.xlu0 0
        %5305 = vperm.xlu0 %5304, %v5218
        %v5306 = vpop.permute.xlu0 %5305
        %5309 = vset.pattern.permute.xlu0 0
        %5310 = vperm.xlu0 %5309, %v5220
        %v5311 = vpop.permute.xlu0 %5310
        %v5313 = vmul.f32 %v5271, %v5306
        %v5314 = vmul.f32 %v5272, %v5306
        %v5315 = vmul.f32 %v5273, %v5306
        %v5316 = vmul.f32 %v5274, %v5306
        %v5317 = vmul.f32 %v5275, %v5306
        %v5318 = vmul.f32 %v5276, %v5306
        %v5319 = vmul.f32 %v5277, %v5306
        %v5320 = vmul.f32 %v5278, %v5306
        %v5321 = vmul.f32 %v5279, %v5306
        %v5322 = vmul.f32 %v5280, %v5306
        %v5323 = vmul.f32 %v5281, %v5306
        %v5324 = vmul.f32 %v5282, %v5306
        %v5325 = vmul.f32 %v5283, %v5306
        %v5326 = vmul.f32 %v5284, %v5306
        %v5327 = vmul.f32 %v5285, %v5306
        %v5328 = vmul.f32 %v5286, %v5306
        %v5329 = vmul.f32 %v5287, %v5311
        %v5330 = vmul.f32 %v5288, %v5311
        %v5331 = vmul.f32 %v5289, %v5311
        %v5332 = vmul.f32 %v5290, %v5311
        %v5333 = vmul.f32 %v5291, %v5311
        %v5334 = vmul.f32 %v5292, %v5311
        %v5335 = vmul.f32 %v5293, %v5311
        %v5336 = vmul.f32 %v5294, %v5311
        %v5337 = vmul.f32 %v5295, %v5311
        %v5338 = vmul.f32 %v5296, %v5311
        %v5339 = vmul.f32 %v5297, %v5311
        %v5340 = vmul.f32 %v5298, %v5311
        %v5341 = vmul.f32 %v5299, %v5311
        %v5342 = vmul.f32 %v5300, %v5311
        %v5343 = vmul.f32 %v5301, %v5311
        %v5344 = vmul.f32 %v5302, %v5311
        %v5345 = vpack.c.bf16 %v5329, %v5313
        %v5346 = vpack.c.bf16 %v5330, %v5314
        %v5347 = vpack.c.bf16 %v5331, %v5315
        %v5348 = vpack.c.bf16 %v5332, %v5316
        %v5349 = vpack.c.bf16 %v5333, %v5317
        %v5350 = vpack.c.bf16 %v5334, %v5318
        %v5351 = vpack.c.bf16 %v5335, %v5319
        %v5352 = vpack.c.bf16 %v5336, %v5320
        %v5353 = vpack.c.bf16 %v5337, %v5321
        %v5354 = vpack.c.bf16 %v5338, %v5322
        %v5355 = vpack.c.bf16 %v5339, %v5323
        %v5356 = vpack.c.bf16 %v5340, %v5324
        %v5357 = vpack.c.bf16 %v5341, %v5325
        %v5358 = vpack.c.bf16 %v5342, %v5326
        %v5359 = vpack.c.bf16 %v5343, %v5327
        %v5360 = vpack.c.bf16 %v5344, %v5328
        %v5377 = vunpack.c.l.b16 %v5345
        %v5378 = vunpack.c.l.b16 %v5346
        %v5379 = vunpack.c.l.b16 %v5347
        %v5380 = vunpack.c.l.b16 %v5348
        %v5381 = vunpack.c.l.b16 %v5349
        %v5382 = vunpack.c.l.b16 %v5350
        %v5383 = vunpack.c.l.b16 %v5351
        %v5384 = vunpack.c.l.b16 %v5352
        %v5385 = vunpack.c.l.b16 %v5353
        %v5386 = vunpack.c.l.b16 %v5354
        %v5387 = vunpack.c.l.b16 %v5355
        %v5388 = vunpack.c.l.b16 %v5356
        %v5389 = vunpack.c.l.b16 %v5357
        %v5390 = vunpack.c.l.b16 %v5358
        %v5391 = vunpack.c.l.b16 %v5359
        %v5392 = vunpack.c.l.b16 %v5360
        %v5393 = vunpack.c.h.b16 %v5345
        %v5394 = vunpack.c.h.b16 %v5346
        %v5395 = vunpack.c.h.b16 %v5347
        %v5396 = vunpack.c.h.b16 %v5348
        %v5397 = vunpack.c.h.b16 %v5349
        %v5398 = vunpack.c.h.b16 %v5350
        %v5399 = vunpack.c.h.b16 %v5351
        %v5400 = vunpack.c.h.b16 %v5352
        %v5401 = vunpack.c.h.b16 %v5353
        %v5402 = vunpack.c.h.b16 %v5354
        %v5403 = vunpack.c.h.b16 %v5355
        %v5404 = vunpack.c.h.b16 %v5356
        %v5405 = vunpack.c.h.b16 %v5357
        %v5406 = vunpack.c.h.b16 %v5358
        %v5407 = vunpack.c.h.b16 %v5359
        %v5408 = vunpack.c.h.b16 %v5360
        %v5409 = vpack.c.b16 %v5378, %v5377
        %v5410 = vpack.c.b16 %v5380, %v5379
        %v5411 = vpack.c.b16 %v5382, %v5381
        %v5412 = vpack.c.b16 %v5384, %v5383
        %v5413 = vpack.c.b16 %v5386, %v5385
        %v5414 = vpack.c.b16 %v5388, %v5387
        %v5415 = vpack.c.b16 %v5390, %v5389
        %v5416 = vpack.c.b16 %v5392, %v5391
        %v5417 = vpack.c.b16 %v5394, %v5393
        %v5418 = vpack.c.b16 %v5396, %v5395
        %v5419 = vpack.c.b16 %v5398, %v5397
        %v5420 = vpack.c.b16 %v5400, %v5399
        %v5421 = vpack.c.b16 %v5402, %v5401
        %v5422 = vpack.c.b16 %v5404, %v5403
        %v5423 = vpack.c.b16 %v5406, %v5405
        %v5424 = vpack.c.b16 %v5408, %v5407
        %5441 = vst [vmem:[%s381] sm:$0xff] %v5409
        %5442 = vst [vmem:[%s381 + $0x8] sm:$0xff] %v5410
        %5443 = vst [vmem:[%s381 + $0x10] sm:$0xff] %v5411
        %5444 = vst [vmem:[%s381 + $0x18] sm:$0xff] %v5412
        %5445 = vst [vmem:[%s381 + $0x20] sm:$0xff] %v5413
        %5446 = vst [vmem:[%s381 + $0x28] sm:$0xff] %v5414
        %5447 = vst [vmem:[%s381 + $0x30] sm:$0xff] %v5415
        %5448 = vst [vmem:[%s381 + $0x38] sm:$0xff] %v5416
        %5449 = vst [vmem:[%s381 + $0x40] sm:$0xff] %v5417
        %5450 = vst [vmem:[%s381 + $0x48] sm:$0xff] %v5418
        %5451 = vst [vmem:[%s381 + $0x50] sm:$0xff] %v5419
        %5452 = vst [vmem:[%s381 + $0x58] sm:$0xff] %v5420
        %5453 = vst [vmem:[%s381 + $0x60] sm:$0xff] %v5421
        %5454 = vst [vmem:[%s381 + $0x68] sm:$0xff] %v5422
        %5455 = vst [vmem:[%s381 + $0x70] sm:$0xff] %v5423
        %5456 = vst [vmem:[%s381 + $0x78] sm:$0xff] %v5424
        %v5457 = vld [vmem:[%s443] sm:$0xff]
        %v5458 = vld [vmem:[%s443 + $0x8] sm:$0xff]
        %v5459 = vld [vmem:[%s443 + $0x10] sm:$0xff]
        %v5460 = vld [vmem:[%s443 + $0x18] sm:$0xff]
        %v5461 = vld [vmem:[%s443 + $0x20] sm:$0xff]
        %v5462 = vld [vmem:[%s443 + $0x28] sm:$0xff]
        %v5463 = vld [vmem:[%s443 + $0x30] sm:$0xff]
        %v5464 = vld [vmem:[%s443 + $0x38] sm:$0xff]
        %v5465 = vld [vmem:[%s443 + $0x40] sm:$0xff]
        %v5466 = vld [vmem:[%s443 + $0x48] sm:$0xff]
        %v5467 = vld [vmem:[%s443 + $0x50] sm:$0xff]
        %v5468 = vld [vmem:[%s443 + $0x58] sm:$0xff]
        %v5469 = vld [vmem:[%s443 + $0x60] sm:$0xff]
        %v5470 = vld [vmem:[%s443 + $0x68] sm:$0xff]
        %v5471 = vld [vmem:[%s443 + $0x70] sm:$0xff]
        %v5472 = vld [vmem:[%s443 + $0x78] sm:$0xff]
        %v5473 = vunpack.c.l.bf16 %v5457
        %v5474 = vunpack.c.h.bf16 %v5457
        %v5475 = vunpack.c.l.bf16 %v5458
        %v5476 = vunpack.c.h.bf16 %v5458
        %v5477 = vunpack.c.l.bf16 %v5459
        %v5478 = vunpack.c.h.bf16 %v5459
        %v5479 = vunpack.c.l.bf16 %v5460
        %v5480 = vunpack.c.h.bf16 %v5460
        %v5481 = vunpack.c.l.bf16 %v5461
        %v5482 = vunpack.c.h.bf16 %v5461
        %v5483 = vunpack.c.l.bf16 %v5462
        %v5484 = vunpack.c.h.bf16 %v5462
        %v5485 = vunpack.c.l.bf16 %v5463
        %v5486 = vunpack.c.h.bf16 %v5463
        %v5487 = vunpack.c.l.bf16 %v5464
        %v5488 = vunpack.c.h.bf16 %v5464
        %v5489 = vunpack.c.l.bf16 %v5465
        %v5490 = vunpack.c.h.bf16 %v5465
        %v5491 = vunpack.c.l.bf16 %v5466
        %v5492 = vunpack.c.h.bf16 %v5466
        %v5493 = vunpack.c.l.bf16 %v5467
        %v5494 = vunpack.c.h.bf16 %v5467
        %v5495 = vunpack.c.l.bf16 %v5468
        %v5496 = vunpack.c.h.bf16 %v5468
        %v5497 = vunpack.c.l.bf16 %v5469
        %v5498 = vunpack.c.h.bf16 %v5469
        %v5499 = vunpack.c.l.bf16 %v5470
        %v5500 = vunpack.c.h.bf16 %v5470
        %v5501 = vunpack.c.l.bf16 %v5471
        %v5502 = vunpack.c.h.bf16 %v5471
        %v5503 = vunpack.c.l.bf16 %v5472
        %v5504 = vunpack.c.h.bf16 %v5472
        %v5505 = vmul.f32 %v5473, %v4123
        %v5506 = vmul.f32 %v5474, %v4127
        %v5507 = vmul.f32 %v5475, %v4131
        %v5508 = vmul.f32 %v5476, %v4135
        %v5509 = vmul.f32 %v5477, %v4139
        %v5510 = vmul.f32 %v5478, %v4143
        %v5511 = vmul.f32 %v5479, %v4147
        %v5512 = vmul.f32 %v5480, %v4151
        %v5513 = vmul.f32 %v5481, %v4155
        %v5514 = vmul.f32 %v5482, %v4159
        %v5515 = vmul.f32 %v5483, %v4163
        %v5516 = vmul.f32 %v5484, %v4167
        %v5517 = vmul.f32 %v5485, %v4171
        %v5518 = vmul.f32 %v5486, %v4175
        %v5519 = vmul.f32 %v5487, %v4179
        %v5520 = vmul.f32 %v5488, %v4183
        %v5521 = vmul.f32 %v5489, %v4123
        %v5522 = vmul.f32 %v5490, %v4127
        %v5523 = vmul.f32 %v5491, %v4131
        %v5524 = vmul.f32 %v5492, %v4135
        %v5525 = vmul.f32 %v5493, %v4139
        %v5526 = vmul.f32 %v5494, %v4143
        %v5527 = vmul.f32 %v5495, %v4147
        %v5528 = vmul.f32 %v5496, %v4151
        %v5529 = vmul.f32 %v5497, %v4155
        %v5530 = vmul.f32 %v5498, %v4159
        %v5531 = vmul.f32 %v5499, %v4163
        %v5532 = vmul.f32 %v5500, %v4167
        %v5533 = vmul.f32 %v5501, %v4171
        %v5534 = vmul.f32 %v5502, %v4175
        %v5535 = vmul.f32 %v5503, %v4179
        %v5536 = vmul.f32 %v5504, %v4183
        %5537 = vset.pattern.permute.xlu0 1
        %5538 = vperm.xlu0 %5537, %v5218
        %v5539 = vpop.permute.xlu0 %5538
        %5541 = vset.pattern.permute.xlu0 1
        %5542 = vperm.xlu0 %5541, %v5220
        %v5543 = vpop.permute.xlu0 %5542
        %v5545 = vmul.f32 %v5505, %v5539
        %v5546 = vmul.f32 %v5506, %v5539
        %v5547 = vmul.f32 %v5507, %v5539
        %v5548 = vmul.f32 %v5508, %v5539
        %v5549 = vmul.f32 %v5509, %v5539
        %v5550 = vmul.f32 %v5510, %v5539
        %v5551 = vmul.f32 %v5511, %v5539
        %v5552 = vmul.f32 %v5512, %v5539
        %v5553 = vmul.f32 %v5513, %v5539
        %v5554 = vmul.f32 %v5514, %v5539
        %v5555 = vmul.f32 %v5515, %v5539
        %v5556 = vmul.f32 %v5516, %v5539
        %v5557 = vmul.f32 %v5517, %v5539
        %v5558 = vmul.f32 %v5518, %v5539
        %v5559 = vmul.f32 %v5519, %v5539
        %v5560 = vmul.f32 %v5520, %v5539
        %v5561 = vmul.f32 %v5521, %v5543
        %v5562 = vmul.f32 %v5522, %v5543
        %v5563 = vmul.f32 %v5523, %v5543
        %v5564 = vmul.f32 %v5524, %v5543
        %v5565 = vmul.f32 %v5525, %v5543
        %v5566 = vmul.f32 %v5526, %v5543
        %v5567 = vmul.f32 %v5527, %v5543
        %v5568 = vmul.f32 %v5528, %v5543
        %v5569 = vmul.f32 %v5529, %v5543
        %v5570 = vmul.f32 %v5530, %v5543
        %v5571 = vmul.f32 %v5531, %v5543
        %v5572 = vmul.f32 %v5532, %v5543
        %v5573 = vmul.f32 %v5533, %v5543
        %v5574 = vmul.f32 %v5534, %v5543
        %v5575 = vmul.f32 %v5535, %v5543
        %v5576 = vmul.f32 %v5536, %v5543
        %v5577 = vpack.c.bf16 %v5561, %v5545
        %v5578 = vpack.c.bf16 %v5562, %v5546
        %v5579 = vpack.c.bf16 %v5563, %v5547
        %v5580 = vpack.c.bf16 %v5564, %v5548
        %v5581 = vpack.c.bf16 %v5565, %v5549
        %v5582 = vpack.c.bf16 %v5566, %v5550
        %v5583 = vpack.c.bf16 %v5567, %v5551
        %v5584 = vpack.c.bf16 %v5568, %v5552
        %v5585 = vpack.c.bf16 %v5569, %v5553
        %v5586 = vpack.c.bf16 %v5570, %v5554
        %v5587 = vpack.c.bf16 %v5571, %v5555
        %v5588 = vpack.c.bf16 %v5572, %v5556
        %v5589 = vpack.c.bf16 %v5573, %v5557
        %v5590 = vpack.c.bf16 %v5574, %v5558
        %v5591 = vpack.c.bf16 %v5575, %v5559
        %v5592 = vpack.c.bf16 %v5576, %v5560
        %v5609 = vunpack.c.l.b16 %v5577
        %v5610 = vunpack.c.l.b16 %v5578
        %v5611 = vunpack.c.l.b16 %v5579
        %v5612 = vunpack.c.l.b16 %v5580
        %v5613 = vunpack.c.l.b16 %v5581
        %v5614 = vunpack.c.l.b16 %v5582
        %v5615 = vunpack.c.l.b16 %v5583
        %v5616 = vunpack.c.l.b16 %v5584
        %v5617 = vunpack.c.l.b16 %v5585
        %v5618 = vunpack.c.l.b16 %v5586
        %v5619 = vunpack.c.l.b16 %v5587
        %v5620 = vunpack.c.l.b16 %v5588
        %v5621 = vunpack.c.l.b16 %v5589
        %v5622 = vunpack.c.l.b16 %v5590
        %v5623 = vunpack.c.l.b16 %v5591
        %v5624 = vunpack.c.l.b16 %v5592
        %v5625 = vunpack.c.h.b16 %v5577
        %v5626 = vunpack.c.h.b16 %v5578
        %v5627 = vunpack.c.h.b16 %v5579
        %v5628 = vunpack.c.h.b16 %v5580
        %v5629 = vunpack.c.h.b16 %v5581
        %v5630 = vunpack.c.h.b16 %v5582
        %v5631 = vunpack.c.h.b16 %v5583
        %v5632 = vunpack.c.h.b16 %v5584
        %v5633 = vunpack.c.h.b16 %v5585
        %v5634 = vunpack.c.h.b16 %v5586
        %v5635 = vunpack.c.h.b16 %v5587
        %v5636 = vunpack.c.h.b16 %v5588
        %v5637 = vunpack.c.h.b16 %v5589
        %v5638 = vunpack.c.h.b16 %v5590
        %v5639 = vunpack.c.h.b16 %v5591
        %v5640 = vunpack.c.h.b16 %v5592
        %v5641 = vpack.c.b16 %v5610, %v5609
        %v5642 = vpack.c.b16 %v5612, %v5611
        %v5643 = vpack.c.b16 %v5614, %v5613
        %v5644 = vpack.c.b16 %v5616, %v5615
        %v5645 = vpack.c.b16 %v5618, %v5617
        %v5646 = vpack.c.b16 %v5620, %v5619
        %v5647 = vpack.c.b16 %v5622, %v5621
        %v5648 = vpack.c.b16 %v5624, %v5623
        %v5649 = vpack.c.b16 %v5626, %v5625
        %v5650 = vpack.c.b16 %v5628, %v5627
        %v5651 = vpack.c.b16 %v5630, %v5629
        %v5652 = vpack.c.b16 %v5632, %v5631
        %v5653 = vpack.c.b16 %v5634, %v5633
        %v5654 = vpack.c.b16 %v5636, %v5635
        %v5655 = vpack.c.b16 %v5638, %v5637
        %v5656 = vpack.c.b16 %v5640, %v5639
        %s5673 = scalar_lea.vmem %s381, 128 [#allocation12]
        %5674 = vst [vmem:[%s5673] sm:$0xff] %v5641
        %5675 = vst [vmem:[%s5673 + $0x8] sm:$0xff] %v5642
        %5676 = vst [vmem:[%s5673 + $0x10] sm:$0xff] %v5643
        %5677 = vst [vmem:[%s5673 + $0x18] sm:$0xff] %v5644
        %5678 = vst [vmem:[%s5673 + $0x20] sm:$0xff] %v5645
        %5679 = vst [vmem:[%s5673 + $0x28] sm:$0xff] %v5646
        %5680 = vst [vmem:[%s5673 + $0x30] sm:$0xff] %v5647
        %5681 = vst [vmem:[%s5673 + $0x38] sm:$0xff] %v5648
        %5682 = vst [vmem:[%s5673 + $0x40] sm:$0xff] %v5649
        %5683 = vst [vmem:[%s5673 + $0x48] sm:$0xff] %v5650
        %5684 = vst [vmem:[%s5673 + $0x50] sm:$0xff] %v5651
        %5685 = vst [vmem:[%s5673 + $0x58] sm:$0xff] %v5652
        %5686 = vst [vmem:[%s5673 + $0x60] sm:$0xff] %v5653
        %5687 = vst [vmem:[%s5673 + $0x68] sm:$0xff] %v5654
        %5688 = vst [vmem:[%s5673 + $0x70] sm:$0xff] %v5655
        %5689 = vst [vmem:[%s5673 + $0x78] sm:$0xff] %v5656
        %v5690 = vld [vmem:[%s540] sm:$0xff]
        %v5691 = vld [vmem:[%s540 + $0x8] sm:$0xff]
        %v5692 = vld [vmem:[%s540 + $0x10] sm:$0xff]
        %v5693 = vld [vmem:[%s540 + $0x18] sm:$0xff]
        %v5694 = vld [vmem:[%s540 + $0x20] sm:$0xff]
        %v5695 = vld [vmem:[%s540 + $0x28] sm:$0xff]
        %v5696 = vld [vmem:[%s540 + $0x30] sm:$0xff]
        %v5697 = vld [vmem:[%s540 + $0x38] sm:$0xff]
        %v5698 = vld [vmem:[%s540 + $0x40] sm:$0xff]
        %v5699 = vld [vmem:[%s540 + $0x48] sm:$0xff]
        %v5700 = vld [vmem:[%s540 + $0x50] sm:$0xff]
        %v5701 = vld [vmem:[%s540 + $0x58] sm:$0xff]
        %v5702 = vld [vmem:[%s540 + $0x60] sm:$0xff]
        %v5703 = vld [vmem:[%s540 + $0x68] sm:$0xff]
        %v5704 = vld [vmem:[%s540 + $0x70] sm:$0xff]
        %v5705 = vld [vmem:[%s540 + $0x78] sm:$0xff]
        %v5706 = vunpack.c.l.bf16 %v5690
        %v5707 = vunpack.c.h.bf16 %v5690
        %v5708 = vunpack.c.l.bf16 %v5691
        %v5709 = vunpack.c.h.bf16 %v5691
        %v5710 = vunpack.c.l.bf16 %v5692
        %v5711 = vunpack.c.h.bf16 %v5692
        %v5712 = vunpack.c.l.bf16 %v5693
        %v5713 = vunpack.c.h.bf16 %v5693
        %v5714 = vunpack.c.l.bf16 %v5694
        %v5715 = vunpack.c.h.bf16 %v5694
        %v5716 = vunpack.c.l.bf16 %v5695
        %v5717 = vunpack.c.h.bf16 %v5695
        %v5718 = vunpack.c.l.bf16 %v5696
        %v5719 = vunpack.c.h.bf16 %v5696
        %v5720 = vunpack.c.l.bf16 %v5697
        %v5721 = vunpack.c.h.bf16 %v5697
        %v5722 = vunpack.c.l.bf16 %v5698
        %v5723 = vunpack.c.h.bf16 %v5698
        %v5724 = vunpack.c.l.bf16 %v5699
        %v5725 = vunpack.c.h.bf16 %v5699
        %v5726 = vunpack.c.l.bf16 %v5700
        %v5727 = vunpack.c.h.bf16 %v5700
        %v5728 = vunpack.c.l.bf16 %v5701
        %v5729 = vunpack.c.h.bf16 %v5701
        %v5730 = vunpack.c.l.bf16 %v5702
        %v5731 = vunpack.c.h.bf16 %v5702
        %v5732 = vunpack.c.l.bf16 %v5703
        %v5733 = vunpack.c.h.bf16 %v5703
        %v5734 = vunpack.c.l.bf16 %v5704
        %v5735 = vunpack.c.h.bf16 %v5704
        %v5736 = vunpack.c.l.bf16 %v5705
        %v5737 = vunpack.c.h.bf16 %v5705
        %v5738 = vmul.f32 %v5706, %v4123
        %v5739 = vmul.f32 %v5707, %v4127
        %v5740 = vmul.f32 %v5708, %v4131
        %v5741 = vmul.f32 %v5709, %v4135
        %v5742 = vmul.f32 %v5710, %v4139
        %v5743 = vmul.f32 %v5711, %v4143
        %v5744 = vmul.f32 %v5712, %v4147
        %v5745 = vmul.f32 %v5713, %v4151
        %v5746 = vmul.f32 %v5714, %v4155
        %v5747 = vmul.f32 %v5715, %v4159
        %v5748 = vmul.f32 %v5716, %v4163
        %v5749 = vmul.f32 %v5717, %v4167
        %v5750 = vmul.f32 %v5718, %v4171
        %v5751 = vmul.f32 %v5719, %v4175
        %v5752 = vmul.f32 %v5720, %v4179
        %v5753 = vmul.f32 %v5721, %v4183
        %v5754 = vmul.f32 %v5722, %v4123
        %v5755 = vmul.f32 %v5723, %v4127
        %v5756 = vmul.f32 %v5724, %v4131
        %v5757 = vmul.f32 %v5725, %v4135
        %v5758 = vmul.f32 %v5726, %v4139
        %v5759 = vmul.f32 %v5727, %v4143
        %v5760 = vmul.f32 %v5728, %v4147
        %v5761 = vmul.f32 %v5729, %v4151
        %v5762 = vmul.f32 %v5730, %v4155
        %v5763 = vmul.f32 %v5731, %v4159
        %v5764 = vmul.f32 %v5732, %v4163
        %v5765 = vmul.f32 %v5733, %v4167
        %v5766 = vmul.f32 %v5734, %v4171
        %v5767 = vmul.f32 %v5735, %v4175
        %v5768 = vmul.f32 %v5736, %v4179
        %v5769 = vmul.f32 %v5737, %v4183
        %5770 = vset.pattern.permute.xlu0 2
        %5771 = vperm.xlu0 %5770, %v5218
        %v5772 = vpop.permute.xlu0 %5771
        %5774 = vset.pattern.permute.xlu0 2
        %5775 = vperm.xlu0 %5774, %v5220
        %v5776 = vpop.permute.xlu0 %5775
        %v5778 = vmul.f32 %v5738, %v5772
        %v5779 = vmul.f32 %v5739, %v5772
        %v5780 = vmul.f32 %v5740, %v5772
        %v5781 = vmul.f32 %v5741, %v5772
        %v5782 = vmul.f32 %v5742, %v5772
        %v5783 = vmul.f32 %v5743, %v5772
        %v5784 = vmul.f32 %v5744, %v5772
        %v5785 = vmul.f32 %v5745, %v5772
        %v5786 = vmul.f32 %v5746, %v5772
        %v5787 = vmul.f32 %v5747, %v5772
        %v5788 = vmul.f32 %v5748, %v5772
        %v5789 = vmul.f32 %v5749, %v5772
        %v5790 = vmul.f32 %v5750, %v5772
        %v5791 = vmul.f32 %v5751, %v5772
        %v5792 = vmul.f32 %v5752, %v5772
        %v5793 = vmul.f32 %v5753, %v5772
        %v5794 = vmul.f32 %v5754, %v5776
        %v5795 = vmul.f32 %v5755, %v5776
        %v5796 = vmul.f32 %v5756, %v5776
        %v5797 = vmul.f32 %v5757, %v5776
        %v5798 = vmul.f32 %v5758, %v5776
        %v5799 = vmul.f32 %v5759, %v5776
        %v5800 = vmul.f32 %v5760, %v5776
        %v5801 = vmul.f32 %v5761, %v5776
        %v5802 = vmul.f32 %v5762, %v5776
        %v5803 = vmul.f32 %v5763, %v5776
        %v5804 = vmul.f32 %v5764, %v5776
        %v5805 = vmul.f32 %v5765, %v5776
        %v5806 = vmul.f32 %v5766, %v5776
        %v5807 = vmul.f32 %v5767, %v5776
        %v5808 = vmul.f32 %v5768, %v5776
        %v5809 = vmul.f32 %v5769, %v5776
        %v5810 = vpack.c.bf16 %v5794, %v5778
        %v5811 = vpack.c.bf16 %v5795, %v5779
        %v5812 = vpack.c.bf16 %v5796, %v5780
        %v5813 = vpack.c.bf16 %v5797, %v5781
        %v5814 = vpack.c.bf16 %v5798, %v5782
        %v5815 = vpack.c.bf16 %v5799, %v5783
        %v5816 = vpack.c.bf16 %v5800, %v5784
        %v5817 = vpack.c.bf16 %v5801, %v5785
        %v5818 = vpack.c.bf16 %v5802, %v5786
        %v5819 = vpack.c.bf16 %v5803, %v5787
        %v5820 = vpack.c.bf16 %v5804, %v5788
        %v5821 = vpack.c.bf16 %v5805, %v5789
        %v5822 = vpack.c.bf16 %v5806, %v5790
        %v5823 = vpack.c.bf16 %v5807, %v5791
        %v5824 = vpack.c.bf16 %v5808, %v5792
        %v5825 = vpack.c.bf16 %v5809, %v5793
        %v5842 = vunpack.c.l.b16 %v5810
        %v5843 = vunpack.c.l.b16 %v5811
        %v5844 = vunpack.c.l.b16 %v5812
        %v5845 = vunpack.c.l.b16 %v5813
        %v5846 = vunpack.c.l.b16 %v5814
        %v5847 = vunpack.c.l.b16 %v5815
        %v5848 = vunpack.c.l.b16 %v5816
        %v5849 = vunpack.c.l.b16 %v5817
        %v5850 = vunpack.c.l.b16 %v5818
        %v5851 = vunpack.c.l.b16 %v5819
        %v5852 = vunpack.c.l.b16 %v5820
        %v5853 = vunpack.c.l.b16 %v5821
        %v5854 = vunpack.c.l.b16 %v5822
        %v5855 = vunpack.c.l.b16 %v5823
        %v5856 = vunpack.c.l.b16 %v5824
        %v5857 = vunpack.c.l.b16 %v5825
        %v5858 = vunpack.c.h.b16 %v5810
        %v5859 = vunpack.c.h.b16 %v5811
        %v5860 = vunpack.c.h.b16 %v5812
        %v5861 = vunpack.c.h.b16 %v5813
        %v5862 = vunpack.c.h.b16 %v5814
        %v5863 = vunpack.c.h.b16 %v5815
        %v5864 = vunpack.c.h.b16 %v5816
        %v5865 = vunpack.c.h.b16 %v5817
        %v5866 = vunpack.c.h.b16 %v5818
        %v5867 = vunpack.c.h.b16 %v5819
        %v5868 = vunpack.c.h.b16 %v5820
        %v5869 = vunpack.c.h.b16 %v5821
        %v5870 = vunpack.c.h.b16 %v5822
        %v5871 = vunpack.c.h.b16 %v5823
        %v5872 = vunpack.c.h.b16 %v5824
        %v5873 = vunpack.c.h.b16 %v5825
        %v5874 = vpack.c.b16 %v5843, %v5842
        %v5875 = vpack.c.b16 %v5845, %v5844
        %v5876 = vpack.c.b16 %v5847, %v5846
        %v5877 = vpack.c.b16 %v5849, %v5848
        %v5878 = vpack.c.b16 %v5851, %v5850
        %v5879 = vpack.c.b16 %v5853, %v5852
        %v5880 = vpack.c.b16 %v5855, %v5854
        %v5881 = vpack.c.b16 %v5857, %v5856
        %v5882 = vpack.c.b16 %v5859, %v5858
        %v5883 = vpack.c.b16 %v5861, %v5860
        %v5884 = vpack.c.b16 %v5863, %v5862
        %v5885 = vpack.c.b16 %v5865, %v5864
        %v5886 = vpack.c.b16 %v5867, %v5866
        %v5887 = vpack.c.b16 %v5869, %v5868
        %v5888 = vpack.c.b16 %v5871, %v5870
        %v5889 = vpack.c.b16 %v5873, %v5872
        %s5906 = scalar_lea.vmem %s381, 256 [#allocation12]
        %5907 = vst [vmem:[%s5906] sm:$0xff] %v5874
        %5908 = vst [vmem:[%s5906 + $0x8] sm:$0xff] %v5875
        %5909 = vst [vmem:[%s5906 + $0x10] sm:$0xff] %v5876
        %5910 = vst [vmem:[%s5906 + $0x18] sm:$0xff] %v5877
        %5911 = vst [vmem:[%s5906 + $0x20] sm:$0xff] %v5878
        %5912 = vst [vmem:[%s5906 + $0x28] sm:$0xff] %v5879
        %5913 = vst [vmem:[%s5906 + $0x30] sm:$0xff] %v5880
        %5914 = vst [vmem:[%s5906 + $0x38] sm:$0xff] %v5881
        %5915 = vst [vmem:[%s5906 + $0x40] sm:$0xff] %v5882
        %5916 = vst [vmem:[%s5906 + $0x48] sm:$0xff] %v5883
        %5917 = vst [vmem:[%s5906 + $0x50] sm:$0xff] %v5884
        %5918 = vst [vmem:[%s5906 + $0x58] sm:$0xff] %v5885
        %5919 = vst [vmem:[%s5906 + $0x60] sm:$0xff] %v5886
        %5920 = vst [vmem:[%s5906 + $0x68] sm:$0xff] %v5887
        %5921 = vst [vmem:[%s5906 + $0x70] sm:$0xff] %v5888
        %5922 = vst [vmem:[%s5906 + $0x78] sm:$0xff] %v5889
        %v5923 = vld [vmem:[%s637] sm:$0xff]
        %v5924 = vld [vmem:[%s637 + $0x8] sm:$0xff]
        %v5925 = vld [vmem:[%s637 + $0x10] sm:$0xff]
        %v5926 = vld [vmem:[%s637 + $0x18] sm:$0xff]
        %v5927 = vld [vmem:[%s637 + $0x20] sm:$0xff]
        %v5928 = vld [vmem:[%s637 + $0x28] sm:$0xff]
        %v5929 = vld [vmem:[%s637 + $0x30] sm:$0xff]
        %v5930 = vld [vmem:[%s637 + $0x38] sm:$0xff]
        %v5931 = vld [vmem:[%s637 + $0x40] sm:$0xff]
        %v5932 = vld [vmem:[%s637 + $0x48] sm:$0xff]
        %v5933 = vld [vmem:[%s637 + $0x50] sm:$0xff]
        %v5934 = vld [vmem:[%s637 + $0x58] sm:$0xff]
        %v5935 = vld [vmem:[%s637 + $0x60] sm:$0xff]
        %v5936 = vld [vmem:[%s637 + $0x68] sm:$0xff]
        %v5937 = vld [vmem:[%s637 + $0x70] sm:$0xff]
        %v5938 = vld [vmem:[%s637 + $0x78] sm:$0xff]
        %v5939 = vunpack.c.l.bf16 %v5923
        %v5940 = vunpack.c.h.bf16 %v5923
        %v5941 = vunpack.c.l.bf16 %v5924
        %v5942 = vunpack.c.h.bf16 %v5924
        %v5943 = vunpack.c.l.bf16 %v5925
        %v5944 = vunpack.c.h.bf16 %v5925
        %v5945 = vunpack.c.l.bf16 %v5926
        %v5946 = vunpack.c.h.bf16 %v5926
        %v5947 = vunpack.c.l.bf16 %v5927
        %v5948 = vunpack.c.h.bf16 %v5927
        %v5949 = vunpack.c.l.bf16 %v5928
        %v5950 = vunpack.c.h.bf16 %v5928
        %v5951 = vunpack.c.l.bf16 %v5929
        %v5952 = vunpack.c.h.bf16 %v5929
        %v5953 = vunpack.c.l.bf16 %v5930
        %v5954 = vunpack.c.h.bf16 %v5930
        %v5955 = vunpack.c.l.bf16 %v5931
        %v5956 = vunpack.c.h.bf16 %v5931
        %v5957 = vunpack.c.l.bf16 %v5932
        %v5958 = vunpack.c.h.bf16 %v5932
        %v5959 = vunpack.c.l.bf16 %v5933
        %v5960 = vunpack.c.h.bf16 %v5933
        %v5961 = vunpack.c.l.bf16 %v5934
        %v5962 = vunpack.c.h.bf16 %v5934
        %v5963 = vunpack.c.l.bf16 %v5935
        %v5964 = vunpack.c.h.bf16 %v5935
        %v5965 = vunpack.c.l.bf16 %v5936
        %v5966 = vunpack.c.h.bf16 %v5936
        %v5967 = vunpack.c.l.bf16 %v5937
        %v5968 = vunpack.c.h.bf16 %v5937
        %v5969 = vunpack.c.l.bf16 %v5938
        %v5970 = vunpack.c.h.bf16 %v5938
        %v5971 = vmul.f32 %v5939, %v4123
        %v5972 = vmul.f32 %v5940, %v4127
        %v5973 = vmul.f32 %v5941, %v4131
        %v5974 = vmul.f32 %v5942, %v4135
        %v5975 = vmul.f32 %v5943, %v4139
        %v5976 = vmul.f32 %v5944, %v4143
        %v5977 = vmul.f32 %v5945, %v4147
        %v5978 = vmul.f32 %v5946, %v4151
        %v5979 = vmul.f32 %v5947, %v4155
        %v5980 = vmul.f32 %v5948, %v4159
        %v5981 = vmul.f32 %v5949, %v4163
        %v5982 = vmul.f32 %v5950, %v4167
        %v5983 = vmul.f32 %v5951, %v4171
        %v5984 = vmul.f32 %v5952, %v4175
        %v5985 = vmul.f32 %v5953, %v4179
        %v5986 = vmul.f32 %v5954, %v4183
        %v5987 = vmul.f32 %v5955, %v4123
        %v5988 = vmul.f32 %v5956, %v4127
        %v5989 = vmul.f32 %v5957, %v4131
        %v5990 = vmul.f32 %v5958, %v4135
        %v5991 = vmul.f32 %v5959, %v4139
        %v5992 = vmul.f32 %v5960, %v4143
        %v5993 = vmul.f32 %v5961, %v4147
        %v5994 = vmul.f32 %v5962, %v4151
        %v5995 = vmul.f32 %v5963, %v4155
        %v5996 = vmul.f32 %v5964, %v4159
        %v5997 = vmul.f32 %v5965, %v4163
        %v5998 = vmul.f32 %v5966, %v4167
        %v5999 = vmul.f32 %v5967, %v4171
        %v6000 = vmul.f32 %v5968, %v4175
        %v6001 = vmul.f32 %v5969, %v4179
        %v6002 = vmul.f32 %v5970, %v4183
        %6003 = vset.pattern.permute.xlu0 3
        %6004 = vperm.xlu0 %6003, %v5218
        %v6005 = vpop.permute.xlu0 %6004
        %6007 = vset.pattern.permute.xlu0 3
        %6008 = vperm.xlu0 %6007, %v5220
        %v6009 = vpop.permute.xlu0 %6008
        %v6011 = vmul.f32 %v5971, %v6005
        %v6012 = vmul.f32 %v5972, %v6005
        %v6013 = vmul.f32 %v5973, %v6005
        %v6014 = vmul.f32 %v5974, %v6005
        %v6015 = vmul.f32 %v5975, %v6005
        %v6016 = vmul.f32 %v5976, %v6005
        %v6017 = vmul.f32 %v5977, %v6005
        %v6018 = vmul.f32 %v5978, %v6005
        %v6019 = vmul.f32 %v5979, %v6005
        %v6020 = vmul.f32 %v5980, %v6005
        %v6021 = vmul.f32 %v5981, %v6005
        %v6022 = vmul.f32 %v5982, %v6005
        %v6023 = vmul.f32 %v5983, %v6005
        %v6024 = vmul.f32 %v5984, %v6005
        %v6025 = vmul.f32 %v5985, %v6005
        %v6026 = vmul.f32 %v5986, %v6005
        %v6027 = vmul.f32 %v5987, %v6009
        %v6028 = vmul.f32 %v5988, %v6009
        %v6029 = vmul.f32 %v5989, %v6009
        %v6030 = vmul.f32 %v5990, %v6009
        %v6031 = vmul.f32 %v5991, %v6009
        %v6032 = vmul.f32 %v5992, %v6009
        %v6033 = vmul.f32 %v5993, %v6009
        %v6034 = vmul.f32 %v5994, %v6009
        %v6035 = vmul.f32 %v5995, %v6009
        %v6036 = vmul.f32 %v5996, %v6009
        %v6037 = vmul.f32 %v5997, %v6009
        %v6038 = vmul.f32 %v5998, %v6009
        %v6039 = vmul.f32 %v5999, %v6009
        %v6040 = vmul.f32 %v6000, %v6009
        %v6041 = vmul.f32 %v6001, %v6009
        %v6042 = vmul.f32 %v6002, %v6009
        %v6043 = vpack.c.bf16 %v6027, %v6011
        %v6044 = vpack.c.bf16 %v6028, %v6012
        %v6045 = vpack.c.bf16 %v6029, %v6013
        %v6046 = vpack.c.bf16 %v6030, %v6014
        %v6047 = vpack.c.bf16 %v6031, %v6015
        %v6048 = vpack.c.bf16 %v6032, %v6016
        %v6049 = vpack.c.bf16 %v6033, %v6017
        %v6050 = vpack.c.bf16 %v6034, %v6018
        %v6051 = vpack.c.bf16 %v6035, %v6019
        %v6052 = vpack.c.bf16 %v6036, %v6020
        %v6053 = vpack.c.bf16 %v6037, %v6021
        %v6054 = vpack.c.bf16 %v6038, %v6022
        %v6055 = vpack.c.bf16 %v6039, %v6023
        %v6056 = vpack.c.bf16 %v6040, %v6024
        %v6057 = vpack.c.bf16 %v6041, %v6025
        %v6058 = vpack.c.bf16 %v6042, %v6026
        %v6075 = vunpack.c.l.b16 %v6043
        %v6076 = vunpack.c.l.b16 %v6044
        %v6077 = vunpack.c.l.b16 %v6045
        %v6078 = vunpack.c.l.b16 %v6046
        %v6079 = vunpack.c.l.b16 %v6047
        %v6080 = vunpack.c.l.b16 %v6048
        %v6081 = vunpack.c.l.b16 %v6049
        %v6082 = vunpack.c.l.b16 %v6050
        %v6083 = vunpack.c.l.b16 %v6051
        %v6084 = vunpack.c.l.b16 %v6052
        %v6085 = vunpack.c.l.b16 %v6053
        %v6086 = vunpack.c.l.b16 %v6054
        %v6087 = vunpack.c.l.b16 %v6055
        %v6088 = vunpack.c.l.b16 %v6056
        %v6089 = vunpack.c.l.b16 %v6057
        %v6090 = vunpack.c.l.b16 %v6058
        %v6091 = vunpack.c.h.b16 %v6043
        %v6092 = vunpack.c.h.b16 %v6044
        %v6093 = vunpack.c.h.b16 %v6045
        %v6094 = vunpack.c.h.b16 %v6046
        %v6095 = vunpack.c.h.b16 %v6047
        %v6096 = vunpack.c.h.b16 %v6048
        %v6097 = vunpack.c.h.b16 %v6049
        %v6098 = vunpack.c.h.b16 %v6050
        %v6099 = vunpack.c.h.b16 %v6051
        %v6100 = vunpack.c.h.b16 %v6052
        %v6101 = vunpack.c.h.b16 %v6053
        %v6102 = vunpack.c.h.b16 %v6054
        %v6103 = vunpack.c.h.b16 %v6055
        %v6104 = vunpack.c.h.b16 %v6056
        %v6105 = vunpack.c.h.b16 %v6057
        %v6106 = vunpack.c.h.b16 %v6058
        %v6107 = vpack.c.b16 %v6076, %v6075
        %v6108 = vpack.c.b16 %v6078, %v6077
        %v6109 = vpack.c.b16 %v6080, %v6079
        %v6110 = vpack.c.b16 %v6082, %v6081
        %v6111 = vpack.c.b16 %v6084, %v6083
        %v6112 = vpack.c.b16 %v6086, %v6085
        %v6113 = vpack.c.b16 %v6088, %v6087
        %v6114 = vpack.c.b16 %v6090, %v6089
        %v6115 = vpack.c.b16 %v6092, %v6091
        %v6116 = vpack.c.b16 %v6094, %v6093
        %v6117 = vpack.c.b16 %v6096, %v6095
        %v6118 = vpack.c.b16 %v6098, %v6097
        %v6119 = vpack.c.b16 %v6100, %v6099
        %v6120 = vpack.c.b16 %v6102, %v6101
        %v6121 = vpack.c.b16 %v6104, %v6103
        %v6122 = vpack.c.b16 %v6106, %v6105
        %s6139 = scalar_lea.vmem %s381, 384 [#allocation12]
        %6140 = vst [vmem:[%s6139] sm:$0xff] %v6107
        %6141 = vst [vmem:[%s6139 + $0x8] sm:$0xff] %v6108
        %6142 = vst [vmem:[%s6139 + $0x10] sm:$0xff] %v6109
        %6143 = vst [vmem:[%s6139 + $0x18] sm:$0xff] %v6110
        %6144 = vst [vmem:[%s6139 + $0x20] sm:$0xff] %v6111
        %6145 = vst [vmem:[%s6139 + $0x28] sm:$0xff] %v6112
        %6146 = vst [vmem:[%s6139 + $0x30] sm:$0xff] %v6113
        %6147 = vst [vmem:[%s6139 + $0x38] sm:$0xff] %v6114
        %6148 = vst [vmem:[%s6139 + $0x40] sm:$0xff] %v6115
        %6149 = vst [vmem:[%s6139 + $0x48] sm:$0xff] %v6116
        %6150 = vst [vmem:[%s6139 + $0x50] sm:$0xff] %v6117
        %6151 = vst [vmem:[%s6139 + $0x58] sm:$0xff] %v6118
        %6152 = vst [vmem:[%s6139 + $0x60] sm:$0xff] %v6119
        %6153 = vst [vmem:[%s6139 + $0x68] sm:$0xff] %v6120
        %6154 = vst [vmem:[%s6139 + $0x70] sm:$0xff] %v6121
        %6155 = vst [vmem:[%s6139 + $0x78] sm:$0xff] %v6122
        %v6156 = vld [vmem:[%s734] sm:$0xff]
        %v6157 = vld [vmem:[%s734 + $0x8] sm:$0xff]
        %v6158 = vld [vmem:[%s734 + $0x10] sm:$0xff]
        %v6159 = vld [vmem:[%s734 + $0x18] sm:$0xff]
        %v6160 = vld [vmem:[%s734 + $0x20] sm:$0xff]
        %v6161 = vld [vmem:[%s734 + $0x28] sm:$0xff]
        %v6162 = vld [vmem:[%s734 + $0x30] sm:$0xff]
        %v6163 = vld [vmem:[%s734 + $0x38] sm:$0xff]
        %v6164 = vld [vmem:[%s734 + $0x40] sm:$0xff]
        %v6165 = vld [vmem:[%s734 + $0x48] sm:$0xff]
        %v6166 = vld [vmem:[%s734 + $0x50] sm:$0xff]
        %v6167 = vld [vmem:[%s734 + $0x58] sm:$0xff]
        %v6168 = vld [vmem:[%s734 + $0x60] sm:$0xff]
        %v6169 = vld [vmem:[%s734 + $0x68] sm:$0xff]
        %v6170 = vld [vmem:[%s734 + $0x70] sm:$0xff]
        %v6171 = vld [vmem:[%s734 + $0x78] sm:$0xff]
        %v6172 = vunpack.c.l.bf16 %v6156
        %v6173 = vunpack.c.h.bf16 %v6156
        %v6174 = vunpack.c.l.bf16 %v6157
        %v6175 = vunpack.c.h.bf16 %v6157
        %v6176 = vunpack.c.l.bf16 %v6158
        %v6177 = vunpack.c.h.bf16 %v6158
        %v6178 = vunpack.c.l.bf16 %v6159
        %v6179 = vunpack.c.h.bf16 %v6159
        %v6180 = vunpack.c.l.bf16 %v6160
        %v6181 = vunpack.c.h.bf16 %v6160
        %v6182 = vunpack.c.l.bf16 %v6161
        %v6183 = vunpack.c.h.bf16 %v6161
        %v6184 = vunpack.c.l.bf16 %v6162
        %v6185 = vunpack.c.h.bf16 %v6162
        %v6186 = vunpack.c.l.bf16 %v6163
        %v6187 = vunpack.c.h.bf16 %v6163
        %v6188 = vunpack.c.l.bf16 %v6164
        %v6189 = vunpack.c.h.bf16 %v6164
        %v6190 = vunpack.c.l.bf16 %v6165
        %v6191 = vunpack.c.h.bf16 %v6165
        %v6192 = vunpack.c.l.bf16 %v6166
        %v6193 = vunpack.c.h.bf16 %v6166
        %v6194 = vunpack.c.l.bf16 %v6167
        %v6195 = vunpack.c.h.bf16 %v6167
        %v6196 = vunpack.c.l.bf16 %v6168
        %v6197 = vunpack.c.h.bf16 %v6168
        %v6198 = vunpack.c.l.bf16 %v6169
        %v6199 = vunpack.c.h.bf16 %v6169
        %v6200 = vunpack.c.l.bf16 %v6170
        %v6201 = vunpack.c.h.bf16 %v6170
        %v6202 = vunpack.c.l.bf16 %v6171
        %v6203 = vunpack.c.h.bf16 %v6171
        %v6204 = vmul.f32 %v6172, %v4123
        %v6205 = vmul.f32 %v6173, %v4127
        %v6206 = vmul.f32 %v6174, %v4131
        %v6207 = vmul.f32 %v6175, %v4135
        %v6208 = vmul.f32 %v6176, %v4139
        %v6209 = vmul.f32 %v6177, %v4143
        %v6210 = vmul.f32 %v6178, %v4147
        %v6211 = vmul.f32 %v6179, %v4151
        %v6212 = vmul.f32 %v6180, %v4155
        %v6213 = vmul.f32 %v6181, %v4159
        %v6214 = vmul.f32 %v6182, %v4163
        %v6215 = vmul.f32 %v6183, %v4167
        %v6216 = vmul.f32 %v6184, %v4171
        %v6217 = vmul.f32 %v6185, %v4175
        %v6218 = vmul.f32 %v6186, %v4179
        %v6219 = vmul.f32 %v6187, %v4183
        %v6220 = vmul.f32 %v6188, %v4123
        %v6221 = vmul.f32 %v6189, %v4127
        %v6222 = vmul.f32 %v6190, %v4131
        %v6223 = vmul.f32 %v6191, %v4135
        %v6224 = vmul.f32 %v6192, %v4139
        %v6225 = vmul.f32 %v6193, %v4143
        %v6226 = vmul.f32 %v6194, %v4147
        %v6227 = vmul.f32 %v6195, %v4151
        %v6228 = vmul.f32 %v6196, %v4155
        %v6229 = vmul.f32 %v6197, %v4159
        %v6230 = vmul.f32 %v6198, %v4163
        %v6231 = vmul.f32 %v6199, %v4167
        %v6232 = vmul.f32 %v6200, %v4171
        %v6233 = vmul.f32 %v6201, %v4175
        %v6234 = vmul.f32 %v6202, %v4179
        %v6235 = vmul.f32 %v6203, %v4183
        %6236 = vset.pattern.permute.xlu0 4
        %6237 = vperm.xlu0 %6236, %v5218
        %v6238 = vpop.permute.xlu0 %6237
        %6240 = vset.pattern.permute.xlu0 4
        %6241 = vperm.xlu0 %6240, %v5220
        %v6242 = vpop.permute.xlu0 %6241
        %v6244 = vmul.f32 %v6204, %v6238
        %v6245 = vmul.f32 %v6205, %v6238
        %v6246 = vmul.f32 %v6206, %v6238
        %v6247 = vmul.f32 %v6207, %v6238
        %v6248 = vmul.f32 %v6208, %v6238
        %v6249 = vmul.f32 %v6209, %v6238
        %v6250 = vmul.f32 %v6210, %v6238
        %v6251 = vmul.f32 %v6211, %v6238
        %v6252 = vmul.f32 %v6212, %v6238
        %v6253 = vmul.f32 %v6213, %v6238
        %v6254 = vmul.f32 %v6214, %v6238
        %v6255 = vmul.f32 %v6215, %v6238
        %v6256 = vmul.f32 %v6216, %v6238
        %v6257 = vmul.f32 %v6217, %v6238
        %v6258 = vmul.f32 %v6218, %v6238
        %v6259 = vmul.f32 %v6219, %v6238
        %v6260 = vmul.f32 %v6220, %v6242
        %v6261 = vmul.f32 %v6221, %v6242
        %v6262 = vmul.f32 %v6222, %v6242
        %v6263 = vmul.f32 %v6223, %v6242
        %v6264 = vmul.f32 %v6224, %v6242
        %v6265 = vmul.f32 %v6225, %v6242
        %v6266 = vmul.f32 %v6226, %v6242
        %v6267 = vmul.f32 %v6227, %v6242
        %v6268 = vmul.f32 %v6228, %v6242
        %v6269 = vmul.f32 %v6229, %v6242
        %v6270 = vmul.f32 %v6230, %v6242
        %v6271 = vmul.f32 %v6231, %v6242
        %v6272 = vmul.f32 %v6232, %v6242
        %v6273 = vmul.f32 %v6233, %v6242
        %v6274 = vmul.f32 %v6234, %v6242
        %v6275 = vmul.f32 %v6235, %v6242
        %v6276 = vpack.c.bf16 %v6260, %v6244
        %v6277 = vpack.c.bf16 %v6261, %v6245
        %v6278 = vpack.c.bf16 %v6262, %v6246
        %v6279 = vpack.c.bf16 %v6263, %v6247
        %v6280 = vpack.c.bf16 %v6264, %v6248
        %v6281 = vpack.c.bf16 %v6265, %v6249
        %v6282 = vpack.c.bf16 %v6266, %v6250
        %v6283 = vpack.c.bf16 %v6267, %v6251
        %v6284 = vpack.c.bf16 %v6268, %v6252
        %v6285 = vpack.c.bf16 %v6269, %v6253
        %v6286 = vpack.c.bf16 %v6270, %v6254
        %v6287 = vpack.c.bf16 %v6271, %v6255
        %v6288 = vpack.c.bf16 %v6272, %v6256
        %v6289 = vpack.c.bf16 %v6273, %v6257
        %v6290 = vpack.c.bf16 %v6274, %v6258
        %v6291 = vpack.c.bf16 %v6275, %v6259
        %v6308 = vunpack.c.l.b16 %v6276
        %v6309 = vunpack.c.l.b16 %v6277
        %v6310 = vunpack.c.l.b16 %v6278
        %v6311 = vunpack.c.l.b16 %v6279
        %v6312 = vunpack.c.l.b16 %v6280
        %v6313 = vunpack.c.l.b16 %v6281
        %v6314 = vunpack.c.l.b16 %v6282
        %v6315 = vunpack.c.l.b16 %v6283
        %v6316 = vunpack.c.l.b16 %v6284
        %v6317 = vunpack.c.l.b16 %v6285
        %v6318 = vunpack.c.l.b16 %v6286
        %v6319 = vunpack.c.l.b16 %v6287
        %v6320 = vunpack.c.l.b16 %v6288
        %v6321 = vunpack.c.l.b16 %v6289
        %v6322 = vunpack.c.l.b16 %v6290
        %v6323 = vunpack.c.l.b16 %v6291
        %v6324 = vunpack.c.h.b16 %v6276
        %v6325 = vunpack.c.h.b16 %v6277
        %v6326 = vunpack.c.h.b16 %v6278
        %v6327 = vunpack.c.h.b16 %v6279
        %v6328 = vunpack.c.h.b16 %v6280
        %v6329 = vunpack.c.h.b16 %v6281
        %v6330 = vunpack.c.h.b16 %v6282
        %v6331 = vunpack.c.h.b16 %v6283
        %v6332 = vunpack.c.h.b16 %v6284
        %v6333 = vunpack.c.h.b16 %v6285
        %v6334 = vunpack.c.h.b16 %v6286
        %v6335 = vunpack.c.h.b16 %v6287
        %v6336 = vunpack.c.h.b16 %v6288
        %v6337 = vunpack.c.h.b16 %v6289
        %v6338 = vunpack.c.h.b16 %v6290
        %v6339 = vunpack.c.h.b16 %v6291
        %v6340 = vpack.c.b16 %v6309, %v6308
        %v6341 = vpack.c.b16 %v6311, %v6310
        %v6342 = vpack.c.b16 %v6313, %v6312
        %v6343 = vpack.c.b16 %v6315, %v6314
        %v6344 = vpack.c.b16 %v6317, %v6316
        %v6345 = vpack.c.b16 %v6319, %v6318
        %v6346 = vpack.c.b16 %v6321, %v6320
        %v6347 = vpack.c.b16 %v6323, %v6322
        %v6348 = vpack.c.b16 %v6325, %v6324
        %v6349 = vpack.c.b16 %v6327, %v6326
        %v6350 = vpack.c.b16 %v6329, %v6328
        %v6351 = vpack.c.b16 %v6331, %v6330
        %v6352 = vpack.c.b16 %v6333, %v6332
        %v6353 = vpack.c.b16 %v6335, %v6334
        %v6354 = vpack.c.b16 %v6337, %v6336
        %v6355 = vpack.c.b16 %v6339, %v6338
        %s6372 = scalar_lea.vmem %s381, 512 [#allocation12]
        %6373 = vst [vmem:[%s6372] sm:$0xff] %v6340
        %6374 = vst [vmem:[%s6372 + $0x8] sm:$0xff] %v6341
        %6375 = vst [vmem:[%s6372 + $0x10] sm:$0xff] %v6342
        %6376 = vst [vmem:[%s6372 + $0x18] sm:$0xff] %v6343
        %6377 = vst [vmem:[%s6372 + $0x20] sm:$0xff] %v6344
        %6378 = vst [vmem:[%s6372 + $0x28] sm:$0xff] %v6345
        %6379 = vst [vmem:[%s6372 + $0x30] sm:$0xff] %v6346
        %6380 = vst [vmem:[%s6372 + $0x38] sm:$0xff] %v6347
        %6381 = vst [vmem:[%s6372 + $0x40] sm:$0xff] %v6348
        %6382 = vst [vmem:[%s6372 + $0x48] sm:$0xff] %v6349
        %6383 = vst [vmem:[%s6372 + $0x50] sm:$0xff] %v6350
        %6384 = vst [vmem:[%s6372 + $0x58] sm:$0xff] %v6351
        %6385 = vst [vmem:[%s6372 + $0x60] sm:$0xff] %v6352
        %6386 = vst [vmem:[%s6372 + $0x68] sm:$0xff] %v6353
        %6387 = vst [vmem:[%s6372 + $0x70] sm:$0xff] %v6354
        %6388 = vst [vmem:[%s6372 + $0x78] sm:$0xff] %v6355
        %v6389 = vld [vmem:[%s831] sm:$0xff]
        %v6390 = vld [vmem:[%s831 + $0x8] sm:$0xff]
        %v6391 = vld [vmem:[%s831 + $0x10] sm:$0xff]
        %v6392 = vld [vmem:[%s831 + $0x18] sm:$0xff]
        %v6393 = vld [vmem:[%s831 + $0x20] sm:$0xff]
        %v6394 = vld [vmem:[%s831 + $0x28] sm:$0xff]
        %v6395 = vld [vmem:[%s831 + $0x30] sm:$0xff]
        %v6396 = vld [vmem:[%s831 + $0x38] sm:$0xff]
        %v6397 = vld [vmem:[%s831 + $0x40] sm:$0xff]
        %v6398 = vld [vmem:[%s831 + $0x48] sm:$0xff]
        %v6399 = vld [vmem:[%s831 + $0x50] sm:$0xff]
        %v6400 = vld [vmem:[%s831 + $0x58] sm:$0xff]
        %v6401 = vld [vmem:[%s831 + $0x60] sm:$0xff]
        %v6402 = vld [vmem:[%s831 + $0x68] sm:$0xff]
        %v6403 = vld [vmem:[%s831 + $0x70] sm:$0xff]
        %v6404 = vld [vmem:[%s831 + $0x78] sm:$0xff]
        %v6405 = vunpack.c.l.bf16 %v6389
        %v6406 = vunpack.c.h.bf16 %v6389
        %v6407 = vunpack.c.l.bf16 %v6390
        %v6408 = vunpack.c.h.bf16 %v6390
        %v6409 = vunpack.c.l.bf16 %v6391
        %v6410 = vunpack.c.h.bf16 %v6391
        %v6411 = vunpack.c.l.bf16 %v6392
        %v6412 = vunpack.c.h.bf16 %v6392
        %v6413 = vunpack.c.l.bf16 %v6393
        %v6414 = vunpack.c.h.bf16 %v6393
        %v6415 = vunpack.c.l.bf16 %v6394
        %v6416 = vunpack.c.h.bf16 %v6394
        %v6417 = vunpack.c.l.bf16 %v6395
        %v6418 = vunpack.c.h.bf16 %v6395
        %v6419 = vunpack.c.l.bf16 %v6396
        %v6420 = vunpack.c.h.bf16 %v6396
        %v6421 = vunpack.c.l.bf16 %v6397
        %v6422 = vunpack.c.h.bf16 %v6397
        %v6423 = vunpack.c.l.bf16 %v6398
        %v6424 = vunpack.c.h.bf16 %v6398
        %v6425 = vunpack.c.l.bf16 %v6399
        %v6426 = vunpack.c.h.bf16 %v6399
        %v6427 = vunpack.c.l.bf16 %v6400
        %v6428 = vunpack.c.h.bf16 %v6400
        %v6429 = vunpack.c.l.bf16 %v6401
        %v6430 = vunpack.c.h.bf16 %v6401
        %v6431 = vunpack.c.l.bf16 %v6402
        %v6432 = vunpack.c.h.bf16 %v6402
        %v6433 = vunpack.c.l.bf16 %v6403
        %v6434 = vunpack.c.h.bf16 %v6403
        %v6435 = vunpack.c.l.bf16 %v6404
        %v6436 = vunpack.c.h.bf16 %v6404
        %v6437 = vmul.f32 %v6405, %v4123
        %v6438 = vmul.f32 %v6406, %v4127
        %v6439 = vmul.f32 %v6407, %v4131
        %v6440 = vmul.f32 %v6408, %v4135
        %v6441 = vmul.f32 %v6409, %v4139
        %v6442 = vmul.f32 %v6410, %v4143
        %v6443 = vmul.f32 %v6411, %v4147
        %v6444 = vmul.f32 %v6412, %v4151
        %v6445 = vmul.f32 %v6413, %v4155
        %v6446 = vmul.f32 %v6414, %v4159
        %v6447 = vmul.f32 %v6415, %v4163
        %v6448 = vmul.f32 %v6416, %v4167
        %v6449 = vmul.f32 %v6417, %v4171
        %v6450 = vmul.f32 %v6418, %v4175
        %v6451 = vmul.f32 %v6419, %v4179
        %v6452 = vmul.f32 %v6420, %v4183
        %v6453 = vmul.f32 %v6421, %v4123
        %v6454 = vmul.f32 %v6422, %v4127
        %v6455 = vmul.f32 %v6423, %v4131
        %v6456 = vmul.f32 %v6424, %v4135
        %v6457 = vmul.f32 %v6425, %v4139
        %v6458 = vmul.f32 %v6426, %v4143
        %v6459 = vmul.f32 %v6427, %v4147
        %v6460 = vmul.f32 %v6428, %v4151
        %v6461 = vmul.f32 %v6429, %v4155
        %v6462 = vmul.f32 %v6430, %v4159
        %v6463 = vmul.f32 %v6431, %v4163
        %v6464 = vmul.f32 %v6432, %v4167
        %v6465 = vmul.f32 %v6433, %v4171
        %v6466 = vmul.f32 %v6434, %v4175
        %v6467 = vmul.f32 %v6435, %v4179
        %v6468 = vmul.f32 %v6436, %v4183
        %6469 = vset.pattern.permute.xlu0 5
        %6470 = vperm.xlu0 %6469, %v5218
        %v6471 = vpop.permute.xlu0 %6470
        %6473 = vset.pattern.permute.xlu0 5
        %6474 = vperm.xlu0 %6473, %v5220
        %v6475 = vpop.permute.xlu0 %6474
        %v6477 = vmul.f32 %v6437, %v6471
        %v6478 = vmul.f32 %v6438, %v6471
        %v6479 = vmul.f32 %v6439, %v6471
        %v6480 = vmul.f32 %v6440, %v6471
        %v6481 = vmul.f32 %v6441, %v6471
        %v6482 = vmul.f32 %v6442, %v6471
        %v6483 = vmul.f32 %v6443, %v6471
        %v6484 = vmul.f32 %v6444, %v6471
        %v6485 = vmul.f32 %v6445, %v6471
        %v6486 = vmul.f32 %v6446, %v6471
        %v6487 = vmul.f32 %v6447, %v6471
        %v6488 = vmul.f32 %v6448, %v6471
        %v6489 = vmul.f32 %v6449, %v6471
        %v6490 = vmul.f32 %v6450, %v6471
        %v6491 = vmul.f32 %v6451, %v6471
        %v6492 = vmul.f32 %v6452, %v6471
        %v6493 = vmul.f32 %v6453, %v6475
        %v6494 = vmul.f32 %v6454, %v6475
        %v6495 = vmul.f32 %v6455, %v6475
        %v6496 = vmul.f32 %v6456, %v6475
        %v6497 = vmul.f32 %v6457, %v6475
        %v6498 = vmul.f32 %v6458, %v6475
        %v6499 = vmul.f32 %v6459, %v6475
        %v6500 = vmul.f32 %v6460, %v6475
        %v6501 = vmul.f32 %v6461, %v6475
        %v6502 = vmul.f32 %v6462, %v6475
        %v6503 = vmul.f32 %v6463, %v6475
        %v6504 = vmul.f32 %v6464, %v6475
        %v6505 = vmul.f32 %v6465, %v6475
        %v6506 = vmul.f32 %v6466, %v6475
        %v6507 = vmul.f32 %v6467, %v6475
        %v6508 = vmul.f32 %v6468, %v6475
        %v6509 = vpack.c.bf16 %v6493, %v6477
        %v6510 = vpack.c.bf16 %v6494, %v6478
        %v6511 = vpack.c.bf16 %v6495, %v6479
        %v6512 = vpack.c.bf16 %v6496, %v6480
        %v6513 = vpack.c.bf16 %v6497, %v6481
        %v6514 = vpack.c.bf16 %v6498, %v6482
        %v6515 = vpack.c.bf16 %v6499, %v6483
        %v6516 = vpack.c.bf16 %v6500, %v6484
        %v6517 = vpack.c.bf16 %v6501, %v6485
        %v6518 = vpack.c.bf16 %v6502, %v6486
        %v6519 = vpack.c.bf16 %v6503, %v6487
        %v6520 = vpack.c.bf16 %v6504, %v6488
        %v6521 = vpack.c.bf16 %v6505, %v6489
        %v6522 = vpack.c.bf16 %v6506, %v6490
        %v6523 = vpack.c.bf16 %v6507, %v6491
        %v6524 = vpack.c.bf16 %v6508, %v6492
        %v6541 = vunpack.c.l.b16 %v6509
        %v6542 = vunpack.c.l.b16 %v6510
        %v6543 = vunpack.c.l.b16 %v6511
        %v6544 = vunpack.c.l.b16 %v6512
        %v6545 = vunpack.c.l.b16 %v6513
        %v6546 = vunpack.c.l.b16 %v6514
        %v6547 = vunpack.c.l.b16 %v6515
        %v6548 = vunpack.c.l.b16 %v6516
        %v6549 = vunpack.c.l.b16 %v6517
        %v6550 = vunpack.c.l.b16 %v6518
        %v6551 = vunpack.c.l.b16 %v6519
        %v6552 = vunpack.c.l.b16 %v6520
        %v6553 = vunpack.c.l.b16 %v6521
        %v6554 = vunpack.c.l.b16 %v6522
        %v6555 = vunpack.c.l.b16 %v6523
        %v6556 = vunpack.c.l.b16 %v6524
        %v6557 = vunpack.c.h.b16 %v6509
        %v6558 = vunpack.c.h.b16 %v6510
        %v6559 = vunpack.c.h.b16 %v6511
        %v6560 = vunpack.c.h.b16 %v6512
        %v6561 = vunpack.c.h.b16 %v6513
        %v6562 = vunpack.c.h.b16 %v6514
        %v6563 = vunpack.c.h.b16 %v6515
        %v6564 = vunpack.c.h.b16 %v6516
        %v6565 = vunpack.c.h.b16 %v6517
        %v6566 = vunpack.c.h.b16 %v6518
        %v6567 = vunpack.c.h.b16 %v6519
        %v6568 = vunpack.c.h.b16 %v6520
        %v6569 = vunpack.c.h.b16 %v6521
        %v6570 = vunpack.c.h.b16 %v6522
        %v6571 = vunpack.c.h.b16 %v6523
        %v6572 = vunpack.c.h.b16 %v6524
        %v6573 = vpack.c.b16 %v6542, %v6541
        %v6574 = vpack.c.b16 %v6544, %v6543
        %v6575 = vpack.c.b16 %v6546, %v6545
        %v6576 = vpack.c.b16 %v6548, %v6547
        %v6577 = vpack.c.b16 %v6550, %v6549
        %v6578 = vpack.c.b16 %v6552, %v6551
        %v6579 = vpack.c.b16 %v6554, %v6553
        %v6580 = vpack.c.b16 %v6556, %v6555
        %v6581 = vpack.c.b16 %v6558, %v6557
        %v6582 = vpack.c.b16 %v6560, %v6559
        %v6583 = vpack.c.b16 %v6562, %v6561
        %v6584 = vpack.c.b16 %v6564, %v6563
        %v6585 = vpack.c.b16 %v6566, %v6565
        %v6586 = vpack.c.b16 %v6568, %v6567
        %v6587 = vpack.c.b16 %v6570, %v6569
        %v6588 = vpack.c.b16 %v6572, %v6571
        %s6605 = scalar_lea.vmem %s381, 640 [#allocation12]
        %6606 = vst [vmem:[%s6605] sm:$0xff] %v6573
        %6607 = vst [vmem:[%s6605 + $0x8] sm:$0xff] %v6574
        %6608 = vst [vmem:[%s6605 + $0x10] sm:$0xff] %v6575
        %6609 = vst [vmem:[%s6605 + $0x18] sm:$0xff] %v6576
        %6610 = vst [vmem:[%s6605 + $0x20] sm:$0xff] %v6577
        %6611 = vst [vmem:[%s6605 + $0x28] sm:$0xff] %v6578
        %6612 = vst [vmem:[%s6605 + $0x30] sm:$0xff] %v6579
        %6613 = vst [vmem:[%s6605 + $0x38] sm:$0xff] %v6580
        %6614 = vst [vmem:[%s6605 + $0x40] sm:$0xff] %v6581
        %6615 = vst [vmem:[%s6605 + $0x48] sm:$0xff] %v6582
        %6616 = vst [vmem:[%s6605 + $0x50] sm:$0xff] %v6583
        %6617 = vst [vmem:[%s6605 + $0x58] sm:$0xff] %v6584
        %6618 = vst [vmem:[%s6605 + $0x60] sm:$0xff] %v6585
        %6619 = vst [vmem:[%s6605 + $0x68] sm:$0xff] %v6586
        %6620 = vst [vmem:[%s6605 + $0x70] sm:$0xff] %v6587
        %6621 = vst [vmem:[%s6605 + $0x78] sm:$0xff] %v6588
        %v6622 = vld [vmem:[%s928] sm:$0xff]
        %v6623 = vld [vmem:[%s928 + $0x8] sm:$0xff]
        %v6624 = vld [vmem:[%s928 + $0x10] sm:$0xff]
        %v6625 = vld [vmem:[%s928 + $0x18] sm:$0xff]
        %v6626 = vld [vmem:[%s928 + $0x20] sm:$0xff]
        %v6627 = vld [vmem:[%s928 + $0x28] sm:$0xff]
        %v6628 = vld [vmem:[%s928 + $0x30] sm:$0xff]
        %v6629 = vld [vmem:[%s928 + $0x38] sm:$0xff]
        %v6630 = vld [vmem:[%s928 + $0x40] sm:$0xff]
        %v6631 = vld [vmem:[%s928 + $0x48] sm:$0xff]
        %v6632 = vld [vmem:[%s928 + $0x50] sm:$0xff]
        %v6633 = vld [vmem:[%s928 + $0x58] sm:$0xff]
        %v6634 = vld [vmem:[%s928 + $0x60] sm:$0xff]
        %v6635 = vld [vmem:[%s928 + $0x68] sm:$0xff]
        %v6636 = vld [vmem:[%s928 + $0x70] sm:$0xff]
        %v6637 = vld [vmem:[%s928 + $0x78] sm:$0xff]
        %v6638 = vunpack.c.l.bf16 %v6622
        %v6639 = vunpack.c.h.bf16 %v6622
        %v6640 = vunpack.c.l.bf16 %v6623
        %v6641 = vunpack.c.h.bf16 %v6623
        %v6642 = vunpack.c.l.bf16 %v6624
        %v6643 = vunpack.c.h.bf16 %v6624
        %v6644 = vunpack.c.l.bf16 %v6625
        %v6645 = vunpack.c.h.bf16 %v6625
        %v6646 = vunpack.c.l.bf16 %v6626
        %v6647 = vunpack.c.h.bf16 %v6626
        %v6648 = vunpack.c.l.bf16 %v6627
        %v6649 = vunpack.c.h.bf16 %v6627
        %v6650 = vunpack.c.l.bf16 %v6628
        %v6651 = vunpack.c.h.bf16 %v6628
        %v6652 = vunpack.c.l.bf16 %v6629
        %v6653 = vunpack.c.h.bf16 %v6629
        %v6654 = vunpack.c.l.bf16 %v6630
        %v6655 = vunpack.c.h.bf16 %v6630
        %v6656 = vunpack.c.l.bf16 %v6631
        %v6657 = vunpack.c.h.bf16 %v6631
        %v6658 = vunpack.c.l.bf16 %v6632
        %v6659 = vunpack.c.h.bf16 %v6632
        %v6660 = vunpack.c.l.bf16 %v6633
        %v6661 = vunpack.c.h.bf16 %v6633
        %v6662 = vunpack.c.l.bf16 %v6634
        %v6663 = vunpack.c.h.bf16 %v6634
        %v6664 = vunpack.c.l.bf16 %v6635
        %v6665 = vunpack.c.h.bf16 %v6635
        %v6666 = vunpack.c.l.bf16 %v6636
        %v6667 = vunpack.c.h.bf16 %v6636
        %v6668 = vunpack.c.l.bf16 %v6637
        %v6669 = vunpack.c.h.bf16 %v6637
        %v6670 = vmul.f32 %v6638, %v4123
        %v6671 = vmul.f32 %v6639, %v4127
        %v6672 = vmul.f32 %v6640, %v4131
        %v6673 = vmul.f32 %v6641, %v4135
        %v6674 = vmul.f32 %v6642, %v4139
        %v6675 = vmul.f32 %v6643, %v4143
        %v6676 = vmul.f32 %v6644, %v4147
        %v6677 = vmul.f32 %v6645, %v4151
        %v6678 = vmul.f32 %v6646, %v4155
        %v6679 = vmul.f32 %v6647, %v4159
        %v6680 = vmul.f32 %v6648, %v4163
        %v6681 = vmul.f32 %v6649, %v4167
        %v6682 = vmul.f32 %v6650, %v4171
        %v6683 = vmul.f32 %v6651, %v4175
        %v6684 = vmul.f32 %v6652, %v4179
        %v6685 = vmul.f32 %v6653, %v4183
        %v6686 = vmul.f32 %v6654, %v4123
        %v6687 = vmul.f32 %v6655, %v4127
        %v6688 = vmul.f32 %v6656, %v4131
        %v6689 = vmul.f32 %v6657, %v4135
        %v6690 = vmul.f32 %v6658, %v4139
        %v6691 = vmul.f32 %v6659, %v4143
        %v6692 = vmul.f32 %v6660, %v4147
        %v6693 = vmul.f32 %v6661, %v4151
        %v6694 = vmul.f32 %v6662, %v4155
        %v6695 = vmul.f32 %v6663, %v4159
        %v6696 = vmul.f32 %v6664, %v4163
        %v6697 = vmul.f32 %v6665, %v4167
        %v6698 = vmul.f32 %v6666, %v4171
        %v6699 = vmul.f32 %v6667, %v4175
        %v6700 = vmul.f32 %v6668, %v4179
        %v6701 = vmul.f32 %v6669, %v4183
        %6702 = vset.pattern.permute.xlu0 6
        %6703 = vperm.xlu0 %6702, %v5218
        %v6704 = vpop.permute.xlu0 %6703
        %6706 = vset.pattern.permute.xlu0 6
        %6707 = vperm.xlu0 %6706, %v5220
        %v6708 = vpop.permute.xlu0 %6707
        %v6710 = vmul.f32 %v6670, %v6704
        %v6711 = vmul.f32 %v6671, %v6704
        %v6712 = vmul.f32 %v6672, %v6704
        %v6713 = vmul.f32 %v6673, %v6704
        %v6714 = vmul.f32 %v6674, %v6704
        %v6715 = vmul.f32 %v6675, %v6704
        %v6716 = vmul.f32 %v6676, %v6704
        %v6717 = vmul.f32 %v6677, %v6704
        %v6718 = vmul.f32 %v6678, %v6704
        %v6719 = vmul.f32 %v6679, %v6704
        %v6720 = vmul.f32 %v6680, %v6704
        %v6721 = vmul.f32 %v6681, %v6704
        %v6722 = vmul.f32 %v6682, %v6704
        %v6723 = vmul.f32 %v6683, %v6704
        %v6724 = vmul.f32 %v6684, %v6704
        %v6725 = vmul.f32 %v6685, %v6704
        %v6726 = vmul.f32 %v6686, %v6708
        %v6727 = vmul.f32 %v6687, %v6708
        %v6728 = vmul.f32 %v6688, %v6708
        %v6729 = vmul.f32 %v6689, %v6708
        %v6730 = vmul.f32 %v6690, %v6708
        %v6731 = vmul.f32 %v6691, %v6708
        %v6732 = vmul.f32 %v6692, %v6708
        %v6733 = vmul.f32 %v6693, %v6708
        %v6734 = vmul.f32 %v6694, %v6708
        %v6735 = vmul.f32 %v6695, %v6708
        %v6736 = vmul.f32 %v6696, %v6708
        %v6737 = vmul.f32 %v6697, %v6708
        %v6738 = vmul.f32 %v6698, %v6708
        %v6739 = vmul.f32 %v6699, %v6708
        %v6740 = vmul.f32 %v6700, %v6708
        %v6741 = vmul.f32 %v6701, %v6708
        %v6742 = vpack.c.bf16 %v6726, %v6710
        %v6743 = vpack.c.bf16 %v6727, %v6711
        %v6744 = vpack.c.bf16 %v6728, %v6712
        %v6745 = vpack.c.bf16 %v6729, %v6713
        %v6746 = vpack.c.bf16 %v6730, %v6714
        %v6747 = vpack.c.bf16 %v6731, %v6715
        %v6748 = vpack.c.bf16 %v6732, %v6716
        %v6749 = vpack.c.bf16 %v6733, %v6717
        %v6750 = vpack.c.bf16 %v6734, %v6718
        %v6751 = vpack.c.bf16 %v6735, %v6719
        %v6752 = vpack.c.bf16 %v6736, %v6720
        %v6753 = vpack.c.bf16 %v6737, %v6721
        %v6754 = vpack.c.bf16 %v6738, %v6722
        %v6755 = vpack.c.bf16 %v6739, %v6723
        %v6756 = vpack.c.bf16 %v6740, %v6724
        %v6757 = vpack.c.bf16 %v6741, %v6725
        %v6774 = vunpack.c.l.b16 %v6742
        %v6775 = vunpack.c.l.b16 %v6743
        %v6776 = vunpack.c.l.b16 %v6744
        %v6777 = vunpack.c.l.b16 %v6745
        %v6778 = vunpack.c.l.b16 %v6746
        %v6779 = vunpack.c.l.b16 %v6747
        %v6780 = vunpack.c.l.b16 %v6748
        %v6781 = vunpack.c.l.b16 %v6749
        %v6782 = vunpack.c.l.b16 %v6750
        %v6783 = vunpack.c.l.b16 %v6751
        %v6784 = vunpack.c.l.b16 %v6752
        %v6785 = vunpack.c.l.b16 %v6753
        %v6786 = vunpack.c.l.b16 %v6754
        %v6787 = vunpack.c.l.b16 %v6755
        %v6788 = vunpack.c.l.b16 %v6756
        %v6789 = vunpack.c.l.b16 %v6757
        %v6790 = vunpack.c.h.b16 %v6742
        %v6791 = vunpack.c.h.b16 %v6743
        %v6792 = vunpack.c.h.b16 %v6744
        %v6793 = vunpack.c.h.b16 %v6745
        %v6794 = vunpack.c.h.b16 %v6746
        %v6795 = vunpack.c.h.b16 %v6747
        %v6796 = vunpack.c.h.b16 %v6748
        %v6797 = vunpack.c.h.b16 %v6749
        %v6798 = vunpack.c.h.b16 %v6750
        %v6799 = vunpack.c.h.b16 %v6751
        %v6800 = vunpack.c.h.b16 %v6752
        %v6801 = vunpack.c.h.b16 %v6753
        %v6802 = vunpack.c.h.b16 %v6754
        %v6803 = vunpack.c.h.b16 %v6755
        %v6804 = vunpack.c.h.b16 %v6756
        %v6805 = vunpack.c.h.b16 %v6757
        %v6806 = vpack.c.b16 %v6775, %v6774
        %v6807 = vpack.c.b16 %v6777, %v6776
        %v6808 = vpack.c.b16 %v6779, %v6778
        %v6809 = vpack.c.b16 %v6781, %v6780
        %v6810 = vpack.c.b16 %v6783, %v6782
        %v6811 = vpack.c.b16 %v6785, %v6784
        %v6812 = vpack.c.b16 %v6787, %v6786
        %v6813 = vpack.c.b16 %v6789, %v6788
        %v6814 = vpack.c.b16 %v6791, %v6790
        %v6815 = vpack.c.b16 %v6793, %v6792
        %v6816 = vpack.c.b16 %v6795, %v6794
        %v6817 = vpack.c.b16 %v6797, %v6796
        %v6818 = vpack.c.b16 %v6799, %v6798
        %v6819 = vpack.c.b16 %v6801, %v6800
        %v6820 = vpack.c.b16 %v6803, %v6802
        %v6821 = vpack.c.b16 %v6805, %v6804
        %s6838 = scalar_lea.vmem %s381, 768 [#allocation12]
        %6839 = vst [vmem:[%s6838] sm:$0xff] %v6806
        %6840 = vst [vmem:[%s6838 + $0x8] sm:$0xff] %v6807
        %6841 = vst [vmem:[%s6838 + $0x10] sm:$0xff] %v6808
        %6842 = vst [vmem:[%s6838 + $0x18] sm:$0xff] %v6809
        %6843 = vst [vmem:[%s6838 + $0x20] sm:$0xff] %v6810
        %6844 = vst [vmem:[%s6838 + $0x28] sm:$0xff] %v6811
        %6845 = vst [vmem:[%s6838 + $0x30] sm:$0xff] %v6812
        %6846 = vst [vmem:[%s6838 + $0x38] sm:$0xff] %v6813
        %6847 = vst [vmem:[%s6838 + $0x40] sm:$0xff] %v6814
        %6848 = vst [vmem:[%s6838 + $0x48] sm:$0xff] %v6815
        %6849 = vst [vmem:[%s6838 + $0x50] sm:$0xff] %v6816
        %6850 = vst [vmem:[%s6838 + $0x58] sm:$0xff] %v6817
        %6851 = vst [vmem:[%s6838 + $0x60] sm:$0xff] %v6818
        %6852 = vst [vmem:[%s6838 + $0x68] sm:$0xff] %v6819
        %6853 = vst [vmem:[%s6838 + $0x70] sm:$0xff] %v6820
        %6854 = vst [vmem:[%s6838 + $0x78] sm:$0xff] %v6821
        %v6855 = vld [vmem:[%s1025] sm:$0xff]
        %v6856 = vld [vmem:[%s1025 + $0x8] sm:$0xff]
        %v6857 = vld [vmem:[%s1025 + $0x10] sm:$0xff]
        %v6858 = vld [vmem:[%s1025 + $0x18] sm:$0xff]
        %v6859 = vld [vmem:[%s1025 + $0x20] sm:$0xff]
        %v6860 = vld [vmem:[%s1025 + $0x28] sm:$0xff]
        %v6861 = vld [vmem:[%s1025 + $0x30] sm:$0xff]
        %v6862 = vld [vmem:[%s1025 + $0x38] sm:$0xff]
        %v6863 = vld [vmem:[%s1025 + $0x40] sm:$0xff]
        %v6864 = vld [vmem:[%s1025 + $0x48] sm:$0xff]
        %v6865 = vld [vmem:[%s1025 + $0x50] sm:$0xff]
        %v6866 = vld [vmem:[%s1025 + $0x58] sm:$0xff]
        %v6867 = vld [vmem:[%s1025 + $0x60] sm:$0xff]
        %v6868 = vld [vmem:[%s1025 + $0x68] sm:$0xff]
        %v6869 = vld [vmem:[%s1025 + $0x70] sm:$0xff]
        %v6870 = vld [vmem:[%s1025 + $0x78] sm:$0xff]
        %v6871 = vunpack.c.l.bf16 %v6855
        %v6872 = vunpack.c.h.bf16 %v6855
        %v6873 = vunpack.c.l.bf16 %v6856
        %v6874 = vunpack.c.h.bf16 %v6856
        %v6875 = vunpack.c.l.bf16 %v6857
        %v6876 = vunpack.c.h.bf16 %v6857
        %v6877 = vunpack.c.l.bf16 %v6858
        %v6878 = vunpack.c.h.bf16 %v6858
        %v6879 = vunpack.c.l.bf16 %v6859
        %v6880 = vunpack.c.h.bf16 %v6859
        %v6881 = vunpack.c.l.bf16 %v6860
        %v6882 = vunpack.c.h.bf16 %v6860
        %v6883 = vunpack.c.l.bf16 %v6861
        %v6884 = vunpack.c.h.bf16 %v6861
        %v6885 = vunpack.c.l.bf16 %v6862
        %v6886 = vunpack.c.h.bf16 %v6862
        %v6887 = vunpack.c.l.bf16 %v6863
        %v6888 = vunpack.c.h.bf16 %v6863
        %v6889 = vunpack.c.l.bf16 %v6864
        %v6890 = vunpack.c.h.bf16 %v6864
        %v6891 = vunpack.c.l.bf16 %v6865
        %v6892 = vunpack.c.h.bf16 %v6865
        %v6893 = vunpack.c.l.bf16 %v6866
        %v6894 = vunpack.c.h.bf16 %v6866
        %v6895 = vunpack.c.l.bf16 %v6867
        %v6896 = vunpack.c.h.bf16 %v6867
        %v6897 = vunpack.c.l.bf16 %v6868
        %v6898 = vunpack.c.h.bf16 %v6868
        %v6899 = vunpack.c.l.bf16 %v6869
        %v6900 = vunpack.c.h.bf16 %v6869
        %v6901 = vunpack.c.l.bf16 %v6870
        %v6902 = vunpack.c.h.bf16 %v6870
        %v6903 = vmul.f32 %v6871, %v4123
        %v6904 = vmul.f32 %v6872, %v4127
        %v6905 = vmul.f32 %v6873, %v4131
        %v6906 = vmul.f32 %v6874, %v4135
        %v6907 = vmul.f32 %v6875, %v4139
        %v6908 = vmul.f32 %v6876, %v4143
        %v6909 = vmul.f32 %v6877, %v4147
        %v6910 = vmul.f32 %v6878, %v4151
        %v6911 = vmul.f32 %v6879, %v4155
        %v6912 = vmul.f32 %v6880, %v4159
        %v6913 = vmul.f32 %v6881, %v4163
        %v6914 = vmul.f32 %v6882, %v4167
        %v6915 = vmul.f32 %v6883, %v4171
        %v6916 = vmul.f32 %v6884, %v4175
        %v6917 = vmul.f32 %v6885, %v4179
        %v6918 = vmul.f32 %v6886, %v4183
        %v6919 = vmul.f32 %v6887, %v4123
        %v6920 = vmul.f32 %v6888, %v4127
        %v6921 = vmul.f32 %v6889, %v4131
        %v6922 = vmul.f32 %v6890, %v4135
        %v6923 = vmul.f32 %v6891, %v4139
        %v6924 = vmul.f32 %v6892, %v4143
        %v6925 = vmul.f32 %v6893, %v4147
        %v6926 = vmul.f32 %v6894, %v4151
        %v6927 = vmul.f32 %v6895, %v4155
        %v6928 = vmul.f32 %v6896, %v4159
        %v6929 = vmul.f32 %v6897, %v4163
        %v6930 = vmul.f32 %v6898, %v4167
        %v6931 = vmul.f32 %v6899, %v4171
        %v6932 = vmul.f32 %v6900, %v4175
        %v6933 = vmul.f32 %v6901, %v4179
        %v6934 = vmul.f32 %v6902, %v4183
        %6935 = vset.pattern.permute.xlu0 7
        %6936 = vperm.xlu0 %6935, %v5218
        %v6937 = vpop.permute.xlu0 %6936
        %6939 = vset.pattern.permute.xlu0 7
        %6940 = vperm.xlu0 %6939, %v5220
        %v6941 = vpop.permute.xlu0 %6940
        %v6943 = vmul.f32 %v6903, %v6937
        %v6944 = vmul.f32 %v6904, %v6937
        %v6945 = vmul.f32 %v6905, %v6937
        %v6946 = vmul.f32 %v6906, %v6937
        %v6947 = vmul.f32 %v6907, %v6937
        %v6948 = vmul.f32 %v6908, %v6937
        %v6949 = vmul.f32 %v6909, %v6937
        %v6950 = vmul.f32 %v6910, %v6937
        %v6951 = vmul.f32 %v6911, %v6937
        %v6952 = vmul.f32 %v6912, %v6937
        %v6953 = vmul.f32 %v6913, %v6937
        %v6954 = vmul.f32 %v6914, %v6937
        %v6955 = vmul.f32 %v6915, %v6937
        %v6956 = vmul.f32 %v6916, %v6937
        %v6957 = vmul.f32 %v6917, %v6937
        %v6958 = vmul.f32 %v6918, %v6937
        %v6959 = vmul.f32 %v6919, %v6941
        %v6960 = vmul.f32 %v6920, %v6941
        %v6961 = vmul.f32 %v6921, %v6941
        %v6962 = vmul.f32 %v6922, %v6941
        %v6963 = vmul.f32 %v6923, %v6941
        %v6964 = vmul.f32 %v6924, %v6941
        %v6965 = vmul.f32 %v6925, %v6941
        %v6966 = vmul.f32 %v6926, %v6941
        %v6967 = vmul.f32 %v6927, %v6941
        %v6968 = vmul.f32 %v6928, %v6941
        %v6969 = vmul.f32 %v6929, %v6941
        %v6970 = vmul.f32 %v6930, %v6941
        %v6971 = vmul.f32 %v6931, %v6941
        %v6972 = vmul.f32 %v6932, %v6941
        %v6973 = vmul.f32 %v6933, %v6941
        %v6974 = vmul.f32 %v6934, %v6941
        %v6975 = vpack.c.bf16 %v6959, %v6943
        %v6976 = vpack.c.bf16 %v6960, %v6944
        %v6977 = vpack.c.bf16 %v6961, %v6945
        %v6978 = vpack.c.bf16 %v6962, %v6946
        %v6979 = vpack.c.bf16 %v6963, %v6947
        %v6980 = vpack.c.bf16 %v6964, %v6948
        %v6981 = vpack.c.bf16 %v6965, %v6949
        %v6982 = vpack.c.bf16 %v6966, %v6950
        %v6983 = vpack.c.bf16 %v6967, %v6951
        %v6984 = vpack.c.bf16 %v6968, %v6952
        %v6985 = vpack.c.bf16 %v6969, %v6953
        %v6986 = vpack.c.bf16 %v6970, %v6954
        %v6987 = vpack.c.bf16 %v6971, %v6955
        %v6988 = vpack.c.bf16 %v6972, %v6956
        %v6989 = vpack.c.bf16 %v6973, %v6957
        %v6990 = vpack.c.bf16 %v6974, %v6958
        %v7007 = vunpack.c.l.b16 %v6975
        %v7008 = vunpack.c.l.b16 %v6976
        %v7009 = vunpack.c.l.b16 %v6977
        %v7010 = vunpack.c.l.b16 %v6978
        %v7011 = vunpack.c.l.b16 %v6979
        %v7012 = vunpack.c.l.b16 %v6980
        %v7013 = vunpack.c.l.b16 %v6981
        %v7014 = vunpack.c.l.b16 %v6982
        %v7015 = vunpack.c.l.b16 %v6983
        %v7016 = vunpack.c.l.b16 %v6984
        %v7017 = vunpack.c.l.b16 %v6985
        %v7018 = vunpack.c.l.b16 %v6986
        %v7019 = vunpack.c.l.b16 %v6987
        %v7020 = vunpack.c.l.b16 %v6988
        %v7021 = vunpack.c.l.b16 %v6989
        %v7022 = vunpack.c.l.b16 %v6990
        %v7023 = vunpack.c.h.b16 %v6975
        %v7024 = vunpack.c.h.b16 %v6976
        %v7025 = vunpack.c.h.b16 %v6977
        %v7026 = vunpack.c.h.b16 %v6978
        %v7027 = vunpack.c.h.b16 %v6979
        %v7028 = vunpack.c.h.b16 %v6980
        %v7029 = vunpack.c.h.b16 %v6981
        %v7030 = vunpack.c.h.b16 %v6982
        %v7031 = vunpack.c.h.b16 %v6983
        %v7032 = vunpack.c.h.b16 %v6984
        %v7033 = vunpack.c.h.b16 %v6985
        %v7034 = vunpack.c.h.b16 %v6986
        %v7035 = vunpack.c.h.b16 %v6987
        %v7036 = vunpack.c.h.b16 %v6988
        %v7037 = vunpack.c.h.b16 %v6989
        %v7038 = vunpack.c.h.b16 %v6990
        %v7039 = vpack.c.b16 %v7008, %v7007
        %v7040 = vpack.c.b16 %v7010, %v7009
        %v7041 = vpack.c.b16 %v7012, %v7011
        %v7042 = vpack.c.b16 %v7014, %v7013
        %v7043 = vpack.c.b16 %v7016, %v7015
        %v7044 = vpack.c.b16 %v7018, %v7017
        %v7045 = vpack.c.b16 %v7020, %v7019
        %v7046 = vpack.c.b16 %v7022, %v7021
        %v7047 = vpack.c.b16 %v7024, %v7023
        %v7048 = vpack.c.b16 %v7026, %v7025
        %v7049 = vpack.c.b16 %v7028, %v7027
        %v7050 = vpack.c.b16 %v7030, %v7029
        %v7051 = vpack.c.b16 %v7032, %v7031
        %v7052 = vpack.c.b16 %v7034, %v7033
        %v7053 = vpack.c.b16 %v7036, %v7035
        %v7054 = vpack.c.b16 %v7038, %v7037
        %s7071 = scalar_lea.vmem %s381, 896 [#allocation12]
        %7072 = vst [vmem:[%s7071] sm:$0xff] %v7039
        %7073 = vst [vmem:[%s7071 + $0x8] sm:$0xff] %v7040
        %7074 = vst [vmem:[%s7071 + $0x10] sm:$0xff] %v7041
        %7075 = vst [vmem:[%s7071 + $0x18] sm:$0xff] %v7042
        %7076 = vst [vmem:[%s7071 + $0x20] sm:$0xff] %v7043
        %7077 = vst [vmem:[%s7071 + $0x28] sm:$0xff] %v7044
        %7078 = vst [vmem:[%s7071 + $0x30] sm:$0xff] %v7045
        %7079 = vst [vmem:[%s7071 + $0x38] sm:$0xff] %v7046
        %7080 = vst [vmem:[%s7071 + $0x40] sm:$0xff] %v7047
        %7081 = vst [vmem:[%s7071 + $0x48] sm:$0xff] %v7048
        %7082 = vst [vmem:[%s7071 + $0x50] sm:$0xff] %v7049
        %7083 = vst [vmem:[%s7071 + $0x58] sm:$0xff] %v7050
        %7084 = vst [vmem:[%s7071 + $0x60] sm:$0xff] %v7051
        %7085 = vst [vmem:[%s7071 + $0x68] sm:$0xff] %v7052
        %7086 = vst [vmem:[%s7071 + $0x70] sm:$0xff] %v7053
        %7087 = vst [vmem:[%s7071 + $0x78] sm:$0xff] %v7054
        %s7088 = sand.u32 %s189, 1
        %s7089 = scalar_lea.sflag [#allocation5], %s7088
        %s7090 = sand.u32 %s189, 1
        %s7091 = smul.addr %s7090, 1024
        %s7092 = scalar_lea.vmem [#allocation12], %s7091
        %p7093 = scmp.lt.s32.totalorder %s29, 1
        %s7094 = scalar_select %p7093, %s29, 1
        %s7095 = smul.addr %s7094, 2
        %s7096 = smul.addr %s7095, 8
        %s7097 = scalar_lea.vmem %s8, %s7096
        // Predicated region
        $region69: #{tpu_custom_call.1} parent=47 // pred_check
          %p7098 = pneg %p199
        $region70: #{tpu_custom_call.1} parent=47 // pred_check_branch
          %7100 = sbr.rel (%p7098) target = $region72
        $region71: #{tpu_custom_call.1} parent=47 // pred_region
          %s7102 = ssub.s32 16384, 16384
          %7103 = vsyncadd %s7089, %s7102
          %s7104 = smul.addr %s29, 256
          %s7105 = smul.addr %s7104, 64
          %s7106 = scalar_lea.hbm %s7, %s7105
          %s7107 = sshll.u32 %s7092, 4
          %s7108 = int_to_ptr.vmem [resolvable:$true] %s7107
          %7113 = dma.vmem_to_hbm [thread:$0]  %s7108, 16384, %s7106, %s7089, 1024, 1024, 64
        $region72: #{tpu_custom_call.1} parent=47 // pred_fallthru
          _
        // Predicated region
        $region73: #{tpu_custom_call.1} parent=47 // pred_check
          %p7114 = pneg %p225
        $region74: #{tpu_custom_call.1} parent=47 // pred_check_branch
          %7116 = sbr.rel (%p7114) target = $region76
        $region75: #{tpu_custom_call.1} parent=47 // pred_region
          _
        $region76: #{tpu_custom_call.1} parent=47 // pred_fallthru
          _
      $region48: #{tpu_custom_call.1} parent=5 // pred_fallthru
        _
      %p7117 = scmp.le.s32.totalorder 2, %s24
      // Predicated region
      $region77: #{tpu_custom_call.1} parent=5 // pred_check
        %p7118 = pneg %p7117
      $region78: #{tpu_custom_call.1} parent=5 // pred_check_branch
        %7120 = sbr.rel (%p7118) target = $region80
      $region79: #{tpu_custom_call.1} parent=5 // pred_region
        %s7121 = ssub.s32 %s24, 2
        // Predicated region
        $region81: #{tpu_custom_call.1} parent=79 // pred_check
          %p7122 = pneg %p205
        $region82: #{tpu_custom_call.1} parent=79 // pred_check_branch
          %7124 = sbr.rel (%p7122) target = $region84
        $region83: #{tpu_custom_call.1} parent=79 // pred_region
          %s7125 = sand.u32 %s190, 1
          %s7126 = scalar_lea.sflag [#allocation5], %s7125
          %s7127 = sand.u32 %s190, 1
          %s7128 = smul.addr %s7127, 1024
          %s7129 = scalar_lea.vmem [#allocation12], %s7128
          %7130 = dma.done %s7126, 16384
        $region84: #{tpu_custom_call.1} parent=79 // pred_fallthru
          _
        // Predicated region
        $region85: #{tpu_custom_call.1} parent=79 // pred_check
          %p7131 = pneg %p231
        $region86: #{tpu_custom_call.1} parent=79 // pred_check_branch
          %7133 = sbr.rel (%p7131) target = $region88
        $region87: #{tpu_custom_call.1} parent=79 // pred_region
          %p7134 = scmp.lt.s32.totalorder %s30, 1
          %s7135 = scalar_select %p7134, %s30, 1
          %s7136 = smul.addr %s7135, 2
          %s7137 = smul.addr %s7136, 8
          %s7138 = scalar_lea.vmem %s8, %s7137
        $region88: #{tpu_custom_call.1} parent=79 // pred_fallthru
          _
      $region80: #{tpu_custom_call.1} parent=5 // pred_fallthru
        _
    $region6: #{tpu_custom_call.1} parent=1 // loop_footer
      %s28 = sadd.s32 1, %s24
    $region7: #{tpu_custom_call.1} parent=1 // loop_footer_branch
      %23 = sbr.rel target = $region3
    $region8: #{tpu_custom_call.1} parent=1 // loop_exit
      _
    %7139 = vsyncpa [#allocation4], 1
    %s7140 = scalar_lea.sflag [#allocation4], 1
    %7141 = vsyncpa %s7140, 1
    %7142 = vsyncpa [#allocation7], 1
    %7143 = vsyncpa [#allocation10], 1
    %7144 = vsyncpa [#allocation5], 1
    %s7145 = scalar_lea.sflag [#allocation5], 1
    %7146 = vsyncpa %s7145, 1

</llo_original>
